<compile_context>
chip_gen: v6e
topology: v6e:2x2x1
jax: 0.10.0
libtpu: 0.0.40
codegen_flags: <defaults>
</compile_context>

<pallas_src>
import math
import functools

import jax
import jax.numpy as jnp
from jax.experimental import pallas as pl
from jax.experimental.pallas import tpu as pltpu

f32 = jnp.float32
MXU_DT = jnp.bfloat16                       # MXU operand dtype; accumulate f32
VMEM_SPEC = pl.BlockSpec(memory_space=pltpu.MemorySpace.VMEM)

W_ROW_ALIGN = 16                            # bf16 sublane tile height
B_ROW_ALIGN = 8                             # f32 sublane tile height
_MAT_KEYS = ("wih", "whh", "w")


def _round_up(n, m):
    return -(-n // m) * m


# --------------------- host-side branch fusion (trace-free) -------------------
# Two parallel LSTMs (mean / logvar) with identical shapes are fused into one
# LSTM of hidden 2H: gate columns interleaved gate-major
# [iA|iB|fA|fB|gA|gB|oA|oB] and recurrent/input weights block-structured, so
# the standard [i,f,g,o] split of width 2H inside the kernel is exactly the
# fused computation.  Mathematically identical to running both branches.

def _interleave_gates(mA, mB, n_gates):
    H = mA.shape[1] // n_gates
    cols = []
    for g in range(n_gates):
        cols.append(mA[:, g * H:(g + 1) * H])
        cols.append(mB[:, g * H:(g + 1) * H])
    return jnp.concatenate(cols, axis=1)


def _fuse_lstm(pA, pB, split_input):
    zA, zB = jnp.zeros_like(pA["wih"]), jnp.zeros_like(pB["wih"])
    if split_input:     # input is [x_A | x_B] (branch-split)
        wih = jnp.concatenate([_interleave_gates(pA["wih"], zB, 4),
                               _interleave_gates(zA, pB["wih"], 4)], axis=0)
    else:               # both branches read the same input
        wih = _interleave_gates(pA["wih"], pB["wih"], 4)
    whh = jnp.concatenate(
        [_interleave_gates(pA["whh"], jnp.zeros_like(pB["whh"]), 4),
         _interleave_gates(jnp.zeros_like(pA["whh"]), pB["whh"], 4)], axis=0)
    b = _interleave_gates(pA["b"], pB["b"], 4)
    return dict(wih=wih, whh=whh, b=b)


def _fuse_linear(pA, pB):
    dA_in, dA_out = pA["w"].shape
    dB_in, dB_out = pB["w"].shape
    w = jnp.concatenate(
        [jnp.concatenate([pA["w"], jnp.zeros((dA_in, dB_out), f32)], axis=1),
         jnp.concatenate([jnp.zeros((dB_in, dA_out), f32), pB["w"]], axis=1)],
        axis=0)
    b = jnp.concatenate([pA["b"], pB["b"]], axis=1)
    return dict(w=w, b=b)


def _fuse_params(params):
    enc, dec, dis = params["encoder"], params["decoder"], params["disc"]
    return dict(
        enc_lstm0=[_fuse_lstm(a, b, split_input=(i > 0)) for i, (a, b) in
                   enumerate(zip(enc["mean"]["lstm0"], enc["logvar"]["lstm0"]))],
        enc_lin=_fuse_linear(enc["mean"]["lin"], enc["logvar"]["lin"]),
        enc_lstm2=[_fuse_lstm(a, b, split_input=True) for a, b in
                   zip(enc["mean"]["lstm2"], enc["logvar"]["lstm2"])],
        dec_lstm=[_fuse_lstm(a, b, split_input=(i > 0)) for i, (a, b) in
                  enumerate(zip(dec["mean"]["lstm"], dec["logvar"]["lstm"]))],
        dec_lin=_fuse_linear(dec["mean"]["lin"], dec["logvar"]["lin"]),
        disc_gru=[dict(g) for g in dis["gru"]],
        disc_lin=dict(dis["lin"]),
    )


# -------- pack every weight matrix / bias into two slabs (2 input DMAs) -------

def _pack_params(fused):
    widths = []

    def collect(node):
        if isinstance(node, dict):
            for v in node.values():
                if isinstance(v, (dict, list)):
                    collect(v)
                else:
                    widths.append(v.shape[1])
        else:
            for v in node:
                collect(v)

    collect(fused)
    lane_w = _round_up(max(widths), 128)

    w_rows, b_rows = [], []
    state = {"w": 0, "b": 0}

    def add(mat, kind):
        rows, cols = mat.shape
        if kind == "w":
            align, dtype, lst = W_ROW_ALIGN, MXU_DT, w_rows
        else:
            align, dtype, lst = B_ROW_ALIGN, f32, b_rows
        pr = _round_up(rows, align)
        buf = jnp.zeros((pr, lane_w), dtype).at[:rows, :cols].set(mat.astype(dtype))
        lst.append(buf)
        off = state[kind]
        state[kind] = off + pr
        return (off, rows, cols)                      # static plan entry

    def walk(node):
        if isinstance(node, dict):
            return {k: (walk(v) if isinstance(v, (dict, list))
                        else add(v, "w" if k in _MAT_KEYS else "b"))
                    for k, v in node.items()}
        return [walk(v) for v in node]

    plan = walk(fused)
    return jnp.concatenate(w_rows, axis=0), jnp.concatenate(b_rows, axis=0), plan


# ------------------------------- fused kernel --------------------------------

def _build_kernel(plan, dims):
    T, B, Bp = dims["T"], dims["B"], dims["Bp"]
    din, nd, od = dims["input_dim"], dims["noise_dim"], dims["output_dim"]

    def kernel(data_ref, w_ref, b_ref, recon_ref, losses_ref):
        def wmat(slot):
            off, r, c = slot
            return w_ref[off:off + r, :c]             # bf16, aligned offsets

        def bvec(slot):
            off, r, c = slot
            return b_ref[off:off + r, :c]             # f32 (1, c)

        def lstm(seq, p):
            # PyTorch-style LSTM (gate order i,f,g,o; h0=c0=0); works for the
            # fused 2-branch weights too (gate-major interleave).
            Tt, N, D = seq.shape
            wih, whh, bias = wmat(p["wih"]), wmat(p["whh"]), bvec(p["b"])
            H = whh.shape[0]
            gi = jnp.dot(seq.reshape(Tt * N, D).astype(MXU_DT), wih,
                         preferred_element_type=f32) + bias   # hoisted proj
            h = jnp.zeros((N, H), f32)
            c = jnp.zeros((N, H), f32)
            outs = []
            for t in range(Tt):                       # static T -> unrolled
                g = gi[t * N:(t + 1) * N, :] + jnp.dot(
                    h.astype(MXU_DT), whh, preferred_element_type=f32)
                i = jax.nn.sigmoid(g[:, 0:H])
                fg = jax.nn.sigmoid(g[:, H:2 * H])
                gg = jnp.tanh(g[:, 2 * H:3 * H])
                o = jax.nn.sigmoid(g[:, 3 * H:4 * H])
                c = fg * c + i * gg
                h = o * jnp.tanh(c)
                outs.append(h)
            return jnp.stack(outs, axis=0)            # (T, N, H), tile aligned

        def gru(seq, p):
            Tt, N, D = seq.shape
            wih, whh = wmat(p["wih"]), wmat(p["whh"])
            bih, bhh = bvec(p["bih"]), bvec(p["bhh"])
            H = whh.shape[0]
            gi = jnp.dot(seq.reshape(Tt * N, D).astype(MXU_DT), wih,
                         preferred_element_type=f32) + bih
            bhh_b = jnp.broadcast_to(bhh, (N, 3 * H))  # hoisted broadcast
            h = jnp.zeros((N, H), f32)
            outs = []
            for t in range(Tt):
                gh = jnp.dot(h.astype(MXU_DT), whh, preferred_element_type=f32) + bhh_b
                gt = gi[t * N:(t + 1) * N, :]
                r = jax.nn.sigmoid(gt[:, 0:H] + gh[:, 0:H])
                z = jax.nn.sigmoid(gt[:, H:2 * H] + gh[:, H:2 * H])
                n = jnp.tanh(gt[:, 2 * H:3 * H] + r * gh[:, 2 * H:3 * H])
                h = (1.0 - z) * n + z * h
                outs.append(h)
            return jnp.stack(outs, axis=0)

        def linear(seq, p):
            Tt, N, D = seq.shape
            w, bias = wmat(p["w"]), bvec(p["b"])
            out = jnp.dot(seq.reshape(Tt * N, D).astype(MXU_DT), w,
                          preferred_element_type=f32) + bias
            return out.reshape(Tt, N, w.shape[1])

        def rsum(x):                                   # full sum -> (1, 1)
            Tt, N, D = x.shape
            return jnp.sum(x.reshape(Tt * N, D), axis=(0, 1), keepdims=True)

        # ------------------------ unpack packed data -------------------------
        x_seq    = data_ref[:, 0 * Bp:1 * Bp, :din]
        real_seq = data_ref[:, 1 * Bp:2 * Bp, :od]
        fake_seq = data_ref[:, 2 * Bp:3 * Bp, :nd]
        eps_z    = data_ref[:, 3 * Bp:4 * Bp, :nd]
        eps_dec  = data_ref[:, 4 * Bp:5 * Bp, :od]
        eps_fake = data_ref[:, 5 * Bp:6 * Bp, :od]
        bmask    = data_ref[0:1, 6 * Bp:7 * Bp, 0:1]   # (1, Bp, 1) valid-batch mask

        # --------- encoder: fused mean+logvar branches (ONE recurrence) ------
        h = x_seq
        for lp in plan["enc_lstm0"]:
            h = lstm(h, lp)
        h = linear(h, plan["enc_lin"])
        for lp in plan["enc_lstm2"]:
            h = lstm(h, lp)
        mu     = h[:, :, 0:nd]
        logvar = h[:, :, nd:2 * nd]
        z = eps_z * jnp.exp(0.5 * logvar) + mu
        kl = 0.5 * rsum(bmask * (-1.0 - logvar + mu * mu + jnp.exp(logvar))) / B

        # --- decoder: fused mean+logvar AND dec(z)/dec(fake) batch-stacked ---
        dec_in = jnp.concatenate([z, fake_seq], axis=1)       # (T, 2Bp, nd)
        d = dec_in
        for lp in plan["dec_lstm"]:
            d = lstm(d, lp)
        dec_out = linear(d, plan["dec_lin"])                  # (T, 2Bp, 2*od)
        mu_dec = dec_out[:, 0:Bp, 0:od]
        lv_dec = dec_out[:, 0:Bp, od:2 * od]
        mu_n   = dec_out[:, Bp:2 * Bp, 0:od]
        lv_n   = dec_out[:, Bp:2 * Bp, od:2 * od]
        recon       = eps_dec * jnp.exp(0.5 * lv_dec) + mu_dec   # repemetrimized_x
        noise_recon = eps_fake * jnp.exp(0.5 * lv_n) + mu_n

        diff = mu_dec - real_seq
        t1 = rsum(bmask * diff * diff * jnp.exp(-lv_dec))
        t2 = rsum(bmask * lv_dec)
        rl = (0.5 * t1 + 0.5 * t2) / B

        # ------ discriminator: 3 streams batched (GradReverse = identity) ----
        disc_in = jnp.concatenate([recon, noise_recon, real_seq], axis=1)  # (T,3Bp,od)
        g = disc_in
        for lp in plan["disc_gru"]:
            g = gru(g, lp)
        probs = jax.nn.sigmoid(linear(g, plan["disc_lin"]))   # (T, 3Bp, 1)
        # torch BCELoss semantics: log clamped at -100 (clamp before mask so
        # masked saturated rows never produce inf*0).
        log_p   = jnp.maximum(jnp.log(probs), -100.0)
        log_1mp = jnp.maximum(jnp.log(1.0 - probs), -100.0)
        bmask2 = jnp.concatenate([bmask, bmask], axis=1)      # (1, 2Bp, 1)
        pos = rsum(bmask2 * log_p[:, 0:2 * Bp, :])            # labels == 1
        neg = rsum(bmask * log_1mp[:, 2 * Bp:3 * Bp, :])      # labels == 0
        bce = -(pos + neg) / B

        recon_ref[...] = recon
        losses_ref[...] = jnp.concatenate([kl, rl, bce], axis=1)   # (1, 3)

    return kernel


# --------------------------------- wrapper ------------------------------------

def make_vae_gan_forward(params):
    """Fuse + pack params once (host side); return jitted forward(x, real, fake, key)."""
    dims = dict(
        input_dim=params["encoder"]["mean"]["lstm0"][0]["wih"].shape[0],
        noise_dim=params["decoder"]["mean"]["lstm"][0]["wih"].shape[0],
        output_dim=params["decoder"]["mean"]["lin"]["w"].shape[1],
    )
    w_slab, b_slab, plan = _pack_params(_fuse_params(params))

    def forward(w_slab, b_slab, x, real, fake, key):
        B, T, _ = x.shape
        Bp = _round_up(max(B, 8), 8)                  # sublane-aligned batch
        din, nd, od = dims["input_dim"], dims["noise_dim"], dims["output_dim"]
        dmax = max(din, nd, od)

        k1, k2, k3 = jax.random.split(key, 3)
        eps_z = jax.random.normal(k1, (T, Bp, nd), f32)
        eps_dec = jax.random.normal(k2, (T, Bp, od), f32)
        eps_fake = jax.random.normal(k3, (T, Bp, od), f32)

        def seq(a):        # (B,T,D) batch-first -> (T, Bp, D), zero-padded batch
            a = jnp.transpose(a, (1, 0, 2))
            return jnp.pad(a, ((0, 0), (0, Bp - B), (0, 0)))

        def padl(a):       # pad feature dim to common slab width
            return jnp.pad(a, ((0, 0), (0, 0), (0, dmax - a.shape[-1])))

        bmask_blk = jnp.pad(jnp.ones((T, B, dmax), f32),
                            ((0, 0), (0, Bp - B), (0, 0)))
        data = jnp.concatenate(
            [padl(seq(x)), padl(seq(real)), padl(seq(fake)),
             padl(eps_z), padl(eps_dec), padl(eps_fake), bmask_blk], axis=1)

        kernel = _build_kernel(plan, dict(T=T, B=B, Bp=Bp, **dims))
        recon_p, losses = pl.pallas_call(
            kernel,
            out_shape=(jax.ShapeDtypeStruct((T, Bp, od), f32),
                       jax.ShapeDtypeStruct((1, 3), f32)),
            in_specs=[VMEM_SPEC, VMEM_SPEC, VMEM_SPEC],
            out_specs=(VMEM_SPEC, VMEM_SPEC),
        )(data, w_slab, b_slab)

        recon_x = jnp.transpose(recon_p[:, :B, :], (1, 0, 2))   # (B, T, od)
        return losses[0, 0], recon_x, losses[0, 1], losses[0, 2]

    return functools.partial(jax.jit(forward), w_slab, b_slab)


# ----------------------------- parameter init ---------------------------------

def _uniform(key, shape, k):
    return jax.random.uniform(key, shape, f32, minval=-k, maxval=k)


def init_lstm(key, in_dim, hid):
    k = 1.0 / math.sqrt(hid)
    k1, k2, k3, k4 = jax.random.split(key, 4)
    return dict(
        wih=_uniform(k1, (in_dim, 4 * hid), k),
        whh=_uniform(k2, (hid, 4 * hid), k),
        b=_uniform(k3, (1, 4 * hid), k) + _uniform(k4, (1, 4 * hid), k),  # b_ih+b_hh
    )


def init_gru(key, in_dim, hid):
    k = 1.0 / math.sqrt(hid)
    k1, k2, k3, k4 = jax.random.split(key, 4)
    return dict(
        wih=_uniform(k1, (in_dim, 3 * hid), k),
        whh=_uniform(k2, (hid, 3 * hid), k),
        bih=_uniform(k3, (1, 3 * hid), k),
        bhh=_uniform(k4, (1, 3 * hid), k),
    )


def init_linear(key, in_dim, out_dim):
    k = 1.0 / math.sqrt(in_dim)
    k1, k2 = jax.random.split(key)
    return dict(w=_uniform(k1, (in_dim, out_dim), k), b=_uniform(k2, (1, out_dim), k))


def init_multi_lstm(key, in_dim, hid, n_layers):
    keys = jax.random.split(key, n_layers)
    layers, d = [], in_dim
    for kk in keys:
        layers.append(init_lstm(kk, d, hid))
        d = hid
    return layers


def init_multi_gru(key, in_dim, hid, n_layers):
    keys = jax.random.split(key, n_layers)
    layers, d = [], in_dim
    for kk in keys:
        layers.append(init_gru(kk, d, hid))
        d = hid
    return layers


def init_params(key, input_dim, hidden_dim, noise_dim, output_dim,
                encoder_layer=1, decoder_layer=1, d_layer=1):
    ks = jax.random.split(key, 12)
    encoder = dict(
        mean=dict(
            lstm0=init_multi_lstm(ks[0], input_dim, input_dim, 1),
            lin=init_linear(ks[1], input_dim, hidden_dim),
            lstm2=init_multi_lstm(ks[2], hidden_dim, noise_dim, encoder_layer)),
        logvar=dict(
            lstm0=init_multi_lstm(ks[3], input_dim, input_dim, 1),
            lin=init_linear(ks[4], input_dim, hidden_dim),
            lstm2=init_multi_lstm(ks[5], hidden_dim, noise_dim, encoder_layer)),
    )
    decoder = dict(
        mean=dict(lstm=init_multi_lstm(ks[6], noise_dim, hidden_dim, decoder_layer),
                  lin=init_linear(ks[7], hidden_dim, output_dim)),
        logvar=dict(lstm=init_multi_lstm(ks[8], noise_dim, hidden_dim, decoder_layer),
                    lin=init_linear(ks[9], hidden_dim, output_dim)),
    )
    disc = dict(gru=init_multi_gru(ks[10], output_dim, hidden_dim, d_layer),
                lin=init_linear(ks[11], hidden_dim, 1))
    return dict(encoder=encoder, decoder=decoder, disc=disc)


# ----------------------------------- main --------------------------------------

if __name__ == "__main__":
    B, T = 2, 8
    input_dim, hidden_dim, noise_dim, output_dim = 8, 16, 8, 8

    key = jax.random.PRNGKey(0)
    kp, kx, kr, kf, ke = jax.random.split(key, 5)

    params = init_params(kp, input_dim, hidden_dim, noise_dim, output_dim,
                         encoder_layer=1, decoder_layer=1, d_layer=1)

    x = jax.random.normal(kx, (B, T, input_dim), f32)        # encoder input
    real = jax.random.normal(kr, (B, T, output_dim), f32)    # real sequences
    fake = jax.random.normal(kf, (B, T, noise_dim), f32)     # fake latent noise

    fwd = make_vae_gan_forward(params)
    kl, recon_x, recon_loss, bce = fwd(x, real, fake, ke)
    jax.block_until_ready((kl, recon_x, recon_loss, bce))
    assert recon_x.shape == (B, T, output_dim)
    print("KERNEL_OK")
</pallas_src>

<mosaic_0001>
module attributes {stable_mosaic.version = 11 : i64} {
  func.func @kernel(%arg0: memref<8x56x8xf32, #tpu.memory_space<vmem>>, %arg1: memref<224x128xbf16, #tpu.memory_space<vmem>>, %arg2: memref<64x128xf32, #tpu.memory_space<vmem>>, %arg3: memref<8x8x8xf32, #tpu.memory_space<vmem>>, %arg4: memref<1x3xf32, #tpu.memory_space<vmem>>) attributes {dimension_semantics = [], scalar_prefetch = 0 : i64, scratch_operands = 0 : i64, tpu.core_type = #tpu.core_type<tc>} {
    %c0 = arith.constant 0 : index
    %c0_0 = arith.constant 0 : index
    %c0_1 = arith.constant 0 : index
    %0 = vector.load %arg0[%c0, %c0_0, %c0_1] : memref<8x56x8xf32, #tpu.memory_space<vmem>>, vector<8x8x8xf32>
    %c0_2 = arith.constant 0 : index
    %c8 = arith.constant 8 : index
    %c0_3 = arith.constant 0 : index
    %1 = vector.load %arg0[%c0_2, %c8, %c0_3] : memref<8x56x8xf32, #tpu.memory_space<vmem>>, vector<8x8x8xf32>
    %c0_4 = arith.constant 0 : index
    %c16 = arith.constant 16 : index
    %c0_5 = arith.constant 0 : index
    %2 = vector.load %arg0[%c0_4, %c16, %c0_5] : memref<8x56x8xf32, #tpu.memory_space<vmem>>, vector<8x8x8xf32>
    %c0_6 = arith.constant 0 : index
    %c24 = arith.constant 24 : index
    %c0_7 = arith.constant 0 : index
    %3 = vector.load %arg0[%c0_6, %c24, %c0_7] : memref<8x56x8xf32, #tpu.memory_space<vmem>>, vector<8x8x8xf32>
    %c0_8 = arith.constant 0 : index
    %c32 = arith.constant 32 : index
    %c0_9 = arith.constant 0 : index
    %4 = vector.load %arg0[%c0_8, %c32, %c0_9] : memref<8x56x8xf32, #tpu.memory_space<vmem>>, vector<8x8x8xf32>
    %c0_10 = arith.constant 0 : index
    %c40 = arith.constant 40 : index
    %c0_11 = arith.constant 0 : index
    %5 = vector.load %arg0[%c0_10, %c40, %c0_11] : memref<8x56x8xf32, #tpu.memory_space<vmem>>, vector<8x8x8xf32>
    %c0_12 = arith.constant 0 : index
    %c48 = arith.constant 48 : index
    %c0_13 = arith.constant 0 : index
    %6 = vector.load %arg0[%c0_12, %c48, %c0_13] : memref<8x56x8xf32, #tpu.memory_space<vmem>>, vector<1x8x1xf32>
    %c0_14 = arith.constant 0 : index
    %c0_15 = arith.constant 0 : index
    %7 = vector.load %arg1[%c0_14, %c0_15] : memref<224x128xbf16, #tpu.memory_space<vmem>>, vector<8x64xbf16>
    %c16_16 = arith.constant 16 : index
    %c0_17 = arith.constant 0 : index
    %8 = vector.load %arg1[%c16_16, %c0_17] : memref<224x128xbf16, #tpu.memory_space<vmem>>, vector<16x64xbf16>
    %c0_18 = arith.constant 0 : index
    %c0_19 = arith.constant 0 : index
    %9 = vector.load %arg2[%c0_18, %c0_19] : memref<64x128xf32, #tpu.memory_space<vmem>>, vector<1x64xf32>
    %10 = vector.shape_cast %0 : vector<8x8x8xf32> to vector<64x8xf32>
    %11 = arith.truncf %10 : vector<64x8xf32> to vector<64x8xbf16>
    %cst = arith.constant dense<0.000000e+00> : vector<64x64xf32>
    %12 = tpu.matmul %11, %7, %cst {dimension_numbers = #tpu.dot_dimension_numbers<[1], [0], [0], [1], [0, 0, 1, 1], [], []>} : vector<64x8xbf16>, vector<8x64xbf16>, vector<64x64xf32> -> vector<64x64xf32>
    %13 = vector.broadcast %9 : vector<1x64xf32> to vector<64x64xf32>
    %14 = arith.addf %12, %13 : vector<64x64xf32>
    %cst_20 = arith.constant 0.000000e+00 : f32
    %15 = vector.broadcast %cst_20 : f32 to vector<8x16xf32>
    %cst_21 = arith.constant 0.000000e+00 : f32
    %16 = vector.broadcast %cst_21 : f32 to vector<8x16xf32>
    %17 = vector.extract_strided_slice %14 {offsets = [0, 0], sizes = [8, 64], strides = [1, 1]} : vector<64x64xf32> to vector<8x64xf32>
    %18 = arith.truncf %15 : vector<8x16xf32> to vector<8x16xbf16>
    %cst_22 = arith.constant dense<0.000000e+00> : vector<8x64xf32>
    %19 = tpu.matmul %18, %8, %cst_22 {dimension_numbers = #tpu.dot_dimension_numbers<[1], [0], [0], [1], [0, 0, 1, 1], [], []>} : vector<8x16xbf16>, vector<16x64xbf16>, vector<8x64xf32> -> vector<8x64xf32>
    %20 = arith.addf %17, %19 : vector<8x64xf32>
    %21 = vector.extract_strided_slice %20 {offsets = [0, 0], sizes = [8, 16], strides = [1, 1]} : vector<8x64xf32> to vector<8x16xf32>
    %22 = arith.negf %21 : vector<8x16xf32>
    %23 = math.exp %22 : vector<8x16xf32>
    %cst_23 = arith.constant 1.000000e+00 : f32
    %24 = vector.broadcast %cst_23 : f32 to vector<8x16xf32>
    %25 = arith.addf %24, %23 : vector<8x16xf32>
    %26 = arith.divf %24, %25 : vector<8x16xf32>
    %27 = vector.extract_strided_slice %20 {offsets = [0, 16], sizes = [8, 16], strides = [1, 1]} : vector<8x64xf32> to vector<8x16xf32>
    %28 = arith.negf %27 : vector<8x16xf32>
    %29 = math.exp %28 : vector<8x16xf32>
    %cst_24 = arith.constant 1.000000e+00 : f32
    %30 = vector.broadcast %cst_24 : f32 to vector<8x16xf32>
    %31 = arith.addf %30, %29 : vector<8x16xf32>
    %32 = arith.divf %30, %31 : vector<8x16xf32>
    %33 = vector.extract_strided_slice %20 {offsets = [0, 32], sizes = [8, 16], strides = [1, 1]} : vector<8x64xf32> to vector<8x16xf32>
    %34 = math.tanh %33 : vector<8x16xf32>
    %35 = vector.extract_strided_slice %20 {offsets = [0, 48], sizes = [8, 16], strides = [1, 1]} : vector<8x64xf32> to vector<8x16xf32>
    %36 = arith.negf %35 : vector<8x16xf32>
    %37 = math.exp %36 : vector<8x16xf32>
    %cst_25 = arith.constant 1.000000e+00 : f32
    %38 = vector.broadcast %cst_25 : f32 to vector<8x16xf32>
    %39 = arith.addf %38, %37 : vector<8x16xf32>
    %40 = arith.divf %38, %39 : vector<8x16xf32>
    %41 = arith.mulf %32, %16 : vector<8x16xf32>
    %42 = arith.mulf %26, %34 : vector<8x16xf32>
    %43 = arith.addf %41, %42 : vector<8x16xf32>
    %44 = math.tanh %43 : vector<8x16xf32>
    %45 = arith.mulf %40, %44 : vector<8x16xf32>
    %46 = vector.extract_strided_slice %14 {offsets = [8, 0], sizes = [8, 64], strides = [1, 1]} : vector<64x64xf32> to vector<8x64xf32>
    %47 = arith.truncf %45 : vector<8x16xf32> to vector<8x16xbf16>
    %cst_26 = arith.constant dense<0.000000e+00> : vector<8x64xf32>
    %48 = tpu.matmul %47, %8, %cst_26 {dimension_numbers = #tpu.dot_dimension_numbers<[1], [0], [0], [1], [0, 0, 1, 1], [], []>} : vector<8x16xbf16>, vector<16x64xbf16>, vector<8x64xf32> -> vector<8x64xf32>
    %49 = arith.addf %46, %48 : vector<8x64xf32>
    %50 = vector.extract_strided_slice %49 {offsets = [0, 0], sizes = [8, 16], strides = [1, 1]} : vector<8x64xf32> to vector<8x16xf32>
    %51 = arith.negf %50 : vector<8x16xf32>
    %52 = math.exp %51 : vector<8x16xf32>
    %cst_27 = arith.constant 1.000000e+00 : f32
    %53 = vector.broadcast %cst_27 : f32 to vector<8x16xf32>
    %54 = arith.addf %53, %52 : vector<8x16xf32>
    %55 = arith.divf %53, %54 : vector<8x16xf32>
    %56 = vector.extract_strided_slice %49 {offsets = [0, 16], sizes = [8, 16], strides = [1, 1]} : vector<8x64xf32> to vector<8x16xf32>
    %57 = arith.negf %56 : vector<8x16xf32>
    %58 = math.exp %57 : vector<8x16xf32>
    %cst_28 = arith.constant 1.000000e+00 : f32
    %59 = vector.broadcast %cst_28 : f32 to vector<8x16xf32>
    %60 = arith.addf %59, %58 : vector<8x16xf32>
    %61 = arith.divf %59, %60 : vector<8x16xf32>
    %62 = vector.extract_strided_slice %49 {offsets = [0, 32], sizes = [8, 16], strides = [1, 1]} : vector<8x64xf32> to vector<8x16xf32>
    %63 = math.tanh %62 : vector<8x16xf32>
    %64 = vector.extract_strided_slice %49 {offsets = [0, 48], sizes = [8, 16], strides = [1, 1]} : vector<8x64xf32> to vector<8x16xf32>
    %65 = arith.negf %64 : vector<8x16xf32>
    %66 = math.exp %65 : vector<8x16xf32>
    %cst_29 = arith.constant 1.000000e+00 : f32
    %67 = vector.broadcast %cst_29 : f32 to vector<8x16xf32>
    %68 = arith.addf %67, %66 : vector<8x16xf32>
    %69 = arith.divf %67, %68 : vector<8x16xf32>
    %70 = arith.mulf %61, %43 : vector<8x16xf32>
    %71 = arith.mulf %55, %63 : vector<8x16xf32>
    %72 = arith.addf %70, %71 : vector<8x16xf32>
    %73 = math.tanh %72 : vector<8x16xf32>
    %74 = arith.mulf %69, %73 : vector<8x16xf32>
    %75 = vector.extract_strided_slice %14 {offsets = [16, 0], sizes = [8, 64], strides = [1, 1]} : vector<64x64xf32> to vector<8x64xf32>
    %76 = arith.truncf %74 : vector<8x16xf32> to vector<8x16xbf16>
    %cst_30 = arith.constant dense<0.000000e+00> : vector<8x64xf32>
    %77 = tpu.matmul %76, %8, %cst_30 {dimension_numbers = #tpu.dot_dimension_numbers<[1], [0], [0], [1], [0, 0, 1, 1], [], []>} : vector<8x16xbf16>, vector<16x64xbf16>, vector<8x64xf32> -> vector<8x64xf32>
    %78 = arith.addf %75, %77 : vector<8x64xf32>
    %79 = vector.extract_strided_slice %78 {offsets = [0, 0], sizes = [8, 16], strides = [1, 1]} : vector<8x64xf32> to vector<8x16xf32>
    %80 = arith.negf %79 : vector<8x16xf32>
    %81 = math.exp %80 : vector<8x16xf32>
    %cst_31 = arith.constant 1.000000e+00 : f32
    %82 = vector.broadcast %cst_31 : f32 to vector<8x16xf32>
    %83 = arith.addf %82, %81 : vector<8x16xf32>
    %84 = arith.divf %82, %83 : vector<8x16xf32>
    %85 = vector.extract_strided_slice %78 {offsets = [0, 16], sizes = [8, 16], strides = [1, 1]} : vector<8x64xf32> to vector<8x16xf32>
    %86 = arith.negf %85 : vector<8x16xf32>
    %87 = math.exp %86 : vector<8x16xf32>
    %cst_32 = arith.constant 1.000000e+00 : f32
    %88 = vector.broadcast %cst_32 : f32 to vector<8x16xf32>
    %89 = arith.addf %88, %87 : vector<8x16xf32>
    %90 = arith.divf %88, %89 : vector<8x16xf32>
    %91 = vector.extract_strided_slice %78 {offsets = [0, 32], sizes = [8, 16], strides = [1, 1]} : vector<8x64xf32> to vector<8x16xf32>
    %92 = math.tanh %91 : vector<8x16xf32>
    %93 = vector.extract_strided_slice %78 {offsets = [0, 48], sizes = [8, 16], strides = [1, 1]} : vector<8x64xf32> to vector<8x16xf32>
    %94 = arith.negf %93 : vector<8x16xf32>
    %95 = math.exp %94 : vector<8x16xf32>
    %cst_33 = arith.constant 1.000000e+00 : f32
    %96 = vector.broadcast %cst_33 : f32 to vector<8x16xf32>
    %97 = arith.addf %96, %95 : vector<8x16xf32>
    %98 = arith.divf %96, %97 : vector<8x16xf32>
    %99 = arith.mulf %90, %72 : vector<8x16xf32>
    %100 = arith.mulf %84, %92 : vector<8x16xf32>
    %101 = arith.addf %99, %100 : vector<8x16xf32>
    %102 = math.tanh %101 : vector<8x16xf32>
    %103 = arith.mulf %98, %102 : vector<8x16xf32>
    %104 = vector.extract_strided_slice %14 {offsets = [24, 0], sizes = [8, 64], strides = [1, 1]} : vector<64x64xf32> to vector<8x64xf32>
    %105 = arith.truncf %103 : vector<8x16xf32> to vector<8x16xbf16>
    %cst_34 = arith.constant dense<0.000000e+00> : vector<8x64xf32>
    %106 = tpu.matmul %105, %8, %cst_34 {dimension_numbers = #tpu.dot_dimension_numbers<[1], [0], [0], [1], [0, 0, 1, 1], [], []>} : vector<8x16xbf16>, vector<16x64xbf16>, vector<8x64xf32> -> vector<8x64xf32>
    %107 = arith.addf %104, %106 : vector<8x64xf32>
    %108 = vector.extract_strided_slice %107 {offsets = [0, 0], sizes = [8, 16], strides = [1, 1]} : vector<8x64xf32> to vector<8x16xf32>
    %109 = arith.negf %108 : vector<8x16xf32>
    %110 = math.exp %109 : vector<8x16xf32>
    %cst_35 = arith.constant 1.000000e+00 : f32
    %111 = vector.broadcast %cst_35 : f32 to vector<8x16xf32>
    %112 = arith.addf %111, %110 : vector<8x16xf32>
    %113 = arith.divf %111, %112 : vector<8x16xf32>
    %114 = vector.extract_strided_slice %107 {offsets = [0, 16], sizes = [8, 16], strides = [1, 1]} : vector<8x64xf32> to vector<8x16xf32>
    %115 = arith.negf %114 : vector<8x16xf32>
    %116 = math.exp %115 : vector<8x16xf32>
    %cst_36 = arith.constant 1.000000e+00 : f32
    %117 = vector.broadcast %cst_36 : f32 to vector<8x16xf32>
    %118 = arith.addf %117, %116 : vector<8x16xf32>
    %119 = arith.divf %117, %118 : vector<8x16xf32>
    %120 = vector.extract_strided_slice %107 {offsets = [0, 32], sizes = [8, 16], strides = [1, 1]} : vector<8x64xf32> to vector<8x16xf32>
    %121 = math.tanh %120 : vector<8x16xf32>
    %122 = vector.extract_strided_slice %107 {offsets = [0, 48], sizes = [8, 16], strides = [1, 1]} : vector<8x64xf32> to vector<8x16xf32>
    %123 = arith.negf %122 : vector<8x16xf32>
    %124 = math.exp %123 : vector<8x16xf32>
    %cst_37 = arith.constant 1.000000e+00 : f32
    %125 = vector.broadcast %cst_37 : f32 to vector<8x16xf32>
    %126 = arith.addf %125, %124 : vector<8x16xf32>
    %127 = arith.divf %125, %126 : vector<8x16xf32>
    %128 = arith.mulf %119, %101 : vector<8x16xf32>
    %129 = arith.mulf %113, %121 : vector<8x16xf32>
    %130 = arith.addf %128, %129 : vector<8x16xf32>
    %131 = math.tanh %130 : vector<8x16xf32>
    %132 = arith.mulf %127, %131 : vector<8x16xf32>
    %133 = vector.extract_strided_slice %14 {offsets = [32, 0], sizes = [8, 64], strides = [1, 1]} : vector<64x64xf32> to vector<8x64xf32>
    %134 = arith.truncf %132 : vector<8x16xf32> to vector<8x16xbf16>
    %cst_38 = arith.constant dense<0.000000e+00> : vector<8x64xf32>
    %135 = tpu.matmul %134, %8, %cst_38 {dimension_numbers = #tpu.dot_dimension_numbers<[1], [0], [0], [1], [0, 0, 1, 1], [], []>} : vector<8x16xbf16>, vector<16x64xbf16>, vector<8x64xf32> -> vector<8x64xf32>
    %136 = arith.addf %133, %135 : vector<8x64xf32>
    %137 = vector.extract_strided_slice %136 {offsets = [0, 0], sizes = [8, 16], strides = [1, 1]} : vector<8x64xf32> to vector<8x16xf32>
    %138 = arith.negf %137 : vector<8x16xf32>
    %139 = math.exp %138 : vector<8x16xf32>
    %cst_39 = arith.constant 1.000000e+00 : f32
    %140 = vector.broadcast %cst_39 : f32 to vector<8x16xf32>
    %141 = arith.addf %140, %139 : vector<8x16xf32>
    %142 = arith.divf %140, %141 : vector<8x16xf32>
    %143 = vector.extract_strided_slice %136 {offsets = [0, 16], sizes = [8, 16], strides = [1, 1]} : vector<8x64xf32> to vector<8x16xf32>
    %144 = arith.negf %143 : vector<8x16xf32>
    %145 = math.exp %144 : vector<8x16xf32>
    %cst_40 = arith.constant 1.000000e+00 : f32
    %146 = vector.broadcast %cst_40 : f32 to vector<8x16xf32>
    %147 = arith.addf %146, %145 : vector<8x16xf32>
    %148 = arith.divf %146, %147 : vector<8x16xf32>
    %149 = vector.extract_strided_slice %136 {offsets = [0, 32], sizes = [8, 16], strides = [1, 1]} : vector<8x64xf32> to vector<8x16xf32>
    %150 = math.tanh %149 : vector<8x16xf32>
    %151 = vector.extract_strided_slice %136 {offsets = [0, 48], sizes = [8, 16], strides = [1, 1]} : vector<8x64xf32> to vector<8x16xf32>
    %152 = arith.negf %151 : vector<8x16xf32>
    %153 = math.exp %152 : vector<8x16xf32>
    %cst_41 = arith.constant 1.000000e+00 : f32
    %154 = vector.broadcast %cst_41 : f32 to vector<8x16xf32>
    %155 = arith.addf %154, %153 : vector<8x16xf32>
    %156 = arith.divf %154, %155 : vector<8x16xf32>
    %157 = arith.mulf %148, %130 : vector<8x16xf32>
    %158 = arith.mulf %142, %150 : vector<8x16xf32>
    %159 = arith.addf %157, %158 : vector<8x16xf32>
    %160 = math.tanh %159 : vector<8x16xf32>
    %161 = arith.mulf %156, %160 : vector<8x16xf32>
    %162 = vector.extract_strided_slice %14 {offsets = [40, 0], sizes = [8, 64], strides = [1, 1]} : vector<64x64xf32> to vector<8x64xf32>
    %163 = arith.truncf %161 : vector<8x16xf32> to vector<8x16xbf16>
    %cst_42 = arith.constant dense<0.000000e+00> : vector<8x64xf32>
    %164 = tpu.matmul %163, %8, %cst_42 {dimension_numbers = #tpu.dot_dimension_numbers<[1], [0], [0], [1], [0, 0, 1, 1], [], []>} : vector<8x16xbf16>, vector<16x64xbf16>, vector<8x64xf32> -> vector<8x64xf32>
    %165 = arith.addf %162, %164 : vector<8x64xf32>
    %166 = vector.extract_strided_slice %165 {offsets = [0, 0], sizes = [8, 16], strides = [1, 1]} : vector<8x64xf32> to vector<8x16xf32>
    %167 = arith.negf %166 : vector<8x16xf32>
    %168 = math.exp %167 : vector<8x16xf32>
    %cst_43 = arith.constant 1.000000e+00 : f32
    %169 = vector.broadcast %cst_43 : f32 to vector<8x16xf32>
    %170 = arith.addf %169, %168 : vector<8x16xf32>
    %171 = arith.divf %169, %170 : vector<8x16xf32>
    %172 = vector.extract_strided_slice %165 {offsets = [0, 16], sizes = [8, 16], strides = [1, 1]} : vector<8x64xf32> to vector<8x16xf32>
    %173 = arith.negf %172 : vector<8x16xf32>
    %174 = math.exp %173 : vector<8x16xf32>
    %cst_44 = arith.constant 1.000000e+00 : f32
    %175 = vector.broadcast %cst_44 : f32 to vector<8x16xf32>
    %176 = arith.addf %175, %174 : vector<8x16xf32>
    %177 = arith.divf %175, %176 : vector<8x16xf32>
    %178 = vector.extract_strided_slice %165 {offsets = [0, 32], sizes = [8, 16], strides = [1, 1]} : vector<8x64xf32> to vector<8x16xf32>
    %179 = math.tanh %178 : vector<8x16xf32>
    %180 = vector.extract_strided_slice %165 {offsets = [0, 48], sizes = [8, 16], strides = [1, 1]} : vector<8x64xf32> to vector<8x16xf32>
    %181 = arith.negf %180 : vector<8x16xf32>
    %182 = math.exp %181 : vector<8x16xf32>
    %cst_45 = arith.constant 1.000000e+00 : f32
    %183 = vector.broadcast %cst_45 : f32 to vector<8x16xf32>
    %184 = arith.addf %183, %182 : vector<8x16xf32>
    %185 = arith.divf %183, %184 : vector<8x16xf32>
    %186 = arith.mulf %177, %159 : vector<8x16xf32>
    %187 = arith.mulf %171, %179 : vector<8x16xf32>
    %188 = arith.addf %186, %187 : vector<8x16xf32>
    %189 = math.tanh %188 : vector<8x16xf32>
    %190 = arith.mulf %185, %189 : vector<8x16xf32>
    %191 = vector.extract_strided_slice %14 {offsets = [48, 0], sizes = [8, 64], strides = [1, 1]} : vector<64x64xf32> to vector<8x64xf32>
    %192 = arith.truncf %190 : vector<8x16xf32> to vector<8x16xbf16>
    %cst_46 = arith.constant dense<0.000000e+00> : vector<8x64xf32>
    %193 = tpu.matmul %192, %8, %cst_46 {dimension_numbers = #tpu.dot_dimension_numbers<[1], [0], [0], [1], [0, 0, 1, 1], [], []>} : vector<8x16xbf16>, vector<16x64xbf16>, vector<8x64xf32> -> vector<8x64xf32>
    %194 = arith.addf %191, %193 : vector<8x64xf32>
    %195 = vector.extract_strided_slice %194 {offsets = [0, 0], sizes = [8, 16], strides = [1, 1]} : vector<8x64xf32> to vector<8x16xf32>
    %196 = arith.negf %195 : vector<8x16xf32>
    %197 = math.exp %196 : vector<8x16xf32>
    %cst_47 = arith.constant 1.000000e+00 : f32
    %198 = vector.broadcast %cst_47 : f32 to vector<8x16xf32>
    %199 = arith.addf %198, %197 : vector<8x16xf32>
    %200 = arith.divf %198, %199 : vector<8x16xf32>
    %201 = vector.extract_strided_slice %194 {offsets = [0, 16], sizes = [8, 16], strides = [1, 1]} : vector<8x64xf32> to vector<8x16xf32>
    %202 = arith.negf %201 : vector<8x16xf32>
    %203 = math.exp %202 : vector<8x16xf32>
    %cst_48 = arith.constant 1.000000e+00 : f32
    %204 = vector.broadcast %cst_48 : f32 to vector<8x16xf32>
    %205 = arith.addf %204, %203 : vector<8x16xf32>
    %206 = arith.divf %204, %205 : vector<8x16xf32>
    %207 = vector.extract_strided_slice %194 {offsets = [0, 32], sizes = [8, 16], strides = [1, 1]} : vector<8x64xf32> to vector<8x16xf32>
    %208 = math.tanh %207 : vector<8x16xf32>
    %209 = vector.extract_strided_slice %194 {offsets = [0, 48], sizes = [8, 16], strides = [1, 1]} : vector<8x64xf32> to vector<8x16xf32>
    %210 = arith.negf %209 : vector<8x16xf32>
    %211 = math.exp %210 : vector<8x16xf32>
    %cst_49 = arith.constant 1.000000e+00 : f32
    %212 = vector.broadcast %cst_49 : f32 to vector<8x16xf32>
    %213 = arith.addf %212, %211 : vector<8x16xf32>
    %214 = arith.divf %212, %213 : vector<8x16xf32>
    %215 = arith.mulf %206, %188 : vector<8x16xf32>
    %216 = arith.mulf %200, %208 : vector<8x16xf32>
    %217 = arith.addf %215, %216 : vector<8x16xf32>
    %218 = math.tanh %217 : vector<8x16xf32>
    %219 = arith.mulf %214, %218 : vector<8x16xf32>
    %220 = vector.extract_strided_slice %14 {offsets = [56, 0], sizes = [8, 64], strides = [1, 1]} : vector<64x64xf32> to vector<8x64xf32>
    %221 = arith.truncf %219 : vector<8x16xf32> to vector<8x16xbf16>
    %cst_50 = arith.constant dense<0.000000e+00> : vector<8x64xf32>
    %222 = tpu.matmul %221, %8, %cst_50 {dimension_numbers = #tpu.dot_dimension_numbers<[1], [0], [0], [1], [0, 0, 1, 1], [], []>} : vector<8x16xbf16>, vector<16x64xbf16>, vector<8x64xf32> -> vector<8x64xf32>
    %223 = arith.addf %220, %222 : vector<8x64xf32>
    %224 = vector.extract_strided_slice %223 {offsets = [0, 0], sizes = [8, 16], strides = [1, 1]} : vector<8x64xf32> to vector<8x16xf32>
    %225 = arith.negf %224 : vector<8x16xf32>
    %226 = math.exp %225 : vector<8x16xf32>
    %cst_51 = arith.constant 1.000000e+00 : f32
    %227 = vector.broadcast %cst_51 : f32 to vector<8x16xf32>
    %228 = arith.addf %227, %226 : vector<8x16xf32>
    %229 = arith.divf %227, %228 : vector<8x16xf32>
    %230 = vector.extract_strided_slice %223 {offsets = [0, 16], sizes = [8, 16], strides = [1, 1]} : vector<8x64xf32> to vector<8x16xf32>
    %231 = arith.negf %230 : vector<8x16xf32>
    %232 = math.exp %231 : vector<8x16xf32>
    %cst_52 = arith.constant 1.000000e+00 : f32
    %233 = vector.broadcast %cst_52 : f32 to vector<8x16xf32>
    %234 = arith.addf %233, %232 : vector<8x16xf32>
    %235 = arith.divf %233, %234 : vector<8x16xf32>
    %236 = vector.extract_strided_slice %223 {offsets = [0, 32], sizes = [8, 16], strides = [1, 1]} : vector<8x64xf32> to vector<8x16xf32>
    %237 = math.tanh %236 : vector<8x16xf32>
    %238 = vector.extract_strided_slice %223 {offsets = [0, 48], sizes = [8, 16], strides = [1, 1]} : vector<8x64xf32> to vector<8x16xf32>
    %239 = arith.negf %238 : vector<8x16xf32>
    %240 = math.exp %239 : vector<8x16xf32>
    %cst_53 = arith.constant 1.000000e+00 : f32
    %241 = vector.broadcast %cst_53 : f32 to vector<8x16xf32>
    %242 = arith.addf %241, %240 : vector<8x16xf32>
    %243 = arith.divf %241, %242 : vector<8x16xf32>
    %244 = arith.mulf %235, %217 : vector<8x16xf32>
    %245 = arith.mulf %229, %237 : vector<8x16xf32>
    %246 = arith.addf %244, %245 : vector<8x16xf32>
    %247 = math.tanh %246 : vector<8x16xf32>
    %248 = arith.mulf %243, %247 : vector<8x16xf32>
    %249 = vector.shape_cast %45 : vector<8x16xf32> to vector<1x8x16xf32>
    %250 = vector.shape_cast %74 : vector<8x16xf32> to vector<1x8x16xf32>
    %251 = vector.shape_cast %103 : vector<8x16xf32> to vector<1x8x16xf32>
    %252 = vector.shape_cast %132 : vector<8x16xf32> to vector<1x8x16xf32>
    %253 = vector.shape_cast %161 : vector<8x16xf32> to vector<1x8x16xf32>
    %254 = vector.shape_cast %190 : vector<8x16xf32> to vector<1x8x16xf32>
    %255 = vector.shape_cast %219 : vector<8x16xf32> to vector<1x8x16xf32>
    %256 = vector.shape_cast %248 : vector<8x16xf32> to vector<1x8x16xf32>
    %257 = tpu.concatenate %249, %250, %251, %252, %253, %254, %255, %256 in 0 : vector<1x8x16xf32>, vector<1x8x16xf32>, vector<1x8x16xf32>, vector<1x8x16xf32>, vector<1x8x16xf32>, vector<1x8x16xf32>, vector<1x8x16xf32>, vector<1x8x16xf32> -> vector<8x8x16xf32>
    %c32_54 = arith.constant 32 : index
    %c0_55 = arith.constant 0 : index
    %258 = vector.load %arg1[%c32_54, %c0_55] : memref<224x128xbf16, #tpu.memory_space<vmem>>, vector<16x32xbf16>
    %c8_56 = arith.constant 8 : index
    %c0_57 = arith.constant 0 : index
    %259 = vector.load %arg2[%c8_56, %c0_57] : memref<64x128xf32, #tpu.memory_space<vmem>>, vector<1x32xf32>
    %260 = vector.shape_cast %257 : vector<8x8x16xf32> to vector<64x16xf32>
    %261 = arith.truncf %260 : vector<64x16xf32> to vector<64x16xbf16>
    %cst_58 = arith.constant dense<0.000000e+00> : vector<64x32xf32>
    %262 = tpu.matmul %261, %258, %cst_58 {dimension_numbers = #tpu.dot_dimension_numbers<[1], [0], [0], [1], [0, 0, 1, 1], [], []>} : vector<64x16xbf16>, vector<16x32xbf16>, vector<64x32xf32> -> vector<64x32xf32>
    %263 = vector.broadcast %259 : vector<1x32xf32> to vector<64x32xf32>
    %264 = arith.addf %262, %263 : vector<64x32xf32>
    %265 = vector.shape_cast %264 : vector<64x32xf32> to vector<8x8x32xf32>
    %c48_59 = arith.constant 48 : index
    %c0_60 = arith.constant 0 : index
    %266 = vector.load %arg1[%c48_59, %c0_60] : memref<224x128xbf16, #tpu.memory_space<vmem>>, vector<32x64xbf16>
    %c80 = arith.constant 80 : index
    %c0_61 = arith.constant 0 : index
    %267 = vector.load %arg1[%c80, %c0_61] : memref<224x128xbf16, #tpu.memory_space<vmem>>, vector<16x64xbf16>
    %c16_62 = arith.constant 16 : index
    %c0_63 = arith.constant 0 : index
    %268 = vector.load %arg2[%c16_62, %c0_63] : memref<64x128xf32, #tpu.memory_space<vmem>>, vector<1x64xf32>
    %269 = vector.shape_cast %265 : vector<8x8x32xf32> to vector<64x32xf32>
    %270 = arith.truncf %269 : vector<64x32xf32> to vector<64x32xbf16>
    %cst_64 = arith.constant dense<0.000000e+00> : vector<64x64xf32>
    %271 = tpu.matmul %270, %266, %cst_64 {dimension_numbers = #tpu.dot_dimension_numbers<[1], [0], [0], [1], [0, 0, 1, 1], [], []>} : vector<64x32xbf16>, vector<32x64xbf16>, vector<64x64xf32> -> vector<64x64xf32>
    %272 = vector.broadcast %268 : vector<1x64xf32> to vector<64x64xf32>
    %273 = arith.addf %271, %272 : vector<64x64xf32>
    %cst_65 = arith.constant 0.000000e+00 : f32
    %274 = vector.broadcast %cst_65 : f32 to vector<8x16xf32>
    %cst_66 = arith.constant 0.000000e+00 : f32
    %275 = vector.broadcast %cst_66 : f32 to vector<8x16xf32>
    %276 = vector.extract_strided_slice %273 {offsets = [0, 0], sizes = [8, 64], strides = [1, 1]} : vector<64x64xf32> to vector<8x64xf32>
    %277 = arith.truncf %274 : vector<8x16xf32> to vector<8x16xbf16>
    %cst_67 = arith.constant dense<0.000000e+00> : vector<8x64xf32>
    %278 = tpu.matmul %277, %267, %cst_67 {dimension_numbers = #tpu.dot_dimension_numbers<[1], [0], [0], [1], [0, 0, 1, 1], [], []>} : vector<8x16xbf16>, vector<16x64xbf16>, vector<8x64xf32> -> vector<8x64xf32>
    %279 = arith.addf %276, %278 : vector<8x64xf32>
    %280 = vector.extract_strided_slice %279 {offsets = [0, 0], sizes = [8, 16], strides = [1, 1]} : vector<8x64xf32> to vector<8x16xf32>
    %281 = arith.negf %280 : vector<8x16xf32>
    %282 = math.exp %281 : vector<8x16xf32>
    %cst_68 = arith.constant 1.000000e+00 : f32
    %283 = vector.broadcast %cst_68 : f32 to vector<8x16xf32>
    %284 = arith.addf %283, %282 : vector<8x16xf32>
    %285 = arith.divf %283, %284 : vector<8x16xf32>
    %286 = vector.extract_strided_slice %279 {offsets = [0, 16], sizes = [8, 16], strides = [1, 1]} : vector<8x64xf32> to vector<8x16xf32>
    %287 = arith.negf %286 : vector<8x16xf32>
    %288 = math.exp %287 : vector<8x16xf32>
    %cst_69 = arith.constant 1.000000e+00 : f32
    %289 = vector.broadcast %cst_69 : f32 to vector<8x16xf32>
    %290 = arith.addf %289, %288 : vector<8x16xf32>
    %291 = arith.divf %289, %290 : vector<8x16xf32>
    %292 = vector.extract_strided_slice %279 {offsets = [0, 32], sizes = [8, 16], strides = [1, 1]} : vector<8x64xf32> to vector<8x16xf32>
    %293 = math.tanh %292 : vector<8x16xf32>
    %294 = vector.extract_strided_slice %279 {offsets = [0, 48], sizes = [8, 16], strides = [1, 1]} : vector<8x64xf32> to vector<8x16xf32>
    %295 = arith.negf %294 : vector<8x16xf32>
    %296 = math.exp %295 : vector<8x16xf32>
    %cst_70 = arith.constant 1.000000e+00 : f32
    %297 = vector.broadcast %cst_70 : f32 to vector<8x16xf32>
    %298 = arith.addf %297, %296 : vector<8x16xf32>
    %299 = arith.divf %297, %298 : vector<8x16xf32>
    %300 = arith.mulf %291, %275 : vector<8x16xf32>
    %301 = arith.mulf %285, %293 : vector<8x16xf32>
    %302 = arith.addf %300, %301 : vector<8x16xf32>
    %303 = math.tanh %302 : vector<8x16xf32>
    %304 = arith.mulf %299, %303 : vector<8x16xf32>
    %305 = vector.extract_strided_slice %273 {offsets = [8, 0], sizes = [8, 64], strides = [1, 1]} : vector<64x64xf32> to vector<8x64xf32>
    %306 = arith.truncf %304 : vector<8x16xf32> to vector<8x16xbf16>
    %cst_71 = arith.constant dense<0.000000e+00> : vector<8x64xf32>
    %307 = tpu.matmul %306, %267, %cst_71 {dimension_numbers = #tpu.dot_dimension_numbers<[1], [0], [0], [1], [0, 0, 1, 1], [], []>} : vector<8x16xbf16>, vector<16x64xbf16>, vector<8x64xf32> -> vector<8x64xf32>
    %308 = arith.addf %305, %307 : vector<8x64xf32>
    %309 = vector.extract_strided_slice %308 {offsets = [0, 0], sizes = [8, 16], strides = [1, 1]} : vector<8x64xf32> to vector<8x16xf32>
    %310 = arith.negf %309 : vector<8x16xf32>
    %311 = math.exp %310 : vector<8x16xf32>
    %cst_72 = arith.constant 1.000000e+00 : f32
    %312 = vector.broadcast %cst_72 : f32 to vector<8x16xf32>
    %313 = arith.addf %312, %311 : vector<8x16xf32>
    %314 = arith.divf %312, %313 : vector<8x16xf32>
    %315 = vector.extract_strided_slice %308 {offsets = [0, 16], sizes = [8, 16], strides = [1, 1]} : vector<8x64xf32> to vector<8x16xf32>
    %316 = arith.negf %315 : vector<8x16xf32>
    %317 = math.exp %316 : vector<8x16xf32>
    %cst_73 = arith.constant 1.000000e+00 : f32
    %318 = vector.broadcast %cst_73 : f32 to vector<8x16xf32>
    %319 = arith.addf %318, %317 : vector<8x16xf32>
    %320 = arith.divf %318, %319 : vector<8x16xf32>
    %321 = vector.extract_strided_slice %308 {offsets = [0, 32], sizes = [8, 16], strides = [1, 1]} : vector<8x64xf32> to vector<8x16xf32>
    %322 = math.tanh %321 : vector<8x16xf32>
    %323 = vector.extract_strided_slice %308 {offsets = [0, 48], sizes = [8, 16], strides = [1, 1]} : vector<8x64xf32> to vector<8x16xf32>
    %324 = arith.negf %323 : vector<8x16xf32>
    %325 = math.exp %324 : vector<8x16xf32>
    %cst_74 = arith.constant 1.000000e+00 : f32
    %326 = vector.broadcast %cst_74 : f32 to vector<8x16xf32>
    %327 = arith.addf %326, %325 : vector<8x16xf32>
    %328 = arith.divf %326, %327 : vector<8x16xf32>
    %329 = arith.mulf %320, %302 : vector<8x16xf32>
    %330 = arith.mulf %314, %322 : vector<8x16xf32>
    %331 = arith.addf %329, %330 : vector<8x16xf32>
    %332 = math.tanh %331 : vector<8x16xf32>
    %333 = arith.mulf %328, %332 : vector<8x16xf32>
    %334 = vector.extract_strided_slice %273 {offsets = [16, 0], sizes = [8, 64], strides = [1, 1]} : vector<64x64xf32> to vector<8x64xf32>
    %335 = arith.truncf %333 : vector<8x16xf32> to vector<8x16xbf16>
    %cst_75 = arith.constant dense<0.000000e+00> : vector<8x64xf32>
    %336 = tpu.matmul %335, %267, %cst_75 {dimension_numbers = #tpu.dot_dimension_numbers<[1], [0], [0], [1], [0, 0, 1, 1], [], []>} : vector<8x16xbf16>, vector<16x64xbf16>, vector<8x64xf32> -> vector<8x64xf32>
    %337 = arith.addf %334, %336 : vector<8x64xf32>
    %338 = vector.extract_strided_slice %337 {offsets = [0, 0], sizes = [8, 16], strides = [1, 1]} : vector<8x64xf32> to vector<8x16xf32>
    %339 = arith.negf %338 : vector<8x16xf32>
    %340 = math.exp %339 : vector<8x16xf32>
    %cst_76 = arith.constant 1.000000e+00 : f32
    %341 = vector.broadcast %cst_76 : f32 to vector<8x16xf32>
    %342 = arith.addf %341, %340 : vector<8x16xf32>
    %343 = arith.divf %341, %342 : vector<8x16xf32>
    %344 = vector.extract_strided_slice %337 {offsets = [0, 16], sizes = [8, 16], strides = [1, 1]} : vector<8x64xf32> to vector<8x16xf32>
    %345 = arith.negf %344 : vector<8x16xf32>
    %346 = math.exp %345 : vector<8x16xf32>
    %cst_77 = arith.constant 1.000000e+00 : f32
    %347 = vector.broadcast %cst_77 : f32 to vector<8x16xf32>
    %348 = arith.addf %347, %346 : vector<8x16xf32>
    %349 = arith.divf %347, %348 : vector<8x16xf32>
    %350 = vector.extract_strided_slice %337 {offsets = [0, 32], sizes = [8, 16], strides = [1, 1]} : vector<8x64xf32> to vector<8x16xf32>
    %351 = math.tanh %350 : vector<8x16xf32>
    %352 = vector.extract_strided_slice %337 {offsets = [0, 48], sizes = [8, 16], strides = [1, 1]} : vector<8x64xf32> to vector<8x16xf32>
    %353 = arith.negf %352 : vector<8x16xf32>
    %354 = math.exp %353 : vector<8x16xf32>
    %cst_78 = arith.constant 1.000000e+00 : f32
    %355 = vector.broadcast %cst_78 : f32 to vector<8x16xf32>
    %356 = arith.addf %355, %354 : vector<8x16xf32>
    %357 = arith.divf %355, %356 : vector<8x16xf32>
    %358 = arith.mulf %349, %331 : vector<8x16xf32>
    %359 = arith.mulf %343, %351 : vector<8x16xf32>
    %360 = arith.addf %358, %359 : vector<8x16xf32>
    %361 = math.tanh %360 : vector<8x16xf32>
    %362 = arith.mulf %357, %361 : vector<8x16xf32>
    %363 = vector.extract_strided_slice %273 {offsets = [24, 0], sizes = [8, 64], strides = [1, 1]} : vector<64x64xf32> to vector<8x64xf32>
    %364 = arith.truncf %362 : vector<8x16xf32> to vector<8x16xbf16>
    %cst_79 = arith.constant dense<0.000000e+00> : vector<8x64xf32>
    %365 = tpu.matmul %364, %267, %cst_79 {dimension_numbers = #tpu.dot_dimension_numbers<[1], [0], [0], [1], [0, 0, 1, 1], [], []>} : vector<8x16xbf16>, vector<16x64xbf16>, vector<8x64xf32> -> vector<8x64xf32>
    %366 = arith.addf %363, %365 : vector<8x64xf32>
    %367 = vector.extract_strided_slice %366 {offsets = [0, 0], sizes = [8, 16], strides = [1, 1]} : vector<8x64xf32> to vector<8x16xf32>
    %368 = arith.negf %367 : vector<8x16xf32>
    %369 = math.exp %368 : vector<8x16xf32>
    %cst_80 = arith.constant 1.000000e+00 : f32
    %370 = vector.broadcast %cst_80 : f32 to vector<8x16xf32>
    %371 = arith.addf %370, %369 : vector<8x16xf32>
    %372 = arith.divf %370, %371 : vector<8x16xf32>
    %373 = vector.extract_strided_slice %366 {offsets = [0, 16], sizes = [8, 16], strides = [1, 1]} : vector<8x64xf32> to vector<8x16xf32>
    %374 = arith.negf %373 : vector<8x16xf32>
    %375 = math.exp %374 : vector<8x16xf32>
    %cst_81 = arith.constant 1.000000e+00 : f32
    %376 = vector.broadcast %cst_81 : f32 to vector<8x16xf32>
    %377 = arith.addf %376, %375 : vector<8x16xf32>
    %378 = arith.divf %376, %377 : vector<8x16xf32>
    %379 = vector.extract_strided_slice %366 {offsets = [0, 32], sizes = [8, 16], strides = [1, 1]} : vector<8x64xf32> to vector<8x16xf32>
    %380 = math.tanh %379 : vector<8x16xf32>
    %381 = vector.extract_strided_slice %366 {offsets = [0, 48], sizes = [8, 16], strides = [1, 1]} : vector<8x64xf32> to vector<8x16xf32>
    %382 = arith.negf %381 : vector<8x16xf32>
    %383 = math.exp %382 : vector<8x16xf32>
    %cst_82 = arith.constant 1.000000e+00 : f32
    %384 = vector.broadcast %cst_82 : f32 to vector<8x16xf32>
    %385 = arith.addf %384, %383 : vector<8x16xf32>
    %386 = arith.divf %384, %385 : vector<8x16xf32>
    %387 = arith.mulf %378, %360 : vector<8x16xf32>
    %388 = arith.mulf %372, %380 : vector<8x16xf32>
    %389 = arith.addf %387, %388 : vector<8x16xf32>
    %390 = math.tanh %389 : vector<8x16xf32>
    %391 = arith.mulf %386, %390 : vector<8x16xf32>
    %392 = vector.extract_strided_slice %273 {offsets = [32, 0], sizes = [8, 64], strides = [1, 1]} : vector<64x64xf32> to vector<8x64xf32>
    %393 = arith.truncf %391 : vector<8x16xf32> to vector<8x16xbf16>
    %cst_83 = arith.constant dense<0.000000e+00> : vector<8x64xf32>
    %394 = tpu.matmul %393, %267, %cst_83 {dimension_numbers = #tpu.dot_dimension_numbers<[1], [0], [0], [1], [0, 0, 1, 1], [], []>} : vector<8x16xbf16>, vector<16x64xbf16>, vector<8x64xf32> -> vector<8x64xf32>
    %395 = arith.addf %392, %394 : vector<8x64xf32>
    %396 = vector.extract_strided_slice %395 {offsets = [0, 0], sizes = [8, 16], strides = [1, 1]} : vector<8x64xf32> to vector<8x16xf32>
    %397 = arith.negf %396 : vector<8x16xf32>
    %398 = math.exp %397 : vector<8x16xf32>
    %cst_84 = arith.constant 1.000000e+00 : f32
    %399 = vector.broadcast %cst_84 : f32 to vector<8x16xf32>
    %400 = arith.addf %399, %398 : vector<8x16xf32>
    %401 = arith.divf %399, %400 : vector<8x16xf32>
    %402 = vector.extract_strided_slice %395 {offsets = [0, 16], sizes = [8, 16], strides = [1, 1]} : vector<8x64xf32> to vector<8x16xf32>
    %403 = arith.negf %402 : vector<8x16xf32>
    %404 = math.exp %403 : vector<8x16xf32>
    %cst_85 = arith.constant 1.000000e+00 : f32
    %405 = vector.broadcast %cst_85 : f32 to vector<8x16xf32>
    %406 = arith.addf %405, %404 : vector<8x16xf32>
    %407 = arith.divf %405, %406 : vector<8x16xf32>
    %408 = vector.extract_strided_slice %395 {offsets = [0, 32], sizes = [8, 16], strides = [1, 1]} : vector<8x64xf32> to vector<8x16xf32>
    %409 = math.tanh %408 : vector<8x16xf32>
    %410 = vector.extract_strided_slice %395 {offsets = [0, 48], sizes = [8, 16], strides = [1, 1]} : vector<8x64xf32> to vector<8x16xf32>
    %411 = arith.negf %410 : vector<8x16xf32>
    %412 = math.exp %411 : vector<8x16xf32>
    %cst_86 = arith.constant 1.000000e+00 : f32
    %413 = vector.broadcast %cst_86 : f32 to vector<8x16xf32>
    %414 = arith.addf %413, %412 : vector<8x16xf32>
    %415 = arith.divf %413, %414 : vector<8x16xf32>
    %416 = arith.mulf %407, %389 : vector<8x16xf32>
    %417 = arith.mulf %401, %409 : vector<8x16xf32>
    %418 = arith.addf %416, %417 : vector<8x16xf32>
    %419 = math.tanh %418 : vector<8x16xf32>
    %420 = arith.mulf %415, %419 : vector<8x16xf32>
    %421 = vector.extract_strided_slice %273 {offsets = [40, 0], sizes = [8, 64], strides = [1, 1]} : vector<64x64xf32> to vector<8x64xf32>
    %422 = arith.truncf %420 : vector<8x16xf32> to vector<8x16xbf16>
    %cst_87 = arith.constant dense<0.000000e+00> : vector<8x64xf32>
    %423 = tpu.matmul %422, %267, %cst_87 {dimension_numbers = #tpu.dot_dimension_numbers<[1], [0], [0], [1], [0, 0, 1, 1], [], []>} : vector<8x16xbf16>, vector<16x64xbf16>, vector<8x64xf32> -> vector<8x64xf32>
    %424 = arith.addf %421, %423 : vector<8x64xf32>
    %425 = vector.extract_strided_slice %424 {offsets = [0, 0], sizes = [8, 16], strides = [1, 1]} : vector<8x64xf32> to vector<8x16xf32>
    %426 = arith.negf %425 : vector<8x16xf32>
    %427 = math.exp %426 : vector<8x16xf32>
    %cst_88 = arith.constant 1.000000e+00 : f32
    %428 = vector.broadcast %cst_88 : f32 to vector<8x16xf32>
    %429 = arith.addf %428, %427 : vector<8x16xf32>
    %430 = arith.divf %428, %429 : vector<8x16xf32>
    %431 = vector.extract_strided_slice %424 {offsets = [0, 16], sizes = [8, 16], strides = [1, 1]} : vector<8x64xf32> to vector<8x16xf32>
    %432 = arith.negf %431 : vector<8x16xf32>
    %433 = math.exp %432 : vector<8x16xf32>
    %cst_89 = arith.constant 1.000000e+00 : f32
    %434 = vector.broadcast %cst_89 : f32 to vector<8x16xf32>
    %435 = arith.addf %434, %433 : vector<8x16xf32>
    %436 = arith.divf %434, %435 : vector<8x16xf32>
    %437 = vector.extract_strided_slice %424 {offsets = [0, 32], sizes = [8, 16], strides = [1, 1]} : vector<8x64xf32> to vector<8x16xf32>
    %438 = math.tanh %437 : vector<8x16xf32>
    %439 = vector.extract_strided_slice %424 {offsets = [0, 48], sizes = [8, 16], strides = [1, 1]} : vector<8x64xf32> to vector<8x16xf32>
    %440 = arith.negf %439 : vector<8x16xf32>
    %441 = math.exp %440 : vector<8x16xf32>
    %cst_90 = arith.constant 1.000000e+00 : f32
    %442 = vector.broadcast %cst_90 : f32 to vector<8x16xf32>
    %443 = arith.addf %442, %441 : vector<8x16xf32>
    %444 = arith.divf %442, %443 : vector<8x16xf32>
    %445 = arith.mulf %436, %418 : vector<8x16xf32>
    %446 = arith.mulf %430, %438 : vector<8x16xf32>
    %447 = arith.addf %445, %446 : vector<8x16xf32>
    %448 = math.tanh %447 : vector<8x16xf32>
    %449 = arith.mulf %444, %448 : vector<8x16xf32>
    %450 = vector.extract_strided_slice %273 {offsets = [48, 0], sizes = [8, 64], strides = [1, 1]} : vector<64x64xf32> to vector<8x64xf32>
    %451 = arith.truncf %449 : vector<8x16xf32> to vector<8x16xbf16>
    %cst_91 = arith.constant dense<0.000000e+00> : vector<8x64xf32>
    %452 = tpu.matmul %451, %267, %cst_91 {dimension_numbers = #tpu.dot_dimension_numbers<[1], [0], [0], [1], [0, 0, 1, 1], [], []>} : vector<8x16xbf16>, vector<16x64xbf16>, vector<8x64xf32> -> vector<8x64xf32>
    %453 = arith.addf %450, %452 : vector<8x64xf32>
    %454 = vector.extract_strided_slice %453 {offsets = [0, 0], sizes = [8, 16], strides = [1, 1]} : vector<8x64xf32> to vector<8x16xf32>
    %455 = arith.negf %454 : vector<8x16xf32>
    %456 = math.exp %455 : vector<8x16xf32>
    %cst_92 = arith.constant 1.000000e+00 : f32
    %457 = vector.broadcast %cst_92 : f32 to vector<8x16xf32>
    %458 = arith.addf %457, %456 : vector<8x16xf32>
    %459 = arith.divf %457, %458 : vector<8x16xf32>
    %460 = vector.extract_strided_slice %453 {offsets = [0, 16], sizes = [8, 16], strides = [1, 1]} : vector<8x64xf32> to vector<8x16xf32>
    %461 = arith.negf %460 : vector<8x16xf32>
    %462 = math.exp %461 : vector<8x16xf32>
    %cst_93 = arith.constant 1.000000e+00 : f32
    %463 = vector.broadcast %cst_93 : f32 to vector<8x16xf32>
    %464 = arith.addf %463, %462 : vector<8x16xf32>
    %465 = arith.divf %463, %464 : vector<8x16xf32>
    %466 = vector.extract_strided_slice %453 {offsets = [0, 32], sizes = [8, 16], strides = [1, 1]} : vector<8x64xf32> to vector<8x16xf32>
    %467 = math.tanh %466 : vector<8x16xf32>
    %468 = vector.extract_strided_slice %453 {offsets = [0, 48], sizes = [8, 16], strides = [1, 1]} : vector<8x64xf32> to vector<8x16xf32>
    %469 = arith.negf %468 : vector<8x16xf32>
    %470 = math.exp %469 : vector<8x16xf32>
    %cst_94 = arith.constant 1.000000e+00 : f32
    %471 = vector.broadcast %cst_94 : f32 to vector<8x16xf32>
    %472 = arith.addf %471, %470 : vector<8x16xf32>
    %473 = arith.divf %471, %472 : vector<8x16xf32>
    %474 = arith.mulf %465, %447 : vector<8x16xf32>
    %475 = arith.mulf %459, %467 : vector<8x16xf32>
    %476 = arith.addf %474, %475 : vector<8x16xf32>
    %477 = math.tanh %476 : vector<8x16xf32>
    %478 = arith.mulf %473, %477 : vector<8x16xf32>
    %479 = vector.extract_strided_slice %273 {offsets = [56, 0], sizes = [8, 64], strides = [1, 1]} : vector<64x64xf32> to vector<8x64xf32>
    %480 = arith.truncf %478 : vector<8x16xf32> to vector<8x16xbf16>
    %cst_95 = arith.constant dense<0.000000e+00> : vector<8x64xf32>
    %481 = tpu.matmul %480, %267, %cst_95 {dimension_numbers = #tpu.dot_dimension_numbers<[1], [0], [0], [1], [0, 0, 1, 1], [], []>} : vector<8x16xbf16>, vector<16x64xbf16>, vector<8x64xf32> -> vector<8x64xf32>
    %482 = arith.addf %479, %481 : vector<8x64xf32>
    %483 = vector.extract_strided_slice %482 {offsets = [0, 0], sizes = [8, 16], strides = [1, 1]} : vector<8x64xf32> to vector<8x16xf32>
    %484 = arith.negf %483 : vector<8x16xf32>
    %485 = math.exp %484 : vector<8x16xf32>
    %cst_96 = arith.constant 1.000000e+00 : f32
    %486 = vector.broadcast %cst_96 : f32 to vector<8x16xf32>
    %487 = arith.addf %486, %485 : vector<8x16xf32>
    %488 = arith.divf %486, %487 : vector<8x16xf32>
    %489 = vector.extract_strided_slice %482 {offsets = [0, 16], sizes = [8, 16], strides = [1, 1]} : vector<8x64xf32> to vector<8x16xf32>
    %490 = arith.negf %489 : vector<8x16xf32>
    %491 = math.exp %490 : vector<8x16xf32>
    %cst_97 = arith.constant 1.000000e+00 : f32
    %492 = vector.broadcast %cst_97 : f32 to vector<8x16xf32>
    %493 = arith.addf %492, %491 : vector<8x16xf32>
    %494 = arith.divf %492, %493 : vector<8x16xf32>
    %495 = vector.extract_strided_slice %482 {offsets = [0, 32], sizes = [8, 16], strides = [1, 1]} : vector<8x64xf32> to vector<8x16xf32>
    %496 = math.tanh %495 : vector<8x16xf32>
    %497 = vector.extract_strided_slice %482 {offsets = [0, 48], sizes = [8, 16], strides = [1, 1]} : vector<8x64xf32> to vector<8x16xf32>
    %498 = arith.negf %497 : vector<8x16xf32>
    %499 = math.exp %498 : vector<8x16xf32>
    %cst_98 = arith.constant 1.000000e+00 : f32
    %500 = vector.broadcast %cst_98 : f32 to vector<8x16xf32>
    %501 = arith.addf %500, %499 : vector<8x16xf32>
    %502 = arith.divf %500, %501 : vector<8x16xf32>
    %503 = arith.mulf %494, %476 : vector<8x16xf32>
    %504 = arith.mulf %488, %496 : vector<8x16xf32>
    %505 = arith.addf %503, %504 : vector<8x16xf32>
    %506 = math.tanh %505 : vector<8x16xf32>
    %507 = arith.mulf %502, %506 : vector<8x16xf32>
    %508 = vector.shape_cast %304 : vector<8x16xf32> to vector<1x8x16xf32>
    %509 = vector.shape_cast %333 : vector<8x16xf32> to vector<1x8x16xf32>
    %510 = vector.shape_cast %362 : vector<8x16xf32> to vector<1x8x16xf32>
    %511 = vector.shape_cast %391 : vector<8x16xf32> to vector<1x8x16xf32>
    %512 = vector.shape_cast %420 : vector<8x16xf32> to vector<1x8x16xf32>
    %513 = vector.shape_cast %449 : vector<8x16xf32> to vector<1x8x16xf32>
    %514 = vector.shape_cast %478 : vector<8x16xf32> to vector<1x8x16xf32>
    %515 = vector.shape_cast %507 : vector<8x16xf32> to vector<1x8x16xf32>
    %516 = tpu.concatenate %508, %509, %510, %511, %512, %513, %514, %515 in 0 : vector<1x8x16xf32>, vector<1x8x16xf32>, vector<1x8x16xf32>, vector<1x8x16xf32>, vector<1x8x16xf32>, vector<1x8x16xf32>, vector<1x8x16xf32>, vector<1x8x16xf32> -> vector<8x8x16xf32>
    %517 = vector.extract_strided_slice %516 {offsets = [0, 0, 0], sizes = [8, 8, 8], strides = [1, 1, 1]} : vector<8x8x16xf32> to vector<8x8x8xf32>
    %518 = vector.extract_strided_slice %516 {offsets = [0, 0, 8], sizes = [8, 8, 8], strides = [1, 1, 1]} : vector<8x8x16xf32> to vector<8x8x8xf32>
    %cst_99 = arith.constant 5.000000e-01 : f32
    %519 = vector.broadcast %cst_99 : f32 to vector<8x8x8xf32>
    %520 = arith.mulf %519, %518 : vector<8x8x8xf32>
    %521 = math.exp %520 : vector<8x8x8xf32>
    %522 = arith.mulf %3, %521 : vector<8x8x8xf32>
    %523 = arith.addf %522, %517 : vector<8x8x8xf32>
    %cst_100 = arith.constant -1.000000e+00 : f32
    %524 = vector.broadcast %cst_100 : f32 to vector<8x8x8xf32>
    %525 = arith.subf %524, %518 : vector<8x8x8xf32>
    %526 = arith.mulf %517, %517 : vector<8x8x8xf32>
    %527 = arith.addf %525, %526 : vector<8x8x8xf32>
    %528 = math.exp %518 : vector<8x8x8xf32>
    %529 = arith.addf %527, %528 : vector<8x8x8xf32>
    %530 = vector.broadcast %6 : vector<1x8x1xf32> to vector<8x8x8xf32>
    %531 = arith.mulf %530, %529 : vector<8x8x8xf32>
    %532 = vector.shape_cast %531 : vector<8x8x8xf32> to vector<64x8xf32>
    %533 = vector.shape_cast %532 : vector<64x8xf32> to vector<1x64x8xf32>
    %cst_101 = arith.constant dense<0.000000e+00> : vector<1xf32>
    %534 = vector.multi_reduction <add>, %533, %cst_101 [1, 2] : vector<1x64x8xf32> to vector<1xf32>
    %535 = vector.shape_cast %534 : vector<1xf32> to vector<1x1x1xf32>
    %536 = vector.extract %535[0, 0, 0] : f32 from vector<1x1x1xf32>
    %537 = vector.broadcast %536 : f32 to vector<1x1xf32>
    %cst_102 = arith.constant 5.000000e-01 : f32
    %538 = vector.broadcast %cst_102 : f32 to vector<1x1xf32>
    %539 = arith.mulf %538, %537 : vector<1x1xf32>
    %cst_103 = arith.constant 2.000000e+00 : f32
    %540 = vector.broadcast %cst_103 : f32 to vector<1x1xf32>
    %541 = arith.divf %539, %540 : vector<1x1xf32>
    %542 = tpu.concatenate %523, %2 in 1 : vector<8x8x8xf32>, vector<8x8x8xf32> -> vector<8x16x8xf32>
    %c96 = arith.constant 96 : index
    %c0_104 = arith.constant 0 : index
    %543 = vector.load %arg1[%c96, %c0_104] : memref<224x128xbf16, #tpu.memory_space<vmem>>, vector<8x128xbf16>
    %c112 = arith.constant 112 : index
    %c0_105 = arith.constant 0 : index
    %544 = vector.load %arg1[%c112, %c0_105] : memref<224x128xbf16, #tpu.memory_space<vmem>>, vector<32x128xbf16>
    %c24_106 = arith.constant 24 : index
    %c0_107 = arith.constant 0 : index
    %545 = vector.load %arg2[%c24_106, %c0_107] : memref<64x128xf32, #tpu.memory_space<vmem>>, vector<1x128xf32>
    %546 = vector.shape_cast %542 : vector<8x16x8xf32> to vector<128x8xf32>
    %547 = arith.truncf %546 : vector<128x8xf32> to vector<128x8xbf16>
    %cst_108 = arith.constant dense<0.000000e+00> : vector<128x128xf32>
    %548 = tpu.matmul %547, %543, %cst_108 {dimension_numbers = #tpu.dot_dimension_numbers<[1], [0], [0], [1], [0, 0, 1, 1], [], []>} : vector<128x8xbf16>, vector<8x128xbf16>, vector<128x128xf32> -> vector<128x128xf32>
    %549 = vector.broadcast %545 : vector<1x128xf32> to vector<128x128xf32>
    %550 = arith.addf %548, %549 : vector<128x128xf32>
    %cst_109 = arith.constant 0.000000e+00 : f32
    %551 = vector.broadcast %cst_109 : f32 to vector<16x32xf32>
    %cst_110 = arith.constant 0.000000e+00 : f32
    %552 = vector.broadcast %cst_110 : f32 to vector<16x32xf32>
    %553 = vector.extract_strided_slice %550 {offsets = [0, 0], sizes = [16, 128], strides = [1, 1]} : vector<128x128xf32> to vector<16x128xf32>
    %554 = arith.truncf %551 : vector<16x32xf32> to vector<16x32xbf16>
    %cst_111 = arith.constant dense<0.000000e+00> : vector<16x128xf32>
    %555 = tpu.matmul %554, %544, %cst_111 {dimension_numbers = #tpu.dot_dimension_numbers<[1], [0], [0], [1], [0, 0, 1, 1], [], []>} : vector<16x32xbf16>, vector<32x128xbf16>, vector<16x128xf32> -> vector<16x128xf32>
    %556 = arith.addf %553, %555 : vector<16x128xf32>
    %557 = vector.extract_strided_slice %556 {offsets = [0, 0], sizes = [16, 32], strides = [1, 1]} : vector<16x128xf32> to vector<16x32xf32>
    %558 = arith.negf %557 : vector<16x32xf32>
    %559 = math.exp %558 : vector<16x32xf32>
    %cst_112 = arith.constant 1.000000e+00 : f32
    %560 = vector.broadcast %cst_112 : f32 to vector<16x32xf32>
    %561 = arith.addf %560, %559 : vector<16x32xf32>
    %562 = arith.divf %560, %561 : vector<16x32xf32>
    %563 = vector.extract_strided_slice %556 {offsets = [0, 32], sizes = [16, 32], strides = [1, 1]} : vector<16x128xf32> to vector<16x32xf32>
    %564 = arith.negf %563 : vector<16x32xf32>
    %565 = math.exp %564 : vector<16x32xf32>
    %cst_113 = arith.constant 1.000000e+00 : f32
    %566 = vector.broadcast %cst_113 : f32 to vector<16x32xf32>
    %567 = arith.addf %566, %565 : vector<16x32xf32>
    %568 = arith.divf %566, %567 : vector<16x32xf32>
    %569 = vector.extract_strided_slice %556 {offsets = [0, 64], sizes = [16, 32], strides = [1, 1]} : vector<16x128xf32> to vector<16x32xf32>
    %570 = math.tanh %569 : vector<16x32xf32>
    %571 = vector.extract_strided_slice %556 {offsets = [0, 96], sizes = [16, 32], strides = [1, 1]} : vector<16x128xf32> to vector<16x32xf32>
    %572 = arith.negf %571 : vector<16x32xf32>
    %573 = math.exp %572 : vector<16x32xf32>
    %cst_114 = arith.constant 1.000000e+00 : f32
    %574 = vector.broadcast %cst_114 : f32 to vector<16x32xf32>
    %575 = arith.addf %574, %573 : vector<16x32xf32>
    %576 = arith.divf %574, %575 : vector<16x32xf32>
    %577 = arith.mulf %568, %552 : vector<16x32xf32>
    %578 = arith.mulf %562, %570 : vector<16x32xf32>
    %579 = arith.addf %577, %578 : vector<16x32xf32>
    %580 = math.tanh %579 : vector<16x32xf32>
    %581 = arith.mulf %576, %580 : vector<16x32xf32>
    %582 = vector.extract_strided_slice %550 {offsets = [16, 0], sizes = [16, 128], strides = [1, 1]} : vector<128x128xf32> to vector<16x128xf32>
    %583 = arith.truncf %581 : vector<16x32xf32> to vector<16x32xbf16>
    %cst_115 = arith.constant dense<0.000000e+00> : vector<16x128xf32>
    %584 = tpu.matmul %583, %544, %cst_115 {dimension_numbers = #tpu.dot_dimension_numbers<[1], [0], [0], [1], [0, 0, 1, 1], [], []>} : vector<16x32xbf16>, vector<32x128xbf16>, vector<16x128xf32> -> vector<16x128xf32>
    %585 = arith.addf %582, %584 : vector<16x128xf32>
    %586 = vector.extract_strided_slice %585 {offsets = [0, 0], sizes = [16, 32], strides = [1, 1]} : vector<16x128xf32> to vector<16x32xf32>
    %587 = arith.negf %586 : vector<16x32xf32>
    %588 = math.exp %587 : vector<16x32xf32>
    %cst_116 = arith.constant 1.000000e+00 : f32
    %589 = vector.broadcast %cst_116 : f32 to vector<16x32xf32>
    %590 = arith.addf %589, %588 : vector<16x32xf32>
    %591 = arith.divf %589, %590 : vector<16x32xf32>
    %592 = vector.extract_strided_slice %585 {offsets = [0, 32], sizes = [16, 32], strides = [1, 1]} : vector<16x128xf32> to vector<16x32xf32>
    %593 = arith.negf %592 : vector<16x32xf32>
    %594 = math.exp %593 : vector<16x32xf32>
    %cst_117 = arith.constant 1.000000e+00 : f32
    %595 = vector.broadcast %cst_117 : f32 to vector<16x32xf32>
    %596 = arith.addf %595, %594 : vector<16x32xf32>
    %597 = arith.divf %595, %596 : vector<16x32xf32>
    %598 = vector.extract_strided_slice %585 {offsets = [0, 64], sizes = [16, 32], strides = [1, 1]} : vector<16x128xf32> to vector<16x32xf32>
    %599 = math.tanh %598 : vector<16x32xf32>
    %600 = vector.extract_strided_slice %585 {offsets = [0, 96], sizes = [16, 32], strides = [1, 1]} : vector<16x128xf32> to vector<16x32xf32>
    %601 = arith.negf %600 : vector<16x32xf32>
    %602 = math.exp %601 : vector<16x32xf32>
    %cst_118 = arith.constant 1.000000e+00 : f32
    %603 = vector.broadcast %cst_118 : f32 to vector<16x32xf32>
    %604 = arith.addf %603, %602 : vector<16x32xf32>
    %605 = arith.divf %603, %604 : vector<16x32xf32>
    %606 = arith.mulf %597, %579 : vector<16x32xf32>
    %607 = arith.mulf %591, %599 : vector<16x32xf32>
    %608 = arith.addf %606, %607 : vector<16x32xf32>
    %609 = math.tanh %608 : vector<16x32xf32>
    %610 = arith.mulf %605, %609 : vector<16x32xf32>
    %611 = vector.extract_strided_slice %550 {offsets = [32, 0], sizes = [16, 128], strides = [1, 1]} : vector<128x128xf32> to vector<16x128xf32>
    %612 = arith.truncf %610 : vector<16x32xf32> to vector<16x32xbf16>
    %cst_119 = arith.constant dense<0.000000e+00> : vector<16x128xf32>
    %613 = tpu.matmul %612, %544, %cst_119 {dimension_numbers = #tpu.dot_dimension_numbers<[1], [0], [0], [1], [0, 0, 1, 1], [], []>} : vector<16x32xbf16>, vector<32x128xbf16>, vector<16x128xf32> -> vector<16x128xf32>
    %614 = arith.addf %611, %613 : vector<16x128xf32>
    %615 = vector.extract_strided_slice %614 {offsets = [0, 0], sizes = [16, 32], strides = [1, 1]} : vector<16x128xf32> to vector<16x32xf32>
    %616 = arith.negf %615 : vector<16x32xf32>
    %617 = math.exp %616 : vector<16x32xf32>
    %cst_120 = arith.constant 1.000000e+00 : f32
    %618 = vector.broadcast %cst_120 : f32 to vector<16x32xf32>
    %619 = arith.addf %618, %617 : vector<16x32xf32>
    %620 = arith.divf %618, %619 : vector<16x32xf32>
    %621 = vector.extract_strided_slice %614 {offsets = [0, 32], sizes = [16, 32], strides = [1, 1]} : vector<16x128xf32> to vector<16x32xf32>
    %622 = arith.negf %621 : vector<16x32xf32>
    %623 = math.exp %622 : vector<16x32xf32>
    %cst_121 = arith.constant 1.000000e+00 : f32
    %624 = vector.broadcast %cst_121 : f32 to vector<16x32xf32>
    %625 = arith.addf %624, %623 : vector<16x32xf32>
    %626 = arith.divf %624, %625 : vector<16x32xf32>
    %627 = vector.extract_strided_slice %614 {offsets = [0, 64], sizes = [16, 32], strides = [1, 1]} : vector<16x128xf32> to vector<16x32xf32>
    %628 = math.tanh %627 : vector<16x32xf32>
    %629 = vector.extract_strided_slice %614 {offsets = [0, 96], sizes = [16, 32], strides = [1, 1]} : vector<16x128xf32> to vector<16x32xf32>
    %630 = arith.negf %629 : vector<16x32xf32>
    %631 = math.exp %630 : vector<16x32xf32>
    %cst_122 = arith.constant 1.000000e+00 : f32
    %632 = vector.broadcast %cst_122 : f32 to vector<16x32xf32>
    %633 = arith.addf %632, %631 : vector<16x32xf32>
    %634 = arith.divf %632, %633 : vector<16x32xf32>
    %635 = arith.mulf %626, %608 : vector<16x32xf32>
    %636 = arith.mulf %620, %628 : vector<16x32xf32>
    %637 = arith.addf %635, %636 : vector<16x32xf32>
    %638 = math.tanh %637 : vector<16x32xf32>
    %639 = arith.mulf %634, %638 : vector<16x32xf32>
    %640 = vector.extract_strided_slice %550 {offsets = [48, 0], sizes = [16, 128], strides = [1, 1]} : vector<128x128xf32> to vector<16x128xf32>
    %641 = arith.truncf %639 : vector<16x32xf32> to vector<16x32xbf16>
    %cst_123 = arith.constant dense<0.000000e+00> : vector<16x128xf32>
    %642 = tpu.matmul %641, %544, %cst_123 {dimension_numbers = #tpu.dot_dimension_numbers<[1], [0], [0], [1], [0, 0, 1, 1], [], []>} : vector<16x32xbf16>, vector<32x128xbf16>, vector<16x128xf32> -> vector<16x128xf32>
    %643 = arith.addf %640, %642 : vector<16x128xf32>
    %644 = vector.extract_strided_slice %643 {offsets = [0, 0], sizes = [16, 32], strides = [1, 1]} : vector<16x128xf32> to vector<16x32xf32>
    %645 = arith.negf %644 : vector<16x32xf32>
    %646 = math.exp %645 : vector<16x32xf32>
    %cst_124 = arith.constant 1.000000e+00 : f32
    %647 = vector.broadcast %cst_124 : f32 to vector<16x32xf32>
    %648 = arith.addf %647, %646 : vector<16x32xf32>
    %649 = arith.divf %647, %648 : vector<16x32xf32>
    %650 = vector.extract_strided_slice %643 {offsets = [0, 32], sizes = [16, 32], strides = [1, 1]} : vector<16x128xf32> to vector<16x32xf32>
    %651 = arith.negf %650 : vector<16x32xf32>
    %652 = math.exp %651 : vector<16x32xf32>
    %cst_125 = arith.constant 1.000000e+00 : f32
    %653 = vector.broadcast %cst_125 : f32 to vector<16x32xf32>
    %654 = arith.addf %653, %652 : vector<16x32xf32>
    %655 = arith.divf %653, %654 : vector<16x32xf32>
    %656 = vector.extract_strided_slice %643 {offsets = [0, 64], sizes = [16, 32], strides = [1, 1]} : vector<16x128xf32> to vector<16x32xf32>
    %657 = math.tanh %656 : vector<16x32xf32>
    %658 = vector.extract_strided_slice %643 {offsets = [0, 96], sizes = [16, 32], strides = [1, 1]} : vector<16x128xf32> to vector<16x32xf32>
    %659 = arith.negf %658 : vector<16x32xf32>
    %660 = math.exp %659 : vector<16x32xf32>
    %cst_126 = arith.constant 1.000000e+00 : f32
    %661 = vector.broadcast %cst_126 : f32 to vector<16x32xf32>
    %662 = arith.addf %661, %660 : vector<16x32xf32>
    %663 = arith.divf %661, %662 : vector<16x32xf32>
    %664 = arith.mulf %655, %637 : vector<16x32xf32>
    %665 = arith.mulf %649, %657 : vector<16x32xf32>
    %666 = arith.addf %664, %665 : vector<16x32xf32>
    %667 = math.tanh %666 : vector<16x32xf32>
    %668 = arith.mulf %663, %667 : vector<16x32xf32>
    %669 = vector.extract_strided_slice %550 {offsets = [64, 0], sizes = [16, 128], strides = [1, 1]} : vector<128x128xf32> to vector<16x128xf32>
    %670 = arith.truncf %668 : vector<16x32xf32> to vector<16x32xbf16>
    %cst_127 = arith.constant dense<0.000000e+00> : vector<16x128xf32>
    %671 = tpu.matmul %670, %544, %cst_127 {dimension_numbers = #tpu.dot_dimension_numbers<[1], [0], [0], [1], [0, 0, 1, 1], [], []>} : vector<16x32xbf16>, vector<32x128xbf16>, vector<16x128xf32> -> vector<16x128xf32>
    %672 = arith.addf %669, %671 : vector<16x128xf32>
    %673 = vector.extract_strided_slice %672 {offsets = [0, 0], sizes = [16, 32], strides = [1, 1]} : vector<16x128xf32> to vector<16x32xf32>
    %674 = arith.negf %673 : vector<16x32xf32>
    %675 = math.exp %674 : vector<16x32xf32>
    %cst_128 = arith.constant 1.000000e+00 : f32
    %676 = vector.broadcast %cst_128 : f32 to vector<16x32xf32>
    %677 = arith.addf %676, %675 : vector<16x32xf32>
    %678 = arith.divf %676, %677 : vector<16x32xf32>
    %679 = vector.extract_strided_slice %672 {offsets = [0, 32], sizes = [16, 32], strides = [1, 1]} : vector<16x128xf32> to vector<16x32xf32>
    %680 = arith.negf %679 : vector<16x32xf32>
    %681 = math.exp %680 : vector<16x32xf32>
    %cst_129 = arith.constant 1.000000e+00 : f32
    %682 = vector.broadcast %cst_129 : f32 to vector<16x32xf32>
    %683 = arith.addf %682, %681 : vector<16x32xf32>
    %684 = arith.divf %682, %683 : vector<16x32xf32>
    %685 = vector.extract_strided_slice %672 {offsets = [0, 64], sizes = [16, 32], strides = [1, 1]} : vector<16x128xf32> to vector<16x32xf32>
    %686 = math.tanh %685 : vector<16x32xf32>
    %687 = vector.extract_strided_slice %672 {offsets = [0, 96], sizes = [16, 32], strides = [1, 1]} : vector<16x128xf32> to vector<16x32xf32>
    %688 = arith.negf %687 : vector<16x32xf32>
    %689 = math.exp %688 : vector<16x32xf32>
    %cst_130 = arith.constant 1.000000e+00 : f32
    %690 = vector.broadcast %cst_130 : f32 to vector<16x32xf32>
    %691 = arith.addf %690, %689 : vector<16x32xf32>
    %692 = arith.divf %690, %691 : vector<16x32xf32>
    %693 = arith.mulf %684, %666 : vector<16x32xf32>
    %694 = arith.mulf %678, %686 : vector<16x32xf32>
    %695 = arith.addf %693, %694 : vector<16x32xf32>
    %696 = math.tanh %695 : vector<16x32xf32>
    %697 = arith.mulf %692, %696 : vector<16x32xf32>
    %698 = vector.extract_strided_slice %550 {offsets = [80, 0], sizes = [16, 128], strides = [1, 1]} : vector<128x128xf32> to vector<16x128xf32>
    %699 = arith.truncf %697 : vector<16x32xf32> to vector<16x32xbf16>
    %cst_131 = arith.constant dense<0.000000e+00> : vector<16x128xf32>
    %700 = tpu.matmul %699, %544, %cst_131 {dimension_numbers = #tpu.dot_dimension_numbers<[1], [0], [0], [1], [0, 0, 1, 1], [], []>} : vector<16x32xbf16>, vector<32x128xbf16>, vector<16x128xf32> -> vector<16x128xf32>
    %701 = arith.addf %698, %700 : vector<16x128xf32>
    %702 = vector.extract_strided_slice %701 {offsets = [0, 0], sizes = [16, 32], strides = [1, 1]} : vector<16x128xf32> to vector<16x32xf32>
    %703 = arith.negf %702 : vector<16x32xf32>
    %704 = math.exp %703 : vector<16x32xf32>
    %cst_132 = arith.constant 1.000000e+00 : f32
    %705 = vector.broadcast %cst_132 : f32 to vector<16x32xf32>
    %706 = arith.addf %705, %704 : vector<16x32xf32>
    %707 = arith.divf %705, %706 : vector<16x32xf32>
    %708 = vector.extract_strided_slice %701 {offsets = [0, 32], sizes = [16, 32], strides = [1, 1]} : vector<16x128xf32> to vector<16x32xf32>
    %709 = arith.negf %708 : vector<16x32xf32>
    %710 = math.exp %709 : vector<16x32xf32>
    %cst_133 = arith.constant 1.000000e+00 : f32
    %711 = vector.broadcast %cst_133 : f32 to vector<16x32xf32>
    %712 = arith.addf %711, %710 : vector<16x32xf32>
    %713 = arith.divf %711, %712 : vector<16x32xf32>
    %714 = vector.extract_strided_slice %701 {offsets = [0, 64], sizes = [16, 32], strides = [1, 1]} : vector<16x128xf32> to vector<16x32xf32>
    %715 = math.tanh %714 : vector<16x32xf32>
    %716 = vector.extract_strided_slice %701 {offsets = [0, 96], sizes = [16, 32], strides = [1, 1]} : vector<16x128xf32> to vector<16x32xf32>
    %717 = arith.negf %716 : vector<16x32xf32>
    %718 = math.exp %717 : vector<16x32xf32>
    %cst_134 = arith.constant 1.000000e+00 : f32
    %719 = vector.broadcast %cst_134 : f32 to vector<16x32xf32>
    %720 = arith.addf %719, %718 : vector<16x32xf32>
    %721 = arith.divf %719, %720 : vector<16x32xf32>
    %722 = arith.mulf %713, %695 : vector<16x32xf32>
    %723 = arith.mulf %707, %715 : vector<16x32xf32>
    %724 = arith.addf %722, %723 : vector<16x32xf32>
    %725 = math.tanh %724 : vector<16x32xf32>
    %726 = arith.mulf %721, %725 : vector<16x32xf32>
    %727 = vector.extract_strided_slice %550 {offsets = [96, 0], sizes = [16, 128], strides = [1, 1]} : vector<128x128xf32> to vector<16x128xf32>
    %728 = arith.truncf %726 : vector<16x32xf32> to vector<16x32xbf16>
    %cst_135 = arith.constant dense<0.000000e+00> : vector<16x128xf32>
    %729 = tpu.matmul %728, %544, %cst_135 {dimension_numbers = #tpu.dot_dimension_numbers<[1], [0], [0], [1], [0, 0, 1, 1], [], []>} : vector<16x32xbf16>, vector<32x128xbf16>, vector<16x128xf32> -> vector<16x128xf32>
    %730 = arith.addf %727, %729 : vector<16x128xf32>
    %731 = vector.extract_strided_slice %730 {offsets = [0, 0], sizes = [16, 32], strides = [1, 1]} : vector<16x128xf32> to vector<16x32xf32>
    %732 = arith.negf %731 : vector<16x32xf32>
    %733 = math.exp %732 : vector<16x32xf32>
    %cst_136 = arith.constant 1.000000e+00 : f32
    %734 = vector.broadcast %cst_136 : f32 to vector<16x32xf32>
    %735 = arith.addf %734, %733 : vector<16x32xf32>
    %736 = arith.divf %734, %735 : vector<16x32xf32>
    %737 = vector.extract_strided_slice %730 {offsets = [0, 32], sizes = [16, 32], strides = [1, 1]} : vector<16x128xf32> to vector<16x32xf32>
    %738 = arith.negf %737 : vector<16x32xf32>
    %739 = math.exp %738 : vector<16x32xf32>
    %cst_137 = arith.constant 1.000000e+00 : f32
    %740 = vector.broadcast %cst_137 : f32 to vector<16x32xf32>
    %741 = arith.addf %740, %739 : vector<16x32xf32>
    %742 = arith.divf %740, %741 : vector<16x32xf32>
    %743 = vector.extract_strided_slice %730 {offsets = [0, 64], sizes = [16, 32], strides = [1, 1]} : vector<16x128xf32> to vector<16x32xf32>
    %744 = math.tanh %743 : vector<16x32xf32>
    %745 = vector.extract_strided_slice %730 {offsets = [0, 96], sizes = [16, 32], strides = [1, 1]} : vector<16x128xf32> to vector<16x32xf32>
    %746 = arith.negf %745 : vector<16x32xf32>
    %747 = math.exp %746 : vector<16x32xf32>
    %cst_138 = arith.constant 1.000000e+00 : f32
    %748 = vector.broadcast %cst_138 : f32 to vector<16x32xf32>
    %749 = arith.addf %748, %747 : vector<16x32xf32>
    %750 = arith.divf %748, %749 : vector<16x32xf32>
    %751 = arith.mulf %742, %724 : vector<16x32xf32>
    %752 = arith.mulf %736, %744 : vector<16x32xf32>
    %753 = arith.addf %751, %752 : vector<16x32xf32>
    %754 = math.tanh %753 : vector<16x32xf32>
    %755 = arith.mulf %750, %754 : vector<16x32xf32>
    %756 = vector.extract_strided_slice %550 {offsets = [112, 0], sizes = [16, 128], strides = [1, 1]} : vector<128x128xf32> to vector<16x128xf32>
    %757 = arith.truncf %755 : vector<16x32xf32> to vector<16x32xbf16>
    %cst_139 = arith.constant dense<0.000000e+00> : vector<16x128xf32>
    %758 = tpu.matmul %757, %544, %cst_139 {dimension_numbers = #tpu.dot_dimension_numbers<[1], [0], [0], [1], [0, 0, 1, 1], [], []>} : vector<16x32xbf16>, vector<32x128xbf16>, vector<16x128xf32> -> vector<16x128xf32>
    %759 = arith.addf %756, %758 : vector<16x128xf32>
    %760 = vector.extract_strided_slice %759 {offsets = [0, 0], sizes = [16, 32], strides = [1, 1]} : vector<16x128xf32> to vector<16x32xf32>
    %761 = arith.negf %760 : vector<16x32xf32>
    %762 = math.exp %761 : vector<16x32xf32>
    %cst_140 = arith.constant 1.000000e+00 : f32
    %763 = vector.broadcast %cst_140 : f32 to vector<16x32xf32>
    %764 = arith.addf %763, %762 : vector<16x32xf32>
    %765 = arith.divf %763, %764 : vector<16x32xf32>
    %766 = vector.extract_strided_slice %759 {offsets = [0, 32], sizes = [16, 32], strides = [1, 1]} : vector<16x128xf32> to vector<16x32xf32>
    %767 = arith.negf %766 : vector<16x32xf32>
    %768 = math.exp %767 : vector<16x32xf32>
    %cst_141 = arith.constant 1.000000e+00 : f32
    %769 = vector.broadcast %cst_141 : f32 to vector<16x32xf32>
    %770 = arith.addf %769, %768 : vector<16x32xf32>
    %771 = arith.divf %769, %770 : vector<16x32xf32>
    %772 = vector.extract_strided_slice %759 {offsets = [0, 64], sizes = [16, 32], strides = [1, 1]} : vector<16x128xf32> to vector<16x32xf32>
    %773 = math.tanh %772 : vector<16x32xf32>
    %774 = vector.extract_strided_slice %759 {offsets = [0, 96], sizes = [16, 32], strides = [1, 1]} : vector<16x128xf32> to vector<16x32xf32>
    %775 = arith.negf %774 : vector<16x32xf32>
    %776 = math.exp %775 : vector<16x32xf32>
    %cst_142 = arith.constant 1.000000e+00 : f32
    %777 = vector.broadcast %cst_142 : f32 to vector<16x32xf32>
    %778 = arith.addf %777, %776 : vector<16x32xf32>
    %779 = arith.divf %777, %778 : vector<16x32xf32>
    %780 = arith.mulf %771, %753 : vector<16x32xf32>
    %781 = arith.mulf %765, %773 : vector<16x32xf32>
    %782 = arith.addf %780, %781 : vector<16x32xf32>
    %783 = math.tanh %782 : vector<16x32xf32>
    %784 = arith.mulf %779, %783 : vector<16x32xf32>
    %785 = vector.shape_cast %581 : vector<16x32xf32> to vector<1x16x32xf32>
    %786 = vector.shape_cast %610 : vector<16x32xf32> to vector<1x16x32xf32>
    %787 = vector.shape_cast %639 : vector<16x32xf32> to vector<1x16x32xf32>
    %788 = vector.shape_cast %668 : vector<16x32xf32> to vector<1x16x32xf32>
    %789 = vector.shape_cast %697 : vector<16x32xf32> to vector<1x16x32xf32>
    %790 = vector.shape_cast %726 : vector<16x32xf32> to vector<1x16x32xf32>
    %791 = vector.shape_cast %755 : vector<16x32xf32> to vector<1x16x32xf32>
    %792 = vector.shape_cast %784 : vector<16x32xf32> to vector<1x16x32xf32>
    %793 = tpu.concatenate %785, %786, %787, %788, %789, %790, %791, %792 in 0 : vector<1x16x32xf32>, vector<1x16x32xf32>, vector<1x16x32xf32>, vector<1x16x32xf32>, vector<1x16x32xf32>, vector<1x16x32xf32>, vector<1x16x32xf32>, vector<1x16x32xf32> -> vector<8x16x32xf32>
    %c144 = arith.constant 144 : index
    %c0_143 = arith.constant 0 : index
    %794 = vector.load %arg1[%c144, %c0_143] : memref<224x128xbf16, #tpu.memory_space<vmem>>, vector<32x16xbf16>
    %c32_144 = arith.constant 32 : index
    %c0_145 = arith.constant 0 : index
    %795 = vector.load %arg2[%c32_144, %c0_145] : memref<64x128xf32, #tpu.memory_space<vmem>>, vector<1x16xf32>
    %796 = vector.shape_cast %793 : vector<8x16x32xf32> to vector<128x32xf32>
    %797 = arith.truncf %796 : vector<128x32xf32> to vector<128x32xbf16>
    %cst_146 = arith.constant dense<0.000000e+00> : vector<128x16xf32>
    %798 = tpu.matmul %797, %794, %cst_146 {dimension_numbers = #tpu.dot_dimension_numbers<[1], [0], [0], [1], [0, 0, 1, 1], [], []>} : vector<128x32xbf16>, vector<32x16xbf16>, vector<128x16xf32> -> vector<128x16xf32>
    %799 = vector.broadcast %795 : vector<1x16xf32> to vector<128x16xf32>
    %800 = arith.addf %798, %799 : vector<128x16xf32>
    %801 = vector.shape_cast %800 : vector<128x16xf32> to vector<8x16x16xf32>
    %802 = vector.extract_strided_slice %801 {offsets = [0, 0, 0], sizes = [8, 8, 8], strides = [1, 1, 1]} : vector<8x16x16xf32> to vector<8x8x8xf32>
    %803 = vector.extract_strided_slice %801 {offsets = [0, 0, 8], sizes = [8, 8, 8], strides = [1, 1, 1]} : vector<8x16x16xf32> to vector<8x8x8xf32>
    %804 = vector.extract_strided_slice %801 {offsets = [0, 8, 0], sizes = [8, 8, 8], strides = [1, 1, 1]} : vector<8x16x16xf32> to vector<8x8x8xf32>
    %805 = vector.extract_strided_slice %801 {offsets = [0, 8, 8], sizes = [8, 8, 8], strides = [1, 1, 1]} : vector<8x16x16xf32> to vector<8x8x8xf32>
    %cst_147 = arith.constant 5.000000e-01 : f32
    %806 = vector.broadcast %cst_147 : f32 to vector<8x8x8xf32>
    %807 = arith.mulf %806, %803 : vector<8x8x8xf32>
    %808 = math.exp %807 : vector<8x8x8xf32>
    %809 = arith.mulf %4, %808 : vector<8x8x8xf32>
    %810 = arith.addf %809, %802 : vector<8x8x8xf32>
    %cst_148 = arith.constant 5.000000e-01 : f32
    %811 = vector.broadcast %cst_148 : f32 to vector<8x8x8xf32>
    %812 = arith.mulf %811, %805 : vector<8x8x8xf32>
    %813 = math.exp %812 : vector<8x8x8xf32>
    %814 = arith.mulf %5, %813 : vector<8x8x8xf32>
    %815 = arith.addf %814, %804 : vector<8x8x8xf32>
    %816 = arith.subf %802, %1 : vector<8x8x8xf32>
    %817 = vector.broadcast %6 : vector<1x8x1xf32> to vector<8x8x8xf32>
    %818 = arith.mulf %817, %816 : vector<8x8x8xf32>
    %819 = arith.mulf %818, %816 : vector<8x8x8xf32>
    %cst_149 = arith.constant 0.000000e+00 : f32
    %820 = vector.broadcast %cst_149 : f32 to vector<8x8x8xf32>
    %821 = arith.subf %820, %803 : vector<8x8x8xf32>
    %822 = math.exp %821 : vector<8x8x8xf32>
    %823 = arith.mulf %819, %822 : vector<8x8x8xf32>
    %824 = vector.shape_cast %823 : vector<8x8x8xf32> to vector<64x8xf32>
    %825 = vector.shape_cast %824 : vector<64x8xf32> to vector<1x64x8xf32>
    %cst_150 = arith.constant dense<0.000000e+00> : vector<1xf32>
    %826 = vector.multi_reduction <add>, %825, %cst_150 [1, 2] : vector<1x64x8xf32> to vector<1xf32>
    %827 = vector.shape_cast %826 : vector<1xf32> to vector<1x1x1xf32>
    %828 = vector.extract %827[0, 0, 0] : f32 from vector<1x1x1xf32>
    %829 = vector.broadcast %828 : f32 to vector<1x1xf32>
    %830 = vector.broadcast %6 : vector<1x8x1xf32> to vector<8x8x8xf32>
    %831 = arith.mulf %830, %803 : vector<8x8x8xf32>
    %832 = vector.shape_cast %831 : vector<8x8x8xf32> to vector<64x8xf32>
    %833 = vector.shape_cast %832 : vector<64x8xf32> to vector<1x64x8xf32>
    %cst_151 = arith.constant dense<0.000000e+00> : vector<1xf32>
    %834 = vector.multi_reduction <add>, %833, %cst_151 [1, 2] : vector<1x64x8xf32> to vector<1xf32>
    %835 = vector.shape_cast %834 : vector<1xf32> to vector<1x1x1xf32>
    %836 = vector.extract %835[0, 0, 0] : f32 from vector<1x1x1xf32>
    %837 = vector.broadcast %836 : f32 to vector<1x1xf32>
    %cst_152 = arith.constant 5.000000e-01 : f32
    %838 = vector.broadcast %cst_152 : f32 to vector<1x1xf32>
    %839 = arith.mulf %838, %829 : vector<1x1xf32>
    %cst_153 = arith.constant 5.000000e-01 : f32
    %840 = vector.broadcast %cst_153 : f32 to vector<1x1xf32>
    %841 = arith.mulf %840, %837 : vector<1x1xf32>
    %842 = arith.addf %839, %841 : vector<1x1xf32>
    %cst_154 = arith.constant 2.000000e+00 : f32
    %843 = vector.broadcast %cst_154 : f32 to vector<1x1xf32>
    %844 = arith.divf %842, %843 : vector<1x1xf32>
    %845 = tpu.concatenate %810, %815, %1 in 1 : vector<8x8x8xf32>, vector<8x8x8xf32>, vector<8x8x8xf32> -> vector<8x24x8xf32>
    %c176 = arith.constant 176 : index
    %c0_155 = arith.constant 0 : index
    %846 = vector.load %arg1[%c176, %c0_155] : memref<224x128xbf16, #tpu.memory_space<vmem>>, vector<8x48xbf16>
    %c192 = arith.constant 192 : index
    %c0_156 = arith.constant 0 : index
    %847 = vector.load %arg1[%c192, %c0_156] : memref<224x128xbf16, #tpu.memory_space<vmem>>, vector<16x48xbf16>
    %c40_157 = arith.constant 40 : index
    %c0_158 = arith.constant 0 : index
    %848 = vector.load %arg2[%c40_157, %c0_158] : memref<64x128xf32, #tpu.memory_space<vmem>>, vector<1x48xf32>
    %c48_159 = arith.constant 48 : index
    %c0_160 = arith.constant 0 : index
    %849 = vector.load %arg2[%c48_159, %c0_160] : memref<64x128xf32, #tpu.memory_space<vmem>>, vector<1x48xf32>
    %850 = vector.shape_cast %845 : vector<8x24x8xf32> to vector<192x8xf32>
    %851 = arith.truncf %850 : vector<192x8xf32> to vector<192x8xbf16>
    %cst_161 = arith.constant dense<0.000000e+00> : vector<192x48xf32>
    %852 = tpu.matmul %851, %846, %cst_161 {dimension_numbers = #tpu.dot_dimension_numbers<[1], [0], [0], [1], [0, 0, 1, 1], [], []>} : vector<192x8xbf16>, vector<8x48xbf16>, vector<192x48xf32> -> vector<192x48xf32>
    %853 = vector.broadcast %848 : vector<1x48xf32> to vector<192x48xf32>
    %854 = arith.addf %852, %853 : vector<192x48xf32>
    %855 = vector.shape_cast %849 : vector<1x48xf32> to vector<1x48xf32>
    %856 = vector.broadcast %855 : vector<1x48xf32> to vector<24x48xf32>
    %cst_162 = arith.constant 0.000000e+00 : f32
    %857 = vector.broadcast %cst_162 : f32 to vector<24x16xf32>
    %858 = arith.truncf %857 : vector<24x16xf32> to vector<24x16xbf16>
    %cst_163 = arith.constant dense<0.000000e+00> : vector<24x48xf32>
    %859 = tpu.matmul %858, %847, %cst_163 {dimension_numbers = #tpu.dot_dimension_numbers<[1], [0], [0], [1], [0, 0, 1, 1], [], []>} : vector<24x16xbf16>, vector<16x48xbf16>, vector<24x48xf32> -> vector<24x48xf32>
    %860 = arith.addf %859, %856 : vector<24x48xf32>
    %861 = vector.extract_strided_slice %854 {offsets = [0, 0], sizes = [24, 48], strides = [1, 1]} : vector<192x48xf32> to vector<24x48xf32>
    %862 = vector.extract_strided_slice %861 {offsets = [0, 0], sizes = [24, 16], strides = [1, 1]} : vector<24x48xf32> to vector<24x16xf32>
    %863 = vector.extract_strided_slice %860 {offsets = [0, 0], sizes = [24, 16], strides = [1, 1]} : vector<24x48xf32> to vector<24x16xf32>
    %864 = arith.addf %862, %863 : vector<24x16xf32>
    %865 = arith.negf %864 : vector<24x16xf32>
    %866 = math.exp %865 : vector<24x16xf32>
    %cst_164 = arith.constant 1.000000e+00 : f32
    %867 = vector.broadcast %cst_164 : f32 to vector<24x16xf32>
    %868 = arith.addf %867, %866 : vector<24x16xf32>
    %869 = arith.divf %867, %868 : vector<24x16xf32>
    %870 = vector.extract_strided_slice %861 {offsets = [0, 16], sizes = [24, 16], strides = [1, 1]} : vector<24x48xf32> to vector<24x16xf32>
    %871 = vector.extract_strided_slice %860 {offsets = [0, 16], sizes = [24, 16], strides = [1, 1]} : vector<24x48xf32> to vector<24x16xf32>
    %872 = arith.addf %870, %871 : vector<24x16xf32>
    %873 = arith.negf %872 : vector<24x16xf32>
    %874 = math.exp %873 : vector<24x16xf32>
    %cst_165 = arith.constant 1.000000e+00 : f32
    %875 = vector.broadcast %cst_165 : f32 to vector<24x16xf32>
    %876 = arith.addf %875, %874 : vector<24x16xf32>
    %877 = arith.divf %875, %876 : vector<24x16xf32>
    %878 = vector.extract_strided_slice %861 {offsets = [0, 32], sizes = [24, 16], strides = [1, 1]} : vector<24x48xf32> to vector<24x16xf32>
    %879 = vector.extract_strided_slice %860 {offsets = [0, 32], sizes = [24, 16], strides = [1, 1]} : vector<24x48xf32> to vector<24x16xf32>
    %880 = arith.mulf %869, %879 : vector<24x16xf32>
    %881 = arith.addf %878, %880 : vector<24x16xf32>
    %882 = math.tanh %881 : vector<24x16xf32>
    %cst_166 = arith.constant 1.000000e+00 : f32
    %883 = vector.broadcast %cst_166 : f32 to vector<24x16xf32>
    %884 = arith.subf %883, %877 : vector<24x16xf32>
    %885 = arith.mulf %884, %882 : vector<24x16xf32>
    %886 = arith.mulf %877, %857 : vector<24x16xf32>
    %887 = arith.addf %885, %886 : vector<24x16xf32>
    %888 = arith.truncf %887 : vector<24x16xf32> to vector<24x16xbf16>
    %cst_167 = arith.constant dense<0.000000e+00> : vector<24x48xf32>
    %889 = tpu.matmul %888, %847, %cst_167 {dimension_numbers = #tpu.dot_dimension_numbers<[1], [0], [0], [1], [0, 0, 1, 1], [], []>} : vector<24x16xbf16>, vector<16x48xbf16>, vector<24x48xf32> -> vector<24x48xf32>
    %890 = arith.addf %889, %856 : vector<24x48xf32>
    %891 = vector.extract_strided_slice %854 {offsets = [24, 0], sizes = [24, 48], strides = [1, 1]} : vector<192x48xf32> to vector<24x48xf32>
    %892 = vector.extract_strided_slice %891 {offsets = [0, 0], sizes = [24, 16], strides = [1, 1]} : vector<24x48xf32> to vector<24x16xf32>
    %893 = vector.extract_strided_slice %890 {offsets = [0, 0], sizes = [24, 16], strides = [1, 1]} : vector<24x48xf32> to vector<24x16xf32>
    %894 = arith.addf %892, %893 : vector<24x16xf32>
    %895 = arith.negf %894 : vector<24x16xf32>
    %896 = math.exp %895 : vector<24x16xf32>
    %cst_168 = arith.constant 1.000000e+00 : f32
    %897 = vector.broadcast %cst_168 : f32 to vector<24x16xf32>
    %898 = arith.addf %897, %896 : vector<24x16xf32>
    %899 = arith.divf %897, %898 : vector<24x16xf32>
    %900 = vector.extract_strided_slice %891 {offsets = [0, 16], sizes = [24, 16], strides = [1, 1]} : vector<24x48xf32> to vector<24x16xf32>
    %901 = vector.extract_strided_slice %890 {offsets = [0, 16], sizes = [24, 16], strides = [1, 1]} : vector<24x48xf32> to vector<24x16xf32>
    %902 = arith.addf %900, %901 : vector<24x16xf32>
    %903 = arith.negf %902 : vector<24x16xf32>
    %904 = math.exp %903 : vector<24x16xf32>
    %cst_169 = arith.constant 1.000000e+00 : f32
    %905 = vector.broadcast %cst_169 : f32 to vector<24x16xf32>
    %906 = arith.addf %905, %904 : vector<24x16xf32>
    %907 = arith.divf %905, %906 : vector<24x16xf32>
    %908 = vector.extract_strided_slice %891 {offsets = [0, 32], sizes = [24, 16], strides = [1, 1]} : vector<24x48xf32> to vector<24x16xf32>
    %909 = vector.extract_strided_slice %890 {offsets = [0, 32], sizes = [24, 16], strides = [1, 1]} : vector<24x48xf32> to vector<24x16xf32>
    %910 = arith.mulf %899, %909 : vector<24x16xf32>
    %911 = arith.addf %908, %910 : vector<24x16xf32>
    %912 = math.tanh %911 : vector<24x16xf32>
    %cst_170 = arith.constant 1.000000e+00 : f32
    %913 = vector.broadcast %cst_170 : f32 to vector<24x16xf32>
    %914 = arith.subf %913, %907 : vector<24x16xf32>
    %915 = arith.mulf %914, %912 : vector<24x16xf32>
    %916 = arith.mulf %907, %887 : vector<24x16xf32>
    %917 = arith.addf %915, %916 : vector<24x16xf32>
    %918 = arith.truncf %917 : vector<24x16xf32> to vector<24x16xbf16>
    %cst_171 = arith.constant dense<0.000000e+00> : vector<24x48xf32>
    %919 = tpu.matmul %918, %847, %cst_171 {dimension_numbers = #tpu.dot_dimension_numbers<[1], [0], [0], [1], [0, 0, 1, 1], [], []>} : vector<24x16xbf16>, vector<16x48xbf16>, vector<24x48xf32> -> vector<24x48xf32>
    %920 = arith.addf %919, %856 : vector<24x48xf32>
    %921 = vector.extract_strided_slice %854 {offsets = [48, 0], sizes = [24, 48], strides = [1, 1]} : vector<192x48xf32> to vector<24x48xf32>
    %922 = vector.extract_strided_slice %921 {offsets = [0, 0], sizes = [24, 16], strides = [1, 1]} : vector<24x48xf32> to vector<24x16xf32>
    %923 = vector.extract_strided_slice %920 {offsets = [0, 0], sizes = [24, 16], strides = [1, 1]} : vector<24x48xf32> to vector<24x16xf32>
    %924 = arith.addf %922, %923 : vector<24x16xf32>
    %925 = arith.negf %924 : vector<24x16xf32>
    %926 = math.exp %925 : vector<24x16xf32>
    %cst_172 = arith.constant 1.000000e+00 : f32
    %927 = vector.broadcast %cst_172 : f32 to vector<24x16xf32>
    %928 = arith.addf %927, %926 : vector<24x16xf32>
    %929 = arith.divf %927, %928 : vector<24x16xf32>
    %930 = vector.extract_strided_slice %921 {offsets = [0, 16], sizes = [24, 16], strides = [1, 1]} : vector<24x48xf32> to vector<24x16xf32>
    %931 = vector.extract_strided_slice %920 {offsets = [0, 16], sizes = [24, 16], strides = [1, 1]} : vector<24x48xf32> to vector<24x16xf32>
    %932 = arith.addf %930, %931 : vector<24x16xf32>
    %933 = arith.negf %932 : vector<24x16xf32>
    %934 = math.exp %933 : vector<24x16xf32>
    %cst_173 = arith.constant 1.000000e+00 : f32
    %935 = vector.broadcast %cst_173 : f32 to vector<24x16xf32>
    %936 = arith.addf %935, %934 : vector<24x16xf32>
    %937 = arith.divf %935, %936 : vector<24x16xf32>
    %938 = vector.extract_strided_slice %921 {offsets = [0, 32], sizes = [24, 16], strides = [1, 1]} : vector<24x48xf32> to vector<24x16xf32>
    %939 = vector.extract_strided_slice %920 {offsets = [0, 32], sizes = [24, 16], strides = [1, 1]} : vector<24x48xf32> to vector<24x16xf32>
    %940 = arith.mulf %929, %939 : vector<24x16xf32>
    %941 = arith.addf %938, %940 : vector<24x16xf32>
    %942 = math.tanh %941 : vector<24x16xf32>
    %cst_174 = arith.constant 1.000000e+00 : f32
    %943 = vector.broadcast %cst_174 : f32 to vector<24x16xf32>
    %944 = arith.subf %943, %937 : vector<24x16xf32>
    %945 = arith.mulf %944, %942 : vector<24x16xf32>
    %946 = arith.mulf %937, %917 : vector<24x16xf32>
    %947 = arith.addf %945, %946 : vector<24x16xf32>
    %948 = arith.truncf %947 : vector<24x16xf32> to vector<24x16xbf16>
    %cst_175 = arith.constant dense<0.000000e+00> : vector<24x48xf32>
    %949 = tpu.matmul %948, %847, %cst_175 {dimension_numbers = #tpu.dot_dimension_numbers<[1], [0], [0], [1], [0, 0, 1, 1], [], []>} : vector<24x16xbf16>, vector<16x48xbf16>, vector<24x48xf32> -> vector<24x48xf32>
    %950 = arith.addf %949, %856 : vector<24x48xf32>
    %951 = vector.extract_strided_slice %854 {offsets = [72, 0], sizes = [24, 48], strides = [1, 1]} : vector<192x48xf32> to vector<24x48xf32>
    %952 = vector.extract_strided_slice %951 {offsets = [0, 0], sizes = [24, 16], strides = [1, 1]} : vector<24x48xf32> to vector<24x16xf32>
    %953 = vector.extract_strided_slice %950 {offsets = [0, 0], sizes = [24, 16], strides = [1, 1]} : vector<24x48xf32> to vector<24x16xf32>
    %954 = arith.addf %952, %953 : vector<24x16xf32>
    %955 = arith.negf %954 : vector<24x16xf32>
    %956 = math.exp %955 : vector<24x16xf32>
    %cst_176 = arith.constant 1.000000e+00 : f32
    %957 = vector.broadcast %cst_176 : f32 to vector<24x16xf32>
    %958 = arith.addf %957, %956 : vector<24x16xf32>
    %959 = arith.divf %957, %958 : vector<24x16xf32>
    %960 = vector.extract_strided_slice %951 {offsets = [0, 16], sizes = [24, 16], strides = [1, 1]} : vector<24x48xf32> to vector<24x16xf32>
    %961 = vector.extract_strided_slice %950 {offsets = [0, 16], sizes = [24, 16], strides = [1, 1]} : vector<24x48xf32> to vector<24x16xf32>
    %962 = arith.addf %960, %961 : vector<24x16xf32>
    %963 = arith.negf %962 : vector<24x16xf32>
    %964 = math.exp %963 : vector<24x16xf32>
    %cst_177 = arith.constant 1.000000e+00 : f32
    %965 = vector.broadcast %cst_177 : f32 to vector<24x16xf32>
    %966 = arith.addf %965, %964 : vector<24x16xf32>
    %967 = arith.divf %965, %966 : vector<24x16xf32>
    %968 = vector.extract_strided_slice %951 {offsets = [0, 32], sizes = [24, 16], strides = [1, 1]} : vector<24x48xf32> to vector<24x16xf32>
    %969 = vector.extract_strided_slice %950 {offsets = [0, 32], sizes = [24, 16], strides = [1, 1]} : vector<24x48xf32> to vector<24x16xf32>
    %970 = arith.mulf %959, %969 : vector<24x16xf32>
    %971 = arith.addf %968, %970 : vector<24x16xf32>
    %972 = math.tanh %971 : vector<24x16xf32>
    %cst_178 = arith.constant 1.000000e+00 : f32
    %973 = vector.broadcast %cst_178 : f32 to vector<24x16xf32>
    %974 = arith.subf %973, %967 : vector<24x16xf32>
    %975 = arith.mulf %974, %972 : vector<24x16xf32>
    %976 = arith.mulf %967, %947 : vector<24x16xf32>
    %977 = arith.addf %975, %976 : vector<24x16xf32>
    %978 = arith.truncf %977 : vector<24x16xf32> to vector<24x16xbf16>
    %cst_179 = arith.constant dense<0.000000e+00> : vector<24x48xf32>
    %979 = tpu.matmul %978, %847, %cst_179 {dimension_numbers = #tpu.dot_dimension_numbers<[1], [0], [0], [1], [0, 0, 1, 1], [], []>} : vector<24x16xbf16>, vector<16x48xbf16>, vector<24x48xf32> -> vector<24x48xf32>
    %980 = arith.addf %979, %856 : vector<24x48xf32>
    %981 = vector.extract_strided_slice %854 {offsets = [96, 0], sizes = [24, 48], strides = [1, 1]} : vector<192x48xf32> to vector<24x48xf32>
    %982 = vector.extract_strided_slice %981 {offsets = [0, 0], sizes = [24, 16], strides = [1, 1]} : vector<24x48xf32> to vector<24x16xf32>
    %983 = vector.extract_strided_slice %980 {offsets = [0, 0], sizes = [24, 16], strides = [1, 1]} : vector<24x48xf32> to vector<24x16xf32>
    %984 = arith.addf %982, %983 : vector<24x16xf32>
    %985 = arith.negf %984 : vector<24x16xf32>
    %986 = math.exp %985 : vector<24x16xf32>
    %cst_180 = arith.constant 1.000000e+00 : f32
    %987 = vector.broadcast %cst_180 : f32 to vector<24x16xf32>
    %988 = arith.addf %987, %986 : vector<24x16xf32>
    %989 = arith.divf %987, %988 : vector<24x16xf32>
    %990 = vector.extract_strided_slice %981 {offsets = [0, 16], sizes = [24, 16], strides = [1, 1]} : vector<24x48xf32> to vector<24x16xf32>
    %991 = vector.extract_strided_slice %980 {offsets = [0, 16], sizes = [24, 16], strides = [1, 1]} : vector<24x48xf32> to vector<24x16xf32>
    %992 = arith.addf %990, %991 : vector<24x16xf32>
    %993 = arith.negf %992 : vector<24x16xf32>
    %994 = math.exp %993 : vector<24x16xf32>
    %cst_181 = arith.constant 1.000000e+00 : f32
    %995 = vector.broadcast %cst_181 : f32 to vector<24x16xf32>
    %996 = arith.addf %995, %994 : vector<24x16xf32>
    %997 = arith.divf %995, %996 : vector<24x16xf32>
    %998 = vector.extract_strided_slice %981 {offsets = [0, 32], sizes = [24, 16], strides = [1, 1]} : vector<24x48xf32> to vector<24x16xf32>
    %999 = vector.extract_strided_slice %980 {offsets = [0, 32], sizes = [24, 16], strides = [1, 1]} : vector<24x48xf32> to vector<24x16xf32>
    %1000 = arith.mulf %989, %999 : vector<24x16xf32>
    %1001 = arith.addf %998, %1000 : vector<24x16xf32>
    %1002 = math.tanh %1001 : vector<24x16xf32>
    %cst_182 = arith.constant 1.000000e+00 : f32
    %1003 = vector.broadcast %cst_182 : f32 to vector<24x16xf32>
    %1004 = arith.subf %1003, %997 : vector<24x16xf32>
    %1005 = arith.mulf %1004, %1002 : vector<24x16xf32>
    %1006 = arith.mulf %997, %977 : vector<24x16xf32>
    %1007 = arith.addf %1005, %1006 : vector<24x16xf32>
    %1008 = arith.truncf %1007 : vector<24x16xf32> to vector<24x16xbf16>
    %cst_183 = arith.constant dense<0.000000e+00> : vector<24x48xf32>
    %1009 = tpu.matmul %1008, %847, %cst_183 {dimension_numbers = #tpu.dot_dimension_numbers<[1], [0], [0], [1], [0, 0, 1, 1], [], []>} : vector<24x16xbf16>, vector<16x48xbf16>, vector<24x48xf32> -> vector<24x48xf32>
    %1010 = arith.addf %1009, %856 : vector<24x48xf32>
    %1011 = vector.extract_strided_slice %854 {offsets = [120, 0], sizes = [24, 48], strides = [1, 1]} : vector<192x48xf32> to vector<24x48xf32>
    %1012 = vector.extract_strided_slice %1011 {offsets = [0, 0], sizes = [24, 16], strides = [1, 1]} : vector<24x48xf32> to vector<24x16xf32>
    %1013 = vector.extract_strided_slice %1010 {offsets = [0, 0], sizes = [24, 16], strides = [1, 1]} : vector<24x48xf32> to vector<24x16xf32>
    %1014 = arith.addf %1012, %1013 : vector<24x16xf32>
    %1015 = arith.negf %1014 : vector<24x16xf32>
    %1016 = math.exp %1015 : vector<24x16xf32>
    %cst_184 = arith.constant 1.000000e+00 : f32
    %1017 = vector.broadcast %cst_184 : f32 to vector<24x16xf32>
    %1018 = arith.addf %1017, %1016 : vector<24x16xf32>
    %1019 = arith.divf %1017, %1018 : vector<24x16xf32>
    %1020 = vector.extract_strided_slice %1011 {offsets = [0, 16], sizes = [24, 16], strides = [1, 1]} : vector<24x48xf32> to vector<24x16xf32>
    %1021 = vector.extract_strided_slice %1010 {offsets = [0, 16], sizes = [24, 16], strides = [1, 1]} : vector<24x48xf32> to vector<24x16xf32>
    %1022 = arith.addf %1020, %1021 : vector<24x16xf32>
    %1023 = arith.negf %1022 : vector<24x16xf32>
    %1024 = math.exp %1023 : vector<24x16xf32>
    %cst_185 = arith.constant 1.000000e+00 : f32
    %1025 = vector.broadcast %cst_185 : f32 to vector<24x16xf32>
    %1026 = arith.addf %1025, %1024 : vector<24x16xf32>
    %1027 = arith.divf %1025, %1026 : vector<24x16xf32>
    %1028 = vector.extract_strided_slice %1011 {offsets = [0, 32], sizes = [24, 16], strides = [1, 1]} : vector<24x48xf32> to vector<24x16xf32>
    %1029 = vector.extract_strided_slice %1010 {offsets = [0, 32], sizes = [24, 16], strides = [1, 1]} : vector<24x48xf32> to vector<24x16xf32>
    %1030 = arith.mulf %1019, %1029 : vector<24x16xf32>
    %1031 = arith.addf %1028, %1030 : vector<24x16xf32>
    %1032 = math.tanh %1031 : vector<24x16xf32>
    %cst_186 = arith.constant 1.000000e+00 : f32
    %1033 = vector.broadcast %cst_186 : f32 to vector<24x16xf32>
    %1034 = arith.subf %1033, %1027 : vector<24x16xf32>
    %1035 = arith.mulf %1034, %1032 : vector<24x16xf32>
    %1036 = arith.mulf %1027, %1007 : vector<24x16xf32>
    %1037 = arith.addf %1035, %1036 : vector<24x16xf32>
    %1038 = arith.truncf %1037 : vector<24x16xf32> to vector<24x16xbf16>
    %cst_187 = arith.constant dense<0.000000e+00> : vector<24x48xf32>
    %1039 = tpu.matmul %1038, %847, %cst_187 {dimension_numbers = #tpu.dot_dimension_numbers<[1], [0], [0], [1], [0, 0, 1, 1], [], []>} : vector<24x16xbf16>, vector<16x48xbf16>, vector<24x48xf32> -> vector<24x48xf32>
    %1040 = arith.addf %1039, %856 : vector<24x48xf32>
    %1041 = vector.extract_strided_slice %854 {offsets = [144, 0], sizes = [24, 48], strides = [1, 1]} : vector<192x48xf32> to vector<24x48xf32>
    %1042 = vector.extract_strided_slice %1041 {offsets = [0, 0], sizes = [24, 16], strides = [1, 1]} : vector<24x48xf32> to vector<24x16xf32>
    %1043 = vector.extract_strided_slice %1040 {offsets = [0, 0], sizes = [24, 16], strides = [1, 1]} : vector<24x48xf32> to vector<24x16xf32>
    %1044 = arith.addf %1042, %1043 : vector<24x16xf32>
    %1045 = arith.negf %1044 : vector<24x16xf32>
    %1046 = math.exp %1045 : vector<24x16xf32>
    %cst_188 = arith.constant 1.000000e+00 : f32
    %1047 = vector.broadcast %cst_188 : f32 to vector<24x16xf32>
    %1048 = arith.addf %1047, %1046 : vector<24x16xf32>
    %1049 = arith.divf %1047, %1048 : vector<24x16xf32>
    %1050 = vector.extract_strided_slice %1041 {offsets = [0, 16], sizes = [24, 16], strides = [1, 1]} : vector<24x48xf32> to vector<24x16xf32>
    %1051 = vector.extract_strided_slice %1040 {offsets = [0, 16], sizes = [24, 16], strides = [1, 1]} : vector<24x48xf32> to vector<24x16xf32>
    %1052 = arith.addf %1050, %1051 : vector<24x16xf32>
    %1053 = arith.negf %1052 : vector<24x16xf32>
    %1054 = math.exp %1053 : vector<24x16xf32>
    %cst_189 = arith.constant 1.000000e+00 : f32
    %1055 = vector.broadcast %cst_189 : f32 to vector<24x16xf32>
    %1056 = arith.addf %1055, %1054 : vector<24x16xf32>
    %1057 = arith.divf %1055, %1056 : vector<24x16xf32>
    %1058 = vector.extract_strided_slice %1041 {offsets = [0, 32], sizes = [24, 16], strides = [1, 1]} : vector<24x48xf32> to vector<24x16xf32>
    %1059 = vector.extract_strided_slice %1040 {offsets = [0, 32], sizes = [24, 16], strides = [1, 1]} : vector<24x48xf32> to vector<24x16xf32>
    %1060 = arith.mulf %1049, %1059 : vector<24x16xf32>
    %1061 = arith.addf %1058, %1060 : vector<24x16xf32>
    %1062 = math.tanh %1061 : vector<24x16xf32>
    %cst_190 = arith.constant 1.000000e+00 : f32
    %1063 = vector.broadcast %cst_190 : f32 to vector<24x16xf32>
    %1064 = arith.subf %1063, %1057 : vector<24x16xf32>
    %1065 = arith.mulf %1064, %1062 : vector<24x16xf32>
    %1066 = arith.mulf %1057, %1037 : vector<24x16xf32>
    %1067 = arith.addf %1065, %1066 : vector<24x16xf32>
    %1068 = arith.truncf %1067 : vector<24x16xf32> to vector<24x16xbf16>
    %cst_191 = arith.constant dense<0.000000e+00> : vector<24x48xf32>
    %1069 = tpu.matmul %1068, %847, %cst_191 {dimension_numbers = #tpu.dot_dimension_numbers<[1], [0], [0], [1], [0, 0, 1, 1], [], []>} : vector<24x16xbf16>, vector<16x48xbf16>, vector<24x48xf32> -> vector<24x48xf32>
    %1070 = arith.addf %1069, %856 : vector<24x48xf32>
    %1071 = vector.extract_strided_slice %854 {offsets = [168, 0], sizes = [24, 48], strides = [1, 1]} : vector<192x48xf32> to vector<24x48xf32>
    %1072 = vector.extract_strided_slice %1071 {offsets = [0, 0], sizes = [24, 16], strides = [1, 1]} : vector<24x48xf32> to vector<24x16xf32>
    %1073 = vector.extract_strided_slice %1070 {offsets = [0, 0], sizes = [24, 16], strides = [1, 1]} : vector<24x48xf32> to vector<24x16xf32>
    %1074 = arith.addf %1072, %1073 : vector<24x16xf32>
    %1075 = arith.negf %1074 : vector<24x16xf32>
    %1076 = math.exp %1075 : vector<24x16xf32>
    %cst_192 = arith.constant 1.000000e+00 : f32
    %1077 = vector.broadcast %cst_192 : f32 to vector<24x16xf32>
    %1078 = arith.addf %1077, %1076 : vector<24x16xf32>
    %1079 = arith.divf %1077, %1078 : vector<24x16xf32>
    %1080 = vector.extract_strided_slice %1071 {offsets = [0, 16], sizes = [24, 16], strides = [1, 1]} : vector<24x48xf32> to vector<24x16xf32>
    %1081 = vector.extract_strided_slice %1070 {offsets = [0, 16], sizes = [24, 16], strides = [1, 1]} : vector<24x48xf32> to vector<24x16xf32>
    %1082 = arith.addf %1080, %1081 : vector<24x16xf32>
    %1083 = arith.negf %1082 : vector<24x16xf32>
    %1084 = math.exp %1083 : vector<24x16xf32>
    %cst_193 = arith.constant 1.000000e+00 : f32
    %1085 = vector.broadcast %cst_193 : f32 to vector<24x16xf32>
    %1086 = arith.addf %1085, %1084 : vector<24x16xf32>
    %1087 = arith.divf %1085, %1086 : vector<24x16xf32>
    %1088 = vector.extract_strided_slice %1071 {offsets = [0, 32], sizes = [24, 16], strides = [1, 1]} : vector<24x48xf32> to vector<24x16xf32>
    %1089 = vector.extract_strided_slice %1070 {offsets = [0, 32], sizes = [24, 16], strides = [1, 1]} : vector<24x48xf32> to vector<24x16xf32>
    %1090 = arith.mulf %1079, %1089 : vector<24x16xf32>
    %1091 = arith.addf %1088, %1090 : vector<24x16xf32>
    %1092 = math.tanh %1091 : vector<24x16xf32>
    %cst_194 = arith.constant 1.000000e+00 : f32
    %1093 = vector.broadcast %cst_194 : f32 to vector<24x16xf32>
    %1094 = arith.subf %1093, %1087 : vector<24x16xf32>
    %1095 = arith.mulf %1094, %1092 : vector<24x16xf32>
    %1096 = arith.mulf %1087, %1067 : vector<24x16xf32>
    %1097 = arith.addf %1095, %1096 : vector<24x16xf32>
    %1098 = vector.shape_cast %887 : vector<24x16xf32> to vector<1x24x16xf32>
    %1099 = vector.shape_cast %917 : vector<24x16xf32> to vector<1x24x16xf32>
    %1100 = vector.shape_cast %947 : vector<24x16xf32> to vector<1x24x16xf32>
    %1101 = vector.shape_cast %977 : vector<24x16xf32> to vector<1x24x16xf32>
    %1102 = vector.shape_cast %1007 : vector<24x16xf32> to vector<1x24x16xf32>
    %1103 = vector.shape_cast %1037 : vector<24x16xf32> to vector<1x24x16xf32>
    %1104 = vector.shape_cast %1067 : vector<24x16xf32> to vector<1x24x16xf32>
    %1105 = vector.shape_cast %1097 : vector<24x16xf32> to vector<1x24x16xf32>
    %1106 = tpu.concatenate %1098, %1099, %1100, %1101, %1102, %1103, %1104, %1105 in 0 : vector<1x24x16xf32>, vector<1x24x16xf32>, vector<1x24x16xf32>, vector<1x24x16xf32>, vector<1x24x16xf32>, vector<1x24x16xf32>, vector<1x24x16xf32>, vector<1x24x16xf32> -> vector<8x24x16xf32>
    %c208 = arith.constant 208 : index
    %c0_195 = arith.constant 0 : index
    %1107 = vector.load %arg1[%c208, %c0_195] : memref<224x128xbf16, #tpu.memory_space<vmem>>, vector<16x1xbf16>
    %c56 = arith.constant 56 : index
    %c0_196 = arith.constant 0 : index
    %1108 = vector.load %arg2[%c56, %c0_196] : memref<64x128xf32, #tpu.memory_space<vmem>>, vector<1x1xf32>
    %1109 = vector.shape_cast %1106 : vector<8x24x16xf32> to vector<192x16xf32>
    %1110 = arith.truncf %1109 : vector<192x16xf32> to vector<192x16xbf16>
    %cst_197 = arith.constant dense<0.000000e+00> : vector<192x1xf32>
    %1111 = tpu.matmul %1110, %1107, %cst_197 {dimension_numbers = #tpu.dot_dimension_numbers<[1], [0], [0], [1], [0, 0, 1, 1], [], []>} : vector<192x16xbf16>, vector<16x1xbf16>, vector<192x1xf32> -> vector<192x1xf32>
    %1112 = vector.broadcast %1108 : vector<1x1xf32> to vector<192x1xf32>
    %1113 = arith.addf %1111, %1112 : vector<192x1xf32>
    %1114 = vector.shape_cast %1113 : vector<192x1xf32> to vector<8x24x1xf32>
    %1115 = arith.negf %1114 : vector<8x24x1xf32>
    %1116 = math.exp %1115 : vector<8x24x1xf32>
    %cst_198 = arith.constant 1.000000e+00 : f32
    %1117 = vector.broadcast %cst_198 : f32 to vector<8x24x1xf32>
    %1118 = arith.addf %1117, %1116 : vector<8x24x1xf32>
    %1119 = arith.divf %1117, %1118 : vector<8x24x1xf32>
    %1120 = math.log %1119 : vector<8x24x1xf32>
    %cst_199 = arith.constant -1.000000e+02 : f32
    %1121 = vector.broadcast %cst_199 : f32 to vector<8x24x1xf32>
    %1122 = arith.maximumf %1120, %1121 : vector<8x24x1xf32>
    %cst_200 = arith.constant 1.000000e+00 : f32
    %1123 = vector.broadcast %cst_200 : f32 to vector<8x24x1xf32>
    %1124 = arith.subf %1123, %1119 : vector<8x24x1xf32>
    %1125 = math.log %1124 : vector<8x24x1xf32>
    %cst_201 = arith.constant -1.000000e+02 : f32
    %1126 = vector.broadcast %cst_201 : f32 to vector<8x24x1xf32>
    %1127 = arith.maximumf %1125, %1126 : vector<8x24x1xf32>
    %1128 = tpu.concatenate %6, %6 in 1 : vector<1x8x1xf32>, vector<1x8x1xf32> -> vector<1x16x1xf32>
    %1129 = vector.extract_strided_slice %1122 {offsets = [0, 0, 0], sizes = [8, 16, 1], strides = [1, 1, 1]} : vector<8x24x1xf32> to vector<8x16x1xf32>
    %1130 = vector.broadcast %1128 : vector<1x16x1xf32> to vector<8x16x1xf32>
    %1131 = arith.mulf %1130, %1129 : vector<8x16x1xf32>
    %1132 = vector.shape_cast %1131 : vector<8x16x1xf32> to vector<128x1xf32>
    %1133 = vector.shape_cast %1132 : vector<128x1xf32> to vector<1x128x1xf32>
    %cst_202 = arith.constant dense<0.000000e+00> : vector<1xf32>
    %1134 = vector.multi_reduction <add>, %1133, %cst_202 [1, 2] : vector<1x128x1xf32> to vector<1xf32>
    %1135 = vector.shape_cast %1134 : vector<1xf32> to vector<1x1x1xf32>
    %1136 = vector.extract %1135[0, 0, 0] : f32 from vector<1x1x1xf32>
    %1137 = vector.broadcast %1136 : f32 to vector<1x1xf32>
    %1138 = vector.extract_strided_slice %1127 {offsets = [0, 16, 0], sizes = [8, 8, 1], strides = [1, 1, 1]} : vector<8x24x1xf32> to vector<8x8x1xf32>
    %1139 = vector.broadcast %6 : vector<1x8x1xf32> to vector<8x8x1xf32>
    %1140 = arith.mulf %1139, %1138 : vector<8x8x1xf32>
    %1141 = vector.shape_cast %1140 : vector<8x8x1xf32> to vector<64x1xf32>
    %1142 = vector.shape_cast %1141 : vector<64x1xf32> to vector<1x64x1xf32>
    %cst_203 = arith.constant dense<0.000000e+00> : vector<1xf32>
    %1143 = vector.multi_reduction <add>, %1142, %cst_203 [1, 2] : vector<1x64x1xf32> to vector<1xf32>
    %1144 = vector.shape_cast %1143 : vector<1xf32> to vector<1x1x1xf32>
    %1145 = vector.extract %1144[0, 0, 0] : f32 from vector<1x1x1xf32>
    %1146 = vector.broadcast %1145 : f32 to vector<1x1xf32>
    %1147 = arith.addf %1137, %1146 : vector<1x1xf32>
    %cst_204 = arith.constant 0.000000e+00 : f32
    %1148 = vector.broadcast %cst_204 : f32 to vector<1x1xf32>
    %1149 = arith.subf %1148, %1147 : vector<1x1xf32>
    %cst_205 = arith.constant 2.000000e+00 : f32
    %1150 = vector.broadcast %cst_205 : f32 to vector<1x1xf32>
    %1151 = arith.divf %1149, %1150 : vector<1x1xf32>
    %c0_206 = arith.constant 0 : index
    %c0_207 = arith.constant 0 : index
    %c0_208 = arith.constant 0 : index
    %1152 = vector.load %arg3[%c0_206, %c0_207, %c0_208] : memref<8x8x8xf32, #tpu.memory_space<vmem>>, vector<8x8x8xf32>
    tpu.vector_store %arg3[%c0_206, %c0_207, %c0_208], %810 {strides = array<i32>} : memref<8x8x8xf32, #tpu.memory_space<vmem>>, vector<8x8x8xf32>,
    %1153 = tpu.concatenate %541, %844, %1151 in 1 : vector<1x1xf32>, vector<1x1xf32>, vector<1x1xf32> -> vector<1x3xf32>
    %c0_209 = arith.constant 0 : index
    %c0_210 = arith.constant 0 : index
    %1154 = vector.load %arg4[%c0_209, %c0_210] : memref<1x3xf32, #tpu.memory_space<vmem>>, vector<1x3xf32>
    tpu.vector_store %arg4[%c0_209, %c0_210], %1153 {strides = array<i32>} : memref<1x3xf32, #tpu.memory_space<vmem>>, vector<1x3xf32>,
    return
  }
}

</mosaic_0001>

<llo_original>
// kernel: forward.1
$region0: #{forward.1}
  #allocation0 [shape = 'u32[]', space=smem, size = 0x4, offset = 0x4, fixed_abs, tag = 'smem constant byte address 0x4 - core index']
  #allocation1 [shape = 'u32[144,128]{1,0:T(1,128)}', space=vmem, size = 0x12000, scoped, tag = 'internal scratch']
  %s0 = inlined_call_operand.vmem [shape: f32[8,56,8], index: 0, kind: input, shape index: {}]
  %s1 = inlined_call_operand.vmem [shape: bf16[224,128], index: 1, kind: input, shape index: {}]
  %s2 = inlined_call_operand.vmem [shape: f32[64,128], index: 2, kind: input, shape index: {}]
  %s3 = inlined_call_operand.vmem [shape: f32[8,8,8], index: 3, kind: output, shape index: {0}]
  %s4 = inlined_call_operand.vmem [shape: f32[1,3], index: 4, kind: output, shape index: {1}]
  %5 = xla_tuple %s3, %s4
  %s6 = sld [smem:[#allocation0]]
  $region30: #{forward.1} parent=0
    _
  %s8 = ssub.s32 1, %s6
  %s9 = scalar_select 0, %s8, %s6
  // Predicated region
  $region2: #{forward.1} parent=0 // pred_check
    _
  $region3: #{forward.1} parent=0 // pred_check_branch
    %11 = sbr.rel (0) target = $region5
  $region4: #{forward.1} parent=0 // pred_region
    _
  $region5: #{forward.1} parent=0 // pred_fallthru
    _
  // Predicated region
  $region6: #{forward.1} parent=0 // pred_check
    _
  $region7: #{forward.1} parent=0 // pred_check_branch
    %13 = sbr.rel (0) target = $region9
  $region8: #{forward.1} parent=0 // pred_region
    _
  $region9: #{forward.1} parent=0 // pred_fallthru
    _
  // Predicated region
  $region10: #{forward.1} parent=0 // pred_check
    _
  $region11: #{forward.1} parent=0 // pred_check_branch
    %15 = sbr.rel (0) target = $region13
  $region12: #{forward.1} parent=0 // pred_region
    _
  $region13: #{forward.1} parent=0 // pred_fallthru
    _
  %v17 = vld [vmem:[%s0] sm:$0xff]
  %v18 = vld [vmem:[%s0 + $0x38] sm:$0xff]
  %v19 = vld [vmem:[%s0 + $0x70] sm:$0xff]
  %v20 = vld [vmem:[%s0 + $0xa8] sm:$0xff]
  %v21 = vld [vmem:[%s0 + $0xe0] sm:$0xff]
  %v22 = vld [vmem:[%s0 + $0x118] sm:$0xff]
  %v23 = vld [vmem:[%s0 + $0x150] sm:$0xff]
  %v24 = vld [vmem:[%s0 + $0x188] sm:$0xff]
  %v25 = vld [vmem:[%s0 + $0x8] sm:$0xff]
  %v26 = vld [vmem:[%s0 + $0x40] sm:$0xff]
  %v27 = vld [vmem:[%s0 + $0x78] sm:$0xff]
  %v28 = vld [vmem:[%s0 + $0xb0] sm:$0xff]
  %v29 = vld [vmem:[%s0 + $0xe8] sm:$0xff]
  %v30 = vld [vmem:[%s0 + $0x120] sm:$0xff]
  %v31 = vld [vmem:[%s0 + $0x158] sm:$0xff]
  %v32 = vld [vmem:[%s0 + $0x190] sm:$0xff]
  %v33 = vld [vmem:[%s0 + $0x10] sm:$0xff]
  %v34 = vld [vmem:[%s0 + $0x48] sm:$0xff]
  %v35 = vld [vmem:[%s0 + $0x80] sm:$0xff]
  %v36 = vld [vmem:[%s0 + $0xb8] sm:$0xff]
  %v37 = vld [vmem:[%s0 + $0xf0] sm:$0xff]
  %v38 = vld [vmem:[%s0 + $0x128] sm:$0xff]
  %v39 = vld [vmem:[%s0 + $0x160] sm:$0xff]
  %v40 = vld [vmem:[%s0 + $0x198] sm:$0xff]
  %v41 = vld [vmem:[%s0 + $0x18] sm:$0xff]
  %v42 = vld [vmem:[%s0 + $0x50] sm:$0xff]
  %v43 = vld [vmem:[%s0 + $0x88] sm:$0xff]
  %v44 = vld [vmem:[%s0 + $0xc0] sm:$0xff]
  %v45 = vld [vmem:[%s0 + $0xf8] sm:$0xff]
  %v46 = vld [vmem:[%s0 + $0x130] sm:$0xff]
  %v47 = vld [vmem:[%s0 + $0x168] sm:$0xff]
  %v48 = vld [vmem:[%s0 + $0x1a0] sm:$0xff]
  %v49 = vld [vmem:[%s0 + $0x20] sm:$0xff]
  %v50 = vld [vmem:[%s0 + $0x58] sm:$0xff]
  %v51 = vld [vmem:[%s0 + $0x90] sm:$0xff]
  %v52 = vld [vmem:[%s0 + $0xc8] sm:$0xff]
  %v53 = vld [vmem:[%s0 + $0x100] sm:$0xff]
  %v54 = vld [vmem:[%s0 + $0x138] sm:$0xff]
  %v55 = vld [vmem:[%s0 + $0x170] sm:$0xff]
  %v56 = vld [vmem:[%s0 + $0x1a8] sm:$0xff]
  %v57 = vld [vmem:[%s0 + $0x28] sm:$0xff]
  %v58 = vld [vmem:[%s0 + $0x60] sm:$0xff]
  %v59 = vld [vmem:[%s0 + $0x98] sm:$0xff]
  %v60 = vld [vmem:[%s0 + $0xd0] sm:$0xff]
  %v61 = vld [vmem:[%s0 + $0x108] sm:$0xff]
  %v62 = vld [vmem:[%s0 + $0x140] sm:$0xff]
  %v63 = vld [vmem:[%s0 + $0x178] sm:$0xff]
  %v64 = vld [vmem:[%s0 + $0x1b0] sm:$0xff]
  %v65 = vld [vmem:[%s0 + $0x30] sm:$0xff]
  %v66 = vld [vmem:[%s1] sm:$0xf]
  %v67 = vld [vmem:[%s1 + $0x8] sm:$0xf]
  %v68 = vld [vmem:[%s1 + $0xc] sm:$0xf]
  %v69 = vld [vmem:[%s2] sm:$0x1]
  %v70 = vpack.c.bf16 %v18, %v17
  %v71 = vpack.c.bf16 %v20, %v19
  %v72 = vpack.c.bf16 %v22, %v21
  %v73 = vpack.c.bf16 %v24, %v23
  %v74 = vlaneseq
  %v75 = vshrl.u32 %v74, 7
  %v76 = vsub.s32 0, %v75
  %v77 = vrot.slane %v69, %v76
  %vm78 = vcmask 64512
  %v80 = vsel %vm78, %v70, 0
  %v83 = vsel %vm78, %v71, 0
  %v86 = vsel %vm78, %v72, 0
  %v89 = vsel %vm78, %v73, 0
  %vm91 = vcmask 1043456
  %v93 = vsel %vm91, %v66, 0
  %95 = vmatprep.subr.bf16.mxu0 0
  %96 = vmatpush1.bf16.msra.mxu0 0
  %97 = vmatprep.subr.bf16.mxu0 0
  %98 = vmatpush1.bf16.msra.mxu0 0
  %99 = vmatprep.subr.bf16.mxu0 0
  %100 = vmatpush1.bf16.msra.mxu0 0
  %101 = vmatprep.subr.bf16.mxu0 0
  %102 = vmatpush1.bf16.msra.mxu0 0
  %103 = vmatprep.subr.bf16.mxu0 0
  %104 = vmatpush1.bf16.msra.mxu0 0
  %105 = vmatprep.subr.bf16.mxu0 0
  %106 = vmatpush1.bf16.msra.mxu0 0
  %107 = vmatprep.subr.bf16.mxu0 0
  %108 = vmatpush1.bf16.msra.mxu0 0
  %109 = vmatprep.subr.bf16.mxu0 0
  %110 = vmatpush1.bf16.msra.mxu0 %v93
  %111 = vmatprep.subr.bf16.mxu0 0
  %112 = vmatpush2.bf16.msra.mxu0 0
  %113 = vmatprep.subr.bf16.mxu0 0
  %114 = vmatpush2.bf16.msra.mxu0 0
  %115 = vmatprep.subr.bf16.mxu0 0
  %116 = vmatpush2.bf16.msra.mxu0 0
  %117 = vmatprep.subr.bf16.mxu0 0
  %118 = vmatpush2.bf16.msra.mxu0 0
  %119 = vmatprep.subr.bf16.mxu0 0
  %120 = vmatpush2.bf16.msra.mxu0 0
  %121 = vmatprep.subr.bf16.mxu0 0
  %122 = vmatpush2.bf16.msra.mxu0 0
  %123 = vmatprep.subr.bf16.mxu0 0
  %124 = vmatpush2.bf16.msra.mxu0 0
  %125 = vmatprep.subr.bf16.mxu0 0
  %126 = vmatpush2.bf16.msra.mxu0 0
  %127 = vmatprep.mubr.bf16.mxu0 0
  %128 = vmatmul.mubr.bf16.gmra.mxu0 %v80
  %v129 = vpop.f32.mrf.mxu0
  %v130 = vadd.f32 %v77, %v129
  %v131 = vpop.f32.mrf.mxu0
  %v132 = vpop.f32.mrf.mxu0
  %v133 = vadd.f32 %v77, %v132
  %v134 = vpop.f32.mrf.mxu0
  %135 = vmatprep.mubr.bf16.mxu0 0
  %136 = vmatmul.mubr.bf16.gmra.mxu0 %v83
  %v137 = vpop.f32.mrf.mxu0
  %v138 = vadd.f32 %v77, %v137
  %v139 = vpop.f32.mrf.mxu0
  %v140 = vpop.f32.mrf.mxu0
  %v141 = vadd.f32 %v77, %v140
  %v142 = vpop.f32.mrf.mxu0
  %143 = vmatprep.mubr.bf16.mxu0 0
  %144 = vmatmul.mubr.bf16.gmra.mxu0 %v86
  %v145 = vpop.f32.mrf.mxu0
  %v146 = vadd.f32 %v77, %v145
  %v147 = vpop.f32.mrf.mxu0
  %v148 = vpop.f32.mrf.mxu0
  %v149 = vadd.f32 %v77, %v148
  %v150 = vpop.f32.mrf.mxu0
  %151 = vmatprep.mubr.bf16.mxu0 0
  %152 = vmatmul.mubr.bf16.gmra.mxu0 %v89
  %v153 = vpop.f32.mrf.mxu0
  %v154 = vadd.f32 %v77, %v153
  %v155 = vpop.f32.mrf.mxu0
  %v156 = vpop.f32.mrf.mxu0
  %v157 = vadd.f32 %v77, %v156
  %v158 = vpop.f32.mrf.mxu0
  %159 = vdwg.mxu0
  %v162 = vunpack.c.l.b16 %v67
  %v163 = vunpack.c.l.b16 %v68
  %v164 = vpack.c.b16 %v163, %v162
  %vm166 = vcmask 130048
  %v168 = vsel %vm166, 0, 0
  %170 = vmatprep.subr.bf16.mxu0 0
  %171 = vmatpush1.bf16.msra.mxu0 0
  %172 = vmatprep.subr.bf16.mxu0 0
  %173 = vmatpush1.bf16.msra.mxu0 0
  %174 = vmatprep.subr.bf16.mxu0 0
  %175 = vmatpush1.bf16.msra.mxu0 0
  %176 = vmatprep.subr.bf16.mxu0 0
  %177 = vmatpush1.bf16.msra.mxu0 0
  %178 = vmatprep.subr.bf16.mxu0 0
  %179 = vmatpush1.bf16.msra.mxu0 0
  %180 = vmatprep.subr.bf16.mxu0 0
  %181 = vmatpush1.bf16.msra.mxu0 0
  %182 = vmatprep.subr.bf16.mxu0 0
  %183 = vmatpush1.bf16.msra.mxu0 0
  %184 = vmatprep.subr.bf16.mxu0 0
  %185 = vmatpush1.bf16.msra.mxu0 %v164
  %186 = vmatprep.subr.bf16.mxu0 0
  %187 = vmatpush2.bf16.msra.mxu0 0
  %188 = vmatprep.subr.bf16.mxu0 0
  %189 = vmatpush2.bf16.msra.mxu0 0
  %190 = vmatprep.subr.bf16.mxu0 0
  %191 = vmatpush2.bf16.msra.mxu0 0
  %192 = vmatprep.subr.bf16.mxu0 0
  %193 = vmatpush2.bf16.msra.mxu0 0
  %194 = vmatprep.subr.bf16.mxu0 0
  %195 = vmatpush2.bf16.msra.mxu0 0
  %196 = vmatprep.subr.bf16.mxu0 0
  %197 = vmatpush2.bf16.msra.mxu0 0
  %198 = vmatprep.subr.bf16.mxu0 0
  %199 = vmatpush2.bf16.msra.mxu0 0
  %200 = vmatprep.subr.bf16.mxu0 0
  %201 = vmatpush2.bf16.msra.mxu0 0
  %202 = vmatprep.mubr.bf16.mxu0 0
  %203 = vmatmul.mubr.bf16.gmra.mxu0 %v168
  %v204 = vpop.f32.mrf.mxu0
  %v205 = vadd.f32 0.0, %v204
  %v206 = vpop.f32.mrf.mxu0
  %v207 = vpop.f32.mrf.mxu0
  %v208 = vpop.f32.mrf.mxu0
  %209 = vdwg.mxu0
  %v210 = vadd.f32 %v130, %v205
  %v211 = vxor.u32 %v210, 2147483648
  %v212 = vmul.f32 %v211, 1.442695
  %v213 = vpow.pop %v212
  %v214 = vadd.f32 %v213, 1.0
  %v215 = vrcp.pop %v214
  %v216 = vmul.f32 1.0, %v215
  %v217 = vtanh.pop %v210
  %v218 = vmul.f32 %v216, 0.0
  %220 = vrot.lane.b32.xlu0 %v217, 96
  %v221 = vpop.permute.xlu0 %220
  %v223 = vmul.f32 %v216, %v221
  %225 = vrot.lane.b32.xlu0 %v223, 16
  %v226 = vpop.permute.xlu0 %225
  %v228 = vadd.f32 %v218, %v226
  %v229 = vtanh.pop %v228
  %231 = vrot.lane.b32.xlu0 %v229, 32
  %v232 = vpop.permute.xlu0 %231
  %v234 = vmul.f32 %v216, %v232
  %v235 = vpack.c.bf16 %v234, %v234
  %237 = vrot.lane.b32.xlu0 %v235, 80
  %v238 = vpop.permute.xlu0 %237
  %v240 = vsel %vm166, %v238, 0
  %242 = vmatprep.subr.bf16.mxu0 0
  %243 = vmatpush1.bf16.msra.mxu0 0
  %244 = vmatprep.subr.bf16.mxu0 0
  %245 = vmatpush1.bf16.msra.mxu0 0
  %246 = vmatprep.subr.bf16.mxu0 0
  %247 = vmatpush1.bf16.msra.mxu0 0
  %248 = vmatprep.subr.bf16.mxu0 0
  %249 = vmatpush1.bf16.msra.mxu0 0
  %250 = vmatprep.subr.bf16.mxu0 0
  %251 = vmatpush1.bf16.msra.mxu0 0
  %252 = vmatprep.subr.bf16.mxu0 0
  %253 = vmatpush1.bf16.msra.mxu0 0
  %254 = vmatprep.subr.bf16.mxu0 0
  %255 = vmatpush1.bf16.msra.mxu0 0
  %256 = vmatprep.subr.bf16.mxu0 0
  %257 = vmatpush1.bf16.msra.mxu0 %v164
  %258 = vmatprep.subr.bf16.mxu0 0
  %259 = vmatpush2.bf16.msra.mxu0 0
  %260 = vmatprep.subr.bf16.mxu0 0
  %261 = vmatpush2.bf16.msra.mxu0 0
  %262 = vmatprep.subr.bf16.mxu0 0
  %263 = vmatpush2.bf16.msra.mxu0 0
  %264 = vmatprep.subr.bf16.mxu0 0
  %265 = vmatpush2.bf16.msra.mxu0 0
  %266 = vmatprep.subr.bf16.mxu0 0
  %267 = vmatpush2.bf16.msra.mxu0 0
  %268 = vmatprep.subr.bf16.mxu0 0
  %269 = vmatpush2.bf16.msra.mxu0 0
  %270 = vmatprep.subr.bf16.mxu0 0
  %271 = vmatpush2.bf16.msra.mxu0 0
  %272 = vmatprep.subr.bf16.mxu0 0
  %273 = vmatpush2.bf16.msra.mxu0 0
  %274 = vmatprep.mubr.bf16.mxu0 0
  %275 = vmatmul.mubr.bf16.gmra.mxu0 %v240
  %v276 = vpop.f32.mrf.mxu0
  %v277 = vadd.f32 0.0, %v276
  %v278 = vpop.f32.mrf.mxu0
  %v279 = vpop.f32.mrf.mxu0
  %v280 = vpop.f32.mrf.mxu0
  %281 = vdwg.mxu0
  %v282 = vadd.f32 %v133, %v277
  %v283 = vxor.u32 %v282, 2147483648
  %v284 = vmul.f32 %v283, 1.442695
  %v285 = vpow.pop %v284
  %v286 = vadd.f32 %v285, 1.0
  %v287 = vrcp.pop %v286
  %v288 = vmul.f32 1.0, %v287
  %v289 = vtanh.pop %v282
  %v290 = vmul.f32 %v288, %v228
  %292 = vrot.lane.b32.xlu0 %v289, 96
  %v293 = vpop.permute.xlu0 %292
  %v295 = vmul.f32 %v288, %v293
  %297 = vrot.lane.b32.xlu0 %v295, 16
  %v298 = vpop.permute.xlu0 %297
  %v300 = vadd.f32 %v290, %v298
  %v301 = vtanh.pop %v300
  %303 = vrot.lane.b32.xlu0 %v301, 32
  %v304 = vpop.permute.xlu0 %303
  %v306 = vmul.f32 %v288, %v304
  %v307 = vpack.c.bf16 %v306, %v306
  %309 = vrot.lane.b32.xlu0 %v307, 80
  %v310 = vpop.permute.xlu0 %309
  %v312 = vsel %vm166, %v310, 0
  %314 = vmatprep.subr.bf16.mxu0 0
  %315 = vmatpush1.bf16.msra.mxu0 0
  %316 = vmatprep.subr.bf16.mxu0 0
  %317 = vmatpush1.bf16.msra.mxu0 0
  %318 = vmatprep.subr.bf16.mxu0 0
  %319 = vmatpush1.bf16.msra.mxu0 0
  %320 = vmatprep.subr.bf16.mxu0 0
  %321 = vmatpush1.bf16.msra.mxu0 0
  %322 = vmatprep.subr.bf16.mxu0 0
  %323 = vmatpush1.bf16.msra.mxu0 0
  %324 = vmatprep.subr.bf16.mxu0 0
  %325 = vmatpush1.bf16.msra.mxu0 0
  %326 = vmatprep.subr.bf16.mxu0 0
  %327 = vmatpush1.bf16.msra.mxu0 0
  %328 = vmatprep.subr.bf16.mxu0 0
  %329 = vmatpush1.bf16.msra.mxu0 %v164
  %330 = vmatprep.subr.bf16.mxu0 0
  %331 = vmatpush2.bf16.msra.mxu0 0
  %332 = vmatprep.subr.bf16.mxu0 0
  %333 = vmatpush2.bf16.msra.mxu0 0
  %334 = vmatprep.subr.bf16.mxu0 0
  %335 = vmatpush2.bf16.msra.mxu0 0
  %336 = vmatprep.subr.bf16.mxu0 0
  %337 = vmatpush2.bf16.msra.mxu0 0
  %338 = vmatprep.subr.bf16.mxu0 0
  %339 = vmatpush2.bf16.msra.mxu0 0
  %340 = vmatprep.subr.bf16.mxu0 0
  %341 = vmatpush2.bf16.msra.mxu0 0
  %342 = vmatprep.subr.bf16.mxu0 0
  %343 = vmatpush2.bf16.msra.mxu0 0
  %344 = vmatprep.subr.bf16.mxu0 0
  %345 = vmatpush2.bf16.msra.mxu0 0
  %346 = vmatprep.mubr.bf16.mxu0 0
  %347 = vmatmul.mubr.bf16.gmra.mxu0 %v312
  %v348 = vpop.f32.mrf.mxu0
  %v349 = vadd.f32 0.0, %v348
  %v350 = vpop.f32.mrf.mxu0
  %v351 = vpop.f32.mrf.mxu0
  %v352 = vpop.f32.mrf.mxu0
  %353 = vdwg.mxu0
  %v354 = vadd.f32 %v138, %v349
  %v355 = vxor.u32 %v354, 2147483648
  %v356 = vmul.f32 %v355, 1.442695
  %v357 = vpow.pop %v356
  %v358 = vadd.f32 %v357, 1.0
  %v359 = vrcp.pop %v358
  %v360 = vmul.f32 1.0, %v359
  %v361 = vtanh.pop %v354
  %v362 = vmul.f32 %v360, %v300
  %364 = vrot.lane.b32.xlu0 %v361, 96
  %v365 = vpop.permute.xlu0 %364
  %v367 = vmul.f32 %v360, %v365
  %369 = vrot.lane.b32.xlu0 %v367, 16
  %v370 = vpop.permute.xlu0 %369
  %v372 = vadd.f32 %v362, %v370
  %v373 = vtanh.pop %v372
  %375 = vrot.lane.b32.xlu0 %v373, 32
  %v376 = vpop.permute.xlu0 %375
  %v378 = vmul.f32 %v360, %v376
  %v379 = vpack.c.bf16 %v378, %v378
  %381 = vrot.lane.b32.xlu0 %v379, 80
  %v382 = vpop.permute.xlu0 %381
  %v384 = vsel %vm166, %v382, 0
  %386 = vmatprep.subr.bf16.mxu0 0
  %387 = vmatpush1.bf16.msra.mxu0 0
  %388 = vmatprep.subr.bf16.mxu0 0
  %389 = vmatpush1.bf16.msra.mxu0 0
  %390 = vmatprep.subr.bf16.mxu0 0
  %391 = vmatpush1.bf16.msra.mxu0 0
  %392 = vmatprep.subr.bf16.mxu0 0
  %393 = vmatpush1.bf16.msra.mxu0 0
  %394 = vmatprep.subr.bf16.mxu0 0
  %395 = vmatpush1.bf16.msra.mxu0 0
  %396 = vmatprep.subr.bf16.mxu0 0
  %397 = vmatpush1.bf16.msra.mxu0 0
  %398 = vmatprep.subr.bf16.mxu0 0
  %399 = vmatpush1.bf16.msra.mxu0 0
  %400 = vmatprep.subr.bf16.mxu0 0
  %401 = vmatpush1.bf16.msra.mxu0 %v164
  %402 = vmatprep.subr.bf16.mxu0 0
  %403 = vmatpush2.bf16.msra.mxu0 0
  %404 = vmatprep.subr.bf16.mxu0 0
  %405 = vmatpush2.bf16.msra.mxu0 0
  %406 = vmatprep.subr.bf16.mxu0 0
  %407 = vmatpush2.bf16.msra.mxu0 0
  %408 = vmatprep.subr.bf16.mxu0 0
  %409 = vmatpush2.bf16.msra.mxu0 0
  %410 = vmatprep.subr.bf16.mxu0 0
  %411 = vmatpush2.bf16.msra.mxu0 0
  %412 = vmatprep.subr.bf16.mxu0 0
  %413 = vmatpush2.bf16.msra.mxu0 0
  %414 = vmatprep.subr.bf16.mxu0 0
  %415 = vmatpush2.bf16.msra.mxu0 0
  %416 = vmatprep.subr.bf16.mxu0 0
  %417 = vmatpush2.bf16.msra.mxu0 0
  %418 = vmatprep.mubr.bf16.mxu0 0
  %419 = vmatmul.mubr.bf16.gmra.mxu0 %v384
  %v420 = vpop.f32.mrf.mxu0
  %v421 = vadd.f32 0.0, %v420
  %v422 = vpop.f32.mrf.mxu0
  %v423 = vpop.f32.mrf.mxu0
  %v424 = vpop.f32.mrf.mxu0
  %425 = vdwg.mxu0
  %v426 = vadd.f32 %v141, %v421
  %v427 = vxor.u32 %v426, 2147483648
  %v428 = vmul.f32 %v427, 1.442695
  %v429 = vpow.pop %v428
  %v430 = vadd.f32 %v429, 1.0
  %v431 = vrcp.pop %v430
  %v432 = vmul.f32 1.0, %v431
  %v433 = vtanh.pop %v426
  %v434 = vmul.f32 %v432, %v372
  %436 = vrot.lane.b32.xlu0 %v433, 96
  %v437 = vpop.permute.xlu0 %436
  %v439 = vmul.f32 %v432, %v437
  %441 = vrot.lane.b32.xlu0 %v439, 16
  %v442 = vpop.permute.xlu0 %441
  %v444 = vadd.f32 %v434, %v442
  %v445 = vtanh.pop %v444
  %447 = vrot.lane.b32.xlu0 %v445, 32
  %v448 = vpop.permute.xlu0 %447
  %v450 = vmul.f32 %v432, %v448
  %v451 = vpack.c.bf16 %v450, %v450
  %453 = vrot.lane.b32.xlu0 %v451, 80
  %v454 = vpop.permute.xlu0 %453
  %v456 = vsel %vm166, %v454, 0
  %458 = vmatprep.subr.bf16.mxu0 0
  %459 = vmatpush1.bf16.msra.mxu0 0
  %460 = vmatprep.subr.bf16.mxu0 0
  %461 = vmatpush1.bf16.msra.mxu0 0
  %462 = vmatprep.subr.bf16.mxu0 0
  %463 = vmatpush1.bf16.msra.mxu0 0
  %464 = vmatprep.subr.bf16.mxu0 0
  %465 = vmatpush1.bf16.msra.mxu0 0
  %466 = vmatprep.subr.bf16.mxu0 0
  %467 = vmatpush1.bf16.msra.mxu0 0
  %468 = vmatprep.subr.bf16.mxu0 0
  %469 = vmatpush1.bf16.msra.mxu0 0
  %470 = vmatprep.subr.bf16.mxu0 0
  %471 = vmatpush1.bf16.msra.mxu0 0
  %472 = vmatprep.subr.bf16.mxu0 0
  %473 = vmatpush1.bf16.msra.mxu0 %v164
  %474 = vmatprep.subr.bf16.mxu0 0
  %475 = vmatpush2.bf16.msra.mxu0 0
  %476 = vmatprep.subr.bf16.mxu0 0
  %477 = vmatpush2.bf16.msra.mxu0 0
  %478 = vmatprep.subr.bf16.mxu0 0
  %479 = vmatpush2.bf16.msra.mxu0 0
  %480 = vmatprep.subr.bf16.mxu0 0
  %481 = vmatpush2.bf16.msra.mxu0 0
  %482 = vmatprep.subr.bf16.mxu0 0
  %483 = vmatpush2.bf16.msra.mxu0 0
  %484 = vmatprep.subr.bf16.mxu0 0
  %485 = vmatpush2.bf16.msra.mxu0 0
  %486 = vmatprep.subr.bf16.mxu0 0
  %487 = vmatpush2.bf16.msra.mxu0 0
  %488 = vmatprep.subr.bf16.mxu0 0
  %489 = vmatpush2.bf16.msra.mxu0 0
  %490 = vmatprep.mubr.bf16.mxu0 0
  %491 = vmatmul.mubr.bf16.gmra.mxu0 %v456
  %v492 = vpop.f32.mrf.mxu0
  %v493 = vadd.f32 0.0, %v492
  %v494 = vpop.f32.mrf.mxu0
  %v495 = vpop.f32.mrf.mxu0
  %v496 = vpop.f32.mrf.mxu0
  %497 = vdwg.mxu0
  %v498 = vadd.f32 %v146, %v493
  %v499 = vxor.u32 %v498, 2147483648
  %v500 = vmul.f32 %v499, 1.442695
  %v501 = vpow.pop %v500
  %v502 = vadd.f32 %v501, 1.0
  %v503 = vrcp.pop %v502
  %v504 = vmul.f32 1.0, %v503
  %v505 = vtanh.pop %v498
  %v506 = vmul.f32 %v504, %v444
  %508 = vrot.lane.b32.xlu0 %v505, 96
  %v509 = vpop.permute.xlu0 %508
  %v511 = vmul.f32 %v504, %v509
  %513 = vrot.lane.b32.xlu0 %v511, 16
  %v514 = vpop.permute.xlu0 %513
  %v516 = vadd.f32 %v506, %v514
  %v517 = vtanh.pop %v516
  %519 = vrot.lane.b32.xlu0 %v517, 32
  %v520 = vpop.permute.xlu0 %519
  %v522 = vmul.f32 %v504, %v520
  %v523 = vpack.c.bf16 %v522, %v522
  %525 = vrot.lane.b32.xlu0 %v523, 80
  %v526 = vpop.permute.xlu0 %525
  %v528 = vsel %vm166, %v526, 0
  %530 = vmatprep.subr.bf16.mxu0 0
  %531 = vmatpush1.bf16.msra.mxu0 0
  %532 = vmatprep.subr.bf16.mxu0 0
  %533 = vmatpush1.bf16.msra.mxu0 0
  %534 = vmatprep.subr.bf16.mxu0 0
  %535 = vmatpush1.bf16.msra.mxu0 0
  %536 = vmatprep.subr.bf16.mxu0 0
  %537 = vmatpush1.bf16.msra.mxu0 0
  %538 = vmatprep.subr.bf16.mxu0 0
  %539 = vmatpush1.bf16.msra.mxu0 0
  %540 = vmatprep.subr.bf16.mxu0 0
  %541 = vmatpush1.bf16.msra.mxu0 0
  %542 = vmatprep.subr.bf16.mxu0 0
  %543 = vmatpush1.bf16.msra.mxu0 0
  %544 = vmatprep.subr.bf16.mxu0 0
  %545 = vmatpush1.bf16.msra.mxu0 %v164
  %546 = vmatprep.subr.bf16.mxu0 0
  %547 = vmatpush2.bf16.msra.mxu0 0
  %548 = vmatprep.subr.bf16.mxu0 0
  %549 = vmatpush2.bf16.msra.mxu0 0
  %550 = vmatprep.subr.bf16.mxu0 0
  %551 = vmatpush2.bf16.msra.mxu0 0
  %552 = vmatprep.subr.bf16.mxu0 0
  %553 = vmatpush2.bf16.msra.mxu0 0
  %554 = vmatprep.subr.bf16.mxu0 0
  %555 = vmatpush2.bf16.msra.mxu0 0
  %556 = vmatprep.subr.bf16.mxu0 0
  %557 = vmatpush2.bf16.msra.mxu0 0
  %558 = vmatprep.subr.bf16.mxu0 0
  %559 = vmatpush2.bf16.msra.mxu0 0
  %560 = vmatprep.subr.bf16.mxu0 0
  %561 = vmatpush2.bf16.msra.mxu0 0
  %562 = vmatprep.mubr.bf16.mxu0 0
  %563 = vmatmul.mubr.bf16.gmra.mxu0 %v528
  %v564 = vpop.f32.mrf.mxu0
  %v565 = vadd.f32 0.0, %v564
  %v566 = vpop.f32.mrf.mxu0
  %v567 = vpop.f32.mrf.mxu0
  %v568 = vpop.f32.mrf.mxu0
  %569 = vdwg.mxu0
  %v570 = vadd.f32 %v149, %v565
  %v571 = vxor.u32 %v570, 2147483648
  %v572 = vmul.f32 %v571, 1.442695
  %v573 = vpow.pop %v572
  %v574 = vadd.f32 %v573, 1.0
  %v575 = vrcp.pop %v574
  %v576 = vmul.f32 1.0, %v575
  %v577 = vtanh.pop %v570
  %v578 = vmul.f32 %v576, %v516
  %580 = vrot.lane.b32.xlu0 %v577, 96
  %v581 = vpop.permute.xlu0 %580
  %v583 = vmul.f32 %v576, %v581
  %585 = vrot.lane.b32.xlu0 %v583, 16
  %v586 = vpop.permute.xlu0 %585
  %v588 = vadd.f32 %v578, %v586
  %v589 = vtanh.pop %v588
  %591 = vrot.lane.b32.xlu0 %v589, 32
  %v592 = vpop.permute.xlu0 %591
  %v594 = vmul.f32 %v576, %v592
  %v595 = vpack.c.bf16 %v594, %v594
  %597 = vrot.lane.b32.xlu0 %v595, 80
  %v598 = vpop.permute.xlu0 %597
  %v600 = vsel %vm166, %v598, 0
  %602 = vmatprep.subr.bf16.mxu0 0
  %603 = vmatpush1.bf16.msra.mxu0 0
  %604 = vmatprep.subr.bf16.mxu0 0
  %605 = vmatpush1.bf16.msra.mxu0 0
  %606 = vmatprep.subr.bf16.mxu0 0
  %607 = vmatpush1.bf16.msra.mxu0 0
  %608 = vmatprep.subr.bf16.mxu0 0
  %609 = vmatpush1.bf16.msra.mxu0 0
  %610 = vmatprep.subr.bf16.mxu0 0
  %611 = vmatpush1.bf16.msra.mxu0 0
  %612 = vmatprep.subr.bf16.mxu0 0
  %613 = vmatpush1.bf16.msra.mxu0 0
  %614 = vmatprep.subr.bf16.mxu0 0
  %615 = vmatpush1.bf16.msra.mxu0 0
  %616 = vmatprep.subr.bf16.mxu0 0
  %617 = vmatpush1.bf16.msra.mxu0 %v164
  %618 = vmatprep.subr.bf16.mxu0 0
  %619 = vmatpush2.bf16.msra.mxu0 0
  %620 = vmatprep.subr.bf16.mxu0 0
  %621 = vmatpush2.bf16.msra.mxu0 0
  %622 = vmatprep.subr.bf16.mxu0 0
  %623 = vmatpush2.bf16.msra.mxu0 0
  %624 = vmatprep.subr.bf16.mxu0 0
  %625 = vmatpush2.bf16.msra.mxu0 0
  %626 = vmatprep.subr.bf16.mxu0 0
  %627 = vmatpush2.bf16.msra.mxu0 0
  %628 = vmatprep.subr.bf16.mxu0 0
  %629 = vmatpush2.bf16.msra.mxu0 0
  %630 = vmatprep.subr.bf16.mxu0 0
  %631 = vmatpush2.bf16.msra.mxu0 0
  %632 = vmatprep.subr.bf16.mxu0 0
  %633 = vmatpush2.bf16.msra.mxu0 0
  %634 = vmatprep.mubr.bf16.mxu0 0
  %635 = vmatmul.mubr.bf16.gmra.mxu0 %v600
  %v636 = vpop.f32.mrf.mxu0
  %v637 = vadd.f32 0.0, %v636
  %v638 = vpop.f32.mrf.mxu0
  %v639 = vpop.f32.mrf.mxu0
  %v640 = vpop.f32.mrf.mxu0
  %641 = vdwg.mxu0
  %v642 = vadd.f32 %v154, %v637
  %v643 = vxor.u32 %v642, 2147483648
  %v644 = vmul.f32 %v643, 1.442695
  %v645 = vpow.pop %v644
  %v646 = vadd.f32 %v645, 1.0
  %v647 = vrcp.pop %v646
  %v648 = vmul.f32 1.0, %v647
  %v649 = vtanh.pop %v642
  %v650 = vmul.f32 %v648, %v588
  %652 = vrot.lane.b32.xlu0 %v649, 96
  %v653 = vpop.permute.xlu0 %652
  %v655 = vmul.f32 %v648, %v653
  %657 = vrot.lane.b32.xlu0 %v655, 16
  %v658 = vpop.permute.xlu0 %657
  %v660 = vadd.f32 %v650, %v658
  %v661 = vtanh.pop %v660
  %663 = vrot.lane.b32.xlu0 %v661, 32
  %v664 = vpop.permute.xlu0 %663
  %v666 = vmul.f32 %v648, %v664
  %v667 = vpack.c.bf16 %v666, %v666
  %669 = vrot.lane.b32.xlu0 %v667, 80
  %v670 = vpop.permute.xlu0 %669
  %v672 = vsel %vm166, %v670, 0
  %674 = vmatprep.subr.bf16.mxu0 0
  %675 = vmatpush1.bf16.msra.mxu0 0
  %676 = vmatprep.subr.bf16.mxu0 0
  %677 = vmatpush1.bf16.msra.mxu0 0
  %678 = vmatprep.subr.bf16.mxu0 0
  %679 = vmatpush1.bf16.msra.mxu0 0
  %680 = vmatprep.subr.bf16.mxu0 0
  %681 = vmatpush1.bf16.msra.mxu0 0
  %682 = vmatprep.subr.bf16.mxu0 0
  %683 = vmatpush1.bf16.msra.mxu0 0
  %684 = vmatprep.subr.bf16.mxu0 0
  %685 = vmatpush1.bf16.msra.mxu0 0
  %686 = vmatprep.subr.bf16.mxu0 0
  %687 = vmatpush1.bf16.msra.mxu0 0
  %688 = vmatprep.subr.bf16.mxu0 0
  %689 = vmatpush1.bf16.msra.mxu0 %v164
  %690 = vmatprep.subr.bf16.mxu0 0
  %691 = vmatpush2.bf16.msra.mxu0 0
  %692 = vmatprep.subr.bf16.mxu0 0
  %693 = vmatpush2.bf16.msra.mxu0 0
  %694 = vmatprep.subr.bf16.mxu0 0
  %695 = vmatpush2.bf16.msra.mxu0 0
  %696 = vmatprep.subr.bf16.mxu0 0
  %697 = vmatpush2.bf16.msra.mxu0 0
  %698 = vmatprep.subr.bf16.mxu0 0
  %699 = vmatpush2.bf16.msra.mxu0 0
  %700 = vmatprep.subr.bf16.mxu0 0
  %701 = vmatpush2.bf16.msra.mxu0 0
  %702 = vmatprep.subr.bf16.mxu0 0
  %703 = vmatpush2.bf16.msra.mxu0 0
  %704 = vmatprep.subr.bf16.mxu0 0
  %705 = vmatpush2.bf16.msra.mxu0 0
  %706 = vmatprep.mubr.bf16.mxu0 0
  %707 = vmatmul.mubr.bf16.gmra.mxu0 %v672
  %v708 = vpop.f32.mrf.mxu0
  %v709 = vadd.f32 0.0, %v708
  %v710 = vpop.f32.mrf.mxu0
  %v711 = vpop.f32.mrf.mxu0
  %v712 = vpop.f32.mrf.mxu0
  %713 = vdwg.mxu0
  %v714 = vadd.f32 %v157, %v709
  %v715 = vxor.u32 %v714, 2147483648
  %v716 = vmul.f32 %v715, 1.442695
  %v717 = vpow.pop %v716
  %v718 = vadd.f32 %v717, 1.0
  %v719 = vrcp.pop %v718
  %v720 = vmul.f32 1.0, %v719
  %v721 = vtanh.pop %v714
  %v722 = vmul.f32 %v720, %v660
  %724 = vrot.lane.b32.xlu0 %v721, 96
  %v725 = vpop.permute.xlu0 %724
  %v727 = vmul.f32 %v720, %v725
  %729 = vrot.lane.b32.xlu0 %v727, 16
  %v730 = vpop.permute.xlu0 %729
  %v732 = vadd.f32 %v722, %v730
  %v733 = vtanh.pop %v732
  %735 = vrot.lane.b32.xlu0 %v733, 32
  %v736 = vpop.permute.xlu0 %735
  %v738 = vmul.f32 %v720, %v736
  %v739 = vld [vmem:[%s1 + $0x10] sm:$0xf]
  %v740 = vld [vmem:[%s1 + $0x14] sm:$0xf]
  %v741 = vld [vmem:[%s2 + $0x8] sm:$0x1]
  %v742 = vpack.c.bf16 %v306, %v234
  %v743 = vpack.c.bf16 %v450, %v378
  %v744 = vpack.c.bf16 %v594, %v522
  %v745 = vpack.c.bf16 %v738, %v666
  %v746 = vlaneseq
  %v747 = vshrl.u32 %v746, 7
  %v748 = vsub.s32 0, %v747
  %v749 = vrot.slane %v741, %v748
  %754 = vrot.lane.b32.xlu0 %v742, 80
  %v755 = vpop.permute.xlu0 %754
  %756 = vrot.lane.b32.xlu0 %v743, 80
  %v757 = vpop.permute.xlu0 %756
  %758 = vrot.lane.b32.xlu0 %v744, 80
  %v759 = vpop.permute.xlu0 %758
  %760 = vrot.lane.b32.xlu0 %v745, 80
  %v761 = vpop.permute.xlu0 %760
  %v764 = vunpack.c.l.b16 %v739
  %v765 = vunpack.c.l.b16 %v740
  %v766 = vpack.c.b16 %v765, %v764
  %v769 = vsel %vm166, %v755, 0
  %v772 = vsel %vm166, %v757, 0
  %v775 = vsel %vm166, %v759, 0
  %v778 = vsel %vm166, %v761, 0
  %780 = vmatprep.subr.bf16.mxu0 0
  %781 = vmatpush1.bf16.msra.mxu0 0
  %782 = vmatprep.subr.bf16.mxu0 0
  %783 = vmatpush1.bf16.msra.mxu0 0
  %784 = vmatprep.subr.bf16.mxu0 0
  %785 = vmatpush1.bf16.msra.mxu0 0
  %786 = vmatprep.subr.bf16.mxu0 0
  %787 = vmatpush1.bf16.msra.mxu0 0
  %788 = vmatprep.subr.bf16.mxu0 0
  %789 = vmatpush1.bf16.msra.mxu0 0
  %790 = vmatprep.subr.bf16.mxu0 0
  %791 = vmatpush1.bf16.msra.mxu0 0
  %792 = vmatprep.subr.bf16.mxu0 0
  %793 = vmatpush1.bf16.msra.mxu0 0
  %794 = vmatprep.subr.bf16.mxu0 0
  %795 = vmatpush1.bf16.msra.mxu0 %v766
  %796 = vmatprep.subr.bf16.mxu0 0
  %797 = vmatpush2.bf16.msra.mxu0 0
  %798 = vmatprep.subr.bf16.mxu0 0
  %799 = vmatpush2.bf16.msra.mxu0 0
  %800 = vmatprep.subr.bf16.mxu0 0
  %801 = vmatpush2.bf16.msra.mxu0 0
  %802 = vmatprep.subr.bf16.mxu0 0
  %803 = vmatpush2.bf16.msra.mxu0 0
  %804 = vmatprep.subr.bf16.mxu0 0
  %805 = vmatpush2.bf16.msra.mxu0 0
  %806 = vmatprep.subr.bf16.mxu0 0
  %807 = vmatpush2.bf16.msra.mxu0 0
  %808 = vmatprep.subr.bf16.mxu0 0
  %809 = vmatpush2.bf16.msra.mxu0 0
  %810 = vmatprep.subr.bf16.mxu0 0
  %811 = vmatpush2.bf16.msra.mxu0 0
  %812 = vmatprep.mubr.bf16.mxu0 0
  %813 = vmatmul.mubr.bf16.gmra.mxu0 %v769
  %v814 = vpop.f32.mrf.mxu0
  %v815 = vadd.f32 %v749, %v814
  %v816 = vpop.f32.mrf.mxu0
  %v817 = vpop.f32.mrf.mxu0
  %v818 = vadd.f32 %v749, %v817
  %v819 = vpop.f32.mrf.mxu0
  %820 = vmatprep.mubr.bf16.mxu0 0
  %821 = vmatmul.mubr.bf16.gmra.mxu0 %v772
  %v822 = vpop.f32.mrf.mxu0
  %v823 = vadd.f32 %v749, %v822
  %v824 = vpop.f32.mrf.mxu0
  %v825 = vpop.f32.mrf.mxu0
  %v826 = vadd.f32 %v749, %v825
  %v827 = vpop.f32.mrf.mxu0
  %828 = vmatprep.mubr.bf16.mxu0 0
  %829 = vmatmul.mubr.bf16.gmra.mxu0 %v775
  %v830 = vpop.f32.mrf.mxu0
  %v831 = vadd.f32 %v749, %v830
  %v832 = vpop.f32.mrf.mxu0
  %v833 = vpop.f32.mrf.mxu0
  %v834 = vadd.f32 %v749, %v833
  %v835 = vpop.f32.mrf.mxu0
  %836 = vmatprep.mubr.bf16.mxu0 0
  %837 = vmatmul.mubr.bf16.gmra.mxu0 %v778
  %v838 = vpop.f32.mrf.mxu0
  %v839 = vadd.f32 %v749, %v838
  %v840 = vpop.f32.mrf.mxu0
  %v841 = vpop.f32.mrf.mxu0
  %v842 = vadd.f32 %v749, %v841
  %v843 = vpop.f32.mrf.mxu0
  %844 = vdwg.mxu0
  %v845 = vld [vmem:[%s1 + $0x18] sm:$0xf]
  %v846 = vld [vmem:[%s1 + $0x1c] sm:$0xf]
  %v847 = vld [vmem:[%s1 + $0x20] sm:$0xf]
  %v848 = vld [vmem:[%s1 + $0x24] sm:$0xf]
  %v849 = vld [vmem:[%s1 + $0x28] sm:$0xf]
  %v850 = vld [vmem:[%s1 + $0x2c] sm:$0xf]
  %v851 = vld [vmem:[%s2 + $0x10] sm:$0x1]
  %v852 = vpack.c.bf16 %v818, %v815
  %v853 = vpack.c.bf16 %v826, %v823
  %v854 = vpack.c.bf16 %v834, %v831
  %v855 = vpack.c.bf16 %v842, %v839
  %v856 = vlaneseq
  %v857 = vshrl.u32 %v856, 7
  %v858 = vsub.s32 0, %v857
  %v859 = vrot.slane %v851, %v858
  %v864 = vunpack.c.l.b16 %v845
  %v865 = vunpack.c.l.b16 %v846
  %v866 = vunpack.c.l.b16 %v847
  %v867 = vunpack.c.l.b16 %v848
  %v868 = vpack.c.b16 %v865, %v864
  %v869 = vpack.c.b16 %v867, %v866
  %vm872 = vcmask 261120
  %v874 = vsel %vm872, %v852, 0
  %v877 = vsel %vm872, %v853, 0
  %v880 = vsel %vm872, %v854, 0
  %v883 = vsel %vm872, %v855, 0
  %885 = vmatprep.subr.bf16.mxu0 0
  %886 = vmatpush1.bf16.msra.mxu0 0
  %887 = vmatprep.subr.bf16.mxu0 0
  %888 = vmatpush1.bf16.msra.mxu0 0
  %889 = vmatprep.subr.bf16.mxu0 0
  %890 = vmatpush1.bf16.msra.mxu0 0
  %891 = vmatprep.subr.bf16.mxu0 0
  %892 = vmatpush1.bf16.msra.mxu0 0
  %893 = vmatprep.subr.bf16.mxu0 0
  %894 = vmatpush1.bf16.msra.mxu0 0
  %895 = vmatprep.subr.bf16.mxu0 0
  %896 = vmatpush1.bf16.msra.mxu0 0
  %897 = vmatprep.subr.bf16.mxu0 0
  %898 = vmatpush1.bf16.msra.mxu0 %v869
  %899 = vmatprep.subr.bf16.mxu0 0
  %900 = vmatpush1.bf16.msra.mxu0 %v868
  %901 = vmatprep.subr.bf16.mxu0 0
  %902 = vmatpush2.bf16.msra.mxu0 0
  %903 = vmatprep.subr.bf16.mxu0 0
  %904 = vmatpush2.bf16.msra.mxu0 0
  %905 = vmatprep.subr.bf16.mxu0 0
  %906 = vmatpush2.bf16.msra.mxu0 0
  %907 = vmatprep.subr.bf16.mxu0 0
  %908 = vmatpush2.bf16.msra.mxu0 0
  %909 = vmatprep.subr.bf16.mxu0 0
  %910 = vmatpush2.bf16.msra.mxu0 0
  %911 = vmatprep.subr.bf16.mxu0 0
  %912 = vmatpush2.bf16.msra.mxu0 0
  %913 = vmatprep.subr.bf16.mxu0 0
  %914 = vmatpush2.bf16.msra.mxu0 0
  %915 = vmatprep.subr.bf16.mxu0 0
  %916 = vmatpush2.bf16.msra.mxu0 0
  %917 = vmatprep.mubr.bf16.mxu0 0
  %918 = vmatmul.mubr.bf16.gmra.mxu0 %v874
  %v919 = vpop.f32.mrf.mxu0
  %v920 = vadd.f32 %v859, %v919
  %v921 = vpop.f32.mrf.mxu0
  %v922 = vpop.f32.mrf.mxu0
  %v923 = vadd.f32 %v859, %v922
  %v924 = vpop.f32.mrf.mxu0
  %925 = vmatprep.mubr.bf16.mxu0 0
  %926 = vmatmul.mubr.bf16.gmra.mxu0 %v877
  %v927 = vpop.f32.mrf.mxu0
  %v928 = vadd.f32 %v859, %v927
  %v929 = vpop.f32.mrf.mxu0
  %v930 = vpop.f32.mrf.mxu0
  %v931 = vadd.f32 %v859, %v930
  %v932 = vpop.f32.mrf.mxu0
  %933 = vmatprep.mubr.bf16.mxu0 0
  %934 = vmatmul.mubr.bf16.gmra.mxu0 %v880
  %v935 = vpop.f32.mrf.mxu0
  %v936 = vadd.f32 %v859, %v935
  %v937 = vpop.f32.mrf.mxu0
  %v938 = vpop.f32.mrf.mxu0
  %v939 = vadd.f32 %v859, %v938
  %v940 = vpop.f32.mrf.mxu0
  %941 = vmatprep.mubr.bf16.mxu0 0
  %942 = vmatmul.mubr.bf16.gmra.mxu0 %v883
  %v943 = vpop.f32.mrf.mxu0
  %v944 = vadd.f32 %v859, %v943
  %v945 = vpop.f32.mrf.mxu0
  %v946 = vpop.f32.mrf.mxu0
  %v947 = vadd.f32 %v859, %v946
  %v948 = vpop.f32.mrf.mxu0
  %949 = vdwg.mxu0
  %v952 = vunpack.c.l.b16 %v849
  %v953 = vunpack.c.l.b16 %v850
  %v954 = vpack.c.b16 %v953, %v952
  %956 = vmatprep.subr.bf16.mxu0 0
  %957 = vmatpush1.bf16.msra.mxu0 0
  %958 = vmatprep.subr.bf16.mxu0 0
  %959 = vmatpush1.bf16.msra.mxu0 0
  %960 = vmatprep.subr.bf16.mxu0 0
  %961 = vmatpush1.bf16.msra.mxu0 0
  %962 = vmatprep.subr.bf16.mxu0 0
  %963 = vmatpush1.bf16.msra.mxu0 0
  %964 = vmatprep.subr.bf16.mxu0 0
  %965 = vmatpush1.bf16.msra.mxu0 0
  %966 = vmatprep.subr.bf16.mxu0 0
  %967 = vmatpush1.bf16.msra.mxu0 0
  %968 = vmatprep.subr.bf16.mxu0 0
  %969 = vmatpush1.bf16.msra.mxu0 0
  %970 = vmatprep.subr.bf16.mxu0 0
  %971 = vmatpush1.bf16.msra.mxu0 %v954
  %972 = vmatprep.subr.bf16.mxu0 0
  %973 = vmatpush2.bf16.msra.mxu0 0
  %974 = vmatprep.subr.bf16.mxu0 0
  %975 = vmatpush2.bf16.msra.mxu0 0
  %976 = vmatprep.subr.bf16.mxu0 0
  %977 = vmatpush2.bf16.msra.mxu0 0
  %978 = vmatprep.subr.bf16.mxu0 0
  %979 = vmatpush2.bf16.msra.mxu0 0
  %980 = vmatprep.subr.bf16.mxu0 0
  %981 = vmatpush2.bf16.msra.mxu0 0
  %982 = vmatprep.subr.bf16.mxu0 0
  %983 = vmatpush2.bf16.msra.mxu0 0
  %984 = vmatprep.subr.bf16.mxu0 0
  %985 = vmatpush2.bf16.msra.mxu0 0
  %986 = vmatprep.subr.bf16.mxu0 0
  %987 = vmatpush2.bf16.msra.mxu0 0
  %988 = vmatprep.mubr.bf16.mxu0 0
  %989 = vmatmul.mubr.bf16.gmra.mxu0 %v168
  %v990 = vpop.f32.mrf.mxu0
  %v991 = vadd.f32 0.0, %v990
  %v992 = vpop.f32.mrf.mxu0
  %v993 = vpop.f32.mrf.mxu0
  %v994 = vpop.f32.mrf.mxu0
  %995 = vdwg.mxu0
  %v996 = vadd.f32 %v920, %v991
  %v997 = vxor.u32 %v996, 2147483648
  %v998 = vmul.f32 %v997, 1.442695
  %v999 = vpow.pop %v998
  %v1000 = vadd.f32 %v999, 1.0
  %v1001 = vrcp.pop %v1000
  %v1002 = vmul.f32 1.0, %v1001
  %v1003 = vtanh.pop %v996
  %v1004 = vmul.f32 %v1002, 0.0
  %1006 = vrot.lane.b32.xlu0 %v1003, 96
  %v1007 = vpop.permute.xlu0 %1006
  %v1009 = vmul.f32 %v1002, %v1007
  %1011 = vrot.lane.b32.xlu0 %v1009, 16
  %v1012 = vpop.permute.xlu0 %1011
  %v1014 = vadd.f32 %v1004, %v1012
  %v1015 = vtanh.pop %v1014
  %1017 = vrot.lane.b32.xlu0 %v1015, 32
  %v1018 = vpop.permute.xlu0 %1017
  %v1020 = vmul.f32 %v1002, %v1018
  %v1021 = vpack.c.bf16 %v1020, %v1020
  %1023 = vrot.lane.b32.xlu0 %v1021, 80
  %v1024 = vpop.permute.xlu0 %1023
  %v1026 = vsel %vm166, %v1024, 0
  %1028 = vmatprep.subr.bf16.mxu0 0
  %1029 = vmatpush1.bf16.msra.mxu0 0
  %1030 = vmatprep.subr.bf16.mxu0 0
  %1031 = vmatpush1.bf16.msra.mxu0 0
  %1032 = vmatprep.subr.bf16.mxu0 0
  %1033 = vmatpush1.bf16.msra.mxu0 0
  %1034 = vmatprep.subr.bf16.mxu0 0
  %1035 = vmatpush1.bf16.msra.mxu0 0
  %1036 = vmatprep.subr.bf16.mxu0 0
  %1037 = vmatpush1.bf16.msra.mxu0 0
  %1038 = vmatprep.subr.bf16.mxu0 0
  %1039 = vmatpush1.bf16.msra.mxu0 0
  %1040 = vmatprep.subr.bf16.mxu0 0
  %1041 = vmatpush1.bf16.msra.mxu0 0
  %1042 = vmatprep.subr.bf16.mxu0 0
  %1043 = vmatpush1.bf16.msra.mxu0 %v954
  %1044 = vmatprep.subr.bf16.mxu0 0
  %1045 = vmatpush2.bf16.msra.mxu0 0
  %1046 = vmatprep.subr.bf16.mxu0 0
  %1047 = vmatpush2.bf16.msra.mxu0 0
  %1048 = vmatprep.subr.bf16.mxu0 0
  %1049 = vmatpush2.bf16.msra.mxu0 0
  %1050 = vmatprep.subr.bf16.mxu0 0
  %1051 = vmatpush2.bf16.msra.mxu0 0
  %1052 = vmatprep.subr.bf16.mxu0 0
  %1053 = vmatpush2.bf16.msra.mxu0 0
  %1054 = vmatprep.subr.bf16.mxu0 0
  %1055 = vmatpush2.bf16.msra.mxu0 0
  %1056 = vmatprep.subr.bf16.mxu0 0
  %1057 = vmatpush2.bf16.msra.mxu0 0
  %1058 = vmatprep.subr.bf16.mxu0 0
  %1059 = vmatpush2.bf16.msra.mxu0 0
  %1060 = vmatprep.mubr.bf16.mxu0 0
  %1061 = vmatmul.mubr.bf16.gmra.mxu0 %v1026
  %v1062 = vpop.f32.mrf.mxu0
  %v1063 = vadd.f32 0.0, %v1062
  %v1064 = vpop.f32.mrf.mxu0
  %v1065 = vpop.f32.mrf.mxu0
  %v1066 = vpop.f32.mrf.mxu0
  %1067 = vdwg.mxu0
  %v1068 = vadd.f32 %v923, %v1063
  %v1069 = vxor.u32 %v1068, 2147483648
  %v1070 = vmul.f32 %v1069, 1.442695
  %v1071 = vpow.pop %v1070
  %v1072 = vadd.f32 %v1071, 1.0
  %v1073 = vrcp.pop %v1072
  %v1074 = vmul.f32 1.0, %v1073
  %v1075 = vtanh.pop %v1068
  %v1076 = vmul.f32 %v1074, %v1014
  %1078 = vrot.lane.b32.xlu0 %v1075, 96
  %v1079 = vpop.permute.xlu0 %1078
  %v1081 = vmul.f32 %v1074, %v1079
  %1083 = vrot.lane.b32.xlu0 %v1081, 16
  %v1084 = vpop.permute.xlu0 %1083
  %v1086 = vadd.f32 %v1076, %v1084
  %v1087 = vtanh.pop %v1086
  %1089 = vrot.lane.b32.xlu0 %v1087, 32
  %v1090 = vpop.permute.xlu0 %1089
  %v1092 = vmul.f32 %v1074, %v1090
  %v1093 = vpack.c.bf16 %v1092, %v1092
  %1095 = vrot.lane.b32.xlu0 %v1093, 80
  %v1096 = vpop.permute.xlu0 %1095
  %v1098 = vsel %vm166, %v1096, 0
  %1100 = vmatprep.subr.bf16.mxu0 0
  %1101 = vmatpush1.bf16.msra.mxu0 0
  %1102 = vmatprep.subr.bf16.mxu0 0
  %1103 = vmatpush1.bf16.msra.mxu0 0
  %1104 = vmatprep.subr.bf16.mxu0 0
  %1105 = vmatpush1.bf16.msra.mxu0 0
  %1106 = vmatprep.subr.bf16.mxu0 0
  %1107 = vmatpush1.bf16.msra.mxu0 0
  %1108 = vmatprep.subr.bf16.mxu0 0
  %1109 = vmatpush1.bf16.msra.mxu0 0
  %1110 = vmatprep.subr.bf16.mxu0 0
  %1111 = vmatpush1.bf16.msra.mxu0 0
  %1112 = vmatprep.subr.bf16.mxu0 0
  %1113 = vmatpush1.bf16.msra.mxu0 0
  %1114 = vmatprep.subr.bf16.mxu0 0
  %1115 = vmatpush1.bf16.msra.mxu0 %v954
  %1116 = vmatprep.subr.bf16.mxu0 0
  %1117 = vmatpush2.bf16.msra.mxu0 0
  %1118 = vmatprep.subr.bf16.mxu0 0
  %1119 = vmatpush2.bf16.msra.mxu0 0
  %1120 = vmatprep.subr.bf16.mxu0 0
  %1121 = vmatpush2.bf16.msra.mxu0 0
  %1122 = vmatprep.subr.bf16.mxu0 0
  %1123 = vmatpush2.bf16.msra.mxu0 0
  %1124 = vmatprep.subr.bf16.mxu0 0
  %1125 = vmatpush2.bf16.msra.mxu0 0
  %1126 = vmatprep.subr.bf16.mxu0 0
  %1127 = vmatpush2.bf16.msra.mxu0 0
  %1128 = vmatprep.subr.bf16.mxu0 0
  %1129 = vmatpush2.bf16.msra.mxu0 0
  %1130 = vmatprep.subr.bf16.mxu0 0
  %1131 = vmatpush2.bf16.msra.mxu0 0
  %1132 = vmatprep.mubr.bf16.mxu0 0
  %1133 = vmatmul.mubr.bf16.gmra.mxu0 %v1098
  %v1134 = vpop.f32.mrf.mxu0
  %v1135 = vadd.f32 0.0, %v1134
  %v1136 = vpop.f32.mrf.mxu0
  %v1137 = vpop.f32.mrf.mxu0
  %v1138 = vpop.f32.mrf.mxu0
  %1139 = vdwg.mxu0
  %v1140 = vadd.f32 %v928, %v1135
  %v1141 = vxor.u32 %v1140, 2147483648
  %v1142 = vmul.f32 %v1141, 1.442695
  %v1143 = vpow.pop %v1142
  %v1144 = vadd.f32 %v1143, 1.0
  %v1145 = vrcp.pop %v1144
  %v1146 = vmul.f32 1.0, %v1145
  %v1147 = vtanh.pop %v1140
  %v1148 = vmul.f32 %v1146, %v1086
  %1150 = vrot.lane.b32.xlu0 %v1147, 96
  %v1151 = vpop.permute.xlu0 %1150
  %v1153 = vmul.f32 %v1146, %v1151
  %1155 = vrot.lane.b32.xlu0 %v1153, 16
  %v1156 = vpop.permute.xlu0 %1155
  %v1158 = vadd.f32 %v1148, %v1156
  %v1159 = vtanh.pop %v1158
  %1161 = vrot.lane.b32.xlu0 %v1159, 32
  %v1162 = vpop.permute.xlu0 %1161
  %v1164 = vmul.f32 %v1146, %v1162
  %v1165 = vpack.c.bf16 %v1164, %v1164
  %1167 = vrot.lane.b32.xlu0 %v1165, 80
  %v1168 = vpop.permute.xlu0 %1167
  %v1170 = vsel %vm166, %v1168, 0
  %1172 = vmatprep.subr.bf16.mxu0 0
  %1173 = vmatpush1.bf16.msra.mxu0 0
  %1174 = vmatprep.subr.bf16.mxu0 0
  %1175 = vmatpush1.bf16.msra.mxu0 0
  %1176 = vmatprep.subr.bf16.mxu0 0
  %1177 = vmatpush1.bf16.msra.mxu0 0
  %1178 = vmatprep.subr.bf16.mxu0 0
  %1179 = vmatpush1.bf16.msra.mxu0 0
  %1180 = vmatprep.subr.bf16.mxu0 0
  %1181 = vmatpush1.bf16.msra.mxu0 0
  %1182 = vmatprep.subr.bf16.mxu0 0
  %1183 = vmatpush1.bf16.msra.mxu0 0
  %1184 = vmatprep.subr.bf16.mxu0 0
  %1185 = vmatpush1.bf16.msra.mxu0 0
  %1186 = vmatprep.subr.bf16.mxu0 0
  %1187 = vmatpush1.bf16.msra.mxu0 %v954
  %1188 = vmatprep.subr.bf16.mxu0 0
  %1189 = vmatpush2.bf16.msra.mxu0 0
  %1190 = vmatprep.subr.bf16.mxu0 0
  %1191 = vmatpush2.bf16.msra.mxu0 0
  %1192 = vmatprep.subr.bf16.mxu0 0
  %1193 = vmatpush2.bf16.msra.mxu0 0
  %1194 = vmatprep.subr.bf16.mxu0 0
  %1195 = vmatpush2.bf16.msra.mxu0 0
  %1196 = vmatprep.subr.bf16.mxu0 0
  %1197 = vmatpush2.bf16.msra.mxu0 0
  %1198 = vmatprep.subr.bf16.mxu0 0
  %1199 = vmatpush2.bf16.msra.mxu0 0
  %1200 = vmatprep.subr.bf16.mxu0 0
  %1201 = vmatpush2.bf16.msra.mxu0 0
  %1202 = vmatprep.subr.bf16.mxu0 0
  %1203 = vmatpush2.bf16.msra.mxu0 0
  %1204 = vmatprep.mubr.bf16.mxu0 0
  %1205 = vmatmul.mubr.bf16.gmra.mxu0 %v1170
  %v1206 = vpop.f32.mrf.mxu0
  %v1207 = vadd.f32 0.0, %v1206
  %v1208 = vpop.f32.mrf.mxu0
  %v1209 = vpop.f32.mrf.mxu0
  %v1210 = vpop.f32.mrf.mxu0
  %1211 = vdwg.mxu0
  %v1212 = vadd.f32 %v931, %v1207
  %v1213 = vxor.u32 %v1212, 2147483648
  %v1214 = vmul.f32 %v1213, 1.442695
  %v1215 = vpow.pop %v1214
  %v1216 = vadd.f32 %v1215, 1.0
  %v1217 = vrcp.pop %v1216
  %v1218 = vmul.f32 1.0, %v1217
  %v1219 = vtanh.pop %v1212
  %v1220 = vmul.f32 %v1218, %v1158
  %1222 = vrot.lane.b32.xlu0 %v1219, 96
  %v1223 = vpop.permute.xlu0 %1222
  %v1225 = vmul.f32 %v1218, %v1223
  %1227 = vrot.lane.b32.xlu0 %v1225, 16
  %v1228 = vpop.permute.xlu0 %1227
  %v1230 = vadd.f32 %v1220, %v1228
  %v1231 = vtanh.pop %v1230
  %1233 = vrot.lane.b32.xlu0 %v1231, 32
  %v1234 = vpop.permute.xlu0 %1233
  %v1236 = vmul.f32 %v1218, %v1234
  %v1237 = vpack.c.bf16 %v1236, %v1236
  %1239 = vrot.lane.b32.xlu0 %v1237, 80
  %v1240 = vpop.permute.xlu0 %1239
  %v1242 = vsel %vm166, %v1240, 0
  %1244 = vmatprep.subr.bf16.mxu0 0
  %1245 = vmatpush1.bf16.msra.mxu0 0
  %1246 = vmatprep.subr.bf16.mxu0 0
  %1247 = vmatpush1.bf16.msra.mxu0 0
  %1248 = vmatprep.subr.bf16.mxu0 0
  %1249 = vmatpush1.bf16.msra.mxu0 0
  %1250 = vmatprep.subr.bf16.mxu0 0
  %1251 = vmatpush1.bf16.msra.mxu0 0
  %1252 = vmatprep.subr.bf16.mxu0 0
  %1253 = vmatpush1.bf16.msra.mxu0 0
  %1254 = vmatprep.subr.bf16.mxu0 0
  %1255 = vmatpush1.bf16.msra.mxu0 0
  %1256 = vmatprep.subr.bf16.mxu0 0
  %1257 = vmatpush1.bf16.msra.mxu0 0
  %1258 = vmatprep.subr.bf16.mxu0 0
  %1259 = vmatpush1.bf16.msra.mxu0 %v954
  %1260 = vmatprep.subr.bf16.mxu0 0
  %1261 = vmatpush2.bf16.msra.mxu0 0
  %1262 = vmatprep.subr.bf16.mxu0 0
  %1263 = vmatpush2.bf16.msra.mxu0 0
  %1264 = vmatprep.subr.bf16.mxu0 0
  %1265 = vmatpush2.bf16.msra.mxu0 0
  %1266 = vmatprep.subr.bf16.mxu0 0
  %1267 = vmatpush2.bf16.msra.mxu0 0
  %1268 = vmatprep.subr.bf16.mxu0 0
  %1269 = vmatpush2.bf16.msra.mxu0 0
  %1270 = vmatprep.subr.bf16.mxu0 0
  %1271 = vmatpush2.bf16.msra.mxu0 0
  %1272 = vmatprep.subr.bf16.mxu0 0
  %1273 = vmatpush2.bf16.msra.mxu0 0
  %1274 = vmatprep.subr.bf16.mxu0 0
  %1275 = vmatpush2.bf16.msra.mxu0 0
  %1276 = vmatprep.mubr.bf16.mxu0 0
  %1277 = vmatmul.mubr.bf16.gmra.mxu0 %v1242
  %v1278 = vpop.f32.mrf.mxu0
  %v1279 = vadd.f32 0.0, %v1278
  %v1280 = vpop.f32.mrf.mxu0
  %v1281 = vpop.f32.mrf.mxu0
  %v1282 = vpop.f32.mrf.mxu0
  %1283 = vdwg.mxu0
  %v1284 = vadd.f32 %v936, %v1279
  %v1285 = vxor.u32 %v1284, 2147483648
  %v1286 = vmul.f32 %v1285, 1.442695
  %v1287 = vpow.pop %v1286
  %v1288 = vadd.f32 %v1287, 1.0
  %v1289 = vrcp.pop %v1288
  %v1290 = vmul.f32 1.0, %v1289
  %v1291 = vtanh.pop %v1284
  %v1292 = vmul.f32 %v1290, %v1230
  %1294 = vrot.lane.b32.xlu0 %v1291, 96
  %v1295 = vpop.permute.xlu0 %1294
  %v1297 = vmul.f32 %v1290, %v1295
  %1299 = vrot.lane.b32.xlu0 %v1297, 16
  %v1300 = vpop.permute.xlu0 %1299
  %v1302 = vadd.f32 %v1292, %v1300
  %v1303 = vtanh.pop %v1302
  %1305 = vrot.lane.b32.xlu0 %v1303, 32
  %v1306 = vpop.permute.xlu0 %1305
  %v1308 = vmul.f32 %v1290, %v1306
  %v1309 = vpack.c.bf16 %v1308, %v1308
  %1311 = vrot.lane.b32.xlu0 %v1309, 80
  %v1312 = vpop.permute.xlu0 %1311
  %v1314 = vsel %vm166, %v1312, 0
  %1316 = vmatprep.subr.bf16.mxu0 0
  %1317 = vmatpush1.bf16.msra.mxu0 0
  %1318 = vmatprep.subr.bf16.mxu0 0
  %1319 = vmatpush1.bf16.msra.mxu0 0
  %1320 = vmatprep.subr.bf16.mxu0 0
  %1321 = vmatpush1.bf16.msra.mxu0 0
  %1322 = vmatprep.subr.bf16.mxu0 0
  %1323 = vmatpush1.bf16.msra.mxu0 0
  %1324 = vmatprep.subr.bf16.mxu0 0
  %1325 = vmatpush1.bf16.msra.mxu0 0
  %1326 = vmatprep.subr.bf16.mxu0 0
  %1327 = vmatpush1.bf16.msra.mxu0 0
  %1328 = vmatprep.subr.bf16.mxu0 0
  %1329 = vmatpush1.bf16.msra.mxu0 0
  %1330 = vmatprep.subr.bf16.mxu0 0
  %1331 = vmatpush1.bf16.msra.mxu0 %v954
  %1332 = vmatprep.subr.bf16.mxu0 0
  %1333 = vmatpush2.bf16.msra.mxu0 0
  %1334 = vmatprep.subr.bf16.mxu0 0
  %1335 = vmatpush2.bf16.msra.mxu0 0
  %1336 = vmatprep.subr.bf16.mxu0 0
  %1337 = vmatpush2.bf16.msra.mxu0 0
  %1338 = vmatprep.subr.bf16.mxu0 0
  %1339 = vmatpush2.bf16.msra.mxu0 0
  %1340 = vmatprep.subr.bf16.mxu0 0
  %1341 = vmatpush2.bf16.msra.mxu0 0
  %1342 = vmatprep.subr.bf16.mxu0 0
  %1343 = vmatpush2.bf16.msra.mxu0 0
  %1344 = vmatprep.subr.bf16.mxu0 0
  %1345 = vmatpush2.bf16.msra.mxu0 0
  %1346 = vmatprep.subr.bf16.mxu0 0
  %1347 = vmatpush2.bf16.msra.mxu0 0
  %1348 = vmatprep.mubr.bf16.mxu0 0
  %1349 = vmatmul.mubr.bf16.gmra.mxu0 %v1314
  %v1350 = vpop.f32.mrf.mxu0
  %v1351 = vadd.f32 0.0, %v1350
  %v1352 = vpop.f32.mrf.mxu0
  %v1353 = vpop.f32.mrf.mxu0
  %v1354 = vpop.f32.mrf.mxu0
  %1355 = vdwg.mxu0
  %v1356 = vadd.f32 %v939, %v1351
  %v1357 = vxor.u32 %v1356, 2147483648
  %v1358 = vmul.f32 %v1357, 1.442695
  %v1359 = vpow.pop %v1358
  %v1360 = vadd.f32 %v1359, 1.0
  %v1361 = vrcp.pop %v1360
  %v1362 = vmul.f32 1.0, %v1361
  %v1363 = vtanh.pop %v1356
  %v1364 = vmul.f32 %v1362, %v1302
  %1366 = vrot.lane.b32.xlu0 %v1363, 96
  %v1367 = vpop.permute.xlu0 %1366
  %v1369 = vmul.f32 %v1362, %v1367
  %1371 = vrot.lane.b32.xlu0 %v1369, 16
  %v1372 = vpop.permute.xlu0 %1371
  %v1374 = vadd.f32 %v1364, %v1372
  %v1375 = vtanh.pop %v1374
  %1377 = vrot.lane.b32.xlu0 %v1375, 32
  %v1378 = vpop.permute.xlu0 %1377
  %v1380 = vmul.f32 %v1362, %v1378
  %v1381 = vpack.c.bf16 %v1380, %v1380
  %1383 = vrot.lane.b32.xlu0 %v1381, 80
  %v1384 = vpop.permute.xlu0 %1383
  %v1386 = vsel %vm166, %v1384, 0
  %1388 = vmatprep.subr.bf16.mxu0 0
  %1389 = vmatpush1.bf16.msra.mxu0 0
  %1390 = vmatprep.subr.bf16.mxu0 0
  %1391 = vmatpush1.bf16.msra.mxu0 0
  %1392 = vmatprep.subr.bf16.mxu0 0
  %1393 = vmatpush1.bf16.msra.mxu0 0
  %1394 = vmatprep.subr.bf16.mxu0 0
  %1395 = vmatpush1.bf16.msra.mxu0 0
  %1396 = vmatprep.subr.bf16.mxu0 0
  %1397 = vmatpush1.bf16.msra.mxu0 0
  %1398 = vmatprep.subr.bf16.mxu0 0
  %1399 = vmatpush1.bf16.msra.mxu0 0
  %1400 = vmatprep.subr.bf16.mxu0 0
  %1401 = vmatpush1.bf16.msra.mxu0 0
  %1402 = vmatprep.subr.bf16.mxu0 0
  %1403 = vmatpush1.bf16.msra.mxu0 %v954
  %1404 = vmatprep.subr.bf16.mxu0 0
  %1405 = vmatpush2.bf16.msra.mxu0 0
  %1406 = vmatprep.subr.bf16.mxu0 0
  %1407 = vmatpush2.bf16.msra.mxu0 0
  %1408 = vmatprep.subr.bf16.mxu0 0
  %1409 = vmatpush2.bf16.msra.mxu0 0
  %1410 = vmatprep.subr.bf16.mxu0 0
  %1411 = vmatpush2.bf16.msra.mxu0 0
  %1412 = vmatprep.subr.bf16.mxu0 0
  %1413 = vmatpush2.bf16.msra.mxu0 0
  %1414 = vmatprep.subr.bf16.mxu0 0
  %1415 = vmatpush2.bf16.msra.mxu0 0
  %1416 = vmatprep.subr.bf16.mxu0 0
  %1417 = vmatpush2.bf16.msra.mxu0 0
  %1418 = vmatprep.subr.bf16.mxu0 0
  %1419 = vmatpush2.bf16.msra.mxu0 0
  %1420 = vmatprep.mubr.bf16.mxu0 0
  %1421 = vmatmul.mubr.bf16.gmra.mxu0 %v1386
  %v1422 = vpop.f32.mrf.mxu0
  %v1423 = vadd.f32 0.0, %v1422
  %v1424 = vpop.f32.mrf.mxu0
  %v1425 = vpop.f32.mrf.mxu0
  %v1426 = vpop.f32.mrf.mxu0
  %1427 = vdwg.mxu0
  %v1428 = vadd.f32 %v944, %v1423
  %v1429 = vxor.u32 %v1428, 2147483648
  %v1430 = vmul.f32 %v1429, 1.442695
  %v1431 = vpow.pop %v1430
  %v1432 = vadd.f32 %v1431, 1.0
  %v1433 = vrcp.pop %v1432
  %v1434 = vmul.f32 1.0, %v1433
  %v1435 = vtanh.pop %v1428
  %v1436 = vmul.f32 %v1434, %v1374
  %1438 = vrot.lane.b32.xlu0 %v1435, 96
  %v1439 = vpop.permute.xlu0 %1438
  %v1441 = vmul.f32 %v1434, %v1439
  %1443 = vrot.lane.b32.xlu0 %v1441, 16
  %v1444 = vpop.permute.xlu0 %1443
  %v1446 = vadd.f32 %v1436, %v1444
  %v1447 = vtanh.pop %v1446
  %1449 = vrot.lane.b32.xlu0 %v1447, 32
  %v1450 = vpop.permute.xlu0 %1449
  %v1452 = vmul.f32 %v1434, %v1450
  %v1453 = vpack.c.bf16 %v1452, %v1452
  %1455 = vrot.lane.b32.xlu0 %v1453, 80
  %v1456 = vpop.permute.xlu0 %1455
  %v1458 = vsel %vm166, %v1456, 0
  %1460 = vmatprep.subr.bf16.mxu0 0
  %1461 = vmatpush1.bf16.msra.mxu0 0
  %1462 = vmatprep.subr.bf16.mxu0 0
  %1463 = vmatpush1.bf16.msra.mxu0 0
  %1464 = vmatprep.subr.bf16.mxu0 0
  %1465 = vmatpush1.bf16.msra.mxu0 0
  %1466 = vmatprep.subr.bf16.mxu0 0
  %1467 = vmatpush1.bf16.msra.mxu0 0
  %1468 = vmatprep.subr.bf16.mxu0 0
  %1469 = vmatpush1.bf16.msra.mxu0 0
  %1470 = vmatprep.subr.bf16.mxu0 0
  %1471 = vmatpush1.bf16.msra.mxu0 0
  %1472 = vmatprep.subr.bf16.mxu0 0
  %1473 = vmatpush1.bf16.msra.mxu0 0
  %1474 = vmatprep.subr.bf16.mxu0 0
  %1475 = vmatpush1.bf16.msra.mxu0 %v954
  %1476 = vmatprep.subr.bf16.mxu0 0
  %1477 = vmatpush2.bf16.msra.mxu0 0
  %1478 = vmatprep.subr.bf16.mxu0 0
  %1479 = vmatpush2.bf16.msra.mxu0 0
  %1480 = vmatprep.subr.bf16.mxu0 0
  %1481 = vmatpush2.bf16.msra.mxu0 0
  %1482 = vmatprep.subr.bf16.mxu0 0
  %1483 = vmatpush2.bf16.msra.mxu0 0
  %1484 = vmatprep.subr.bf16.mxu0 0
  %1485 = vmatpush2.bf16.msra.mxu0 0
  %1486 = vmatprep.subr.bf16.mxu0 0
  %1487 = vmatpush2.bf16.msra.mxu0 0
  %1488 = vmatprep.subr.bf16.mxu0 0
  %1489 = vmatpush2.bf16.msra.mxu0 0
  %1490 = vmatprep.subr.bf16.mxu0 0
  %1491 = vmatpush2.bf16.msra.mxu0 0
  %1492 = vmatprep.mubr.bf16.mxu0 0
  %1493 = vmatmul.mubr.bf16.gmra.mxu0 %v1458
  %v1494 = vpop.f32.mrf.mxu0
  %v1495 = vadd.f32 0.0, %v1494
  %v1496 = vpop.f32.mrf.mxu0
  %v1497 = vpop.f32.mrf.mxu0
  %v1498 = vpop.f32.mrf.mxu0
  %1499 = vdwg.mxu0
  %v1500 = vadd.f32 %v947, %v1495
  %v1501 = vxor.u32 %v1500, 2147483648
  %v1502 = vmul.f32 %v1501, 1.442695
  %v1503 = vpow.pop %v1502
  %v1504 = vadd.f32 %v1503, 1.0
  %v1505 = vrcp.pop %v1504
  %v1506 = vmul.f32 1.0, %v1505
  %v1507 = vtanh.pop %v1500
  %v1508 = vmul.f32 %v1506, %v1446
  %1510 = vrot.lane.b32.xlu0 %v1507, 96
  %v1511 = vpop.permute.xlu0 %1510
  %v1513 = vmul.f32 %v1506, %v1511
  %1515 = vrot.lane.b32.xlu0 %v1513, 16
  %v1516 = vpop.permute.xlu0 %1515
  %v1518 = vadd.f32 %v1508, %v1516
  %v1519 = vtanh.pop %v1518
  %1521 = vrot.lane.b32.xlu0 %v1519, 32
  %v1522 = vpop.permute.xlu0 %1521
  %v1524 = vmul.f32 %v1506, %v1522
  %v1525 = vmul.f32 %v1020, 0.5
  %v1526 = vmul.f32 %v1092, 0.5
  %v1527 = vmul.f32 %v1164, 0.5
  %v1528 = vmul.f32 %v1236, 0.5
  %v1529 = vmul.f32 %v1308, 0.5
  %v1530 = vmul.f32 %v1380, 0.5
  %v1531 = vmul.f32 %v1452, 0.5
  %v1532 = vmul.f32 %v1524, 0.5
  %v1533 = vmul.f32 %v1525, 1.442695
  %v1534 = vpow.pop %v1533
  %v1535 = vmul.f32 %v1526, 1.442695
  %v1536 = vpow.pop %v1535
  %v1537 = vmul.f32 %v1527, 1.442695
  %v1538 = vpow.pop %v1537
  %v1539 = vmul.f32 %v1528, 1.442695
  %v1540 = vpow.pop %v1539
  %v1541 = vmul.f32 %v1529, 1.442695
  %v1542 = vpow.pop %v1541
  %v1543 = vmul.f32 %v1530, 1.442695
  %v1544 = vpow.pop %v1543
  %v1545 = vmul.f32 %v1531, 1.442695
  %v1546 = vpow.pop %v1545
  %v1547 = vmul.f32 %v1532, 1.442695
  %v1548 = vpow.pop %v1547
  %1557 = vrot.lane.b32.xlu0 %v1534, 72
  %v1558 = vpop.permute.xlu0 %1557
  %1559 = vrot.lane.b32.xlu0 %v1536, 72
  %v1560 = vpop.permute.xlu0 %1559
  %1561 = vrot.lane.b32.xlu0 %v1538, 72
  %v1562 = vpop.permute.xlu0 %1561
  %1563 = vrot.lane.b32.xlu0 %v1540, 72
  %v1564 = vpop.permute.xlu0 %1563
  %1565 = vrot.lane.b32.xlu0 %v1542, 72
  %v1566 = vpop.permute.xlu0 %1565
  %1567 = vrot.lane.b32.xlu0 %v1544, 72
  %v1568 = vpop.permute.xlu0 %1567
  %1569 = vrot.lane.b32.xlu0 %v1546, 72
  %v1570 = vpop.permute.xlu0 %1569
  %1571 = vrot.lane.b32.xlu0 %v1548, 72
  %v1572 = vpop.permute.xlu0 %1571
  %v1581 = vmul.f32 %v41, %v1558
  %v1582 = vmul.f32 %v42, %v1560
  %v1583 = vmul.f32 %v43, %v1562
  %v1584 = vmul.f32 %v44, %v1564
  %v1585 = vmul.f32 %v45, %v1566
  %v1586 = vmul.f32 %v46, %v1568
  %v1587 = vmul.f32 %v47, %v1570
  %v1588 = vmul.f32 %v48, %v1572
  %1597 = vrot.lane.b32.xlu0 %v1020, 80
  %v1598 = vpop.permute.xlu0 %1597
  %1599 = vrot.lane.b32.xlu0 %v1092, 80
  %v1600 = vpop.permute.xlu0 %1599
  %1601 = vrot.lane.b32.xlu0 %v1164, 80
  %v1602 = vpop.permute.xlu0 %1601
  %1603 = vrot.lane.b32.xlu0 %v1236, 80
  %v1604 = vpop.permute.xlu0 %1603
  %1605 = vrot.lane.b32.xlu0 %v1308, 80
  %v1606 = vpop.permute.xlu0 %1605
  %1607 = vrot.lane.b32.xlu0 %v1380, 80
  %v1608 = vpop.permute.xlu0 %1607
  %1609 = vrot.lane.b32.xlu0 %v1452, 80
  %v1610 = vpop.permute.xlu0 %1609
  %1611 = vrot.lane.b32.xlu0 %v1524, 80
  %v1612 = vpop.permute.xlu0 %1611
  %v1621 = vadd.f32 %v1581, %v1598
  %v1622 = vadd.f32 %v1582, %v1600
  %v1623 = vadd.f32 %v1583, %v1602
  %v1624 = vadd.f32 %v1584, %v1604
  %v1625 = vadd.f32 %v1585, %v1606
  %v1626 = vadd.f32 %v1586, %v1608
  %v1627 = vadd.f32 %v1587, %v1610
  %v1628 = vadd.f32 %v1588, %v1612
  %v1629 = vsub.f32 -1.0, %v1020
  %v1630 = vsub.f32 -1.0, %v1092
  %v1631 = vsub.f32 -1.0, %v1164
  %v1632 = vsub.f32 -1.0, %v1236
  %v1633 = vsub.f32 -1.0, %v1308
  %v1634 = vsub.f32 -1.0, %v1380
  %v1635 = vsub.f32 -1.0, %v1452
  %v1636 = vsub.f32 -1.0, %v1524
  %v1637 = vmul.f32 %v1020, %v1020
  %v1638 = vmul.f32 %v1092, %v1092
  %v1639 = vmul.f32 %v1164, %v1164
  %v1640 = vmul.f32 %v1236, %v1236
  %v1641 = vmul.f32 %v1308, %v1308
  %v1642 = vmul.f32 %v1380, %v1380
  %v1643 = vmul.f32 %v1452, %v1452
  %v1644 = vmul.f32 %v1524, %v1524
  %1653 = vrot.lane.b32.xlu0 %v1637, 8
  %v1654 = vpop.permute.xlu0 %1653
  %1655 = vrot.lane.b32.xlu0 %v1638, 8
  %v1656 = vpop.permute.xlu0 %1655
  %1657 = vrot.lane.b32.xlu0 %v1639, 8
  %v1658 = vpop.permute.xlu0 %1657
  %1659 = vrot.lane.b32.xlu0 %v1640, 8
  %v1660 = vpop.permute.xlu0 %1659
  %1661 = vrot.lane.b32.xlu0 %v1641, 8
  %v1662 = vpop.permute.xlu0 %1661
  %1663 = vrot.lane.b32.xlu0 %v1642, 8
  %v1664 = vpop.permute.xlu0 %1663
  %1665 = vrot.lane.b32.xlu0 %v1643, 8
  %v1666 = vpop.permute.xlu0 %1665
  %1667 = vrot.lane.b32.xlu0 %v1644, 8
  %v1668 = vpop.permute.xlu0 %1667
  %v1677 = vadd.f32 %v1629, %v1654
  %v1678 = vadd.f32 %v1630, %v1656
  %v1679 = vadd.f32 %v1631, %v1658
  %v1680 = vadd.f32 %v1632, %v1660
  %v1681 = vadd.f32 %v1633, %v1662
  %v1682 = vadd.f32 %v1634, %v1664
  %v1683 = vadd.f32 %v1635, %v1666
  %v1684 = vadd.f32 %v1636, %v1668
  %v1685 = vmul.f32 %v1020, 1.442695
  %v1686 = vpow.pop %v1685
  %v1687 = vmul.f32 %v1092, 1.442695
  %v1688 = vpow.pop %v1687
  %v1689 = vmul.f32 %v1164, 1.442695
  %v1690 = vpow.pop %v1689
  %v1691 = vmul.f32 %v1236, 1.442695
  %v1692 = vpow.pop %v1691
  %v1693 = vmul.f32 %v1308, 1.442695
  %v1694 = vpow.pop %v1693
  %v1695 = vmul.f32 %v1380, 1.442695
  %v1696 = vpow.pop %v1695
  %v1697 = vmul.f32 %v1452, 1.442695
  %v1698 = vpow.pop %v1697
  %v1699 = vmul.f32 %v1524, 1.442695
  %v1700 = vpow.pop %v1699
  %v1701 = vadd.f32 %v1677, %v1686
  %v1702 = vadd.f32 %v1678, %v1688
  %v1703 = vadd.f32 %v1679, %v1690
  %v1704 = vadd.f32 %v1680, %v1692
  %v1705 = vadd.f32 %v1681, %v1694
  %v1706 = vadd.f32 %v1682, %v1696
  %v1707 = vadd.f32 %v1683, %v1698
  %v1708 = vadd.f32 %v1684, %v1700
  %1710 = vset.pattern.permute.xlu0 0
  %1711 = vperm.xlu0 %1710, %v65
  %v1712 = vpop.permute.xlu0 %1711
  %v1714 = vmul.f32 %v1712, %v1701
  %v1715 = vmul.f32 %v1712, %v1702
  %v1716 = vmul.f32 %v1712, %v1703
  %v1717 = vmul.f32 %v1712, %v1704
  %v1718 = vmul.f32 %v1712, %v1705
  %v1719 = vmul.f32 %v1712, %v1706
  %v1720 = vmul.f32 %v1712, %v1707
  %v1721 = vmul.f32 %v1712, %v1708
  %1730 = vrot.lane.b32.xlu0 %v1714, 72
  %v1731 = vpop.permute.xlu0 %1730
  %1732 = vrot.lane.b32.xlu0 %v1715, 72
  %v1733 = vpop.permute.xlu0 %1732
  %1734 = vrot.lane.b32.xlu0 %v1716, 72
  %v1735 = vpop.permute.xlu0 %1734
  %1736 = vrot.lane.b32.xlu0 %v1717, 72
  %v1737 = vpop.permute.xlu0 %1736
  %1738 = vrot.lane.b32.xlu0 %v1718, 72
  %v1739 = vpop.permute.xlu0 %1738
  %1740 = vrot.lane.b32.xlu0 %v1719, 72
  %v1741 = vpop.permute.xlu0 %1740
  %1742 = vrot.lane.b32.xlu0 %v1720, 72
  %v1743 = vpop.permute.xlu0 %1742
  %1744 = vrot.lane.b32.xlu0 %v1721, 72
  %v1745 = vpop.permute.xlu0 %1744
  %v1754 = vsel %vm78, %v1731, 0.0
  %v1755 = vsel %vm78, %v1733, 0.0
  %v1756 = vadd.f32 %v1754, %v1755
  %v1757 = vsel %vm78, %v1735, 0.0
  %v1758 = vadd.f32 %v1756, %v1757
  %v1759 = vsel %vm78, %v1737, 0.0
  %v1760 = vadd.f32 %v1758, %v1759
  %v1761 = vsel %vm78, %v1739, 0.0
  %v1762 = vadd.f32 %v1760, %v1761
  %v1763 = vsel %vm78, %v1741, 0.0
  %v1764 = vadd.f32 %v1762, %v1763
  %v1765 = vsel %vm78, %v1743, 0.0
  %v1766 = vadd.f32 %v1764, %v1765
  %v1767 = vsel %vm78, %v1745, 0.0
  %v1768 = vadd.f32 %v1766, %v1767
  %1769 = vadd.xlane.f32.xlu0 %v1768
  %v1770 = vpop.xlane.xlu0 %1769
  %v1771 = vrot.slane %v1770, 4
  %v1772 = vadd.f32 %v1770, %v1771
  %v1773 = vrot.slane %v1772, 2
  %v1774 = vadd.f32 %v1772, %v1773
  %v1775 = vrot.slane %v1774, 1
  %v1776 = vadd.f32 %v1774, %v1775
  %s1777 = vtos %v1776
  %v1778 = vstv %s1777
  %v1779 = vmul.f32 %v1778, 0.5
  %v1780 = vrcp.pop 2.0
  %v1781 = vmul.f32 %v1779, %v1780
  %v1782 = vld [vmem:[%s1 + $0x30] sm:$0xf]
  %v1783 = vld [vmem:[%s1 + $0x38] sm:$0xf]
  %v1784 = vld [vmem:[%s1 + $0x3c] sm:$0xf]
  %v1785 = vld [vmem:[%s1 + $0x40] sm:$0xf]
  %v1786 = vld [vmem:[%s1 + $0x44] sm:$0xf]
  %v1787 = vld [vmem:[%s2 + $0x18] sm:$0x1]
  %v1788 = vpack.c.bf16 %v33, %v1621
  %v1789 = vpack.c.bf16 %v34, %v1622
  %v1790 = vpack.c.bf16 %v35, %v1623
  %v1791 = vpack.c.bf16 %v36, %v1624
  %v1792 = vpack.c.bf16 %v37, %v1625
  %v1793 = vpack.c.bf16 %v38, %v1626
  %v1794 = vpack.c.bf16 %v39, %v1627
  %v1795 = vpack.c.bf16 %v40, %v1628
  %v1796 = vlaneseq
  %v1797 = vshrl.u32 %v1796, 7
  %v1798 = vsub.s32 0, %v1797
  %v1799 = vrot.slane %v1787, %v1798
  %v1801 = vsel %vm78, %v1788, 0
  %v1804 = vsel %vm78, %v1789, 0
  %v1807 = vsel %vm78, %v1790, 0
  %v1810 = vsel %vm78, %v1791, 0
  %v1813 = vsel %vm78, %v1792, 0
  %v1816 = vsel %vm78, %v1793, 0
  %v1819 = vsel %vm78, %v1794, 0
  %v1822 = vsel %vm78, %v1795, 0
  %v1825 = vsel %vm91, %v1782, 0
  %1827 = vmatprep.subr.bf16.mxu0 0
  %1828 = vmatpush1.bf16.msra.mxu0 0
  %1829 = vmatprep.subr.bf16.mxu0 0
  %1830 = vmatpush1.bf16.msra.mxu0 0
  %1831 = vmatprep.subr.bf16.mxu0 0
  %1832 = vmatpush1.bf16.msra.mxu0 0
  %1833 = vmatprep.subr.bf16.mxu0 0
  %1834 = vmatpush1.bf16.msra.mxu0 0
  %1835 = vmatprep.subr.bf16.mxu0 0
  %1836 = vmatpush1.bf16.msra.mxu0 0
  %1837 = vmatprep.subr.bf16.mxu0 0
  %1838 = vmatpush1.bf16.msra.mxu0 0
  %1839 = vmatprep.subr.bf16.mxu0 0
  %1840 = vmatpush1.bf16.msra.mxu0 0
  %1841 = vmatprep.subr.bf16.mxu0 0
  %1842 = vmatpush1.bf16.msra.mxu0 %v1825
  %1843 = vmatprep.subr.bf16.mxu0 0
  %1844 = vmatpush2.bf16.msra.mxu0 0
  %1845 = vmatprep.subr.bf16.mxu0 0
  %1846 = vmatpush2.bf16.msra.mxu0 0
  %1847 = vmatprep.subr.bf16.mxu0 0
  %1848 = vmatpush2.bf16.msra.mxu0 0
  %1849 = vmatprep.subr.bf16.mxu0 0
  %1850 = vmatpush2.bf16.msra.mxu0 0
  %1851 = vmatprep.subr.bf16.mxu0 0
  %1852 = vmatpush2.bf16.msra.mxu0 0
  %1853 = vmatprep.subr.bf16.mxu0 0
  %1854 = vmatpush2.bf16.msra.mxu0 0
  %1855 = vmatprep.subr.bf16.mxu0 0
  %1856 = vmatpush2.bf16.msra.mxu0 0
  %1857 = vmatprep.subr.bf16.mxu0 0
  %1858 = vmatpush2.bf16.msra.mxu0 0
  %1859 = vmatprep.mubr.bf16.mxu0 0
  %1860 = vmatmul.mubr.bf16.gmra.mxu0 %v1801
  %v1861 = vpop.f32.mrf.mxu0
  %v1862 = vadd.f32 %v1799, %v1861
  %v1863 = vpop.f32.mrf.mxu0
  %v1864 = vpop.f32.mrf.mxu0
  %v1865 = vadd.f32 %v1799, %v1864
  %v1866 = vpop.f32.mrf.mxu0
  %1867 = vmatprep.mubr.bf16.mxu0 0
  %1868 = vmatmul.mubr.bf16.gmra.mxu0 %v1804
  %v1869 = vpop.f32.mrf.mxu0
  %v1870 = vadd.f32 %v1799, %v1869
  %v1871 = vpop.f32.mrf.mxu0
  %v1872 = vpop.f32.mrf.mxu0
  %v1873 = vadd.f32 %v1799, %v1872
  %v1874 = vpop.f32.mrf.mxu0
  %1875 = vmatprep.mubr.bf16.mxu0 0
  %1876 = vmatmul.mubr.bf16.gmra.mxu0 %v1807
  %v1877 = vpop.f32.mrf.mxu0
  %v1878 = vadd.f32 %v1799, %v1877
  %v1879 = vpop.f32.mrf.mxu0
  %v1880 = vpop.f32.mrf.mxu0
  %v1881 = vadd.f32 %v1799, %v1880
  %v1882 = vpop.f32.mrf.mxu0
  %1883 = vmatprep.mubr.bf16.mxu0 0
  %1884 = vmatmul.mubr.bf16.gmra.mxu0 %v1810
  %v1885 = vpop.f32.mrf.mxu0
  %v1886 = vadd.f32 %v1799, %v1885
  %v1887 = vpop.f32.mrf.mxu0
  %v1888 = vpop.f32.mrf.mxu0
  %v1889 = vadd.f32 %v1799, %v1888
  %v1890 = vpop.f32.mrf.mxu0
  %1891 = vmatprep.mubr.bf16.mxu0 0
  %1892 = vmatmul.mubr.bf16.gmra.mxu0 %v1813
  %v1893 = vpop.f32.mrf.mxu0
  %v1894 = vadd.f32 %v1799, %v1893
  %v1895 = vpop.f32.mrf.mxu0
  %v1896 = vpop.f32.mrf.mxu0
  %v1897 = vadd.f32 %v1799, %v1896
  %v1898 = vpop.f32.mrf.mxu0
  %1899 = vmatprep.mubr.bf16.mxu0 0
  %1900 = vmatmul.mubr.bf16.gmra.mxu0 %v1816
  %v1901 = vpop.f32.mrf.mxu0
  %v1902 = vadd.f32 %v1799, %v1901
  %v1903 = vpop.f32.mrf.mxu0
  %v1904 = vpop.f32.mrf.mxu0
  %v1905 = vadd.f32 %v1799, %v1904
  %v1906 = vpop.f32.mrf.mxu0
  %1907 = vmatprep.mubr.bf16.mxu0 0
  %1908 = vmatmul.mubr.bf16.gmra.mxu0 %v1819
  %v1909 = vpop.f32.mrf.mxu0
  %v1910 = vadd.f32 %v1799, %v1909
  %v1911 = vpop.f32.mrf.mxu0
  %v1912 = vpop.f32.mrf.mxu0
  %v1913 = vadd.f32 %v1799, %v1912
  %v1914 = vpop.f32.mrf.mxu0
  %1915 = vmatprep.mubr.bf16.mxu0 0
  %1916 = vmatmul.mubr.bf16.gmra.mxu0 %v1822
  %v1917 = vpop.f32.mrf.mxu0
  %v1918 = vadd.f32 %v1799, %v1917
  %v1919 = vpop.f32.mrf.mxu0
  %v1920 = vpop.f32.mrf.mxu0
  %v1921 = vadd.f32 %v1799, %v1920
  %v1922 = vpop.f32.mrf.mxu0
  %1923 = vdwg.mxu0
  %v1928 = vunpack.c.l.b16 %v1783
  %v1929 = vunpack.c.l.b16 %v1784
  %v1930 = vunpack.c.l.b16 %v1785
  %v1931 = vunpack.c.l.b16 %v1786
  %v1932 = vpack.c.b16 %v1929, %v1928
  %v1933 = vpack.c.b16 %v1931, %v1930
  %v1936 = vsel %vm872, 0, 0
  %1938 = vmatprep.subr.bf16.mxu0 0
  %1939 = vmatpush1.bf16.msra.mxu0 0
  %1940 = vmatprep.subr.bf16.mxu0 0
  %1941 = vmatpush1.bf16.msra.mxu0 0
  %1942 = vmatprep.subr.bf16.mxu0 0
  %1943 = vmatpush1.bf16.msra.mxu0 0
  %1944 = vmatprep.subr.bf16.mxu0 0
  %1945 = vmatpush1.bf16.msra.mxu0 0
  %1946 = vmatprep.subr.bf16.mxu0 0
  %1947 = vmatpush1.bf16.msra.mxu0 0
  %1948 = vmatprep.subr.bf16.mxu0 0
  %1949 = vmatpush1.bf16.msra.mxu0 0
  %1950 = vmatprep.subr.bf16.mxu0 0
  %1951 = vmatpush1.bf16.msra.mxu0 %v1933
  %1952 = vmatprep.subr.bf16.mxu0 0
  %1953 = vmatpush1.bf16.msra.mxu0 %v1932
  %1954 = vmatprep.subr.bf16.mxu0 0
  %1955 = vmatpush2.bf16.msra.mxu0 0
  %1956 = vmatprep.subr.bf16.mxu0 0
  %1957 = vmatpush2.bf16.msra.mxu0 0
  %1958 = vmatprep.subr.bf16.mxu0 0
  %1959 = vmatpush2.bf16.msra.mxu0 0
  %1960 = vmatprep.subr.bf16.mxu0 0
  %1961 = vmatpush2.bf16.msra.mxu0 0
  %1962 = vmatprep.subr.bf16.mxu0 0
  %1963 = vmatpush2.bf16.msra.mxu0 0
  %1964 = vmatprep.subr.bf16.mxu0 0
  %1965 = vmatpush2.bf16.msra.mxu0 0
  %1966 = vmatprep.subr.bf16.mxu0 0
  %1967 = vmatpush2.bf16.msra.mxu0 0
  %1968 = vmatprep.subr.bf16.mxu0 0
  %1969 = vmatpush2.bf16.msra.mxu0 0
  %1970 = vmatprep.mubr.bf16.mxu0 0
  %1971 = vmatmul.mubr.bf16.gmra.mxu0 %v1936
  %v1972 = vpop.f32.mrf.mxu0
  %v1973 = vadd.f32 0.0, %v1972
  %v1974 = vpop.f32.mrf.mxu0
  %v1975 = vpop.f32.mrf.mxu0
  %v1976 = vadd.f32 0.0, %v1975
  %v1977 = vpop.f32.mrf.mxu0
  %1978 = vdwg.mxu0
  %v1979 = vadd.f32 %v1862, %v1973
  %v1980 = vadd.f32 %v1865, %v1976
  %v1981 = vxor.u32 %v1979, 2147483648
  %v1982 = vxor.u32 %v1980, 2147483648
  %v1983 = vmul.f32 %v1981, 1.442695
  %v1984 = vpow.pop %v1983
  %v1985 = vmul.f32 %v1982, 1.442695
  %v1986 = vpow.pop %v1985
  %v1987 = vadd.f32 %v1984, 1.0
  %v1988 = vadd.f32 %v1986, 1.0
  %v1989 = vrcp.pop %v1987
  %v1990 = vmul.f32 1.0, %v1989
  %v1991 = vrcp.pop %v1988
  %v1992 = vmul.f32 1.0, %v1991
  %v1993 = vtanh.pop %v1979
  %v1994 = vtanh.pop %v1980
  %v1995 = vmul.f32 %v1990, 0.0
  %v1996 = vmul.f32 %v1992, 0.0
  %1999 = vrot.lane.b32.xlu0 %v1993, 64
  %v2000 = vpop.permute.xlu0 %1999
  %2001 = vrot.lane.b32.xlu0 %v1994, 64
  %v2002 = vpop.permute.xlu0 %2001
  %v2005 = vmul.f32 %v1990, %v2000
  %v2006 = vmul.f32 %v1992, %v2002
  %2009 = vrot.lane.b32.xlu0 %v2005, 32
  %v2010 = vpop.permute.xlu0 %2009
  %2011 = vrot.lane.b32.xlu0 %v2006, 32
  %v2012 = vpop.permute.xlu0 %2011
  %v2015 = vadd.f32 %v1995, %v2010
  %v2016 = vadd.f32 %v1996, %v2012
  %v2017 = vtanh.pop %v2015
  %v2018 = vtanh.pop %v2016
  %2021 = vrot.lane.b32.xlu0 %v2017, 64
  %v2022 = vpop.permute.xlu0 %2021
  %2023 = vrot.lane.b32.xlu0 %v2018, 64
  %v2024 = vpop.permute.xlu0 %2023
  %v2027 = vmul.f32 %v1990, %v2022
  %v2028 = vmul.f32 %v1992, %v2024
  %v2029 = vpack.c.bf16 %v2028, %v2027
  %2031 = vrot.lane.b32.xlu0 %v2029, 32
  %v2032 = vpop.permute.xlu0 %2031
  %v2034 = vsel %vm872, %v2032, 0
  %2036 = vmatprep.subr.bf16.mxu0 0
  %2037 = vmatpush1.bf16.msra.mxu0 0
  %2038 = vmatprep.subr.bf16.mxu0 0
  %2039 = vmatpush1.bf16.msra.mxu0 0
  %2040 = vmatprep.subr.bf16.mxu0 0
  %2041 = vmatpush1.bf16.msra.mxu0 0
  %2042 = vmatprep.subr.bf16.mxu0 0
  %2043 = vmatpush1.bf16.msra.mxu0 0
  %2044 = vmatprep.subr.bf16.mxu0 0
  %2045 = vmatpush1.bf16.msra.mxu0 0
  %2046 = vmatprep.subr.bf16.mxu0 0
  %2047 = vmatpush1.bf16.msra.mxu0 0
  %2048 = vmatprep.subr.bf16.mxu0 0
  %2049 = vmatpush1.bf16.msra.mxu0 %v1933
  %2050 = vmatprep.subr.bf16.mxu0 0
  %2051 = vmatpush1.bf16.msra.mxu0 %v1932
  %2052 = vmatprep.subr.bf16.mxu0 0
  %2053 = vmatpush2.bf16.msra.mxu0 0
  %2054 = vmatprep.subr.bf16.mxu0 0
  %2055 = vmatpush2.bf16.msra.mxu0 0
  %2056 = vmatprep.subr.bf16.mxu0 0
  %2057 = vmatpush2.bf16.msra.mxu0 0
  %2058 = vmatprep.subr.bf16.mxu0 0
  %2059 = vmatpush2.bf16.msra.mxu0 0
  %2060 = vmatprep.subr.bf16.mxu0 0
  %2061 = vmatpush2.bf16.msra.mxu0 0
  %2062 = vmatprep.subr.bf16.mxu0 0
  %2063 = vmatpush2.bf16.msra.mxu0 0
  %2064 = vmatprep.subr.bf16.mxu0 0
  %2065 = vmatpush2.bf16.msra.mxu0 0
  %2066 = vmatprep.subr.bf16.mxu0 0
  %2067 = vmatpush2.bf16.msra.mxu0 0
  %2068 = vmatprep.mubr.bf16.mxu0 0
  %2069 = vmatmul.mubr.bf16.gmra.mxu0 %v2034
  %v2070 = vpop.f32.mrf.mxu0
  %v2071 = vadd.f32 0.0, %v2070
  %v2072 = vpop.f32.mrf.mxu0
  %v2073 = vpop.f32.mrf.mxu0
  %v2074 = vadd.f32 0.0, %v2073
  %v2075 = vpop.f32.mrf.mxu0
  %2076 = vdwg.mxu0
  %v2077 = vadd.f32 %v1870, %v2071
  %v2078 = vadd.f32 %v1873, %v2074
  %v2079 = vxor.u32 %v2077, 2147483648
  %v2080 = vxor.u32 %v2078, 2147483648
  %v2081 = vmul.f32 %v2079, 1.442695
  %v2082 = vpow.pop %v2081
  %v2083 = vmul.f32 %v2080, 1.442695
  %v2084 = vpow.pop %v2083
  %v2085 = vadd.f32 %v2082, 1.0
  %v2086 = vadd.f32 %v2084, 1.0
  %v2087 = vrcp.pop %v2085
  %v2088 = vmul.f32 1.0, %v2087
  %v2089 = vrcp.pop %v2086
  %v2090 = vmul.f32 1.0, %v2089
  %v2091 = vtanh.pop %v2077
  %v2092 = vtanh.pop %v2078
  %v2093 = vmul.f32 %v2088, %v2015
  %v2094 = vmul.f32 %v2090, %v2016
  %2097 = vrot.lane.b32.xlu0 %v2091, 64
  %v2098 = vpop.permute.xlu0 %2097
  %2099 = vrot.lane.b32.xlu0 %v2092, 64
  %v2100 = vpop.permute.xlu0 %2099
  %v2103 = vmul.f32 %v2088, %v2098
  %v2104 = vmul.f32 %v2090, %v2100
  %2107 = vrot.lane.b32.xlu0 %v2103, 32
  %v2108 = vpop.permute.xlu0 %2107
  %2109 = vrot.lane.b32.xlu0 %v2104, 32
  %v2110 = vpop.permute.xlu0 %2109
  %v2113 = vadd.f32 %v2093, %v2108
  %v2114 = vadd.f32 %v2094, %v2110
  %v2115 = vtanh.pop %v2113
  %v2116 = vtanh.pop %v2114
  %2119 = vrot.lane.b32.xlu0 %v2115, 64
  %v2120 = vpop.permute.xlu0 %2119
  %2121 = vrot.lane.b32.xlu0 %v2116, 64
  %v2122 = vpop.permute.xlu0 %2121
  %v2125 = vmul.f32 %v2088, %v2120
  %v2126 = vmul.f32 %v2090, %v2122
  %v2127 = vpack.c.bf16 %v2126, %v2125
  %2129 = vrot.lane.b32.xlu0 %v2127, 32
  %v2130 = vpop.permute.xlu0 %2129
  %v2132 = vsel %vm872, %v2130, 0
  %2134 = vmatprep.subr.bf16.mxu0 0
  %2135 = vmatpush1.bf16.msra.mxu0 0
  %2136 = vmatprep.subr.bf16.mxu0 0
  %2137 = vmatpush1.bf16.msra.mxu0 0
  %2138 = vmatprep.subr.bf16.mxu0 0
  %2139 = vmatpush1.bf16.msra.mxu0 0
  %2140 = vmatprep.subr.bf16.mxu0 0
  %2141 = vmatpush1.bf16.msra.mxu0 0
  %2142 = vmatprep.subr.bf16.mxu0 0
  %2143 = vmatpush1.bf16.msra.mxu0 0
  %2144 = vmatprep.subr.bf16.mxu0 0
  %2145 = vmatpush1.bf16.msra.mxu0 0
  %2146 = vmatprep.subr.bf16.mxu0 0
  %2147 = vmatpush1.bf16.msra.mxu0 %v1933
  %2148 = vmatprep.subr.bf16.mxu0 0
  %2149 = vmatpush1.bf16.msra.mxu0 %v1932
  %2150 = vmatprep.subr.bf16.mxu0 0
  %2151 = vmatpush2.bf16.msra.mxu0 0
  %2152 = vmatprep.subr.bf16.mxu0 0
  %2153 = vmatpush2.bf16.msra.mxu0 0
  %2154 = vmatprep.subr.bf16.mxu0 0
  %2155 = vmatpush2.bf16.msra.mxu0 0
  %2156 = vmatprep.subr.bf16.mxu0 0
  %2157 = vmatpush2.bf16.msra.mxu0 0
  %2158 = vmatprep.subr.bf16.mxu0 0
  %2159 = vmatpush2.bf16.msra.mxu0 0
  %2160 = vmatprep.subr.bf16.mxu0 0
  %2161 = vmatpush2.bf16.msra.mxu0 0
  %2162 = vmatprep.subr.bf16.mxu0 0
  %2163 = vmatpush2.bf16.msra.mxu0 0
  %2164 = vmatprep.subr.bf16.mxu0 0
  %2165 = vmatpush2.bf16.msra.mxu0 0
  %2166 = vmatprep.mubr.bf16.mxu0 0
  %2167 = vmatmul.mubr.bf16.gmra.mxu0 %v2132
  %v2168 = vpop.f32.mrf.mxu0
  %v2169 = vadd.f32 0.0, %v2168
  %v2170 = vpop.f32.mrf.mxu0
  %v2171 = vpop.f32.mrf.mxu0
  %v2172 = vadd.f32 0.0, %v2171
  %v2173 = vpop.f32.mrf.mxu0
  %2174 = vdwg.mxu0
  %v2175 = vadd.f32 %v1878, %v2169
  %v2176 = vadd.f32 %v1881, %v2172
  %v2177 = vxor.u32 %v2175, 2147483648
  %v2178 = vxor.u32 %v2176, 2147483648
  %v2179 = vmul.f32 %v2177, 1.442695
  %v2180 = vpow.pop %v2179
  %v2181 = vmul.f32 %v2178, 1.442695
  %v2182 = vpow.pop %v2181
  %v2183 = vadd.f32 %v2180, 1.0
  %v2184 = vadd.f32 %v2182, 1.0
  %v2185 = vrcp.pop %v2183
  %v2186 = vmul.f32 1.0, %v2185
  %v2187 = vrcp.pop %v2184
  %v2188 = vmul.f32 1.0, %v2187
  %v2189 = vtanh.pop %v2175
  %v2190 = vtanh.pop %v2176
  %v2191 = vmul.f32 %v2186, %v2113
  %v2192 = vmul.f32 %v2188, %v2114
  %2195 = vrot.lane.b32.xlu0 %v2189, 64
  %v2196 = vpop.permute.xlu0 %2195
  %2197 = vrot.lane.b32.xlu0 %v2190, 64
  %v2198 = vpop.permute.xlu0 %2197
  %v2201 = vmul.f32 %v2186, %v2196
  %v2202 = vmul.f32 %v2188, %v2198
  %2205 = vrot.lane.b32.xlu0 %v2201, 32
  %v2206 = vpop.permute.xlu0 %2205
  %2207 = vrot.lane.b32.xlu0 %v2202, 32
  %v2208 = vpop.permute.xlu0 %2207
  %v2211 = vadd.f32 %v2191, %v2206
  %v2212 = vadd.f32 %v2192, %v2208
  %v2213 = vtanh.pop %v2211
  %v2214 = vtanh.pop %v2212
  %2217 = vrot.lane.b32.xlu0 %v2213, 64
  %v2218 = vpop.permute.xlu0 %2217
  %2219 = vrot.lane.b32.xlu0 %v2214, 64
  %v2220 = vpop.permute.xlu0 %2219
  %v2223 = vmul.f32 %v2186, %v2218
  %v2224 = vmul.f32 %v2188, %v2220
  %v2225 = vpack.c.bf16 %v2224, %v2223
  %2227 = vrot.lane.b32.xlu0 %v2225, 32
  %v2228 = vpop.permute.xlu0 %2227
  %v2230 = vsel %vm872, %v2228, 0
  %2232 = vmatprep.subr.bf16.mxu0 0
  %2233 = vmatpush1.bf16.msra.mxu0 0
  %2234 = vmatprep.subr.bf16.mxu0 0
  %2235 = vmatpush1.bf16.msra.mxu0 0
  %2236 = vmatprep.subr.bf16.mxu0 0
  %2237 = vmatpush1.bf16.msra.mxu0 0
  %2238 = vmatprep.subr.bf16.mxu0 0
  %2239 = vmatpush1.bf16.msra.mxu0 0
  %2240 = vmatprep.subr.bf16.mxu0 0
  %2241 = vmatpush1.bf16.msra.mxu0 0
  %2242 = vmatprep.subr.bf16.mxu0 0
  %2243 = vmatpush1.bf16.msra.mxu0 0
  %2244 = vmatprep.subr.bf16.mxu0 0
  %2245 = vmatpush1.bf16.msra.mxu0 %v1933
  %2246 = vmatprep.subr.bf16.mxu0 0
  %2247 = vmatpush1.bf16.msra.mxu0 %v1932
  %2248 = vmatprep.subr.bf16.mxu0 0
  %2249 = vmatpush2.bf16.msra.mxu0 0
  %2250 = vmatprep.subr.bf16.mxu0 0
  %2251 = vmatpush2.bf16.msra.mxu0 0
  %2252 = vmatprep.subr.bf16.mxu0 0
  %2253 = vmatpush2.bf16.msra.mxu0 0
  %2254 = vmatprep.subr.bf16.mxu0 0
  %2255 = vmatpush2.bf16.msra.mxu0 0
  %2256 = vmatprep.subr.bf16.mxu0 0
  %2257 = vmatpush2.bf16.msra.mxu0 0
  %2258 = vmatprep.subr.bf16.mxu0 0
  %2259 = vmatpush2.bf16.msra.mxu0 0
  %2260 = vmatprep.subr.bf16.mxu0 0
  %2261 = vmatpush2.bf16.msra.mxu0 0
  %2262 = vmatprep.subr.bf16.mxu0 0
  %2263 = vmatpush2.bf16.msra.mxu0 0
  %2264 = vmatprep.mubr.bf16.mxu0 0
  %2265 = vmatmul.mubr.bf16.gmra.mxu0 %v2230
  %v2266 = vpop.f32.mrf.mxu0
  %v2267 = vadd.f32 0.0, %v2266
  %v2268 = vpop.f32.mrf.mxu0
  %v2269 = vpop.f32.mrf.mxu0
  %v2270 = vadd.f32 0.0, %v2269
  %v2271 = vpop.f32.mrf.mxu0
  %2272 = vdwg.mxu0
  %v2273 = vadd.f32 %v1886, %v2267
  %v2274 = vadd.f32 %v1889, %v2270
  %v2275 = vxor.u32 %v2273, 2147483648
  %v2276 = vxor.u32 %v2274, 2147483648
  %v2277 = vmul.f32 %v2275, 1.442695
  %v2278 = vpow.pop %v2277
  %v2279 = vmul.f32 %v2276, 1.442695
  %v2280 = vpow.pop %v2279
  %v2281 = vadd.f32 %v2278, 1.0
  %v2282 = vadd.f32 %v2280, 1.0
  %v2283 = vrcp.pop %v2281
  %v2284 = vmul.f32 1.0, %v2283
  %v2285 = vrcp.pop %v2282
  %v2286 = vmul.f32 1.0, %v2285
  %v2287 = vtanh.pop %v2273
  %v2288 = vtanh.pop %v2274
  %v2289 = vmul.f32 %v2284, %v2211
  %v2290 = vmul.f32 %v2286, %v2212
  %2293 = vrot.lane.b32.xlu0 %v2287, 64
  %v2294 = vpop.permute.xlu0 %2293
  %2295 = vrot.lane.b32.xlu0 %v2288, 64
  %v2296 = vpop.permute.xlu0 %2295
  %v2299 = vmul.f32 %v2284, %v2294
  %v2300 = vmul.f32 %v2286, %v2296
  %2303 = vrot.lane.b32.xlu0 %v2299, 32
  %v2304 = vpop.permute.xlu0 %2303
  %2305 = vrot.lane.b32.xlu0 %v2300, 32
  %v2306 = vpop.permute.xlu0 %2305
  %v2309 = vadd.f32 %v2289, %v2304
  %v2310 = vadd.f32 %v2290, %v2306
  %v2311 = vtanh.pop %v2309
  %v2312 = vtanh.pop %v2310
  %2315 = vrot.lane.b32.xlu0 %v2311, 64
  %v2316 = vpop.permute.xlu0 %2315
  %2317 = vrot.lane.b32.xlu0 %v2312, 64
  %v2318 = vpop.permute.xlu0 %2317
  %v2321 = vmul.f32 %v2284, %v2316
  %v2322 = vmul.f32 %v2286, %v2318
  %v2323 = vpack.c.bf16 %v2322, %v2321
  %2325 = vrot.lane.b32.xlu0 %v2323, 32
  %v2326 = vpop.permute.xlu0 %2325
  %v2328 = vsel %vm872, %v2326, 0
  %2330 = vmatprep.subr.bf16.mxu0 0
  %2331 = vmatpush1.bf16.msra.mxu0 0
  %2332 = vmatprep.subr.bf16.mxu0 0
  %2333 = vmatpush1.bf16.msra.mxu0 0
  %2334 = vmatprep.subr.bf16.mxu0 0
  %2335 = vmatpush1.bf16.msra.mxu0 0
  %2336 = vmatprep.subr.bf16.mxu0 0
  %2337 = vmatpush1.bf16.msra.mxu0 0
  %2338 = vmatprep.subr.bf16.mxu0 0
  %2339 = vmatpush1.bf16.msra.mxu0 0
  %2340 = vmatprep.subr.bf16.mxu0 0
  %2341 = vmatpush1.bf16.msra.mxu0 0
  %2342 = vmatprep.subr.bf16.mxu0 0
  %2343 = vmatpush1.bf16.msra.mxu0 %v1933
  %2344 = vmatprep.subr.bf16.mxu0 0
  %2345 = vmatpush1.bf16.msra.mxu0 %v1932
  %2346 = vmatprep.subr.bf16.mxu0 0
  %2347 = vmatpush2.bf16.msra.mxu0 0
  %2348 = vmatprep.subr.bf16.mxu0 0
  %2349 = vmatpush2.bf16.msra.mxu0 0
  %2350 = vmatprep.subr.bf16.mxu0 0
  %2351 = vmatpush2.bf16.msra.mxu0 0
  %2352 = vmatprep.subr.bf16.mxu0 0
  %2353 = vmatpush2.bf16.msra.mxu0 0
  %2354 = vmatprep.subr.bf16.mxu0 0
  %2355 = vmatpush2.bf16.msra.mxu0 0
  %2356 = vmatprep.subr.bf16.mxu0 0
  %2357 = vmatpush2.bf16.msra.mxu0 0
  %2358 = vmatprep.subr.bf16.mxu0 0
  %2359 = vmatpush2.bf16.msra.mxu0 0
  %2360 = vmatprep.subr.bf16.mxu0 0
  %2361 = vmatpush2.bf16.msra.mxu0 0
  %2362 = vmatprep.mubr.bf16.mxu0 0
  %2363 = vmatmul.mubr.bf16.gmra.mxu0 %v2328
  %v2364 = vpop.f32.mrf.mxu0
  %v2365 = vadd.f32 0.0, %v2364
  %v2366 = vpop.f32.mrf.mxu0
  %v2367 = vpop.f32.mrf.mxu0
  %v2368 = vadd.f32 0.0, %v2367
  %v2369 = vpop.f32.mrf.mxu0
  %2370 = vdwg.mxu0
  %v2371 = vadd.f32 %v1894, %v2365
  %v2372 = vadd.f32 %v1897, %v2368
  %v2373 = vxor.u32 %v2371, 2147483648
  %v2374 = vxor.u32 %v2372, 2147483648
  %v2375 = vmul.f32 %v2373, 1.442695
  %v2376 = vpow.pop %v2375
  %v2377 = vmul.f32 %v2374, 1.442695
  %v2378 = vpow.pop %v2377
  %v2379 = vadd.f32 %v2376, 1.0
  %v2380 = vadd.f32 %v2378, 1.0
  %v2381 = vrcp.pop %v2379
  %v2382 = vmul.f32 1.0, %v2381
  %v2383 = vrcp.pop %v2380
  %v2384 = vmul.f32 1.0, %v2383
  %v2385 = vtanh.pop %v2371
  %v2386 = vtanh.pop %v2372
  %v2387 = vmul.f32 %v2382, %v2309
  %v2388 = vmul.f32 %v2384, %v2310
  %2391 = vrot.lane.b32.xlu0 %v2385, 64
  %v2392 = vpop.permute.xlu0 %2391
  %2393 = vrot.lane.b32.xlu0 %v2386, 64
  %v2394 = vpop.permute.xlu0 %2393
  %v2397 = vmul.f32 %v2382, %v2392
  %v2398 = vmul.f32 %v2384, %v2394
  %2401 = vrot.lane.b32.xlu0 %v2397, 32
  %v2402 = vpop.permute.xlu0 %2401
  %2403 = vrot.lane.b32.xlu0 %v2398, 32
  %v2404 = vpop.permute.xlu0 %2403
  %v2407 = vadd.f32 %v2387, %v2402
  %v2408 = vadd.f32 %v2388, %v2404
  %v2409 = vtanh.pop %v2407
  %v2410 = vtanh.pop %v2408
  %2413 = vrot.lane.b32.xlu0 %v2409, 64
  %v2414 = vpop.permute.xlu0 %2413
  %2415 = vrot.lane.b32.xlu0 %v2410, 64
  %v2416 = vpop.permute.xlu0 %2415
  %v2419 = vmul.f32 %v2382, %v2414
  %v2420 = vmul.f32 %v2384, %v2416
  %v2421 = vpack.c.bf16 %v2420, %v2419
  %2423 = vrot.lane.b32.xlu0 %v2421, 32
  %v2424 = vpop.permute.xlu0 %2423
  %v2426 = vsel %vm872, %v2424, 0
  %2428 = vmatprep.subr.bf16.mxu0 0
  %2429 = vmatpush1.bf16.msra.mxu0 0
  %2430 = vmatprep.subr.bf16.mxu0 0
  %2431 = vmatpush1.bf16.msra.mxu0 0
  %2432 = vmatprep.subr.bf16.mxu0 0
  %2433 = vmatpush1.bf16.msra.mxu0 0
  %2434 = vmatprep.subr.bf16.mxu0 0
  %2435 = vmatpush1.bf16.msra.mxu0 0
  %2436 = vmatprep.subr.bf16.mxu0 0
  %2437 = vmatpush1.bf16.msra.mxu0 0
  %2438 = vmatprep.subr.bf16.mxu0 0
  %2439 = vmatpush1.bf16.msra.mxu0 0
  %2440 = vmatprep.subr.bf16.mxu0 0
  %2441 = vmatpush1.bf16.msra.mxu0 %v1933
  %2442 = vmatprep.subr.bf16.mxu0 0
  %2443 = vmatpush1.bf16.msra.mxu0 %v1932
  %2444 = vmatprep.subr.bf16.mxu0 0
  %2445 = vmatpush2.bf16.msra.mxu0 0
  %2446 = vmatprep.subr.bf16.mxu0 0
  %2447 = vmatpush2.bf16.msra.mxu0 0
  %2448 = vmatprep.subr.bf16.mxu0 0
  %2449 = vmatpush2.bf16.msra.mxu0 0
  %2450 = vmatprep.subr.bf16.mxu0 0
  %2451 = vmatpush2.bf16.msra.mxu0 0
  %2452 = vmatprep.subr.bf16.mxu0 0
  %2453 = vmatpush2.bf16.msra.mxu0 0
  %2454 = vmatprep.subr.bf16.mxu0 0
  %2455 = vmatpush2.bf16.msra.mxu0 0
  %2456 = vmatprep.subr.bf16.mxu0 0
  %2457 = vmatpush2.bf16.msra.mxu0 0
  %2458 = vmatprep.subr.bf16.mxu0 0
  %2459 = vmatpush2.bf16.msra.mxu0 0
  %2460 = vmatprep.mubr.bf16.mxu0 0
  %2461 = vmatmul.mubr.bf16.gmra.mxu0 %v2426
  %v2462 = vpop.f32.mrf.mxu0
  %v2463 = vadd.f32 0.0, %v2462
  %v2464 = vpop.f32.mrf.mxu0
  %v2465 = vpop.f32.mrf.mxu0
  %v2466 = vadd.f32 0.0, %v2465
  %v2467 = vpop.f32.mrf.mxu0
  %2468 = vdwg.mxu0
  %v2469 = vadd.f32 %v1902, %v2463
  %v2470 = vadd.f32 %v1905, %v2466
  %v2471 = vxor.u32 %v2469, 2147483648
  %v2472 = vxor.u32 %v2470, 2147483648
  %v2473 = vmul.f32 %v2471, 1.442695
  %v2474 = vpow.pop %v2473
  %v2475 = vmul.f32 %v2472, 1.442695
  %v2476 = vpow.pop %v2475
  %v2477 = vadd.f32 %v2474, 1.0
  %v2478 = vadd.f32 %v2476, 1.0
  %v2479 = vrcp.pop %v2477
  %v2480 = vmul.f32 1.0, %v2479
  %v2481 = vrcp.pop %v2478
  %v2482 = vmul.f32 1.0, %v2481
  %v2483 = vtanh.pop %v2469
  %v2484 = vtanh.pop %v2470
  %v2485 = vmul.f32 %v2480, %v2407
  %v2486 = vmul.f32 %v2482, %v2408
  %2489 = vrot.lane.b32.xlu0 %v2483, 64
  %v2490 = vpop.permute.xlu0 %2489
  %2491 = vrot.lane.b32.xlu0 %v2484, 64
  %v2492 = vpop.permute.xlu0 %2491
  %v2495 = vmul.f32 %v2480, %v2490
  %v2496 = vmul.f32 %v2482, %v2492
  %2499 = vrot.lane.b32.xlu0 %v2495, 32
  %v2500 = vpop.permute.xlu0 %2499
  %2501 = vrot.lane.b32.xlu0 %v2496, 32
  %v2502 = vpop.permute.xlu0 %2501
  %v2505 = vadd.f32 %v2485, %v2500
  %v2506 = vadd.f32 %v2486, %v2502
  %v2507 = vtanh.pop %v2505
  %v2508 = vtanh.pop %v2506
  %2511 = vrot.lane.b32.xlu0 %v2507, 64
  %v2512 = vpop.permute.xlu0 %2511
  %2513 = vrot.lane.b32.xlu0 %v2508, 64
  %v2514 = vpop.permute.xlu0 %2513
  %v2517 = vmul.f32 %v2480, %v2512
  %v2518 = vmul.f32 %v2482, %v2514
  %v2519 = vpack.c.bf16 %v2518, %v2517
  %2521 = vrot.lane.b32.xlu0 %v2519, 32
  %v2522 = vpop.permute.xlu0 %2521
  %v2524 = vsel %vm872, %v2522, 0
  %2526 = vmatprep.subr.bf16.mxu0 0
  %2527 = vmatpush1.bf16.msra.mxu0 0
  %2528 = vmatprep.subr.bf16.mxu0 0
  %2529 = vmatpush1.bf16.msra.mxu0 0
  %2530 = vmatprep.subr.bf16.mxu0 0
  %2531 = vmatpush1.bf16.msra.mxu0 0
  %2532 = vmatprep.subr.bf16.mxu0 0
  %2533 = vmatpush1.bf16.msra.mxu0 0
  %2534 = vmatprep.subr.bf16.mxu0 0
  %2535 = vmatpush1.bf16.msra.mxu0 0
  %2536 = vmatprep.subr.bf16.mxu0 0
  %2537 = vmatpush1.bf16.msra.mxu0 0
  %2538 = vmatprep.subr.bf16.mxu0 0
  %2539 = vmatpush1.bf16.msra.mxu0 %v1933
  %2540 = vmatprep.subr.bf16.mxu0 0
  %2541 = vmatpush1.bf16.msra.mxu0 %v1932
  %2542 = vmatprep.subr.bf16.mxu0 0
  %2543 = vmatpush2.bf16.msra.mxu0 0
  %2544 = vmatprep.subr.bf16.mxu0 0
  %2545 = vmatpush2.bf16.msra.mxu0 0
  %2546 = vmatprep.subr.bf16.mxu0 0
  %2547 = vmatpush2.bf16.msra.mxu0 0
  %2548 = vmatprep.subr.bf16.mxu0 0
  %2549 = vmatpush2.bf16.msra.mxu0 0
  %2550 = vmatprep.subr.bf16.mxu0 0
  %2551 = vmatpush2.bf16.msra.mxu0 0
  %2552 = vmatprep.subr.bf16.mxu0 0
  %2553 = vmatpush2.bf16.msra.mxu0 0
  %2554 = vmatprep.subr.bf16.mxu0 0
  %2555 = vmatpush2.bf16.msra.mxu0 0
  %2556 = vmatprep.subr.bf16.mxu0 0
  %2557 = vmatpush2.bf16.msra.mxu0 0
  %2558 = vmatprep.mubr.bf16.mxu0 0
  %2559 = vmatmul.mubr.bf16.gmra.mxu0 %v2524
  %v2560 = vpop.f32.mrf.mxu0
  %v2561 = vadd.f32 0.0, %v2560
  %v2562 = vpop.f32.mrf.mxu0
  %v2563 = vpop.f32.mrf.mxu0
  %v2564 = vadd.f32 0.0, %v2563
  %v2565 = vpop.f32.mrf.mxu0
  %2566 = vdwg.mxu0
  %v2567 = vadd.f32 %v1910, %v2561
  %v2568 = vadd.f32 %v1913, %v2564
  %v2569 = vxor.u32 %v2567, 2147483648
  %v2570 = vxor.u32 %v2568, 2147483648
  %v2571 = vmul.f32 %v2569, 1.442695
  %v2572 = vpow.pop %v2571
  %v2573 = vmul.f32 %v2570, 1.442695
  %v2574 = vpow.pop %v2573
  %v2575 = vadd.f32 %v2572, 1.0
  %v2576 = vadd.f32 %v2574, 1.0
  %v2577 = vrcp.pop %v2575
  %v2578 = vmul.f32 1.0, %v2577
  %v2579 = vrcp.pop %v2576
  %v2580 = vmul.f32 1.0, %v2579
  %v2581 = vtanh.pop %v2567
  %v2582 = vtanh.pop %v2568
  %v2583 = vmul.f32 %v2578, %v2505
  %v2584 = vmul.f32 %v2580, %v2506
  %2587 = vrot.lane.b32.xlu0 %v2581, 64
  %v2588 = vpop.permute.xlu0 %2587
  %2589 = vrot.lane.b32.xlu0 %v2582, 64
  %v2590 = vpop.permute.xlu0 %2589
  %v2593 = vmul.f32 %v2578, %v2588
  %v2594 = vmul.f32 %v2580, %v2590
  %2597 = vrot.lane.b32.xlu0 %v2593, 32
  %v2598 = vpop.permute.xlu0 %2597
  %2599 = vrot.lane.b32.xlu0 %v2594, 32
  %v2600 = vpop.permute.xlu0 %2599
  %v2603 = vadd.f32 %v2583, %v2598
  %v2604 = vadd.f32 %v2584, %v2600
  %v2605 = vtanh.pop %v2603
  %v2606 = vtanh.pop %v2604
  %2609 = vrot.lane.b32.xlu0 %v2605, 64
  %v2610 = vpop.permute.xlu0 %2609
  %2611 = vrot.lane.b32.xlu0 %v2606, 64
  %v2612 = vpop.permute.xlu0 %2611
  %v2615 = vmul.f32 %v2578, %v2610
  %v2616 = vmul.f32 %v2580, %v2612
  %v2617 = vpack.c.bf16 %v2616, %v2615
  %2619 = vrot.lane.b32.xlu0 %v2617, 32
  %v2620 = vpop.permute.xlu0 %2619
  %v2622 = vsel %vm872, %v2620, 0
  %2624 = vmatprep.subr.bf16.mxu0 0
  %2625 = vmatpush1.bf16.msra.mxu0 0
  %2626 = vmatprep.subr.bf16.mxu0 0
  %2627 = vmatpush1.bf16.msra.mxu0 0
  %2628 = vmatprep.subr.bf16.mxu0 0
  %2629 = vmatpush1.bf16.msra.mxu0 0
  %2630 = vmatprep.subr.bf16.mxu0 0
  %2631 = vmatpush1.bf16.msra.mxu0 0
  %2632 = vmatprep.subr.bf16.mxu0 0
  %2633 = vmatpush1.bf16.msra.mxu0 0
  %2634 = vmatprep.subr.bf16.mxu0 0
  %2635 = vmatpush1.bf16.msra.mxu0 0
  %2636 = vmatprep.subr.bf16.mxu0 0
  %2637 = vmatpush1.bf16.msra.mxu0 %v1933
  %2638 = vmatprep.subr.bf16.mxu0 0
  %2639 = vmatpush1.bf16.msra.mxu0 %v1932
  %2640 = vmatprep.subr.bf16.mxu0 0
  %2641 = vmatpush2.bf16.msra.mxu0 0
  %2642 = vmatprep.subr.bf16.mxu0 0
  %2643 = vmatpush2.bf16.msra.mxu0 0
  %2644 = vmatprep.subr.bf16.mxu0 0
  %2645 = vmatpush2.bf16.msra.mxu0 0
  %2646 = vmatprep.subr.bf16.mxu0 0
  %2647 = vmatpush2.bf16.msra.mxu0 0
  %2648 = vmatprep.subr.bf16.mxu0 0
  %2649 = vmatpush2.bf16.msra.mxu0 0
  %2650 = vmatprep.subr.bf16.mxu0 0
  %2651 = vmatpush2.bf16.msra.mxu0 0
  %2652 = vmatprep.subr.bf16.mxu0 0
  %2653 = vmatpush2.bf16.msra.mxu0 0
  %2654 = vmatprep.subr.bf16.mxu0 0
  %2655 = vmatpush2.bf16.msra.mxu0 0
  %2656 = vmatprep.mubr.bf16.mxu0 0
  %2657 = vmatmul.mubr.bf16.gmra.mxu0 %v2622
  %v2658 = vpop.f32.mrf.mxu0
  %v2659 = vadd.f32 0.0, %v2658
  %v2660 = vpop.f32.mrf.mxu0
  %v2661 = vpop.f32.mrf.mxu0
  %v2662 = vadd.f32 0.0, %v2661
  %v2663 = vpop.f32.mrf.mxu0
  %2664 = vdwg.mxu0
  %v2665 = vadd.f32 %v1918, %v2659
  %v2666 = vadd.f32 %v1921, %v2662
  %v2667 = vxor.u32 %v2665, 2147483648
  %v2668 = vxor.u32 %v2666, 2147483648
  %v2669 = vmul.f32 %v2667, 1.442695
  %v2670 = vpow.pop %v2669
  %v2671 = vmul.f32 %v2668, 1.442695
  %v2672 = vpow.pop %v2671
  %v2673 = vadd.f32 %v2670, 1.0
  %v2674 = vadd.f32 %v2672, 1.0
  %v2675 = vrcp.pop %v2673
  %v2676 = vmul.f32 1.0, %v2675
  %v2677 = vrcp.pop %v2674
  %v2678 = vmul.f32 1.0, %v2677
  %v2679 = vtanh.pop %v2665
  %v2680 = vtanh.pop %v2666
  %v2681 = vmul.f32 %v2676, %v2603
  %v2682 = vmul.f32 %v2678, %v2604
  %2685 = vrot.lane.b32.xlu0 %v2679, 64
  %v2686 = vpop.permute.xlu0 %2685
  %2687 = vrot.lane.b32.xlu0 %v2680, 64
  %v2688 = vpop.permute.xlu0 %2687
  %v2691 = vmul.f32 %v2676, %v2686
  %v2692 = vmul.f32 %v2678, %v2688
  %2695 = vrot.lane.b32.xlu0 %v2691, 32
  %v2696 = vpop.permute.xlu0 %2695
  %2697 = vrot.lane.b32.xlu0 %v2692, 32
  %v2698 = vpop.permute.xlu0 %2697
  %v2701 = vadd.f32 %v2681, %v2696
  %v2702 = vadd.f32 %v2682, %v2698
  %v2703 = vtanh.pop %v2701
  %v2704 = vtanh.pop %v2702
  %2707 = vrot.lane.b32.xlu0 %v2703, 64
  %v2708 = vpop.permute.xlu0 %2707
  %2709 = vrot.lane.b32.xlu0 %v2704, 64
  %v2710 = vpop.permute.xlu0 %2709
  %v2713 = vmul.f32 %v2676, %v2708
  %v2714 = vmul.f32 %v2678, %v2710
  %v2715 = vld [vmem:[%s1 + $0x48] sm:$0xf]
  %v2716 = vld [vmem:[%s1 + $0x4c] sm:$0xf]
  %v2717 = vld [vmem:[%s1 + $0x50] sm:$0xf]
  %v2718 = vld [vmem:[%s1 + $0x54] sm:$0xf]
  %v2719 = vld [vmem:[%s2 + $0x20] sm:$0x1]
  %v2720 = vpack.c.bf16 %v2714, %v2713
  %v2721 = vlaneseq
  %v2722 = vshrl.u32 %v2721, 7
  %v2723 = vsub.s32 0, %v2722
  %v2724 = vrot.slane %v2719, %v2723
  %2726 = vrot.lane.b32.xlu0 %v2720, 32
  %v2727 = vpop.permute.xlu0 %2726
  %v2732 = vunpack.c.l.b16 %v2715
  %v2733 = vunpack.c.l.b16 %v2716
  %v2734 = vunpack.c.l.b16 %v2717
  %v2735 = vunpack.c.l.b16 %v2718
  %v2736 = vpack.c.b16 %v2733, %v2732
  %v2737 = vpack.c.b16 %v2735, %v2734
  %v2741 = vsel %vm872, %v2727, 0
  %2743 = vmatprep.subr.bf16.mxu0 0
  %2744 = vmatpush1.bf16.msra.mxu0 0
  %2745 = vmatprep.subr.bf16.mxu0 0
  %2746 = vmatpush1.bf16.msra.mxu0 0
  %2747 = vmatprep.subr.bf16.mxu0 0
  %2748 = vmatpush1.bf16.msra.mxu0 0
  %2749 = vmatprep.subr.bf16.mxu0 0
  %2750 = vmatpush1.bf16.msra.mxu0 0
  %2751 = vmatprep.subr.bf16.mxu0 0
  %2752 = vmatpush1.bf16.msra.mxu0 0
  %2753 = vmatprep.subr.bf16.mxu0 0
  %2754 = vmatpush1.bf16.msra.mxu0 0
  %2755 = vmatprep.subr.bf16.mxu0 0
  %2756 = vmatpush1.bf16.msra.mxu0 %v2737
  %2757 = vmatprep.subr.bf16.mxu0 0
  %2758 = vmatpush1.bf16.msra.mxu0 %v2736
  %2759 = vmatprep.subr.bf16.mxu0 0
  %2760 = vmatpush2.bf16.msra.mxu0 0
  %2761 = vmatprep.subr.bf16.mxu0 0
  %2762 = vmatpush2.bf16.msra.mxu0 0
  %2763 = vmatprep.subr.bf16.mxu0 0
  %2764 = vmatpush2.bf16.msra.mxu0 0
  %2765 = vmatprep.subr.bf16.mxu0 0
  %2766 = vmatpush2.bf16.msra.mxu0 0
  %2767 = vmatprep.subr.bf16.mxu0 0
  %2768 = vmatpush2.bf16.msra.mxu0 0
  %2769 = vmatprep.subr.bf16.mxu0 0
  %2770 = vmatpush2.bf16.msra.mxu0 0
  %2771 = vmatprep.subr.bf16.mxu0 0
  %2772 = vmatpush2.bf16.msra.mxu0 0
  %2773 = vmatprep.subr.bf16.mxu0 0
  %2774 = vmatpush2.bf16.msra.mxu0 0
  %2775 = vmatprep.mubr.bf16.mxu0 0
  %2776 = vmatmul.mubr.bf16.gmra.mxu0 %v2034
  %v2777 = vpop.f32.mrf.mxu0
  %v2778 = vadd.f32 %v2724, %v2777
  %v2779 = vpop.f32.mrf.mxu0
  %v2780 = vpop.f32.mrf.mxu0
  %v2781 = vadd.f32 %v2724, %v2780
  %v2782 = vpop.f32.mrf.mxu0
  %2783 = vmatprep.mubr.bf16.mxu0 0
  %2784 = vmatmul.mubr.bf16.gmra.mxu0 %v2132
  %v2785 = vpop.f32.mrf.mxu0
  %v2786 = vadd.f32 %v2724, %v2785
  %v2787 = vpop.f32.mrf.mxu0
  %v2788 = vpop.f32.mrf.mxu0
  %v2789 = vadd.f32 %v2724, %v2788
  %v2790 = vpop.f32.mrf.mxu0
  %2791 = vmatprep.mubr.bf16.mxu0 0
  %2792 = vmatmul.mubr.bf16.gmra.mxu0 %v2230
  %v2793 = vpop.f32.mrf.mxu0
  %v2794 = vadd.f32 %v2724, %v2793
  %v2795 = vpop.f32.mrf.mxu0
  %v2796 = vpop.f32.mrf.mxu0
  %v2797 = vadd.f32 %v2724, %v2796
  %v2798 = vpop.f32.mrf.mxu0
  %2799 = vmatprep.mubr.bf16.mxu0 0
  %2800 = vmatmul.mubr.bf16.gmra.mxu0 %v2328
  %v2801 = vpop.f32.mrf.mxu0
  %v2802 = vadd.f32 %v2724, %v2801
  %v2803 = vpop.f32.mrf.mxu0
  %v2804 = vpop.f32.mrf.mxu0
  %v2805 = vadd.f32 %v2724, %v2804
  %v2806 = vpop.f32.mrf.mxu0
  %2807 = vmatprep.mubr.bf16.mxu0 0
  %2808 = vmatmul.mubr.bf16.gmra.mxu0 %v2426
  %v2809 = vpop.f32.mrf.mxu0
  %v2810 = vadd.f32 %v2724, %v2809
  %v2811 = vpop.f32.mrf.mxu0
  %v2812 = vpop.f32.mrf.mxu0
  %v2813 = vadd.f32 %v2724, %v2812
  %v2814 = vpop.f32.mrf.mxu0
  %2815 = vmatprep.mubr.bf16.mxu0 0
  %2816 = vmatmul.mubr.bf16.gmra.mxu0 %v2524
  %v2817 = vpop.f32.mrf.mxu0
  %v2818 = vadd.f32 %v2724, %v2817
  %v2819 = vpop.f32.mrf.mxu0
  %v2820 = vpop.f32.mrf.mxu0
  %v2821 = vadd.f32 %v2724, %v2820
  %v2822 = vpop.f32.mrf.mxu0
  %2823 = vmatprep.mubr.bf16.mxu0 0
  %2824 = vmatmul.mubr.bf16.gmra.mxu0 %v2622
  %v2825 = vpop.f32.mrf.mxu0
  %v2826 = vadd.f32 %v2724, %v2825
  %v2827 = vpop.f32.mrf.mxu0
  %v2828 = vpop.f32.mrf.mxu0
  %v2829 = vadd.f32 %v2724, %v2828
  %v2830 = vpop.f32.mrf.mxu0
  %2831 = vmatprep.mubr.bf16.mxu0 0
  %2832 = vmatmul.mubr.bf16.gmra.mxu0 %v2741
  %v2833 = vpop.f32.mrf.mxu0
  %v2834 = vadd.f32 %v2724, %v2833
  %v2835 = vpop.f32.mrf.mxu0
  %v2836 = vpop.f32.mrf.mxu0
  %v2837 = vadd.f32 %v2724, %v2836
  %v2838 = vpop.f32.mrf.mxu0
  %2839 = vdwg.mxu0
  %v2840 = vmul.f32 %v2778, 0.5
  %v2841 = vmul.f32 %v2786, 0.5
  %v2842 = vmul.f32 %v2794, 0.5
  %v2843 = vmul.f32 %v2802, 0.5
  %v2844 = vmul.f32 %v2810, 0.5
  %v2845 = vmul.f32 %v2818, 0.5
  %v2846 = vmul.f32 %v2826, 0.5
  %v2847 = vmul.f32 %v2834, 0.5
  %v2848 = vmul.f32 %v2840, 1.442695
  %v2849 = vpow.pop %v2848
  %v2850 = vmul.f32 %v2841, 1.442695
  %v2851 = vpow.pop %v2850
  %v2852 = vmul.f32 %v2842, 1.442695
  %v2853 = vpow.pop %v2852
  %v2854 = vmul.f32 %v2843, 1.442695
  %v2855 = vpow.pop %v2854
  %v2856 = vmul.f32 %v2844, 1.442695
  %v2857 = vpow.pop %v2856
  %v2858 = vmul.f32 %v2845, 1.442695
  %v2859 = vpow.pop %v2858
  %v2860 = vmul.f32 %v2846, 1.442695
  %v2861 = vpow.pop %v2860
  %v2862 = vmul.f32 %v2847, 1.442695
  %v2863 = vpow.pop %v2862
  %2872 = vrot.lane.b32.xlu0 %v2849, 120
  %v2873 = vpop.permute.xlu0 %2872
  %2874 = vrot.lane.b32.xlu0 %v2851, 120
  %v2875 = vpop.permute.xlu0 %2874
  %2876 = vrot.lane.b32.xlu0 %v2853, 120
  %v2877 = vpop.permute.xlu0 %2876
  %2878 = vrot.lane.b32.xlu0 %v2855, 120
  %v2879 = vpop.permute.xlu0 %2878
  %2880 = vrot.lane.b32.xlu0 %v2857, 120
  %v2881 = vpop.permute.xlu0 %2880
  %2882 = vrot.lane.b32.xlu0 %v2859, 120
  %v2883 = vpop.permute.xlu0 %2882
  %2884 = vrot.lane.b32.xlu0 %v2861, 120
  %v2885 = vpop.permute.xlu0 %2884
  %2886 = vrot.lane.b32.xlu0 %v2863, 120
  %v2887 = vpop.permute.xlu0 %2886
  %v2896 = vmul.f32 %v49, %v2873
  %v2897 = vmul.f32 %v50, %v2875
  %v2898 = vmul.f32 %v51, %v2877
  %v2899 = vmul.f32 %v52, %v2879
  %v2900 = vmul.f32 %v53, %v2881
  %v2901 = vmul.f32 %v54, %v2883
  %v2902 = vmul.f32 %v55, %v2885
  %v2903 = vmul.f32 %v56, %v2887
  %v2904 = vadd.f32 %v2896, %v2778
  %v2905 = vadd.f32 %v2897, %v2786
  %v2906 = vadd.f32 %v2898, %v2794
  %v2907 = vadd.f32 %v2899, %v2802
  %v2908 = vadd.f32 %v2900, %v2810
  %v2909 = vadd.f32 %v2901, %v2818
  %v2910 = vadd.f32 %v2902, %v2826
  %v2911 = vadd.f32 %v2903, %v2834
  %v2912 = vmul.f32 %v2781, 0.5
  %v2913 = vmul.f32 %v2789, 0.5
  %v2914 = vmul.f32 %v2797, 0.5
  %v2915 = vmul.f32 %v2805, 0.5
  %v2916 = vmul.f32 %v2813, 0.5
  %v2917 = vmul.f32 %v2821, 0.5
  %v2918 = vmul.f32 %v2829, 0.5
  %v2919 = vmul.f32 %v2837, 0.5
  %v2920 = vmul.f32 %v2912, 1.442695
  %v2921 = vpow.pop %v2920
  %v2922 = vmul.f32 %v2913, 1.442695
  %v2923 = vpow.pop %v2922
  %v2924 = vmul.f32 %v2914, 1.442695
  %v2925 = vpow.pop %v2924
  %v2926 = vmul.f32 %v2915, 1.442695
  %v2927 = vpow.pop %v2926
  %v2928 = vmul.f32 %v2916, 1.442695
  %v2929 = vpow.pop %v2928
  %v2930 = vmul.f32 %v2917, 1.442695
  %v2931 = vpow.pop %v2930
  %v2932 = vmul.f32 %v2918, 1.442695
  %v2933 = vpow.pop %v2932
  %v2934 = vmul.f32 %v2919, 1.442695
  %v2935 = vpow.pop %v2934
  %2944 = vrot.lane.b32.xlu0 %v2921, 120
  %v2945 = vpop.permute.xlu0 %2944
  %2946 = vrot.lane.b32.xlu0 %v2923, 120
  %v2947 = vpop.permute.xlu0 %2946
  %2948 = vrot.lane.b32.xlu0 %v2925, 120
  %v2949 = vpop.permute.xlu0 %2948
  %2950 = vrot.lane.b32.xlu0 %v2927, 120
  %v2951 = vpop.permute.xlu0 %2950
  %2952 = vrot.lane.b32.xlu0 %v2929, 120
  %v2953 = vpop.permute.xlu0 %2952
  %2954 = vrot.lane.b32.xlu0 %v2931, 120
  %v2955 = vpop.permute.xlu0 %2954
  %2956 = vrot.lane.b32.xlu0 %v2933, 120
  %v2957 = vpop.permute.xlu0 %2956
  %2958 = vrot.lane.b32.xlu0 %v2935, 120
  %v2959 = vpop.permute.xlu0 %2958
  %v2968 = vmul.f32 %v57, %v2945
  %v2969 = vmul.f32 %v58, %v2947
  %v2970 = vmul.f32 %v59, %v2949
  %v2971 = vmul.f32 %v60, %v2951
  %v2972 = vmul.f32 %v61, %v2953
  %v2973 = vmul.f32 %v62, %v2955
  %v2974 = vmul.f32 %v63, %v2957
  %v2975 = vmul.f32 %v64, %v2959
  %v2976 = vadd.f32 %v2968, %v2781
  %v2977 = vadd.f32 %v2969, %v2789
  %v2978 = vadd.f32 %v2970, %v2797
  %v2979 = vadd.f32 %v2971, %v2805
  %v2980 = vadd.f32 %v2972, %v2813
  %v2981 = vadd.f32 %v2973, %v2821
  %v2982 = vadd.f32 %v2974, %v2829
  %v2983 = vadd.f32 %v2975, %v2837
  %v2984 = vsub.f32 %v2778, %v25
  %v2985 = vsub.f32 %v2786, %v26
  %v2986 = vsub.f32 %v2794, %v27
  %v2987 = vsub.f32 %v2802, %v28
  %v2988 = vsub.f32 %v2810, %v29
  %v2989 = vsub.f32 %v2818, %v30
  %v2990 = vsub.f32 %v2826, %v31
  %v2991 = vsub.f32 %v2834, %v32
  %v2992 = vmul.f32 %v1712, %v2984
  %v2993 = vmul.f32 %v1712, %v2985
  %v2994 = vmul.f32 %v1712, %v2986
  %v2995 = vmul.f32 %v1712, %v2987
  %v2996 = vmul.f32 %v1712, %v2988
  %v2997 = vmul.f32 %v1712, %v2989
  %v2998 = vmul.f32 %v1712, %v2990
  %v2999 = vmul.f32 %v1712, %v2991
  %v3000 = vmul.f32 %v2992, %v2984
  %v3001 = vmul.f32 %v2993, %v2985
  %v3002 = vmul.f32 %v2994, %v2986
  %v3003 = vmul.f32 %v2995, %v2987
  %v3004 = vmul.f32 %v2996, %v2988
  %v3005 = vmul.f32 %v2997, %v2989
  %v3006 = vmul.f32 %v2998, %v2990
  %v3007 = vmul.f32 %v2999, %v2991
  %v3008 = vsub.f32 0.0, %v2778
  %v3009 = vsub.f32 0.0, %v2786
  %v3010 = vsub.f32 0.0, %v2794
  %v3011 = vsub.f32 0.0, %v2802
  %v3012 = vsub.f32 0.0, %v2810
  %v3013 = vsub.f32 0.0, %v2818
  %v3014 = vsub.f32 0.0, %v2826
  %v3015 = vsub.f32 0.0, %v2834
  %v3016 = vmul.f32 %v3008, 1.442695
  %v3017 = vpow.pop %v3016
  %v3018 = vmul.f32 %v3009, 1.442695
  %v3019 = vpow.pop %v3018
  %v3020 = vmul.f32 %v3010, 1.442695
  %v3021 = vpow.pop %v3020
  %v3022 = vmul.f32 %v3011, 1.442695
  %v3023 = vpow.pop %v3022
  %v3024 = vmul.f32 %v3012, 1.442695
  %v3025 = vpow.pop %v3024
  %v3026 = vmul.f32 %v3013, 1.442695
  %v3027 = vpow.pop %v3026
  %v3028 = vmul.f32 %v3014, 1.442695
  %v3029 = vpow.pop %v3028
  %v3030 = vmul.f32 %v3015, 1.442695
  %v3031 = vpow.pop %v3030
  %3040 = vrot.lane.b32.xlu0 %v3017, 120
  %v3041 = vpop.permute.xlu0 %3040
  %3042 = vrot.lane.b32.xlu0 %v3019, 120
  %v3043 = vpop.permute.xlu0 %3042
  %3044 = vrot.lane.b32.xlu0 %v3021, 120
  %v3045 = vpop.permute.xlu0 %3044
  %3046 = vrot.lane.b32.xlu0 %v3023, 120
  %v3047 = vpop.permute.xlu0 %3046
  %3048 = vrot.lane.b32.xlu0 %v3025, 120
  %v3049 = vpop.permute.xlu0 %3048
  %3050 = vrot.lane.b32.xlu0 %v3027, 120
  %v3051 = vpop.permute.xlu0 %3050
  %3052 = vrot.lane.b32.xlu0 %v3029, 120
  %v3053 = vpop.permute.xlu0 %3052
  %3054 = vrot.lane.b32.xlu0 %v3031, 120
  %v3055 = vpop.permute.xlu0 %3054
  %v3064 = vmul.f32 %v3000, %v3041
  %v3065 = vmul.f32 %v3001, %v3043
  %v3066 = vmul.f32 %v3002, %v3045
  %v3067 = vmul.f32 %v3003, %v3047
  %v3068 = vmul.f32 %v3004, %v3049
  %v3069 = vmul.f32 %v3005, %v3051
  %v3070 = vmul.f32 %v3006, %v3053
  %v3071 = vmul.f32 %v3007, %v3055
  %v3072 = vsel %vm78, %v3064, 0.0
  %v3073 = vsel %vm78, %v3065, 0.0
  %v3074 = vadd.f32 %v3072, %v3073
  %v3075 = vsel %vm78, %v3066, 0.0
  %v3076 = vadd.f32 %v3074, %v3075
  %v3077 = vsel %vm78, %v3067, 0.0
  %v3078 = vadd.f32 %v3076, %v3077
  %v3079 = vsel %vm78, %v3068, 0.0
  %v3080 = vadd.f32 %v3078, %v3079
  %v3081 = vsel %vm78, %v3069, 0.0
  %v3082 = vadd.f32 %v3080, %v3081
  %v3083 = vsel %vm78, %v3070, 0.0
  %v3084 = vadd.f32 %v3082, %v3083
  %v3085 = vsel %vm78, %v3071, 0.0
  %v3086 = vadd.f32 %v3084, %v3085
  %3087 = vadd.xlane.f32.xlu0 %v3086
  %v3088 = vpop.xlane.xlu0 %3087
  %v3089 = vrot.slane %v3088, 4
  %v3090 = vadd.f32 %v3088, %v3089
  %v3091 = vrot.slane %v3090, 2
  %v3092 = vadd.f32 %v3090, %v3091
  %v3093 = vrot.slane %v3092, 1
  %v3094 = vadd.f32 %v3092, %v3093
  %s3095 = vtos %v3094
  %v3096 = vstv %s3095
  %v3097 = vmul.f32 %v1712, %v2778
  %v3098 = vmul.f32 %v1712, %v2786
  %v3099 = vmul.f32 %v1712, %v2794
  %v3100 = vmul.f32 %v1712, %v2802
  %v3101 = vmul.f32 %v1712, %v2810
  %v3102 = vmul.f32 %v1712, %v2818
  %v3103 = vmul.f32 %v1712, %v2826
  %v3104 = vmul.f32 %v1712, %v2834
  %3113 = vrot.lane.b32.xlu0 %v3097, 120
  %v3114 = vpop.permute.xlu0 %3113
  %3115 = vrot.lane.b32.xlu0 %v3098, 120
  %v3116 = vpop.permute.xlu0 %3115
  %3117 = vrot.lane.b32.xlu0 %v3099, 120
  %v3118 = vpop.permute.xlu0 %3117
  %3119 = vrot.lane.b32.xlu0 %v3100, 120
  %v3120 = vpop.permute.xlu0 %3119
  %3121 = vrot.lane.b32.xlu0 %v3101, 120
  %v3122 = vpop.permute.xlu0 %3121
  %3123 = vrot.lane.b32.xlu0 %v3102, 120
  %v3124 = vpop.permute.xlu0 %3123
  %3125 = vrot.lane.b32.xlu0 %v3103, 120
  %v3126 = vpop.permute.xlu0 %3125
  %3127 = vrot.lane.b32.xlu0 %v3104, 120
  %v3128 = vpop.permute.xlu0 %3127
  %v3137 = vsel %vm78, %v3114, 0.0
  %v3138 = vsel %vm78, %v3116, 0.0
  %v3139 = vadd.f32 %v3137, %v3138
  %v3140 = vsel %vm78, %v3118, 0.0
  %v3141 = vadd.f32 %v3139, %v3140
  %v3142 = vsel %vm78, %v3120, 0.0
  %v3143 = vadd.f32 %v3141, %v3142
  %v3144 = vsel %vm78, %v3122, 0.0
  %v3145 = vadd.f32 %v3143, %v3144
  %v3146 = vsel %vm78, %v3124, 0.0
  %v3147 = vadd.f32 %v3145, %v3146
  %v3148 = vsel %vm78, %v3126, 0.0
  %v3149 = vadd.f32 %v3147, %v3148
  %v3150 = vsel %vm78, %v3128, 0.0
  %v3151 = vadd.f32 %v3149, %v3150
  %3152 = vadd.xlane.f32.xlu0 %v3151
  %v3153 = vpop.xlane.xlu0 %3152
  %v3154 = vrot.slane %v3153, 4
  %v3155 = vadd.f32 %v3153, %v3154
  %v3156 = vrot.slane %v3155, 2
  %v3157 = vadd.f32 %v3155, %v3156
  %v3158 = vrot.slane %v3157, 1
  %v3159 = vadd.f32 %v3157, %v3158
  %s3160 = vtos %v3159
  %v3161 = vstv %s3160
  %v3162 = vmul.f32 %v3096, 0.5
  %v3163 = vmul.f32 %v3161, 0.5
  %v3164 = vadd.f32 %v3162, %v3163
  %v3165 = vmul.f32 %v3164, %v1780
  %v3166 = vld [vmem:[%s1 + $0x58] sm:$0xf]
  %v3167 = vld [vmem:[%s1 + $0x60] sm:$0xf]
  %v3168 = vld [vmem:[%s1 + $0x64] sm:$0xf]
  %v3169 = vld [vmem:[%s2 + $0x28] sm:$0x1]
  %v3170 = vld [vmem:[%s2 + $0x30] sm:$0x1]
  %v3171 = vpack.c.bf16 %v2976, %v2904
  %v3172 = vpack.c.bf16 %v2905, %v25
  %v3173 = vpack.c.bf16 %v26, %v2977
  %v3174 = vpack.c.bf16 %v2978, %v2906
  %v3175 = vpack.c.bf16 %v2907, %v27
  %v3176 = vpack.c.bf16 %v28, %v2979
  %v3177 = vpack.c.bf16 %v2980, %v2908
  %v3178 = vpack.c.bf16 %v2909, %v29
  %v3179 = vpack.c.bf16 %v30, %v2981
  %v3180 = vpack.c.bf16 %v2982, %v2910
  %v3181 = vpack.c.bf16 %v2911, %v31
  %v3182 = vpack.c.bf16 %v32, %v2983
  %v3183 = vlaneseq
  %v3184 = vshrl.u32 %v3183, 7
  %v3185 = vsub.s32 0, %v3184
  %v3186 = vrot.slane %v3169, %v3185
  %v3188 = vsel %vm78, %v3171, 0
  %v3191 = vsel %vm78, %v3172, 0
  %v3194 = vsel %vm78, %v3173, 0
  %v3197 = vsel %vm78, %v3174, 0
  %v3200 = vsel %vm78, %v3175, 0
  %v3203 = vsel %vm78, %v3176, 0
  %v3206 = vsel %vm78, %v3177, 0
  %v3209 = vsel %vm78, %v3178, 0
  %v3212 = vsel %vm78, %v3179, 0
  %v3215 = vsel %vm78, %v3180, 0
  %v3218 = vsel %vm78, %v3181, 0
  %v3221 = vsel %vm78, %v3182, 0
  %v3224 = vsel %vm91, %v3166, 0
  %3226 = vmatprep.subr.bf16.mxu0 0
  %3227 = vmatpush1.bf16.msra.mxu0 0
  %3228 = vmatprep.subr.bf16.mxu0 0
  %3229 = vmatpush1.bf16.msra.mxu0 0
  %3230 = vmatprep.subr.bf16.mxu0 0
  %3231 = vmatpush1.bf16.msra.mxu0 0
  %3232 = vmatprep.subr.bf16.mxu0 0
  %3233 = vmatpush1.bf16.msra.mxu0 0
  %3234 = vmatprep.subr.bf16.mxu0 0
  %3235 = vmatpush1.bf16.msra.mxu0 0
  %3236 = vmatprep.subr.bf16.mxu0 0
  %3237 = vmatpush1.bf16.msra.mxu0 0
  %3238 = vmatprep.subr.bf16.mxu0 0
  %3239 = vmatpush1.bf16.msra.mxu0 0
  %3240 = vmatprep.subr.bf16.mxu0 0
  %3241 = vmatpush1.bf16.msra.mxu0 %v3224
  %3242 = vmatprep.subr.bf16.mxu0 0
  %3243 = vmatpush2.bf16.msra.mxu0 0
  %3244 = vmatprep.subr.bf16.mxu0 0
  %3245 = vmatpush2.bf16.msra.mxu0 0
  %3246 = vmatprep.subr.bf16.mxu0 0
  %3247 = vmatpush2.bf16.msra.mxu0 0
  %3248 = vmatprep.subr.bf16.mxu0 0
  %3249 = vmatpush2.bf16.msra.mxu0 0
  %3250 = vmatprep.subr.bf16.mxu0 0
  %3251 = vmatpush2.bf16.msra.mxu0 0
  %3252 = vmatprep.subr.bf16.mxu0 0
  %3253 = vmatpush2.bf16.msra.mxu0 0
  %3254 = vmatprep.subr.bf16.mxu0 0
  %3255 = vmatpush2.bf16.msra.mxu0 0
  %3256 = vmatprep.subr.bf16.mxu0 0
  %3257 = vmatpush2.bf16.msra.mxu0 0
  %3258 = vmatprep.mubr.bf16.mxu0 0
  %3259 = vmatmul.mubr.bf16.gmra.mxu0 %v3188
  %v3260 = vpop.f32.mrf.mxu0
  %v3261 = vadd.f32 %v3186, %v3260
  %v3262 = vpop.f32.mrf.mxu0
  %v3263 = vpop.f32.mrf.mxu0
  %v3264 = vadd.f32 %v3186, %v3263
  %v3265 = vpop.f32.mrf.mxu0
  %3266 = vmatprep.mubr.bf16.mxu0 0
  %3267 = vmatmul.mubr.bf16.gmra.mxu0 %v3191
  %v3268 = vpop.f32.mrf.mxu0
  %v3269 = vadd.f32 %v3186, %v3268
  %v3270 = vpop.f32.mrf.mxu0
  %v3271 = vpop.f32.mrf.mxu0
  %v3272 = vadd.f32 %v3186, %v3271
  %v3273 = vpop.f32.mrf.mxu0
  %3274 = vmatprep.mubr.bf16.mxu0 0
  %3275 = vmatmul.mubr.bf16.gmra.mxu0 %v3194
  %v3276 = vpop.f32.mrf.mxu0
  %v3277 = vadd.f32 %v3186, %v3276
  %v3278 = vpop.f32.mrf.mxu0
  %v3279 = vpop.f32.mrf.mxu0
  %v3280 = vadd.f32 %v3186, %v3279
  %v3281 = vpop.f32.mrf.mxu0
  %3282 = vmatprep.mubr.bf16.mxu0 0
  %3283 = vmatmul.mubr.bf16.gmra.mxu0 %v3197
  %v3284 = vpop.f32.mrf.mxu0
  %v3285 = vadd.f32 %v3186, %v3284
  %v3286 = vpop.f32.mrf.mxu0
  %v3287 = vpop.f32.mrf.mxu0
  %v3288 = vadd.f32 %v3186, %v3287
  %v3289 = vpop.f32.mrf.mxu0
  %3290 = vmatprep.mubr.bf16.mxu0 0
  %3291 = vmatmul.mubr.bf16.gmra.mxu0 %v3200
  %v3292 = vpop.f32.mrf.mxu0
  %v3293 = vadd.f32 %v3186, %v3292
  %v3294 = vpop.f32.mrf.mxu0
  %v3295 = vpop.f32.mrf.mxu0
  %v3296 = vadd.f32 %v3186, %v3295
  %v3297 = vpop.f32.mrf.mxu0
  %3298 = vmatprep.mubr.bf16.mxu0 0
  %3299 = vmatmul.mubr.bf16.gmra.mxu0 %v3203
  %v3300 = vpop.f32.mrf.mxu0
  %v3301 = vadd.f32 %v3186, %v3300
  %v3302 = vpop.f32.mrf.mxu0
  %v3303 = vpop.f32.mrf.mxu0
  %v3304 = vadd.f32 %v3186, %v3303
  %v3305 = vpop.f32.mrf.mxu0
  %3306 = vmatprep.mubr.bf16.mxu0 0
  %3307 = vmatmul.mubr.bf16.gmra.mxu0 %v3206
  %v3308 = vpop.f32.mrf.mxu0
  %v3309 = vadd.f32 %v3186, %v3308
  %v3310 = vpop.f32.mrf.mxu0
  %v3311 = vpop.f32.mrf.mxu0
  %v3312 = vadd.f32 %v3186, %v3311
  %v3313 = vpop.f32.mrf.mxu0
  %3314 = vmatprep.mubr.bf16.mxu0 0
  %3315 = vmatmul.mubr.bf16.gmra.mxu0 %v3209
  %v3316 = vpop.f32.mrf.mxu0
  %v3317 = vadd.f32 %v3186, %v3316
  %v3318 = vpop.f32.mrf.mxu0
  %v3319 = vpop.f32.mrf.mxu0
  %v3320 = vadd.f32 %v3186, %v3319
  %v3321 = vpop.f32.mrf.mxu0
  %3322 = vmatprep.mubr.bf16.mxu0 0
  %3323 = vmatmul.mubr.bf16.gmra.mxu0 %v3212
  %v3324 = vpop.f32.mrf.mxu0
  %v3325 = vadd.f32 %v3186, %v3324
  %v3326 = vpop.f32.mrf.mxu0
  %v3327 = vpop.f32.mrf.mxu0
  %v3328 = vadd.f32 %v3186, %v3327
  %v3329 = vpop.f32.mrf.mxu0
  %3330 = vmatprep.mubr.bf16.mxu0 0
  %3331 = vmatmul.mubr.bf16.gmra.mxu0 %v3215
  %v3332 = vpop.f32.mrf.mxu0
  %v3333 = vadd.f32 %v3186, %v3332
  %v3334 = vpop.f32.mrf.mxu0
  %v3335 = vpop.f32.mrf.mxu0
  %v3336 = vadd.f32 %v3186, %v3335
  %v3337 = vpop.f32.mrf.mxu0
  %3338 = vmatprep.mubr.bf16.mxu0 0
  %3339 = vmatmul.mubr.bf16.gmra.mxu0 %v3218
  %v3340 = vpop.f32.mrf.mxu0
  %v3341 = vadd.f32 %v3186, %v3340
  %v3342 = vpop.f32.mrf.mxu0
  %v3343 = vpop.f32.mrf.mxu0
  %v3344 = vadd.f32 %v3186, %v3343
  %v3345 = vpop.f32.mrf.mxu0
  %3346 = vmatprep.mubr.bf16.mxu0 0
  %3347 = vmatmul.mubr.bf16.gmra.mxu0 %v3221
  %v3348 = vpop.f32.mrf.mxu0
  %v3349 = vadd.f32 %v3186, %v3348
  %v3350 = vpop.f32.mrf.mxu0
  %v3351 = vpop.f32.mrf.mxu0
  %v3352 = vadd.f32 %v3186, %v3351
  %v3353 = vpop.f32.mrf.mxu0
  %3354 = vdwg.mxu0
  %v3355 = vlaneseq
  %v3356 = vshrl.u32 %v3355, 7
  %v3357 = vsub.s32 0, %v3356
  %v3358 = vrot.slane %v3170, %v3357
  %v3361 = vunpack.c.l.b16 %v3167
  %v3362 = vunpack.c.l.b16 %v3168
  %v3363 = vpack.c.b16 %v3362, %v3361
  %3365 = vmatprep.subr.bf16.mxu0 0
  %3366 = vmatpush1.bf16.msra.mxu0 0
  %3367 = vmatprep.subr.bf16.mxu0 0
  %3368 = vmatpush1.bf16.msra.mxu0 0
  %3369 = vmatprep.subr.bf16.mxu0 0
  %3370 = vmatpush1.bf16.msra.mxu0 0
  %3371 = vmatprep.subr.bf16.mxu0 0
  %3372 = vmatpush1.bf16.msra.mxu0 0
  %3373 = vmatprep.subr.bf16.mxu0 0
  %3374 = vmatpush1.bf16.msra.mxu0 0
  %3375 = vmatprep.subr.bf16.mxu0 0
  %3376 = vmatpush1.bf16.msra.mxu0 0
  %3377 = vmatprep.subr.bf16.mxu0 0
  %3378 = vmatpush1.bf16.msra.mxu0 0
  %3379 = vmatprep.subr.bf16.mxu0 0
  %3380 = vmatpush1.bf16.msra.mxu0 %v3363
  %3381 = vmatprep.subr.bf16.mxu0 0
  %3382 = vmatpush2.bf16.msra.mxu0 0
  %3383 = vmatprep.subr.bf16.mxu0 0
  %3384 = vmatpush2.bf16.msra.mxu0 0
  %3385 = vmatprep.subr.bf16.mxu0 0
  %3386 = vmatpush2.bf16.msra.mxu0 0
  %3387 = vmatprep.subr.bf16.mxu0 0
  %3388 = vmatpush2.bf16.msra.mxu0 0
  %3389 = vmatprep.subr.bf16.mxu0 0
  %3390 = vmatpush2.bf16.msra.mxu0 0
  %3391 = vmatprep.subr.bf16.mxu0 0
  %3392 = vmatpush2.bf16.msra.mxu0 0
  %3393 = vmatprep.subr.bf16.mxu0 0
  %3394 = vmatpush2.bf16.msra.mxu0 0
  %3395 = vmatprep.subr.bf16.mxu0 0
  %3396 = vmatpush2.bf16.msra.mxu0 0
  %3397 = vmatprep.mubr.bf16.mxu0 0
  %3398 = vmatmul.mubr.bf16.gmra.mxu0 %v168
  %v3399 = vpop.f32.mrf.mxu0
  %v3400 = vadd.f32 %v3358, %v3399
  %v3401 = vpop.f32.mrf.mxu0
  %v3402 = vpop.f32.mrf.mxu0
  %v3403 = vadd.f32 %v3358, %v3402
  %v3404 = vpop.f32.mrf.mxu0
  %3405 = vmatprep.mubr.bf16.mxu0 0
  %3406 = vmatmul.mubr.bf16.gmra.mxu0 %v168
  %v3407 = vpop.f32.mrf.mxu0
  %v3408 = vadd.f32 %v3358, %v3407
  %v3409 = vpop.f32.mrf.mxu0
  %v3410 = vpop.f32.mrf.mxu0
  %v3411 = vpop.f32.mrf.mxu0
  %3412 = vdwg.mxu0
  %v3413 = vadd.f32 %v3261, %v3400
  %v3414 = vadd.f32 %v3264, %v3403
  %v3415 = vadd.f32 %v3269, %v3408
  %v3416 = vxor.u32 %v3413, 2147483648
  %v3417 = vxor.u32 %v3414, 2147483648
  %v3418 = vxor.u32 %v3415, 2147483648
  %v3419 = vmul.f32 %v3416, 1.442695
  %v3420 = vpow.pop %v3419
  %v3421 = vmul.f32 %v3417, 1.442695
  %v3422 = vpow.pop %v3421
  %v3423 = vmul.f32 %v3418, 1.442695
  %v3424 = vpow.pop %v3423
  %v3425 = vadd.f32 %v3420, 1.0
  %v3426 = vadd.f32 %v3422, 1.0
  %v3427 = vadd.f32 %v3424, 1.0
  %v3428 = vrcp.pop %v3425
  %v3429 = vmul.f32 1.0, %v3428
  %v3430 = vrcp.pop %v3426
  %v3431 = vmul.f32 1.0, %v3430
  %v3432 = vrcp.pop %v3427
  %v3433 = vmul.f32 1.0, %v3432
  %3437 = vrot.lane.b32.xlu0 %v3400, 96
  %v3438 = vpop.permute.xlu0 %3437
  %3439 = vrot.lane.b32.xlu0 %v3403, 96
  %v3440 = vpop.permute.xlu0 %3439
  %3441 = vrot.lane.b32.xlu0 %v3408, 96
  %v3442 = vpop.permute.xlu0 %3441
  %v3446 = vmul.f32 %v3429, %v3438
  %v3447 = vmul.f32 %v3431, %v3440
  %v3448 = vmul.f32 %v3433, %v3442
  %3452 = vrot.lane.b32.xlu0 %v3446, 32
  %v3453 = vpop.permute.xlu0 %3452
  %3454 = vrot.lane.b32.xlu0 %v3447, 32
  %v3455 = vpop.permute.xlu0 %3454
  %3456 = vrot.lane.b32.xlu0 %v3448, 32
  %v3457 = vpop.permute.xlu0 %3456
  %v3461 = vadd.f32 %v3261, %v3453
  %v3462 = vadd.f32 %v3264, %v3455
  %v3463 = vadd.f32 %v3269, %v3457
  %v3464 = vtanh.pop %v3461
  %v3465 = vtanh.pop %v3462
  %v3466 = vtanh.pop %v3463
  %v3467 = vsub.f32 1.0, %v3429
  %v3468 = vsub.f32 1.0, %v3431
  %v3469 = vsub.f32 1.0, %v3433
  %3473 = vrot.lane.b32.xlu0 %v3464, 112
  %v3474 = vpop.permute.xlu0 %3473
  %3475 = vrot.lane.b32.xlu0 %v3465, 112
  %v3476 = vpop.permute.xlu0 %3475
  %3477 = vrot.lane.b32.xlu0 %v3466, 112
  %v3478 = vpop.permute.xlu0 %3477
  %v3482 = vmul.f32 %v3467, %v3474
  %v3483 = vmul.f32 %v3468, %v3476
  %v3484 = vmul.f32 %v3469, %v3478
  %v3485 = vmul.f32 %v3429, 0.0
  %v3486 = vmul.f32 %v3431, 0.0
  %v3487 = vmul.f32 %v3433, 0.0
  %v3488 = vadd.f32 %v3482, %v3485
  %v3489 = vadd.f32 %v3483, %v3486
  %v3490 = vadd.f32 %v3484, %v3487
  %v3491 = vpack.c.bf16 %v3489, %v3488
  %v3492 = vpack.c.bf16 %v3490, %v3490
  %3495 = vrot.lane.b32.xlu0 %v3491, 112
  %v3496 = vpop.permute.xlu0 %3495
  %3497 = vrot.lane.b32.xlu0 %v3492, 112
  %v3498 = vpop.permute.xlu0 %3497
  %v3500 = vsel %vm166, %v3496, 0
  %v3503 = vsel %vm166, %v3498, 0
  %3505 = vmatprep.subr.bf16.mxu0 0
  %3506 = vmatpush1.bf16.msra.mxu0 0
  %3507 = vmatprep.subr.bf16.mxu0 0
  %3508 = vmatpush1.bf16.msra.mxu0 0
  %3509 = vmatprep.subr.bf16.mxu0 0
  %3510 = vmatpush1.bf16.msra.mxu0 0
  %3511 = vmatprep.subr.bf16.mxu0 0
  %3512 = vmatpush1.bf16.msra.mxu0 0
  %3513 = vmatprep.subr.bf16.mxu0 0
  %3514 = vmatpush1.bf16.msra.mxu0 0
  %3515 = vmatprep.subr.bf16.mxu0 0
  %3516 = vmatpush1.bf16.msra.mxu0 0
  %3517 = vmatprep.subr.bf16.mxu0 0
  %3518 = vmatpush1.bf16.msra.mxu0 0
  %3519 = vmatprep.subr.bf16.mxu0 0
  %3520 = vmatpush1.bf16.msra.mxu0 %v3363
  %3521 = vmatprep.subr.bf16.mxu0 0
  %3522 = vmatpush2.bf16.msra.mxu0 0
  %3523 = vmatprep.subr.bf16.mxu0 0
  %3524 = vmatpush2.bf16.msra.mxu0 0
  %3525 = vmatprep.subr.bf16.mxu0 0
  %3526 = vmatpush2.bf16.msra.mxu0 0
  %3527 = vmatprep.subr.bf16.mxu0 0
  %3528 = vmatpush2.bf16.msra.mxu0 0
  %3529 = vmatprep.subr.bf16.mxu0 0
  %3530 = vmatpush2.bf16.msra.mxu0 0
  %3531 = vmatprep.subr.bf16.mxu0 0
  %3532 = vmatpush2.bf16.msra.mxu0 0
  %3533 = vmatprep.subr.bf16.mxu0 0
  %3534 = vmatpush2.bf16.msra.mxu0 0
  %3535 = vmatprep.subr.bf16.mxu0 0
  %3536 = vmatpush2.bf16.msra.mxu0 0
  %3537 = vmatprep.mubr.bf16.mxu0 0
  %3538 = vmatmul.mubr.bf16.gmra.mxu0 %v3500
  %v3539 = vpop.f32.mrf.mxu0
  %v3540 = vadd.f32 %v3358, %v3539
  %v3541 = vpop.f32.mrf.mxu0
  %v3542 = vpop.f32.mrf.mxu0
  %v3543 = vadd.f32 %v3358, %v3542
  %v3544 = vpop.f32.mrf.mxu0
  %3545 = vmatprep.mubr.bf16.mxu0 0
  %3546 = vmatmul.mubr.bf16.gmra.mxu0 %v3503
  %v3547 = vpop.f32.mrf.mxu0
  %v3548 = vadd.f32 %v3358, %v3547
  %v3549 = vpop.f32.mrf.mxu0
  %v3550 = vpop.f32.mrf.mxu0
  %v3551 = vpop.f32.mrf.mxu0
  %3552 = vdwg.mxu0
  %v3553 = vadd.f32 %v3272, %v3540
  %v3554 = vadd.f32 %v3277, %v3543
  %v3555 = vadd.f32 %v3280, %v3548
  %v3556 = vxor.u32 %v3553, 2147483648
  %v3557 = vxor.u32 %v3554, 2147483648
  %v3558 = vxor.u32 %v3555, 2147483648
  %v3559 = vmul.f32 %v3556, 1.442695
  %v3560 = vpow.pop %v3559
  %v3561 = vmul.f32 %v3557, 1.442695
  %v3562 = vpow.pop %v3561
  %v3563 = vmul.f32 %v3558, 1.442695
  %v3564 = vpow.pop %v3563
  %v3565 = vadd.f32 %v3560, 1.0
  %v3566 = vadd.f32 %v3562, 1.0
  %v3567 = vadd.f32 %v3564, 1.0
  %v3568 = vrcp.pop %v3565
  %v3569 = vmul.f32 1.0, %v3568
  %v3570 = vrcp.pop %v3566
  %v3571 = vmul.f32 1.0, %v3570
  %v3572 = vrcp.pop %v3567
  %v3573 = vmul.f32 1.0, %v3572
  %3577 = vrot.lane.b32.xlu0 %v3540, 96
  %v3578 = vpop.permute.xlu0 %3577
  %3579 = vrot.lane.b32.xlu0 %v3543, 96
  %v3580 = vpop.permute.xlu0 %3579
  %3581 = vrot.lane.b32.xlu0 %v3548, 96
  %v3582 = vpop.permute.xlu0 %3581
  %v3586 = vmul.f32 %v3569, %v3578
  %v3587 = vmul.f32 %v3571, %v3580
  %v3588 = vmul.f32 %v3573, %v3582
  %3592 = vrot.lane.b32.xlu0 %v3586, 32
  %v3593 = vpop.permute.xlu0 %3592
  %3594 = vrot.lane.b32.xlu0 %v3587, 32
  %v3595 = vpop.permute.xlu0 %3594
  %3596 = vrot.lane.b32.xlu0 %v3588, 32
  %v3597 = vpop.permute.xlu0 %3596
  %v3601 = vadd.f32 %v3272, %v3593
  %v3602 = vadd.f32 %v3277, %v3595
  %v3603 = vadd.f32 %v3280, %v3597
  %v3604 = vtanh.pop %v3601
  %v3605 = vtanh.pop %v3602
  %v3606 = vtanh.pop %v3603
  %v3607 = vsub.f32 1.0, %v3569
  %v3608 = vsub.f32 1.0, %v3571
  %v3609 = vsub.f32 1.0, %v3573
  %3613 = vrot.lane.b32.xlu0 %v3604, 112
  %v3614 = vpop.permute.xlu0 %3613
  %3615 = vrot.lane.b32.xlu0 %v3605, 112
  %v3616 = vpop.permute.xlu0 %3615
  %3617 = vrot.lane.b32.xlu0 %v3606, 112
  %v3618 = vpop.permute.xlu0 %3617
  %v3622 = vmul.f32 %v3607, %v3614
  %v3623 = vmul.f32 %v3608, %v3616
  %v3624 = vmul.f32 %v3609, %v3618
  %v3625 = vmul.f32 %v3569, %v3488
  %v3626 = vmul.f32 %v3571, %v3489
  %v3627 = vmul.f32 %v3573, %v3490
  %v3628 = vadd.f32 %v3622, %v3625
  %v3629 = vadd.f32 %v3623, %v3626
  %v3630 = vadd.f32 %v3624, %v3627
  %v3631 = vpack.c.bf16 %v3629, %v3628
  %v3632 = vpack.c.bf16 %v3630, %v3630
  %3635 = vrot.lane.b32.xlu0 %v3631, 112
  %v3636 = vpop.permute.xlu0 %3635
  %3637 = vrot.lane.b32.xlu0 %v3632, 112
  %v3638 = vpop.permute.xlu0 %3637
  %v3640 = vsel %vm166, %v3636, 0
  %v3643 = vsel %vm166, %v3638, 0
  %3645 = vmatprep.subr.bf16.mxu0 0
  %3646 = vmatpush1.bf16.msra.mxu0 0
  %3647 = vmatprep.subr.bf16.mxu0 0
  %3648 = vmatpush1.bf16.msra.mxu0 0
  %3649 = vmatprep.subr.bf16.mxu0 0
  %3650 = vmatpush1.bf16.msra.mxu0 0
  %3651 = vmatprep.subr.bf16.mxu0 0
  %3652 = vmatpush1.bf16.msra.mxu0 0
  %3653 = vmatprep.subr.bf16.mxu0 0
  %3654 = vmatpush1.bf16.msra.mxu0 0
  %3655 = vmatprep.subr.bf16.mxu0 0
  %3656 = vmatpush1.bf16.msra.mxu0 0
  %3657 = vmatprep.subr.bf16.mxu0 0
  %3658 = vmatpush1.bf16.msra.mxu0 0
  %3659 = vmatprep.subr.bf16.mxu0 0
  %3660 = vmatpush1.bf16.msra.mxu0 %v3363
  %3661 = vmatprep.subr.bf16.mxu0 0
  %3662 = vmatpush2.bf16.msra.mxu0 0
  %3663 = vmatprep.subr.bf16.mxu0 0
  %3664 = vmatpush2.bf16.msra.mxu0 0
  %3665 = vmatprep.subr.bf16.mxu0 0
  %3666 = vmatpush2.bf16.msra.mxu0 0
  %3667 = vmatprep.subr.bf16.mxu0 0
  %3668 = vmatpush2.bf16.msra.mxu0 0
  %3669 = vmatprep.subr.bf16.mxu0 0
  %3670 = vmatpush2.bf16.msra.mxu0 0
  %3671 = vmatprep.subr.bf16.mxu0 0
  %3672 = vmatpush2.bf16.msra.mxu0 0
  %3673 = vmatprep.subr.bf16.mxu0 0
  %3674 = vmatpush2.bf16.msra.mxu0 0
  %3675 = vmatprep.subr.bf16.mxu0 0
  %3676 = vmatpush2.bf16.msra.mxu0 0
  %3677 = vmatprep.mubr.bf16.mxu0 0
  %3678 = vmatmul.mubr.bf16.gmra.mxu0 %v3640
  %v3679 = vpop.f32.mrf.mxu0
  %v3680 = vadd.f32 %v3358, %v3679
  %v3681 = vpop.f32.mrf.mxu0
  %v3682 = vpop.f32.mrf.mxu0
  %v3683 = vadd.f32 %v3358, %v3682
  %v3684 = vpop.f32.mrf.mxu0
  %3685 = vmatprep.mubr.bf16.mxu0 0
  %3686 = vmatmul.mubr.bf16.gmra.mxu0 %v3643
  %v3687 = vpop.f32.mrf.mxu0
  %v3688 = vadd.f32 %v3358, %v3687
  %v3689 = vpop.f32.mrf.mxu0
  %v3690 = vpop.f32.mrf.mxu0
  %v3691 = vpop.f32.mrf.mxu0
  %3692 = vdwg.mxu0
  %v3693 = vadd.f32 %v3285, %v3680
  %v3694 = vadd.f32 %v3288, %v3683
  %v3695 = vadd.f32 %v3293, %v3688
  %v3696 = vxor.u32 %v3693, 2147483648
  %v3697 = vxor.u32 %v3694, 2147483648
  %v3698 = vxor.u32 %v3695, 2147483648
  %v3699 = vmul.f32 %v3696, 1.442695
  %v3700 = vpow.pop %v3699
  %v3701 = vmul.f32 %v3697, 1.442695
  %v3702 = vpow.pop %v3701
  %v3703 = vmul.f32 %v3698, 1.442695
  %v3704 = vpow.pop %v3703
  %v3705 = vadd.f32 %v3700, 1.0
  %v3706 = vadd.f32 %v3702, 1.0
  %v3707 = vadd.f32 %v3704, 1.0
  %v3708 = vrcp.pop %v3705
  %v3709 = vmul.f32 1.0, %v3708
  %v3710 = vrcp.pop %v3706
  %v3711 = vmul.f32 1.0, %v3710
  %v3712 = vrcp.pop %v3707
  %v3713 = vmul.f32 1.0, %v3712
  %3717 = vrot.lane.b32.xlu0 %v3680, 96
  %v3718 = vpop.permute.xlu0 %3717
  %3719 = vrot.lane.b32.xlu0 %v3683, 96
  %v3720 = vpop.permute.xlu0 %3719
  %3721 = vrot.lane.b32.xlu0 %v3688, 96
  %v3722 = vpop.permute.xlu0 %3721
  %v3726 = vmul.f32 %v3709, %v3718
  %v3727 = vmul.f32 %v3711, %v3720
  %v3728 = vmul.f32 %v3713, %v3722
  %3732 = vrot.lane.b32.xlu0 %v3726, 32
  %v3733 = vpop.permute.xlu0 %3732
  %3734 = vrot.lane.b32.xlu0 %v3727, 32
  %v3735 = vpop.permute.xlu0 %3734
  %3736 = vrot.lane.b32.xlu0 %v3728, 32
  %v3737 = vpop.permute.xlu0 %3736
  %v3741 = vadd.f32 %v3285, %v3733
  %v3742 = vadd.f32 %v3288, %v3735
  %v3743 = vadd.f32 %v3293, %v3737
  %v3744 = vtanh.pop %v3741
  %v3745 = vtanh.pop %v3742
  %v3746 = vtanh.pop %v3743
  %v3747 = vsub.f32 1.0, %v3709
  %v3748 = vsub.f32 1.0, %v3711
  %v3749 = vsub.f32 1.0, %v3713
  %3753 = vrot.lane.b32.xlu0 %v3744, 112
  %v3754 = vpop.permute.xlu0 %3753
  %3755 = vrot.lane.b32.xlu0 %v3745, 112
  %v3756 = vpop.permute.xlu0 %3755
  %3757 = vrot.lane.b32.xlu0 %v3746, 112
  %v3758 = vpop.permute.xlu0 %3757
  %v3762 = vmul.f32 %v3747, %v3754
  %v3763 = vmul.f32 %v3748, %v3756
  %v3764 = vmul.f32 %v3749, %v3758
  %v3765 = vmul.f32 %v3709, %v3628
  %v3766 = vmul.f32 %v3711, %v3629
  %v3767 = vmul.f32 %v3713, %v3630
  %v3768 = vadd.f32 %v3762, %v3765
  %v3769 = vadd.f32 %v3763, %v3766
  %v3770 = vadd.f32 %v3764, %v3767
  %v3771 = vpack.c.bf16 %v3769, %v3768
  %v3772 = vpack.c.bf16 %v3770, %v3770
  %3775 = vrot.lane.b32.xlu0 %v3771, 112
  %v3776 = vpop.permute.xlu0 %3775
  %3777 = vrot.lane.b32.xlu0 %v3772, 112
  %v3778 = vpop.permute.xlu0 %3777
  %v3780 = vsel %vm166, %v3776, 0
  %v3783 = vsel %vm166, %v3778, 0
  %3785 = vmatprep.subr.bf16.mxu0 0
  %3786 = vmatpush1.bf16.msra.mxu0 0
  %3787 = vmatprep.subr.bf16.mxu0 0
  %3788 = vmatpush1.bf16.msra.mxu0 0
  %3789 = vmatprep.subr.bf16.mxu0 0
  %3790 = vmatpush1.bf16.msra.mxu0 0
  %3791 = vmatprep.subr.bf16.mxu0 0
  %3792 = vmatpush1.bf16.msra.mxu0 0
  %3793 = vmatprep.subr.bf16.mxu0 0
  %3794 = vmatpush1.bf16.msra.mxu0 0
  %3795 = vmatprep.subr.bf16.mxu0 0
  %3796 = vmatpush1.bf16.msra.mxu0 0
  %3797 = vmatprep.subr.bf16.mxu0 0
  %3798 = vmatpush1.bf16.msra.mxu0 0
  %3799 = vmatprep.subr.bf16.mxu0 0
  %3800 = vmatpush1.bf16.msra.mxu0 %v3363
  %3801 = vmatprep.subr.bf16.mxu0 0
  %3802 = vmatpush2.bf16.msra.mxu0 0
  %3803 = vmatprep.subr.bf16.mxu0 0
  %3804 = vmatpush2.bf16.msra.mxu0 0
  %3805 = vmatprep.subr.bf16.mxu0 0
  %3806 = vmatpush2.bf16.msra.mxu0 0
  %3807 = vmatprep.subr.bf16.mxu0 0
  %3808 = vmatpush2.bf16.msra.mxu0 0
  %3809 = vmatprep.subr.bf16.mxu0 0
  %3810 = vmatpush2.bf16.msra.mxu0 0
  %3811 = vmatprep.subr.bf16.mxu0 0
  %3812 = vmatpush2.bf16.msra.mxu0 0
  %3813 = vmatprep.subr.bf16.mxu0 0
  %3814 = vmatpush2.bf16.msra.mxu0 0
  %3815 = vmatprep.subr.bf16.mxu0 0
  %3816 = vmatpush2.bf16.msra.mxu0 0
  %3817 = vmatprep.mubr.bf16.mxu0 0
  %3818 = vmatmul.mubr.bf16.gmra.mxu0 %v3780
  %v3819 = vpop.f32.mrf.mxu0
  %v3820 = vadd.f32 %v3358, %v3819
  %v3821 = vpop.f32.mrf.mxu0
  %v3822 = vpop.f32.mrf.mxu0
  %v3823 = vadd.f32 %v3358, %v3822
  %v3824 = vpop.f32.mrf.mxu0
  %3825 = vmatprep.mubr.bf16.mxu0 0
  %3826 = vmatmul.mubr.bf16.gmra.mxu0 %v3783
  %v3827 = vpop.f32.mrf.mxu0
  %v3828 = vadd.f32 %v3358, %v3827
  %v3829 = vpop.f32.mrf.mxu0
  %v3830 = vpop.f32.mrf.mxu0
  %v3831 = vpop.f32.mrf.mxu0
  %3832 = vdwg.mxu0
  %v3833 = vadd.f32 %v3296, %v3820
  %v3834 = vadd.f32 %v3301, %v3823
  %v3835 = vadd.f32 %v3304, %v3828
  %v3836 = vxor.u32 %v3833, 2147483648
  %v3837 = vxor.u32 %v3834, 2147483648
  %v3838 = vxor.u32 %v3835, 2147483648
  %v3839 = vmul.f32 %v3836, 1.442695
  %v3840 = vpow.pop %v3839
  %v3841 = vmul.f32 %v3837, 1.442695
  %v3842 = vpow.pop %v3841
  %v3843 = vmul.f32 %v3838, 1.442695
  %v3844 = vpow.pop %v3843
  %v3845 = vadd.f32 %v3840, 1.0
  %v3846 = vadd.f32 %v3842, 1.0
  %v3847 = vadd.f32 %v3844, 1.0
  %v3848 = vrcp.pop %v3845
  %v3849 = vmul.f32 1.0, %v3848
  %v3850 = vrcp.pop %v3846
  %v3851 = vmul.f32 1.0, %v3850
  %v3852 = vrcp.pop %v3847
  %v3853 = vmul.f32 1.0, %v3852
  %3857 = vrot.lane.b32.xlu0 %v3820, 96
  %v3858 = vpop.permute.xlu0 %3857
  %3859 = vrot.lane.b32.xlu0 %v3823, 96
  %v3860 = vpop.permute.xlu0 %3859
  %3861 = vrot.lane.b32.xlu0 %v3828, 96
  %v3862 = vpop.permute.xlu0 %3861
  %v3866 = vmul.f32 %v3849, %v3858
  %v3867 = vmul.f32 %v3851, %v3860
  %v3868 = vmul.f32 %v3853, %v3862
  %3872 = vrot.lane.b32.xlu0 %v3866, 32
  %v3873 = vpop.permute.xlu0 %3872
  %3874 = vrot.lane.b32.xlu0 %v3867, 32
  %v3875 = vpop.permute.xlu0 %3874
  %3876 = vrot.lane.b32.xlu0 %v3868, 32
  %v3877 = vpop.permute.xlu0 %3876
  %v3881 = vadd.f32 %v3296, %v3873
  %v3882 = vadd.f32 %v3301, %v3875
  %v3883 = vadd.f32 %v3304, %v3877
  %v3884 = vtanh.pop %v3881
  %v3885 = vtanh.pop %v3882
  %v3886 = vtanh.pop %v3883
  %v3887 = vsub.f32 1.0, %v3849
  %v3888 = vsub.f32 1.0, %v3851
  %v3889 = vsub.f32 1.0, %v3853
  %3893 = vrot.lane.b32.xlu0 %v3884, 112
  %v3894 = vpop.permute.xlu0 %3893
  %3895 = vrot.lane.b32.xlu0 %v3885, 112
  %v3896 = vpop.permute.xlu0 %3895
  %3897 = vrot.lane.b32.xlu0 %v3886, 112
  %v3898 = vpop.permute.xlu0 %3897
  %v3902 = vmul.f32 %v3887, %v3894
  %v3903 = vmul.f32 %v3888, %v3896
  %v3904 = vmul.f32 %v3889, %v3898
  %v3905 = vmul.f32 %v3849, %v3768
  %v3906 = vmul.f32 %v3851, %v3769
  %v3907 = vmul.f32 %v3853, %v3770
  %v3908 = vadd.f32 %v3902, %v3905
  %v3909 = vadd.f32 %v3903, %v3906
  %v3910 = vadd.f32 %v3904, %v3907
  %v3911 = vpack.c.bf16 %v3909, %v3908
  %v3912 = vpack.c.bf16 %v3910, %v3910
  %3915 = vrot.lane.b32.xlu0 %v3911, 112
  %v3916 = vpop.permute.xlu0 %3915
  %3917 = vrot.lane.b32.xlu0 %v3912, 112
  %v3918 = vpop.permute.xlu0 %3917
  %v3920 = vsel %vm166, %v3916, 0
  %v3923 = vsel %vm166, %v3918, 0
  %3925 = vmatprep.subr.bf16.mxu0 0
  %3926 = vmatpush1.bf16.msra.mxu0 0
  %3927 = vmatprep.subr.bf16.mxu0 0
  %3928 = vmatpush1.bf16.msra.mxu0 0
  %3929 = vmatprep.subr.bf16.mxu0 0
  %3930 = vmatpush1.bf16.msra.mxu0 0
  %3931 = vmatprep.subr.bf16.mxu0 0
  %3932 = vmatpush1.bf16.msra.mxu0 0
  %3933 = vmatprep.subr.bf16.mxu0 0
  %3934 = vmatpush1.bf16.msra.mxu0 0
  %3935 = vmatprep.subr.bf16.mxu0 0
  %3936 = vmatpush1.bf16.msra.mxu0 0
  %3937 = vmatprep.subr.bf16.mxu0 0
  %3938 = vmatpush1.bf16.msra.mxu0 0
  %3939 = vmatprep.subr.bf16.mxu0 0
  %3940 = vmatpush1.bf16.msra.mxu0 %v3363
  %3941 = vmatprep.subr.bf16.mxu0 0
  %3942 = vmatpush2.bf16.msra.mxu0 0
  %3943 = vmatprep.subr.bf16.mxu0 0
  %3944 = vmatpush2.bf16.msra.mxu0 0
  %3945 = vmatprep.subr.bf16.mxu0 0
  %3946 = vmatpush2.bf16.msra.mxu0 0
  %3947 = vmatprep.subr.bf16.mxu0 0
  %3948 = vmatpush2.bf16.msra.mxu0 0
  %3949 = vmatprep.subr.bf16.mxu0 0
  %3950 = vmatpush2.bf16.msra.mxu0 0
  %3951 = vmatprep.subr.bf16.mxu0 0
  %3952 = vmatpush2.bf16.msra.mxu0 0
  %3953 = vmatprep.subr.bf16.mxu0 0
  %3954 = vmatpush2.bf16.msra.mxu0 0
  %3955 = vmatprep.subr.bf16.mxu0 0
  %3956 = vmatpush2.bf16.msra.mxu0 0
  %3957 = vmatprep.mubr.bf16.mxu0 0
  %3958 = vmatmul.mubr.bf16.gmra.mxu0 %v3920
  %v3959 = vpop.f32.mrf.mxu0
  %v3960 = vadd.f32 %v3358, %v3959
  %v3961 = vpop.f32.mrf.mxu0
  %v3962 = vpop.f32.mrf.mxu0
  %v3963 = vadd.f32 %v3358, %v3962
  %v3964 = vpop.f32.mrf.mxu0
  %3965 = vmatprep.mubr.bf16.mxu0 0
  %3966 = vmatmul.mubr.bf16.gmra.mxu0 %v3923
  %v3967 = vpop.f32.mrf.mxu0
  %v3968 = vadd.f32 %v3358, %v3967
  %v3969 = vpop.f32.mrf.mxu0
  %v3970 = vpop.f32.mrf.mxu0
  %v3971 = vpop.f32.mrf.mxu0
  %3972 = vdwg.mxu0
  %v3973 = vadd.f32 %v3309, %v3960
  %v3974 = vadd.f32 %v3312, %v3963
  %v3975 = vadd.f32 %v3317, %v3968
  %v3976 = vxor.u32 %v3973, 2147483648
  %v3977 = vxor.u32 %v3974, 2147483648
  %v3978 = vxor.u32 %v3975, 2147483648
  %v3979 = vmul.f32 %v3976, 1.442695
  %v3980 = vpow.pop %v3979
  %v3981 = vmul.f32 %v3977, 1.442695
  %v3982 = vpow.pop %v3981
  %v3983 = vmul.f32 %v3978, 1.442695
  %v3984 = vpow.pop %v3983
  %v3985 = vadd.f32 %v3980, 1.0
  %v3986 = vadd.f32 %v3982, 1.0
  %v3987 = vadd.f32 %v3984, 1.0
  %v3988 = vrcp.pop %v3985
  %v3989 = vmul.f32 1.0, %v3988
  %v3990 = vrcp.pop %v3986
  %v3991 = vmul.f32 1.0, %v3990
  %v3992 = vrcp.pop %v3987
  %v3993 = vmul.f32 1.0, %v3992
  %3997 = vrot.lane.b32.xlu0 %v3960, 96
  %v3998 = vpop.permute.xlu0 %3997
  %3999 = vrot.lane.b32.xlu0 %v3963, 96
  %v4000 = vpop.permute.xlu0 %3999
  %4001 = vrot.lane.b32.xlu0 %v3968, 96
  %v4002 = vpop.permute.xlu0 %4001
  %v4006 = vmul.f32 %v3989, %v3998
  %v4007 = vmul.f32 %v3991, %v4000
  %v4008 = vmul.f32 %v3993, %v4002
  %4012 = vrot.lane.b32.xlu0 %v4006, 32
  %v4013 = vpop.permute.xlu0 %4012
  %4014 = vrot.lane.b32.xlu0 %v4007, 32
  %v4015 = vpop.permute.xlu0 %4014
  %4016 = vrot.lane.b32.xlu0 %v4008, 32
  %v4017 = vpop.permute.xlu0 %4016
  %v4021 = vadd.f32 %v3309, %v4013
  %v4022 = vadd.f32 %v3312, %v4015
  %v4023 = vadd.f32 %v3317, %v4017
  %v4024 = vtanh.pop %v4021
  %v4025 = vtanh.pop %v4022
  %v4026 = vtanh.pop %v4023
  %v4027 = vsub.f32 1.0, %v3989
  %v4028 = vsub.f32 1.0, %v3991
  %v4029 = vsub.f32 1.0, %v3993
  %4033 = vrot.lane.b32.xlu0 %v4024, 112
  %v4034 = vpop.permute.xlu0 %4033
  %4035 = vrot.lane.b32.xlu0 %v4025, 112
  %v4036 = vpop.permute.xlu0 %4035
  %4037 = vrot.lane.b32.xlu0 %v4026, 112
  %v4038 = vpop.permute.xlu0 %4037
  %v4042 = vmul.f32 %v4027, %v4034
  %v4043 = vmul.f32 %v4028, %v4036
  %v4044 = vmul.f32 %v4029, %v4038
  %v4045 = vmul.f32 %v3989, %v3908
  %v4046 = vmul.f32 %v3991, %v3909
  %v4047 = vmul.f32 %v3993, %v3910
  %v4048 = vadd.f32 %v4042, %v4045
  %v4049 = vadd.f32 %v4043, %v4046
  %v4050 = vadd.f32 %v4044, %v4047
  %v4051 = vpack.c.bf16 %v4049, %v4048
  %v4052 = vpack.c.bf16 %v4050, %v4050
  %4055 = vrot.lane.b32.xlu0 %v4051, 112
  %v4056 = vpop.permute.xlu0 %4055
  %4057 = vrot.lane.b32.xlu0 %v4052, 112
  %v4058 = vpop.permute.xlu0 %4057
  %v4060 = vsel %vm166, %v4056, 0
  %v4063 = vsel %vm166, %v4058, 0
  %4065 = vmatprep.subr.bf16.mxu0 0
  %4066 = vmatpush1.bf16.msra.mxu0 0
  %4067 = vmatprep.subr.bf16.mxu0 0
  %4068 = vmatpush1.bf16.msra.mxu0 0
  %4069 = vmatprep.subr.bf16.mxu0 0
  %4070 = vmatpush1.bf16.msra.mxu0 0
  %4071 = vmatprep.subr.bf16.mxu0 0
  %4072 = vmatpush1.bf16.msra.mxu0 0
  %4073 = vmatprep.subr.bf16.mxu0 0
  %4074 = vmatpush1.bf16.msra.mxu0 0
  %4075 = vmatprep.subr.bf16.mxu0 0
  %4076 = vmatpush1.bf16.msra.mxu0 0
  %4077 = vmatprep.subr.bf16.mxu0 0
  %4078 = vmatpush1.bf16.msra.mxu0 0
  %4079 = vmatprep.subr.bf16.mxu0 0
  %4080 = vmatpush1.bf16.msra.mxu0 %v3363
  %4081 = vmatprep.subr.bf16.mxu0 0
  %4082 = vmatpush2.bf16.msra.mxu0 0
  %4083 = vmatprep.subr.bf16.mxu0 0
  %4084 = vmatpush2.bf16.msra.mxu0 0
  %4085 = vmatprep.subr.bf16.mxu0 0
  %4086 = vmatpush2.bf16.msra.mxu0 0
  %4087 = vmatprep.subr.bf16.mxu0 0
  %4088 = vmatpush2.bf16.msra.mxu0 0
  %4089 = vmatprep.subr.bf16.mxu0 0
  %4090 = vmatpush2.bf16.msra.mxu0 0
  %4091 = vmatprep.subr.bf16.mxu0 0
  %4092 = vmatpush2.bf16.msra.mxu0 0
  %4093 = vmatprep.subr.bf16.mxu0 0
  %4094 = vmatpush2.bf16.msra.mxu0 0
  %4095 = vmatprep.subr.bf16.mxu0 0
  %4096 = vmatpush2.bf16.msra.mxu0 0
  %4097 = vmatprep.mubr.bf16.mxu0 0
  %4098 = vmatmul.mubr.bf16.gmra.mxu0 %v4060
  %v4099 = vpop.f32.mrf.mxu0
  %v4100 = vadd.f32 %v3358, %v4099
  %v4101 = vpop.f32.mrf.mxu0
  %v4102 = vpop.f32.mrf.mxu0
  %v4103 = vadd.f32 %v3358, %v4102
  %v4104 = vpop.f32.mrf.mxu0
  %4105 = vmatprep.mubr.bf16.mxu0 0
  %4106 = vmatmul.mubr.bf16.gmra.mxu0 %v4063
  %v4107 = vpop.f32.mrf.mxu0
  %v4108 = vadd.f32 %v3358, %v4107
  %v4109 = vpop.f32.mrf.mxu0
  %v4110 = vpop.f32.mrf.mxu0
  %v4111 = vpop.f32.mrf.mxu0
  %4112 = vdwg.mxu0
  %v4113 = vadd.f32 %v3320, %v4100
  %v4114 = vadd.f32 %v3325, %v4103
  %v4115 = vadd.f32 %v3328, %v4108
  %v4116 = vxor.u32 %v4113, 2147483648
  %v4117 = vxor.u32 %v4114, 2147483648
  %v4118 = vxor.u32 %v4115, 2147483648
  %v4119 = vmul.f32 %v4116, 1.442695
  %v4120 = vpow.pop %v4119
  %v4121 = vmul.f32 %v4117, 1.442695
  %v4122 = vpow.pop %v4121
  %v4123 = vmul.f32 %v4118, 1.442695
  %v4124 = vpow.pop %v4123
  %v4125 = vadd.f32 %v4120, 1.0
  %v4126 = vadd.f32 %v4122, 1.0
  %v4127 = vadd.f32 %v4124, 1.0
  %v4128 = vrcp.pop %v4125
  %v4129 = vmul.f32 1.0, %v4128
  %v4130 = vrcp.pop %v4126
  %v4131 = vmul.f32 1.0, %v4130
  %v4132 = vrcp.pop %v4127
  %v4133 = vmul.f32 1.0, %v4132
  %4137 = vrot.lane.b32.xlu0 %v4100, 96
  %v4138 = vpop.permute.xlu0 %4137
  %4139 = vrot.lane.b32.xlu0 %v4103, 96
  %v4140 = vpop.permute.xlu0 %4139
  %4141 = vrot.lane.b32.xlu0 %v4108, 96
  %v4142 = vpop.permute.xlu0 %4141
  %v4146 = vmul.f32 %v4129, %v4138
  %v4147 = vmul.f32 %v4131, %v4140
  %v4148 = vmul.f32 %v4133, %v4142
  %4152 = vrot.lane.b32.xlu0 %v4146, 32
  %v4153 = vpop.permute.xlu0 %4152
  %4154 = vrot.lane.b32.xlu0 %v4147, 32
  %v4155 = vpop.permute.xlu0 %4154
  %4156 = vrot.lane.b32.xlu0 %v4148, 32
  %v4157 = vpop.permute.xlu0 %4156
  %v4161 = vadd.f32 %v3320, %v4153
  %v4162 = vadd.f32 %v3325, %v4155
  %v4163 = vadd.f32 %v3328, %v4157
  %v4164 = vtanh.pop %v4161
  %v4165 = vtanh.pop %v4162
  %v4166 = vtanh.pop %v4163
  %v4167 = vsub.f32 1.0, %v4129
  %v4168 = vsub.f32 1.0, %v4131
  %v4169 = vsub.f32 1.0, %v4133
  %4173 = vrot.lane.b32.xlu0 %v4164, 112
  %v4174 = vpop.permute.xlu0 %4173
  %4175 = vrot.lane.b32.xlu0 %v4165, 112
  %v4176 = vpop.permute.xlu0 %4175
  %4177 = vrot.lane.b32.xlu0 %v4166, 112
  %v4178 = vpop.permute.xlu0 %4177
  %v4182 = vmul.f32 %v4167, %v4174
  %v4183 = vmul.f32 %v4168, %v4176
  %v4184 = vmul.f32 %v4169, %v4178
  %v4185 = vmul.f32 %v4129, %v4048
  %v4186 = vmul.f32 %v4131, %v4049
  %v4187 = vmul.f32 %v4133, %v4050
  %v4188 = vadd.f32 %v4182, %v4185
  %v4189 = vadd.f32 %v4183, %v4186
  %v4190 = vadd.f32 %v4184, %v4187
  %v4191 = vpack.c.bf16 %v4189, %v4188
  %v4192 = vpack.c.bf16 %v4190, %v4190
  %4195 = vrot.lane.b32.xlu0 %v4191, 112
  %v4196 = vpop.permute.xlu0 %4195
  %4197 = vrot.lane.b32.xlu0 %v4192, 112
  %v4198 = vpop.permute.xlu0 %4197
  %v4200 = vsel %vm166, %v4196, 0
  %v4203 = vsel %vm166, %v4198, 0
  %4205 = vmatprep.subr.bf16.mxu0 0
  %4206 = vmatpush1.bf16.msra.mxu0 0
  %4207 = vmatprep.subr.bf16.mxu0 0
  %4208 = vmatpush1.bf16.msra.mxu0 0
  %4209 = vmatprep.subr.bf16.mxu0 0
  %4210 = vmatpush1.bf16.msra.mxu0 0
  %4211 = vmatprep.subr.bf16.mxu0 0
  %4212 = vmatpush1.bf16.msra.mxu0 0
  %4213 = vmatprep.subr.bf16.mxu0 0
  %4214 = vmatpush1.bf16.msra.mxu0 0
  %4215 = vmatprep.subr.bf16.mxu0 0
  %4216 = vmatpush1.bf16.msra.mxu0 0
  %4217 = vmatprep.subr.bf16.mxu0 0
  %4218 = vmatpush1.bf16.msra.mxu0 0
  %4219 = vmatprep.subr.bf16.mxu0 0
  %4220 = vmatpush1.bf16.msra.mxu0 %v3363
  %4221 = vmatprep.subr.bf16.mxu0 0
  %4222 = vmatpush2.bf16.msra.mxu0 0
  %4223 = vmatprep.subr.bf16.mxu0 0
  %4224 = vmatpush2.bf16.msra.mxu0 0
  %4225 = vmatprep.subr.bf16.mxu0 0
  %4226 = vmatpush2.bf16.msra.mxu0 0
  %4227 = vmatprep.subr.bf16.mxu0 0
  %4228 = vmatpush2.bf16.msra.mxu0 0
  %4229 = vmatprep.subr.bf16.mxu0 0
  %4230 = vmatpush2.bf16.msra.mxu0 0
  %4231 = vmatprep.subr.bf16.mxu0 0
  %4232 = vmatpush2.bf16.msra.mxu0 0
  %4233 = vmatprep.subr.bf16.mxu0 0
  %4234 = vmatpush2.bf16.msra.mxu0 0
  %4235 = vmatprep.subr.bf16.mxu0 0
  %4236 = vmatpush2.bf16.msra.mxu0 0
  %4237 = vmatprep.mubr.bf16.mxu0 0
  %4238 = vmatmul.mubr.bf16.gmra.mxu0 %v4200
  %v4239 = vpop.f32.mrf.mxu0
  %v4240 = vadd.f32 %v3358, %v4239
  %v4241 = vpop.f32.mrf.mxu0
  %v4242 = vpop.f32.mrf.mxu0
  %v4243 = vadd.f32 %v3358, %v4242
  %v4244 = vpop.f32.mrf.mxu0
  %4245 = vmatprep.mubr.bf16.mxu0 0
  %4246 = vmatmul.mubr.bf16.gmra.mxu0 %v4203
  %v4247 = vpop.f32.mrf.mxu0
  %v4248 = vadd.f32 %v3358, %v4247
  %v4249 = vpop.f32.mrf.mxu0
  %v4250 = vpop.f32.mrf.mxu0
  %v4251 = vpop.f32.mrf.mxu0
  %4252 = vdwg.mxu0
  %v4253 = vadd.f32 %v3333, %v4240
  %v4254 = vadd.f32 %v3336, %v4243
  %v4255 = vadd.f32 %v3341, %v4248
  %v4256 = vxor.u32 %v4253, 2147483648
  %v4257 = vxor.u32 %v4254, 2147483648
  %v4258 = vxor.u32 %v4255, 2147483648
  %v4259 = vmul.f32 %v4256, 1.442695
  %v4260 = vpow.pop %v4259
  %v4261 = vmul.f32 %v4257, 1.442695
  %v4262 = vpow.pop %v4261
  %v4263 = vmul.f32 %v4258, 1.442695
  %v4264 = vpow.pop %v4263
  %v4265 = vadd.f32 %v4260, 1.0
  %v4266 = vadd.f32 %v4262, 1.0
  %v4267 = vadd.f32 %v4264, 1.0
  %v4268 = vrcp.pop %v4265
  %v4269 = vmul.f32 1.0, %v4268
  %v4270 = vrcp.pop %v4266
  %v4271 = vmul.f32 1.0, %v4270
  %v4272 = vrcp.pop %v4267
  %v4273 = vmul.f32 1.0, %v4272
  %4277 = vrot.lane.b32.xlu0 %v4240, 96
  %v4278 = vpop.permute.xlu0 %4277
  %4279 = vrot.lane.b32.xlu0 %v4243, 96
  %v4280 = vpop.permute.xlu0 %4279
  %4281 = vrot.lane.b32.xlu0 %v4248, 96
  %v4282 = vpop.permute.xlu0 %4281
  %v4286 = vmul.f32 %v4269, %v4278
  %v4287 = vmul.f32 %v4271, %v4280
  %v4288 = vmul.f32 %v4273, %v4282
  %4292 = vrot.lane.b32.xlu0 %v4286, 32
  %v4293 = vpop.permute.xlu0 %4292
  %4294 = vrot.lane.b32.xlu0 %v4287, 32
  %v4295 = vpop.permute.xlu0 %4294
  %4296 = vrot.lane.b32.xlu0 %v4288, 32
  %v4297 = vpop.permute.xlu0 %4296
  %v4301 = vadd.f32 %v3333, %v4293
  %v4302 = vadd.f32 %v3336, %v4295
  %v4303 = vadd.f32 %v3341, %v4297
  %v4304 = vtanh.pop %v4301
  %v4305 = vtanh.pop %v4302
  %v4306 = vtanh.pop %v4303
  %v4307 = vsub.f32 1.0, %v4269
  %v4308 = vsub.f32 1.0, %v4271
  %v4309 = vsub.f32 1.0, %v4273
  %4313 = vrot.lane.b32.xlu0 %v4304, 112
  %v4314 = vpop.permute.xlu0 %4313
  %4315 = vrot.lane.b32.xlu0 %v4305, 112
  %v4316 = vpop.permute.xlu0 %4315
  %4317 = vrot.lane.b32.xlu0 %v4306, 112
  %v4318 = vpop.permute.xlu0 %4317
  %v4322 = vmul.f32 %v4307, %v4314
  %v4323 = vmul.f32 %v4308, %v4316
  %v4324 = vmul.f32 %v4309, %v4318
  %v4325 = vmul.f32 %v4269, %v4188
  %v4326 = vmul.f32 %v4271, %v4189
  %v4327 = vmul.f32 %v4273, %v4190
  %v4328 = vadd.f32 %v4322, %v4325
  %v4329 = vadd.f32 %v4323, %v4326
  %v4330 = vadd.f32 %v4324, %v4327
  %v4331 = vpack.c.bf16 %v4329, %v4328
  %v4332 = vpack.c.bf16 %v4330, %v4330
  %4335 = vrot.lane.b32.xlu0 %v4331, 112
  %v4336 = vpop.permute.xlu0 %4335
  %4337 = vrot.lane.b32.xlu0 %v4332, 112
  %v4338 = vpop.permute.xlu0 %4337
  %v4340 = vsel %vm166, %v4336, 0
  %v4343 = vsel %vm166, %v4338, 0
  %4345 = vmatprep.subr.bf16.mxu0 0
  %4346 = vmatpush1.bf16.msra.mxu0 0
  %4347 = vmatprep.subr.bf16.mxu0 0
  %4348 = vmatpush1.bf16.msra.mxu0 0
  %4349 = vmatprep.subr.bf16.mxu0 0
  %4350 = vmatpush1.bf16.msra.mxu0 0
  %4351 = vmatprep.subr.bf16.mxu0 0
  %4352 = vmatpush1.bf16.msra.mxu0 0
  %4353 = vmatprep.subr.bf16.mxu0 0
  %4354 = vmatpush1.bf16.msra.mxu0 0
  %4355 = vmatprep.subr.bf16.mxu0 0
  %4356 = vmatpush1.bf16.msra.mxu0 0
  %4357 = vmatprep.subr.bf16.mxu0 0
  %4358 = vmatpush1.bf16.msra.mxu0 0
  %4359 = vmatprep.subr.bf16.mxu0 0
  %4360 = vmatpush1.bf16.msra.mxu0 %v3363
  %4361 = vmatprep.subr.bf16.mxu0 0
  %4362 = vmatpush2.bf16.msra.mxu0 0
  %4363 = vmatprep.subr.bf16.mxu0 0
  %4364 = vmatpush2.bf16.msra.mxu0 0
  %4365 = vmatprep.subr.bf16.mxu0 0
  %4366 = vmatpush2.bf16.msra.mxu0 0
  %4367 = vmatprep.subr.bf16.mxu0 0
  %4368 = vmatpush2.bf16.msra.mxu0 0
  %4369 = vmatprep.subr.bf16.mxu0 0
  %4370 = vmatpush2.bf16.msra.mxu0 0
  %4371 = vmatprep.subr.bf16.mxu0 0
  %4372 = vmatpush2.bf16.msra.mxu0 0
  %4373 = vmatprep.subr.bf16.mxu0 0
  %4374 = vmatpush2.bf16.msra.mxu0 0
  %4375 = vmatprep.subr.bf16.mxu0 0
  %4376 = vmatpush2.bf16.msra.mxu0 0
  %4377 = vmatprep.mubr.bf16.mxu0 0
  %4378 = vmatmul.mubr.bf16.gmra.mxu0 %v4340
  %v4379 = vpop.f32.mrf.mxu0
  %v4380 = vadd.f32 %v3358, %v4379
  %v4381 = vpop.f32.mrf.mxu0
  %v4382 = vpop.f32.mrf.mxu0
  %v4383 = vadd.f32 %v3358, %v4382
  %v4384 = vpop.f32.mrf.mxu0
  %4385 = vmatprep.mubr.bf16.mxu0 0
  %4386 = vmatmul.mubr.bf16.gmra.mxu0 %v4343
  %v4387 = vpop.f32.mrf.mxu0
  %v4388 = vadd.f32 %v3358, %v4387
  %v4389 = vpop.f32.mrf.mxu0
  %v4390 = vpop.f32.mrf.mxu0
  %v4391 = vpop.f32.mrf.mxu0
  %4392 = vdwg.mxu0
  %v4393 = vadd.f32 %v3344, %v4380
  %v4394 = vadd.f32 %v3349, %v4383
  %v4395 = vadd.f32 %v3352, %v4388
  %v4396 = vxor.u32 %v4393, 2147483648
  %v4397 = vxor.u32 %v4394, 2147483648
  %v4398 = vxor.u32 %v4395, 2147483648
  %v4399 = vmul.f32 %v4396, 1.442695
  %v4400 = vpow.pop %v4399
  %v4401 = vmul.f32 %v4397, 1.442695
  %v4402 = vpow.pop %v4401
  %v4403 = vmul.f32 %v4398, 1.442695
  %v4404 = vpow.pop %v4403
  %v4405 = vadd.f32 %v4400, 1.0
  %v4406 = vadd.f32 %v4402, 1.0
  %v4407 = vadd.f32 %v4404, 1.0
  %v4408 = vrcp.pop %v4405
  %v4409 = vmul.f32 1.0, %v4408
  %v4410 = vrcp.pop %v4406
  %v4411 = vmul.f32 1.0, %v4410
  %v4412 = vrcp.pop %v4407
  %v4413 = vmul.f32 1.0, %v4412
  %4417 = vrot.lane.b32.xlu0 %v4380, 96
  %v4418 = vpop.permute.xlu0 %4417
  %4419 = vrot.lane.b32.xlu0 %v4383, 96
  %v4420 = vpop.permute.xlu0 %4419
  %4421 = vrot.lane.b32.xlu0 %v4388, 96
  %v4422 = vpop.permute.xlu0 %4421
  %v4426 = vmul.f32 %v4409, %v4418
  %v4427 = vmul.f32 %v4411, %v4420
  %v4428 = vmul.f32 %v4413, %v4422
  %4432 = vrot.lane.b32.xlu0 %v4426, 32
  %v4433 = vpop.permute.xlu0 %4432
  %4434 = vrot.lane.b32.xlu0 %v4427, 32
  %v4435 = vpop.permute.xlu0 %4434
  %4436 = vrot.lane.b32.xlu0 %v4428, 32
  %v4437 = vpop.permute.xlu0 %4436
  %v4441 = vadd.f32 %v3344, %v4433
  %v4442 = vadd.f32 %v3349, %v4435
  %v4443 = vadd.f32 %v3352, %v4437
  %v4444 = vtanh.pop %v4441
  %v4445 = vtanh.pop %v4442
  %v4446 = vtanh.pop %v4443
  %v4447 = vsub.f32 1.0, %v4409
  %v4448 = vsub.f32 1.0, %v4411
  %v4449 = vsub.f32 1.0, %v4413
  %4453 = vrot.lane.b32.xlu0 %v4444, 112
  %v4454 = vpop.permute.xlu0 %4453
  %4455 = vrot.lane.b32.xlu0 %v4445, 112
  %v4456 = vpop.permute.xlu0 %4455
  %4457 = vrot.lane.b32.xlu0 %v4446, 112
  %v4458 = vpop.permute.xlu0 %4457
  %v4462 = vmul.f32 %v4447, %v4454
  %v4463 = vmul.f32 %v4448, %v4456
  %v4464 = vmul.f32 %v4449, %v4458
  %v4465 = vmul.f32 %v4409, %v4328
  %v4466 = vmul.f32 %v4411, %v4329
  %v4467 = vmul.f32 %v4413, %v4330
  %v4468 = vadd.f32 %v4462, %v4465
  %v4469 = vadd.f32 %v4463, %v4466
  %v4470 = vadd.f32 %v4464, %v4467
  %v4471 = vld [vmem:[%s1 + $0x68] sm:$0xf]
  %v4472 = vld [vmem:[%s1 + $0x6c] sm:$0xf]
  %v4473 = vld [vmem:[%s2 + $0x38] sm:$0x1]
  %v4474 = vpack.c.bf16 %v3628, %v3490
  %v4475 = vpack.c.bf16 %v3630, %v3629
  %v4476 = vpack.c.bf16 %v3908, %v3770
  %v4477 = vpack.c.bf16 %v3910, %v3909
  %v4478 = vpack.c.bf16 %v4188, %v4050
  %v4479 = vpack.c.bf16 %v4190, %v4189
  %v4480 = vpack.c.bf16 %v4468, %v4330
  %v4481 = vpack.c.bf16 %v4470, %v4469
  %v4482 = vlaneseq
  %v4483 = vshrl.u32 %v4482, 7
  %v4484 = vsub.s32 0, %v4483
  %v4485 = vrot.slane %v4473, %v4484
  %4494 = vrot.lane.b32.xlu0 %v4474, 112
  %v4495 = vpop.permute.xlu0 %4494
  %4496 = vrot.lane.b32.xlu0 %v4475, 112
  %v4497 = vpop.permute.xlu0 %4496
  %4498 = vrot.lane.b32.xlu0 %v4476, 112
  %v4499 = vpop.permute.xlu0 %4498
  %4500 = vrot.lane.b32.xlu0 %v4477, 112
  %v4501 = vpop.permute.xlu0 %4500
  %4502 = vrot.lane.b32.xlu0 %v4478, 112
  %v4503 = vpop.permute.xlu0 %4502
  %4504 = vrot.lane.b32.xlu0 %v4479, 112
  %v4505 = vpop.permute.xlu0 %4504
  %4506 = vrot.lane.b32.xlu0 %v4480, 112
  %v4507 = vpop.permute.xlu0 %4506
  %4508 = vrot.lane.b32.xlu0 %v4481, 112
  %v4509 = vpop.permute.xlu0 %4508
  %v4512 = vunpack.c.l.b16 %v4471
  %v4513 = vunpack.c.l.b16 %v4472
  %v4514 = vpack.c.b16 %v4513, %v4512
  %v4517 = vsel %vm166, %v4495, 0
  %v4520 = vsel %vm166, %v4497, 0
  %v4523 = vsel %vm166, %v4499, 0
  %v4526 = vsel %vm166, %v4501, 0
  %v4529 = vsel %vm166, %v4503, 0
  %v4532 = vsel %vm166, %v4505, 0
  %v4535 = vsel %vm166, %v4507, 0
  %v4538 = vsel %vm166, %v4509, 0
  %4540 = vmatprep.subr.bf16.mxu0 0
  %4541 = vmatpush1.bf16.msra.mxu0 0
  %4542 = vmatprep.subr.bf16.mxu0 0
  %4543 = vmatpush1.bf16.msra.mxu0 0
  %4544 = vmatprep.subr.bf16.mxu0 0
  %4545 = vmatpush1.bf16.msra.mxu0 0
  %4546 = vmatprep.subr.bf16.mxu0 0
  %4547 = vmatpush1.bf16.msra.mxu0 0
  %4548 = vmatprep.subr.bf16.mxu0 0
  %4549 = vmatpush1.bf16.msra.mxu0 0
  %4550 = vmatprep.subr.bf16.mxu0 0
  %4551 = vmatpush1.bf16.msra.mxu0 0
  %4552 = vmatprep.subr.bf16.mxu0 0
  %4553 = vmatpush1.bf16.msra.mxu0 0
  %4554 = vmatprep.subr.bf16.mxu0 0
  %4555 = vmatpush1.bf16.msra.mxu0 %v4514
  %4556 = vmatprep.subr.bf16.mxu0 0
  %4557 = vmatpush2.bf16.msra.mxu0 0
  %4558 = vmatprep.subr.bf16.mxu0 0
  %4559 = vmatpush2.bf16.msra.mxu0 0
  %4560 = vmatprep.subr.bf16.mxu0 0
  %4561 = vmatpush2.bf16.msra.mxu0 0
  %4562 = vmatprep.subr.bf16.mxu0 0
  %4563 = vmatpush2.bf16.msra.mxu0 0
  %4564 = vmatprep.subr.bf16.mxu0 0
  %4565 = vmatpush2.bf16.msra.mxu0 0
  %4566 = vmatprep.subr.bf16.mxu0 0
  %4567 = vmatpush2.bf16.msra.mxu0 0
  %4568 = vmatprep.subr.bf16.mxu0 0
  %4569 = vmatpush2.bf16.msra.mxu0 0
  %4570 = vmatprep.subr.bf16.mxu0 0
  %4571 = vmatpush2.bf16.msra.mxu0 0
  %4572 = vmatprep.mubr.bf16.mxu0 0
  %4573 = vmatmul.mubr.bf16.gmra.mxu0 %v3500
  %v4574 = vpop.f32.mrf.mxu0
  %v4575 = vadd.f32 %v4485, %v4574
  %v4576 = vpop.f32.mrf.mxu0
  %v4577 = vpop.f32.mrf.mxu0
  %v4578 = vadd.f32 %v4485, %v4577
  %v4579 = vpop.f32.mrf.mxu0
  %4580 = vmatprep.mubr.bf16.mxu0 0
  %4581 = vmatmul.mubr.bf16.gmra.mxu0 %v4517
  %v4582 = vpop.f32.mrf.mxu0
  %v4583 = vadd.f32 %v4485, %v4582
  %v4584 = vpop.f32.mrf.mxu0
  %v4585 = vpop.f32.mrf.mxu0
  %v4586 = vadd.f32 %v4485, %v4585
  %v4587 = vpop.f32.mrf.mxu0
  %4588 = vmatprep.mubr.bf16.mxu0 0
  %4589 = vmatmul.mubr.bf16.gmra.mxu0 %v4520
  %v4590 = vpop.f32.mrf.mxu0
  %v4591 = vadd.f32 %v4485, %v4590
  %v4592 = vpop.f32.mrf.mxu0
  %v4593 = vpop.f32.mrf.mxu0
  %v4594 = vadd.f32 %v4485, %v4593
  %v4595 = vpop.f32.mrf.mxu0
  %4596 = vmatprep.mubr.bf16.mxu0 0
  %4597 = vmatmul.mubr.bf16.gmra.mxu0 %v3780
  %v4598 = vpop.f32.mrf.mxu0
  %v4599 = vadd.f32 %v4485, %v4598
  %v4600 = vpop.f32.mrf.mxu0
  %v4601 = vpop.f32.mrf.mxu0
  %v4602 = vadd.f32 %v4485, %v4601
  %v4603 = vpop.f32.mrf.mxu0
  %4604 = vmatprep.mubr.bf16.mxu0 0
  %4605 = vmatmul.mubr.bf16.gmra.mxu0 %v4523
  %v4606 = vpop.f32.mrf.mxu0
  %v4607 = vadd.f32 %v4485, %v4606
  %v4608 = vpop.f32.mrf.mxu0
  %v4609 = vpop.f32.mrf.mxu0
  %v4610 = vadd.f32 %v4485, %v4609
  %v4611 = vpop.f32.mrf.mxu0
  %4612 = vmatprep.mubr.bf16.mxu0 0
  %4613 = vmatmul.mubr.bf16.gmra.mxu0 %v4526
  %v4614 = vpop.f32.mrf.mxu0
  %v4615 = vadd.f32 %v4485, %v4614
  %v4616 = vpop.f32.mrf.mxu0
  %v4617 = vpop.f32.mrf.mxu0
  %v4618 = vadd.f32 %v4485, %v4617
  %v4619 = vpop.f32.mrf.mxu0
  %4620 = vmatprep.mubr.bf16.mxu0 0
  %4621 = vmatmul.mubr.bf16.gmra.mxu0 %v4060
  %v4622 = vpop.f32.mrf.mxu0
  %v4623 = vadd.f32 %v4485, %v4622
  %v4624 = vpop.f32.mrf.mxu0
  %v4625 = vpop.f32.mrf.mxu0
  %v4626 = vadd.f32 %v4485, %v4625
  %v4627 = vpop.f32.mrf.mxu0
  %4628 = vmatprep.mubr.bf16.mxu0 0
  %4629 = vmatmul.mubr.bf16.gmra.mxu0 %v4529
  %v4630 = vpop.f32.mrf.mxu0
  %v4631 = vadd.f32 %v4485, %v4630
  %v4632 = vpop.f32.mrf.mxu0
  %v4633 = vpop.f32.mrf.mxu0
  %v4634 = vadd.f32 %v4485, %v4633
  %v4635 = vpop.f32.mrf.mxu0
  %4636 = vmatprep.mubr.bf16.mxu0 0
  %4637 = vmatmul.mubr.bf16.gmra.mxu0 %v4532
  %v4638 = vpop.f32.mrf.mxu0
  %v4639 = vadd.f32 %v4485, %v4638
  %v4640 = vpop.f32.mrf.mxu0
  %v4641 = vpop.f32.mrf.mxu0
  %v4642 = vadd.f32 %v4485, %v4641
  %v4643 = vpop.f32.mrf.mxu0
  %4644 = vmatprep.mubr.bf16.mxu0 0
  %4645 = vmatmul.mubr.bf16.gmra.mxu0 %v4340
  %v4646 = vpop.f32.mrf.mxu0
  %v4647 = vadd.f32 %v4485, %v4646
  %v4648 = vpop.f32.mrf.mxu0
  %v4649 = vpop.f32.mrf.mxu0
  %v4650 = vadd.f32 %v4485, %v4649
  %v4651 = vpop.f32.mrf.mxu0
  %4652 = vmatprep.mubr.bf16.mxu0 0
  %4653 = vmatmul.mubr.bf16.gmra.mxu0 %v4535
  %v4654 = vpop.f32.mrf.mxu0
  %v4655 = vadd.f32 %v4485, %v4654
  %v4656 = vpop.f32.mrf.mxu0
  %v4657 = vpop.f32.mrf.mxu0
  %v4658 = vadd.f32 %v4485, %v4657
  %v4659 = vpop.f32.mrf.mxu0
  %4660 = vmatprep.mubr.bf16.mxu0 0
  %4661 = vmatmul.mubr.bf16.gmra.mxu0 %v4538
  %v4662 = vpop.f32.mrf.mxu0
  %v4663 = vadd.f32 %v4485, %v4662
  %v4664 = vpop.f32.mrf.mxu0
  %v4665 = vpop.f32.mrf.mxu0
  %v4666 = vadd.f32 %v4485, %v4665
  %v4667 = vpop.f32.mrf.mxu0
  %4668 = vdwg.mxu0
  %v4669 = vxor.u32 %v4575, 2147483648
  %v4670 = vxor.u32 %v4578, 2147483648
  %v4671 = vxor.u32 %v4583, 2147483648
  %v4672 = vxor.u32 %v4586, 2147483648
  %v4673 = vxor.u32 %v4591, 2147483648
  %v4674 = vxor.u32 %v4594, 2147483648
  %v4675 = vxor.u32 %v4599, 2147483648
  %v4676 = vxor.u32 %v4602, 2147483648
  %v4677 = vxor.u32 %v4607, 2147483648
  %v4678 = vxor.u32 %v4610, 2147483648
  %v4679 = vxor.u32 %v4615, 2147483648
  %v4680 = vxor.u32 %v4618, 2147483648
  %v4681 = vxor.u32 %v4623, 2147483648
  %v4682 = vxor.u32 %v4626, 2147483648
  %v4683 = vxor.u32 %v4631, 2147483648
  %v4684 = vxor.u32 %v4634, 2147483648
  %v4685 = vxor.u32 %v4639, 2147483648
  %v4686 = vxor.u32 %v4642, 2147483648
  %v4687 = vxor.u32 %v4647, 2147483648
  %v4688 = vxor.u32 %v4650, 2147483648
  %v4689 = vxor.u32 %v4655, 2147483648
  %v4690 = vxor.u32 %v4658, 2147483648
  %v4691 = vxor.u32 %v4663, 2147483648
  %v4692 = vxor.u32 %v4666, 2147483648
  %v4693 = vmul.f32 %v4669, 1.442695
  %v4694 = vpow.pop %v4693
  %v4695 = vmul.f32 %v4670, 1.442695
  %v4696 = vpow.pop %v4695
  %v4697 = vmul.f32 %v4671, 1.442695
  %v4698 = vpow.pop %v4697
  %v4699 = vmul.f32 %v4672, 1.442695
  %v4700 = vpow.pop %v4699
  %v4701 = vmul.f32 %v4673, 1.442695
  %v4702 = vpow.pop %v4701
  %v4703 = vmul.f32 %v4674, 1.442695
  %v4704 = vpow.pop %v4703
  %v4705 = vmul.f32 %v4675, 1.442695
  %v4706 = vpow.pop %v4705
  %v4707 = vmul.f32 %v4676, 1.442695
  %v4708 = vpow.pop %v4707
  %v4709 = vmul.f32 %v4677, 1.442695
  %v4710 = vpow.pop %v4709
  %v4711 = vmul.f32 %v4678, 1.442695
  %v4712 = vpow.pop %v4711
  %v4713 = vmul.f32 %v4679, 1.442695
  %v4714 = vpow.pop %v4713
  %v4715 = vmul.f32 %v4680, 1.442695
  %v4716 = vpow.pop %v4715
  %v4717 = vmul.f32 %v4681, 1.442695
  %v4718 = vpow.pop %v4717
  %v4719 = vmul.f32 %v4682, 1.442695
  %v4720 = vpow.pop %v4719
  %v4721 = vmul.f32 %v4683, 1.442695
  %v4722 = vpow.pop %v4721
  %v4723 = vmul.f32 %v4684, 1.442695
  %v4724 = vpow.pop %v4723
  %v4725 = vmul.f32 %v4685, 1.442695
  %v4726 = vpow.pop %v4725
  %v4727 = vmul.f32 %v4686, 1.442695
  %v4728 = vpow.pop %v4727
  %v4729 = vmul.f32 %v4687, 1.442695
  %v4730 = vpow.pop %v4729
  %v4731 = vmul.f32 %v4688, 1.442695
  %v4732 = vpow.pop %v4731
  %v4733 = vmul.f32 %v4689, 1.442695
  %v4734 = vpow.pop %v4733
  %v4735 = vmul.f32 %v4690, 1.442695
  %v4736 = vpow.pop %v4735
  %v4737 = vmul.f32 %v4691, 1.442695
  %v4738 = vpow.pop %v4737
  %v4739 = vmul.f32 %v4692, 1.442695
  %v4740 = vpow.pop %v4739
  %v4741 = vadd.f32 %v4694, 1.0
  %v4742 = vadd.f32 %v4696, 1.0
  %v4743 = vadd.f32 %v4698, 1.0
  %v4744 = vadd.f32 %v4700, 1.0
  %v4745 = vadd.f32 %v4702, 1.0
  %v4746 = vadd.f32 %v4704, 1.0
  %v4747 = vadd.f32 %v4706, 1.0
  %v4748 = vadd.f32 %v4708, 1.0
  %v4749 = vadd.f32 %v4710, 1.0
  %v4750 = vadd.f32 %v4712, 1.0
  %v4751 = vadd.f32 %v4714, 1.0
  %v4752 = vadd.f32 %v4716, 1.0
  %v4753 = vadd.f32 %v4718, 1.0
  %v4754 = vadd.f32 %v4720, 1.0
  %v4755 = vadd.f32 %v4722, 1.0
  %v4756 = vadd.f32 %v4724, 1.0
  %v4757 = vadd.f32 %v4726, 1.0
  %v4758 = vadd.f32 %v4728, 1.0
  %v4759 = vadd.f32 %v4730, 1.0
  %v4760 = vadd.f32 %v4732, 1.0
  %v4761 = vadd.f32 %v4734, 1.0
  %v4762 = vadd.f32 %v4736, 1.0
  %v4763 = vadd.f32 %v4738, 1.0
  %v4764 = vadd.f32 %v4740, 1.0
  %v4765 = vrcp.pop %v4741
  %v4766 = vmul.f32 1.0, %v4765
  %v4767 = vrcp.pop %v4742
  %v4768 = vmul.f32 1.0, %v4767
  %v4769 = vrcp.pop %v4743
  %v4770 = vmul.f32 1.0, %v4769
  %v4771 = vrcp.pop %v4744
  %v4772 = vmul.f32 1.0, %v4771
  %v4773 = vrcp.pop %v4745
  %v4774 = vmul.f32 1.0, %v4773
  %v4775 = vrcp.pop %v4746
  %v4776 = vmul.f32 1.0, %v4775
  %v4777 = vrcp.pop %v4747
  %v4778 = vmul.f32 1.0, %v4777
  %v4779 = vrcp.pop %v4748
  %v4780 = vmul.f32 1.0, %v4779
  %v4781 = vrcp.pop %v4749
  %v4782 = vmul.f32 1.0, %v4781
  %v4783 = vrcp.pop %v4750
  %v4784 = vmul.f32 1.0, %v4783
  %v4785 = vrcp.pop %v4751
  %v4786 = vmul.f32 1.0, %v4785
  %v4787 = vrcp.pop %v4752
  %v4788 = vmul.f32 1.0, %v4787
  %v4789 = vrcp.pop %v4753
  %v4790 = vmul.f32 1.0, %v4789
  %v4791 = vrcp.pop %v4754
  %v4792 = vmul.f32 1.0, %v4791
  %v4793 = vrcp.pop %v4755
  %v4794 = vmul.f32 1.0, %v4793
  %v4795 = vrcp.pop %v4756
  %v4796 = vmul.f32 1.0, %v4795
  %v4797 = vrcp.pop %v4757
  %v4798 = vmul.f32 1.0, %v4797
  %v4799 = vrcp.pop %v4758
  %v4800 = vmul.f32 1.0, %v4799
  %v4801 = vrcp.pop %v4759
  %v4802 = vmul.f32 1.0, %v4801
  %v4803 = vrcp.pop %v4760
  %v4804 = vmul.f32 1.0, %v4803
  %v4805 = vrcp.pop %v4761
  %v4806 = vmul.f32 1.0, %v4805
  %v4807 = vrcp.pop %v4762
  %v4808 = vmul.f32 1.0, %v4807
  %v4809 = vrcp.pop %v4763
  %v4810 = vmul.f32 1.0, %v4809
  %v4811 = vrcp.pop %v4764
  %v4812 = vmul.f32 1.0, %v4811
  %v4813 = vlog2.pop %v4766
  %v4814 = vmul.f32 %v4813, 0.6931472
  %v4815 = vlog2.pop %v4768
  %v4816 = vmul.f32 %v4815, 0.6931472
  %v4817 = vlog2.pop %v4772
  %v4818 = vmul.f32 %v4817, 0.6931472
  %v4819 = vlog2.pop %v4774
  %v4820 = vmul.f32 %v4819, 0.6931472
  %v4821 = vlog2.pop %v4778
  %v4822 = vmul.f32 %v4821, 0.6931472
  %v4823 = vlog2.pop %v4780
  %v4824 = vmul.f32 %v4823, 0.6931472
  %v4825 = vlog2.pop %v4784
  %v4826 = vmul.f32 %v4825, 0.6931472
  %v4827 = vlog2.pop %v4786
  %v4828 = vmul.f32 %v4827, 0.6931472
  %v4829 = vlog2.pop %v4790
  %v4830 = vmul.f32 %v4829, 0.6931472
  %v4831 = vlog2.pop %v4792
  %v4832 = vmul.f32 %v4831, 0.6931472
  %v4833 = vlog2.pop %v4796
  %v4834 = vmul.f32 %v4833, 0.6931472
  %v4835 = vlog2.pop %v4798
  %v4836 = vmul.f32 %v4835, 0.6931472
  %v4837 = vlog2.pop %v4802
  %v4838 = vmul.f32 %v4837, 0.6931472
  %v4839 = vlog2.pop %v4804
  %v4840 = vmul.f32 %v4839, 0.6931472
  %v4841 = vlog2.pop %v4808
  %v4842 = vmul.f32 %v4841, 0.6931472
  %v4843 = vlog2.pop %v4810
  %v4844 = vmul.f32 %v4843, 0.6931472
  %v4845 = vmax.f32 %v4814, -100.0
  %v4846 = vmax.f32 %v4816, -100.0
  %v4847 = vmax.f32 %v4818, -100.0
  %v4848 = vmax.f32 %v4820, -100.0
  %v4849 = vmax.f32 %v4822, -100.0
  %v4850 = vmax.f32 %v4824, -100.0
  %v4851 = vmax.f32 %v4826, -100.0
  %v4852 = vmax.f32 %v4828, -100.0
  %v4853 = vmax.f32 %v4830, -100.0
  %v4854 = vmax.f32 %v4832, -100.0
  %v4855 = vmax.f32 %v4834, -100.0
  %v4856 = vmax.f32 %v4836, -100.0
  %v4857 = vmax.f32 %v4838, -100.0
  %v4858 = vmax.f32 %v4840, -100.0
  %v4859 = vmax.f32 %v4842, -100.0
  %v4860 = vmax.f32 %v4844, -100.0
  %v4861 = vsub.f32 1.0, %v4770
  %v4862 = vsub.f32 1.0, %v4776
  %v4863 = vsub.f32 1.0, %v4782
  %v4864 = vsub.f32 1.0, %v4788
  %v4865 = vsub.f32 1.0, %v4794
  %v4866 = vsub.f32 1.0, %v4800
  %v4867 = vsub.f32 1.0, %v4806
  %v4868 = vsub.f32 1.0, %v4812
  %v4869 = vlog2.pop %v4861
  %v4870 = vmul.f32 %v4869, 0.6931472
  %v4871 = vlog2.pop %v4862
  %v4872 = vmul.f32 %v4871, 0.6931472
  %v4873 = vlog2.pop %v4863
  %v4874 = vmul.f32 %v4873, 0.6931472
  %v4875 = vlog2.pop %v4864
  %v4876 = vmul.f32 %v4875, 0.6931472
  %v4877 = vlog2.pop %v4865
  %v4878 = vmul.f32 %v4877, 0.6931472
  %v4879 = vlog2.pop %v4866
  %v4880 = vmul.f32 %v4879, 0.6931472
  %v4881 = vlog2.pop %v4867
  %v4882 = vmul.f32 %v4881, 0.6931472
  %v4883 = vlog2.pop %v4868
  %v4884 = vmul.f32 %v4883, 0.6931472
  %v4885 = vmax.f32 %v4870, -100.0
  %v4886 = vmax.f32 %v4872, -100.0
  %v4887 = vmax.f32 %v4874, -100.0
  %v4888 = vmax.f32 %v4876, -100.0
  %v4889 = vmax.f32 %v4878, -100.0
  %v4890 = vmax.f32 %v4880, -100.0
  %v4891 = vmax.f32 %v4882, -100.0
  %v4892 = vmax.f32 %v4884, -100.0
  %v4893 = vmul.f32 %v65, %v4845
  %v4894 = vmul.f32 %v65, %v4846
  %v4895 = vmul.f32 %v65, %v4847
  %v4896 = vmul.f32 %v65, %v4848
  %v4897 = vmul.f32 %v65, %v4849
  %v4898 = vmul.f32 %v65, %v4850
  %v4899 = vmul.f32 %v65, %v4851
  %v4900 = vmul.f32 %v65, %v4852
  %v4901 = vmul.f32 %v65, %v4853
  %v4902 = vmul.f32 %v65, %v4854
  %v4903 = vmul.f32 %v65, %v4855
  %v4904 = vmul.f32 %v65, %v4856
  %v4905 = vmul.f32 %v65, %v4857
  %v4906 = vmul.f32 %v65, %v4858
  %v4907 = vmul.f32 %v65, %v4859
  %v4908 = vmul.f32 %v65, %v4860
  %vm4909 = vcmask 7168
  %v4910 = vsel %vm4909, %v4893, 0.0
  %v4911 = vsel %vm4909, %v4894, 0.0
  %v4912 = vadd.f32 %v4910, %v4911
  %v4913 = vsel %vm4909, %v4895, 0.0
  %v4914 = vadd.f32 %v4912, %v4913
  %v4915 = vsel %vm4909, %v4896, 0.0
  %v4916 = vadd.f32 %v4914, %v4915
  %v4917 = vsel %vm4909, %v4897, 0.0
  %v4918 = vadd.f32 %v4916, %v4917
  %v4919 = vsel %vm4909, %v4898, 0.0
  %v4920 = vadd.f32 %v4918, %v4919
  %v4921 = vsel %vm4909, %v4899, 0.0
  %v4922 = vadd.f32 %v4920, %v4921
  %v4923 = vsel %vm4909, %v4900, 0.0
  %v4924 = vadd.f32 %v4922, %v4923
  %v4925 = vsel %vm4909, %v4901, 0.0
  %v4926 = vadd.f32 %v4924, %v4925
  %v4927 = vsel %vm4909, %v4902, 0.0
  %v4928 = vadd.f32 %v4926, %v4927
  %v4929 = vsel %vm4909, %v4903, 0.0
  %v4930 = vadd.f32 %v4928, %v4929
  %v4931 = vsel %vm4909, %v4904, 0.0
  %v4932 = vadd.f32 %v4930, %v4931
  %v4933 = vsel %vm4909, %v4905, 0.0
  %v4934 = vadd.f32 %v4932, %v4933
  %v4935 = vsel %vm4909, %v4906, 0.0
  %v4936 = vadd.f32 %v4934, %v4935
  %v4937 = vsel %vm4909, %v4907, 0.0
  %v4938 = vadd.f32 %v4936, %v4937
  %v4939 = vsel %vm4909, %v4908, 0.0
  %v4940 = vadd.f32 %v4938, %v4939
  %4941 = vadd.xlane.f32.xlu0 %v4940
  %v4942 = vpop.xlane.xlu0 %4941
  %v4943 = vrot.slane %v4942, 4
  %v4944 = vadd.f32 %v4942, %v4943
  %v4945 = vrot.slane %v4944, 2
  %v4946 = vadd.f32 %v4944, %v4945
  %v4947 = vrot.slane %v4946, 1
  %v4948 = vadd.f32 %v4946, %v4947
  %s4949 = vtos %v4948
  %v4950 = vstv %s4949
  %v4951 = vmul.f32 %v65, %v4885
  %v4952 = vmul.f32 %v65, %v4886
  %v4953 = vmul.f32 %v65, %v4887
  %v4954 = vmul.f32 %v65, %v4888
  %v4955 = vmul.f32 %v65, %v4889
  %v4956 = vmul.f32 %v65, %v4890
  %v4957 = vmul.f32 %v65, %v4891
  %v4958 = vmul.f32 %v65, %v4892
  %v4959 = vsel %vm4909, %v4951, 0.0
  %v4960 = vsel %vm4909, %v4952, 0.0
  %v4961 = vadd.f32 %v4959, %v4960
  %v4962 = vsel %vm4909, %v4953, 0.0
  %v4963 = vadd.f32 %v4961, %v4962
  %v4964 = vsel %vm4909, %v4954, 0.0
  %v4965 = vadd.f32 %v4963, %v4964
  %v4966 = vsel %vm4909, %v4955, 0.0
  %v4967 = vadd.f32 %v4965, %v4966
  %v4968 = vsel %vm4909, %v4956, 0.0
  %v4969 = vadd.f32 %v4967, %v4968
  %v4970 = vsel %vm4909, %v4957, 0.0
  %v4971 = vadd.f32 %v4969, %v4970
  %v4972 = vsel %vm4909, %v4958, 0.0
  %v4973 = vadd.f32 %v4971, %v4972
  %4974 = vadd.xlane.f32.xlu0 %v4973
  %v4975 = vpop.xlane.xlu0 %4974
  %v4976 = vrot.slane %v4975, 4
  %v4977 = vadd.f32 %v4975, %v4976
  %v4978 = vrot.slane %v4977, 2
  %v4979 = vadd.f32 %v4977, %v4978
  %v4980 = vrot.slane %v4979, 1
  %v4981 = vadd.f32 %v4979, %v4980
  %s4982 = vtos %v4981
  %v4983 = vstv %s4982
  %v4984 = vadd.f32 %v4950, %v4983
  %v4985 = vsub.f32 0.0, %v4984
  %v4986 = vmul.f32 %v4985, %v1780
  %4987 = vst.msk [vmem:[%s3] sm:$0xff] %vm78, %v2904
  %4988 = vst.msk [vmem:[%s3 + $0x8] sm:$0xff] %vm78, %v2905
  %4989 = vst.msk [vmem:[%s3 + $0x10] sm:$0xff] %vm78, %v2906
  %4990 = vst.msk [vmem:[%s3 + $0x18] sm:$0xff] %vm78, %v2907
  %4991 = vst.msk [vmem:[%s3 + $0x20] sm:$0xff] %vm78, %v2908
  %4992 = vst.msk [vmem:[%s3 + $0x28] sm:$0xff] %vm78, %v2909
  %4993 = vst.msk [vmem:[%s3 + $0x30] sm:$0xff] %vm78, %v2910
  %4994 = vst.msk [vmem:[%s3 + $0x38] sm:$0xff] %vm78, %v2911
  %v4995 = vsel %vm4909, %v1781, %v3165
  %vm4996 = vcmask 15360
  %v4997 = vsel %vm4996, %v4995, %v4986
  %vm4998 = vcmask 16384
  %4999 = vst.msk [vmem:[%s4] sm:$0x1] %vm4998, %v4997
  // Predicated region
  $region14: #{forward.1} parent=0 // pred_check
    _
  $region15: #{forward.1} parent=0 // pred_check_branch
    %5001 = sbr.rel (0) target = $region17
  $region16: #{forward.1} parent=0 // pred_region
    _
  $region17: #{forward.1} parent=0 // pred_fallthru
    _
  // Predicated region
  $region18: #{forward.1} parent=0 // pred_check
    _
  $region19: #{forward.1} parent=0 // pred_check_branch
    %5003 = sbr.rel (0) target = $region21
  $region20: #{forward.1} parent=0 // pred_region
    _
  $region21: #{forward.1} parent=0 // pred_fallthru
    _
  // Predicated region
  $region22: #{forward.1} parent=0 // pred_check
    _
  $region23: #{forward.1} parent=0 // pred_check_branch
    %5005 = sbr.rel (0) target = $region25
  $region24: #{forward.1} parent=0 // pred_region
    _
  $region25: #{forward.1} parent=0 // pred_fallthru
    _
  // Predicated region
  $region26: #{forward.1} parent=0 // pred_check
    _
  $region27: #{forward.1} parent=0 // pred_check_branch
    %5007 = sbr.rel (0) target = $region29
  $region28: #{forward.1} parent=0 // pred_region
    _
  $region29: #{forward.1} parent=0 // pred_fallthru
    _

</llo_original>
